<compile_context>
chip_gen: v7x
topology: tpu7x:2x2x1
jax: 0.10.0
libtpu: 0.0.40
codegen_flags: <defaults>
</compile_context>

<pallas_src>
import numpy as np
import jax
import jax.numpy as jnp
from jax.experimental import pallas as pl
from jax.experimental.pallas import tpu as pltpu

HIDDEN = 84          # nn.GRU hidden size
HP = 128             # lane-padded hidden size (one full vreg lane tile)
G = 3 * HP           # lane-aligned gate width (r|z|n)

_VMEM = pl.BlockSpec(memory_space=pltpu.MemorySpace.VMEM)
_ANY = pl.BlockSpec(memory_space=pl.ANY)


# -----------------------------------------------------------------------------
# Fused Pallas kernel
# -----------------------------------------------------------------------------
def _rnn_fused_kernel(x_ref,
                      wih0f_ref, wih0b_ref, whh0_ref,
                      bih0f_ref, bih0b_ref, bhn0f_ref, bhn0b_ref,
                      wih1f_ref, wih1b_ref, bih1f_ref, bih1b_ref,
                      bhn1f_ref, bhn1b_ref,
                      whh1_hbm, w1_hbm, w2_hbm, b1_ref, b2_ref,
                      o_ref,
                      gx1f_ref, gx1b_ref, whh1_scr, w1_scr, w2_scr, dma_sem):
    """Entire network in one kernel (no grid, everything VMEM-resident).

      x_ref        : (T*BP, D)   time-major, batch sublane-padded input (f32)
      wih0*        : (D, 3HP)    layer-0 W_ih^T, gate blocks lane-aligned (f32)
      whh0/whh1    : (2HP, 6HP)  blockdiag(W_hh_f^T, W_hh_b^T), bf16
      wih1f/wih1b  : (HP, 6HP)   layer-1 W_ih^T split by input half, both output
                                 directions lane-concatenated, bf16
      bih*         : (1, 3HP)    b_ih with b_hh(r,z) folded in (f32)
      bhn*         : (1, HP)     b_hn (stays inside r*(...), f32)
      whh1_hbm/w1_hbm/w2_hbm : HBM refs (pl.ANY) DMA'd into *_scr while layer 0 runs
      o_ref        : (BP, OUTP)  lane-padded output
      gx1f/gx1b    : (T*BP, 3HP) scratch: layer-1 input projections (accumulated)
    """
    f32, bf16 = jnp.float32, jnp.bfloat16
    TBP = x_ref.shape[0]
    BP = o_ref.shape[0]
    T = TBP // BP

    # ---- overlap HBM->VMEM DMA of the "late" weights with the layer-0 recurrence ----
    cp_whh1 = pltpu.make_async_copy(whh1_hbm, whh1_scr, dma_sem.at[0])
    cp_w1 = pltpu.make_async_copy(w1_hbm, w1_scr, dma_sem.at[1])
    cp_w2 = pltpu.make_async_copy(w2_hbm, w2_scr, dma_sem.at[2])
    cp_whh1.start()
    cp_w1.start()
    cp_w2.start()

    # layer-1 gx accumulators start from the (r/z-folded) input bias
    gx1f_ref[...] = jnp.broadcast_to(bih1f_ref[...], (TBP, G))
    gx1b_ref[...] = jnp.broadcast_to(bih1b_ref[...], (TBP, G))

    # ---- layer 0: input projections hoisted out of the recurrence ----
    x = x_ref[...]                                                  # (T*BP, D)
    gx0f = jnp.dot(x, wih0f_ref[...], preferred_element_type=f32) + bih0f_ref[...]
    gx0b = jnp.dot(x, wih0b_ref[...], preferred_element_type=f32) + bih0b_ref[...]

    def gru_gate(gx, gh, bhn_bc, h):
        # gx already contains b_ih + b_hh for r,z; only b_hn is added here (inside r*).
        r = jax.nn.sigmoid(gx[:, 0:HP] + gh[:, 0:HP])
        z = jax.nn.sigmoid(gx[:, HP:2 * HP] + gh[:, HP:2 * HP])
        n = jnp.tanh(gx[:, 2 * HP:G] + r * (gh[:, 2 * HP:G] + bhn_bc))
        return (1.0 - z) * n + z * h
        # Padded lanes: gx=gh=bhn=0 -> r=z=0.5, n=0 -> padded h stays 0 forever.

    # hoisted broadcasts / weight reads
    bhn0f_bc = jnp.broadcast_to(bhn0f_ref[...], (BP, HP))
    bhn0b_bc = jnp.broadcast_to(bhn0b_ref[...], (BP, HP))
    whh0 = whh0_ref[...]
    wih1f = wih1f_ref[...]
    wih1b = wih1b_ref[...]

    # TODO(synk): keep W_hh resident in the MXU across the unrolled loop via
    # pltpu.matmul_push_rhs / matmul_acc_lhs / matmul_pop; the 768-wide RHS needs
    # column chunking and the explicit-MXU path is not portable across v5e/v6e/v7x,
    # so the recurrent matmul stays a plain jnp.dot here.
    hf = jnp.zeros((BP, HP), f32)
    hb = jnp.zeros((BP, HP), f32)
    for i in range(T):                               # static T, fully unrolled
        tf, tb = i, T - 1 - i
        # one block-diagonal matmul covers both directions (K=256 fills v6e/v7x MXU)
        hcat = jnp.concatenate([hf, hb], axis=-1).astype(bf16)      # (BP, 2HP)
        gh = jnp.dot(hcat, whh0, preferred_element_type=f32)        # (BP, 6HP)
        hf = gru_gate(gx0f[tf * BP:(tf + 1) * BP, :], gh[:, 0:G], bhn0f_bc, hf)
        hb = gru_gate(gx0b[tb * BP:(tb + 1) * BP, :], gh[:, G:2 * G], bhn0b_bc, hb)
        # layer-1 input projections, computed incrementally under the latency-bound
        # layer-0 recurrence (fills otherwise idle MXU slots, no inter-layer block)
        pf = jnp.dot(hf.astype(bf16), wih1f, preferred_element_type=f32)   # (BP, 6HP)
        pb = jnp.dot(hb.astype(bf16), wih1b, preferred_element_type=f32)
        gx1f_ref[tf * BP:(tf + 1) * BP, :] += pf[:, 0:G]
        gx1b_ref[tf * BP:(tf + 1) * BP, :] += pf[:, G:2 * G]
        gx1f_ref[tb * BP:(tb + 1) * BP, :] += pb[:, 0:G]
        gx1b_ref[tb * BP:(tb + 1) * BP, :] += pb[:, G:2 * G]
    hn0f, hn0b = hf, hb

    # ---- layer 1 recurrence (weights arrived via the overlapped DMA) ----
    cp_whh1.wait()
    whh1 = whh1_scr[...]
    bhn1f_bc = jnp.broadcast_to(bhn1f_ref[...], (BP, HP))
    bhn1b_bc = jnp.broadcast_to(bhn1b_ref[...], (BP, HP))
    hf = jnp.zeros((BP, HP), f32)
    hb = jnp.zeros((BP, HP), f32)
    for i in range(T):
        tf, tb = i, T - 1 - i
        hcat = jnp.concatenate([hf, hb], axis=-1).astype(bf16)
        gh = jnp.dot(hcat, whh1, preferred_element_type=f32)
        hf = gru_gate(gx1f_ref[tf * BP:(tf + 1) * BP, :], gh[:, 0:G], bhn1f_bc, hf)
        hb = gru_gate(gx1b_ref[tb * BP:(tb + 1) * BP, :], gh[:, G:2 * G], bhn1b_bc, hb)
    hn1f, hn1b = hf, hb

    # ---- MLP head: hn concat realized as one K=4*HP matmul ----
    cp_w1.wait()
    cp_w2.wait()
    hn = jnp.concatenate([hn0f, hn0b, hn1f, hn1b], axis=-1).astype(bf16)   # (BP, 4HP)
    m = jnp.dot(hn, w1_scr[...], preferred_element_type=f32) + b1_ref[...]
    # nn.Dropout(p=0.0) is the identity.
    o_ref[...] = jnp.dot(m.astype(bf16), w2_scr[...], preferred_element_type=f32) + b2_ref[...]


# -----------------------------------------------------------------------------
# One-time parameter packing: transpose, lane-align gates, fold biases, bf16 cast.
# -----------------------------------------------------------------------------
def _gate_pad_cols(wT):
    """(K, 3H) -> (K, 3HP) with each gate block starting on a 128-lane boundary."""
    out = jnp.zeros((wT.shape[0], G), jnp.float32)
    for g in range(3):
        out = out.at[:, g * HP:g * HP + HIDDEN].set(wT[:, g * HIDDEN:(g + 1) * HIDDEN])
    return out


def _gate_pad_bias(b):
    out = jnp.zeros((1, G), jnp.float32)
    for g in range(3):
        out = out.at[0, g * HP:g * HP + HIDDEN].set(b[g * HIDDEN:(g + 1) * HIDDEN])
    return out


def _pad_rows(w, rows):
    return jnp.zeros((rows, w.shape[1]), w.dtype).at[:w.shape[0]].set(w)


def _blockdiag(wf, wb):
    out = jnp.zeros((2 * HP, 2 * G), jnp.float32)
    out = out.at[:HP, :G].set(wf)
    out = out.at[HP:, G:].set(wb)
    return out


def pack_params(params, num_layers=2):
    """Pre-transpose / pad / fold / cast all weights once (not per forward call)."""
    assert num_layers == 2, "fused kernel is specialized for the module default num_layers=2"
    bf16 = jnp.bfloat16

    def biases(l, suffix):
        b_ih = params[f"bias_ih_l{l}{suffix}"]
        b_hh = params[f"bias_hh_l{l}{suffix}"]
        # fold b_hr, b_hz into the hoisted gx bias; b_hn must stay inside r*(...) (PyTorch GRU)
        fold = jnp.concatenate([b_ih[:2 * HIDDEN] + b_hh[:2 * HIDDEN], b_ih[2 * HIDDEN:]])
        bih = _gate_pad_bias(fold)
        bhn = jnp.zeros((1, HP), jnp.float32).at[0, :HIDDEN].set(b_hh[2 * HIDDEN:])
        return bih, bhn

    def whh_pad(l, suffix):
        return _pad_rows(_gate_pad_cols(params[f"weight_hh_l{l}{suffix}"].T), HP)

    # ---- layer 0 ----
    wih0f = _gate_pad_cols(params["weight_ih_l0"].T)               # (D, 3HP), f32 (tiny)
    wih0b = _gate_pad_cols(params["weight_ih_l0_reverse"].T)
    whh0_blk = _blockdiag(whh_pad(0, ""), whh_pad(0, "_reverse")).astype(bf16)
    bih0f, bhn0f = biases(0, "")
    bih0b, bhn0b = biases(0, "_reverse")

    # ---- layer 1: split W_ih by input half (from h0_fwd / h0_bwd) and lane-concat
    # the two output directions, so each layer-0 state drives one (HP,6HP) matmul. ----
    wi1f = params["weight_ih_l1"]                  # (3H, 2H), layer-1 forward dir
    wi1b = params["weight_ih_l1_reverse"]

    def from_half(lo, hi):
        to_fwd = _pad_rows(_gate_pad_cols(wi1f[:, lo:hi].T), HP)
        to_bwd = _pad_rows(_gate_pad_cols(wi1b[:, lo:hi].T), HP)
        return jnp.concatenate([to_fwd, to_bwd], axis=1)           # (HP, 6HP)

    wih1f = from_half(0, HIDDEN).astype(bf16)
    wih1b = from_half(HIDDEN, 2 * HIDDEN).astype(bf16)
    whh1_blk = _blockdiag(whh_pad(1, ""), whh_pad(1, "_reverse")).astype(bf16)
    bih1f, bhn1f = biases(1, "")
    bih1b, bhn1b = biases(1, "_reverse")

    # ---- MLP head ----
    w1 = params["mlp_w1"]                          # (256, 4H)
    mlp_hid = w1.shape[0]
    w1T = w1.T                                     # (4H, 256)
    w1_p = jnp.zeros((4 * HP, mlp_hid), jnp.float32)
    for k in range(4):                             # slots: [l0f, l0b, l1f, l1b]
        w1_p = w1_p.at[k * HP:k * HP + HIDDEN].set(w1T[k * HIDDEN:(k + 1) * HIDDEN])
    b1_p = params["mlp_b1"][None, :]
    w2 = params["mlp_w2"]                          # (OUT, 256)
    out_dim = w2.shape[0]
    outp = ((out_dim + 127) // 128) * 128          # lane-dense output slab
    w2_p = jnp.zeros((mlp_hid, outp), jnp.float32).at[:, :out_dim].set(w2.T)
    b2_p = jnp.zeros((1, outp), jnp.float32).at[0, :out_dim].set(params["mlp_b2"])

    return (wih0f, wih0b, whh0_blk, bih0f, bih0b, bhn0f, bhn0b,
            wih1f, wih1b, bih1f, bih1b, bhn1f, bhn1b,
            whh1_blk, w1_p.astype(bf16), w2_p.astype(bf16), b1_p, b2_p)


# -----------------------------------------------------------------------------
# Forward wrapper (single pallas_call)
# -----------------------------------------------------------------------------
def rnn_forward(packed, x, output_size):
    """x: (batch, seq, input_size) — PyTorch batch_first convention."""
    B, T, D = x.shape
    BP = max(8, ((B + 7) // 8) * 8)          # sublane-pad batch: whole (8,128) tiles per step
    xt = jnp.transpose(x.astype(jnp.float32), (1, 0, 2))           # (T, B, D)
    xt = jnp.pad(xt, ((0, 0), (0, BP - B), (0, 0)))
    x_tb = xt.reshape(T * BP, D)

    whh1_blk, w1_p, w2_p = packed[13], packed[14], packed[15]
    outp = w2_p.shape[1]

    n_in = 1 + len(packed)
    in_specs = [_VMEM] * n_in
    for idx in (14, 15, 16):                 # whh1_blk, w1, w2: stay in HBM, DMA'd in-kernel
        in_specs[idx] = _ANY

    # TODO(synk): for production-sized (T, B) switch to a grid over T with pl.Buffered
    # x/gx blocks and add a "parallel" batch-tile axis so the 2nd v7x TensorCore is used.
    out = pl.pallas_call(
        _rnn_fused_kernel,
        out_shape=jax.ShapeDtypeStruct((BP, outp), jnp.float32),
        in_specs=in_specs,
        out_specs=_VMEM,
        scratch_shapes=[
            pltpu.VMEM((T * BP, G), jnp.float32),          # gx1 fwd accumulator
            pltpu.VMEM((T * BP, G), jnp.float32),          # gx1 bwd accumulator
            pltpu.VMEM(whh1_blk.shape, whh1_blk.dtype),    # layer-1 W_hh landing buffer
            pltpu.VMEM(w1_p.shape, w1_p.dtype),            # MLP W1 landing buffer
            pltpu.VMEM(w2_p.shape, w2_p.dtype),            # MLP W2 landing buffer
            pltpu.SemaphoreType.DMA((3,)),
        ],
        compiler_params=pltpu.CompilerParams(vmem_limit_bytes=32 * 1024 * 1024),
    )(x_tb, *packed)
    return out[:B, :output_size]


# -----------------------------------------------------------------------------
# Pure-JAX reference (for correctness check only)
# -----------------------------------------------------------------------------
def rnn_ref(params, x, num_layers=2):
    B, T, _ = x.shape
    H = HIDDEN
    inp = x.astype(jnp.float32)
    hns = []
    for l in range(num_layers):
        outs_dirs = []
        for suffix, rev in (("", False), ("_reverse", True)):
            w_ih = params[f"weight_ih_l{l}{suffix}"]
            w_hh = params[f"weight_hh_l{l}{suffix}"]
            b_ih = params[f"bias_ih_l{l}{suffix}"]
            b_hh = params[f"bias_hh_l{l}{suffix}"]
            h = jnp.zeros((B, H), jnp.float32)
            outs = [None] * T
            order = range(T - 1, -1, -1) if rev else range(T)
            for t in order:
                xt = inp[:, t, :]
                gx = xt @ w_ih.T + b_ih
                gh = h @ w_hh.T + b_hh
                r = jax.nn.sigmoid(gx[:, :H] + gh[:, :H])
                z = jax.nn.sigmoid(gx[:, H:2 * H] + gh[:, H:2 * H])
                n = jnp.tanh(gx[:, 2 * H:] + r * gh[:, 2 * H:])
                h = (1.0 - z) * n + z * h
                outs[t] = h
            outs_dirs.append(jnp.stack(outs, axis=1))
            hns.append(h)
        inp = jnp.concatenate(outs_dirs, axis=-1)
    hcat = jnp.concatenate(hns, axis=-1)
    h1 = hcat @ params["mlp_w1"].T + params["mlp_b1"]
    return h1 @ params["mlp_w2"].T + params["mlp_b2"]


# -----------------------------------------------------------------------------
# Deterministic parameter init (PyTorch-style uniform ranges, synthetic values)
# -----------------------------------------------------------------------------
def init_params(key, input_size, output_size, num_layers=2):
    params = {}
    stdv = 1.0 / np.sqrt(HIDDEN)
    keys = iter(jax.random.split(key, 8 * num_layers + 4))

    def u(shape, s):
        return jax.random.uniform(next(keys), shape, jnp.float32, -s, s)

    for l in range(num_layers):
        in_sz = input_size if l == 0 else 2 * HIDDEN
        for suffix in ("", "_reverse"):
            params[f"weight_ih_l{l}{suffix}"] = u((3 * HIDDEN, in_sz), stdv)
            params[f"weight_hh_l{l}{suffix}"] = u((3 * HIDDEN, HIDDEN), stdv)
            params[f"bias_ih_l{l}{suffix}"] = u((3 * HIDDEN,), stdv)
            params[f"bias_hh_l{l}{suffix}"] = u((3 * HIDDEN,), stdv)

    mlp_in = 2 * HIDDEN * num_layers  # == 168 * num_layers
    s1, s2 = 1.0 / np.sqrt(mlp_in), 1.0 / np.sqrt(256)
    params["mlp_w1"] = u((256, mlp_in), s1)
    params["mlp_b1"] = u((256,), s1)
    params["mlp_w2"] = u((output_size, 256), s2)
    params["mlp_b2"] = u((output_size,), s2)
    return params


if __name__ == "__main__":
    key = jax.random.PRNGKey(0)
    k_param, k_x = jax.random.split(key)

    batch, seq, input_size, output_size = 2, 8, 12, 3
    params = init_params(k_param, input_size, output_size, num_layers=2)
    x = jax.random.normal(k_x, (batch, seq, input_size), jnp.float32)

    packed = pack_params(params)                          # one-time weight prep
    fwd = jax.jit(rnn_forward, static_argnums=(2,))
    y = jax.block_until_ready(fwd(packed, x, output_size))

    assert y.shape == (batch, output_size)
    y_ref = rnn_ref(params, x)
    np.testing.assert_allclose(np.asarray(y), np.asarray(y_ref), rtol=1e-2, atol=1e-2)
    print("KERNEL_OK")
</pallas_src>

<mosaic_0001>
module attributes {stable_mosaic.version = 11 : i64} {
  func.func @_rnn_fused_kernel(%arg0: memref<64x12xf32, #tpu.memory_space<vmem>>, %arg1: memref<12x384xf32, #tpu.memory_space<vmem>>, %arg2: memref<12x384xf32, #tpu.memory_space<vmem>>, %arg3: memref<256x768xbf16, #tpu.memory_space<vmem>>, %arg4: memref<1x384xf32, #tpu.memory_space<vmem>>, %arg5: memref<1x384xf32, #tpu.memory_space<vmem>>, %arg6: memref<1x128xf32, #tpu.memory_space<vmem>>, %arg7: memref<1x128xf32, #tpu.memory_space<vmem>>, %arg8: memref<128x768xbf16, #tpu.memory_space<vmem>>, %arg9: memref<128x768xbf16, #tpu.memory_space<vmem>>, %arg10: memref<1x384xf32, #tpu.memory_space<vmem>>, %arg11: memref<1x384xf32, #tpu.memory_space<vmem>>, %arg12: memref<1x128xf32, #tpu.memory_space<vmem>>, %arg13: memref<1x128xf32, #tpu.memory_space<vmem>>, %arg14: memref<256x768xbf16, #tpu.memory_space<any>>, %arg15: memref<512x256xbf16, #tpu.memory_space<any>>, %arg16: memref<256x128xbf16, #tpu.memory_space<any>>, %arg17: memref<1x256xf32, #tpu.memory_space<vmem>>, %arg18: memref<1x128xf32, #tpu.memory_space<vmem>>, %arg19: memref<8x128xf32, #tpu.memory_space<vmem>>, %arg20: memref<64x384xf32, #tpu.memory_space<vmem>>, %arg21: memref<64x384xf32, #tpu.memory_space<vmem>>, %arg22: memref<256x768xbf16, #tpu.memory_space<vmem>>, %arg23: memref<512x256xbf16, #tpu.memory_space<vmem>>, %arg24: memref<256x128xbf16, #tpu.memory_space<vmem>>, %arg25: memref<3x!tpu.dma_semaphore, #tpu.memory_space<semaphore_mem>>) attributes {dimension_semantics = [], scalar_prefetch = 0 : i64, scratch_operands = 6 : i64, tpu.core_type = #tpu.core_type<tc>} {
    %c0_i32 = arith.constant 0 : i32
    %0 = tpu.memref_slice %arg25[%c0_i32] : memref<3x!tpu.dma_semaphore, #tpu.memory_space<semaphore_mem>> -> memref<1x!tpu.dma_semaphore, #tpu.memory_space<semaphore_mem>>
    %1 = tpu.memref_squeeze %0 : memref<1x!tpu.dma_semaphore, #tpu.memory_space<semaphore_mem>> -> memref<!tpu.dma_semaphore, #tpu.memory_space<semaphore_mem>>
    tpu.enqueue_dma source(%arg14 : memref<256x768xbf16, #tpu.memory_space<any>>) target(%arg22 : memref<256x768xbf16, #tpu.memory_space<vmem>>) target_semaphore(%1 : memref<!tpu.dma_semaphore, #tpu.memory_space<semaphore_mem>>)
    %c1_i32 = arith.constant 1 : i32
    %2 = tpu.memref_slice %arg25[%c1_i32] : memref<3x!tpu.dma_semaphore, #tpu.memory_space<semaphore_mem>> -> memref<1x!tpu.dma_semaphore, #tpu.memory_space<semaphore_mem>>
    %3 = tpu.memref_squeeze %2 : memref<1x!tpu.dma_semaphore, #tpu.memory_space<semaphore_mem>> -> memref<!tpu.dma_semaphore, #tpu.memory_space<semaphore_mem>>
    tpu.enqueue_dma source(%arg15 : memref<512x256xbf16, #tpu.memory_space<any>>) target(%arg23 : memref<512x256xbf16, #tpu.memory_space<vmem>>) target_semaphore(%3 : memref<!tpu.dma_semaphore, #tpu.memory_space<semaphore_mem>>)
    %c2_i32 = arith.constant 2 : i32
    %4 = tpu.memref_slice %arg25[%c2_i32] : memref<3x!tpu.dma_semaphore, #tpu.memory_space<semaphore_mem>> -> memref<1x!tpu.dma_semaphore, #tpu.memory_space<semaphore_mem>>
    %5 = tpu.memref_squeeze %4 : memref<1x!tpu.dma_semaphore, #tpu.memory_space<semaphore_mem>> -> memref<!tpu.dma_semaphore, #tpu.memory_space<semaphore_mem>>
    tpu.enqueue_dma source(%arg16 : memref<256x128xbf16, #tpu.memory_space<any>>) target(%arg24 : memref<256x128xbf16, #tpu.memory_space<vmem>>) target_semaphore(%5 : memref<!tpu.dma_semaphore, #tpu.memory_space<semaphore_mem>>)
    %c0 = arith.constant 0 : index
    %c0_0 = arith.constant 0 : index
    %6 = vector.load %arg10[%c0, %c0_0] : memref<1x384xf32, #tpu.memory_space<vmem>>, vector<1x384xf32>
    %7 = vector.shape_cast %6 : vector<1x384xf32> to vector<1x384xf32>
    %8 = vector.broadcast %7 : vector<1x384xf32> to vector<64x384xf32>
    %c0_1 = arith.constant 0 : index
    %c0_2 = arith.constant 0 : index
    %9 = vector.load %arg20[%c0_1, %c0_2] : memref<64x384xf32, #tpu.memory_space<vmem>>, vector<64x384xf32>
    tpu.vector_store %arg20[%c0_1, %c0_2], %8 {strides = array<i32>} : memref<64x384xf32, #tpu.memory_space<vmem>>, vector<64x384xf32>,
    %c0_3 = arith.constant 0 : index
    %c0_4 = arith.constant 0 : index
    %10 = vector.load %arg11[%c0_3, %c0_4] : memref<1x384xf32, #tpu.memory_space<vmem>>, vector<1x384xf32>
    %11 = vector.shape_cast %10 : vector<1x384xf32> to vector<1x384xf32>
    %12 = vector.broadcast %11 : vector<1x384xf32> to vector<64x384xf32>
    %c0_5 = arith.constant 0 : index
    %c0_6 = arith.constant 0 : index
    %13 = vector.load %arg21[%c0_5, %c0_6] : memref<64x384xf32, #tpu.memory_space<vmem>>, vector<64x384xf32>
    tpu.vector_store %arg21[%c0_5, %c0_6], %12 {strides = array<i32>} : memref<64x384xf32, #tpu.memory_space<vmem>>, vector<64x384xf32>,
    %c0_7 = arith.constant 0 : index
    %c0_8 = arith.constant 0 : index
    %14 = vector.load %arg0[%c0_7, %c0_8] : memref<64x12xf32, #tpu.memory_space<vmem>>, vector<64x12xf32>
    %c0_9 = arith.constant 0 : index
    %c0_10 = arith.constant 0 : index
    %15 = vector.load %arg1[%c0_9, %c0_10] : memref<12x384xf32, #tpu.memory_space<vmem>>, vector<12x384xf32>
    %cst = arith.constant dense<0.000000e+00> : vector<64x384xf32>
    %16 = tpu.matmul %14, %15, %cst {dimension_numbers = #tpu.dot_dimension_numbers<[1], [0], [0], [1], [0, 0, 1, 1], [], []>} : vector<64x12xf32>, vector<12x384xf32>, vector<64x384xf32> -> vector<64x384xf32>
    %c0_11 = arith.constant 0 : index
    %c0_12 = arith.constant 0 : index
    %17 = vector.load %arg4[%c0_11, %c0_12] : memref<1x384xf32, #tpu.memory_space<vmem>>, vector<1x384xf32>
    %18 = vector.broadcast %17 : vector<1x384xf32> to vector<64x384xf32>
    %19 = arith.addf %16, %18 : vector<64x384xf32>
    %c0_13 = arith.constant 0 : index
    %c0_14 = arith.constant 0 : index
    %20 = vector.load %arg2[%c0_13, %c0_14] : memref<12x384xf32, #tpu.memory_space<vmem>>, vector<12x384xf32>
    %cst_15 = arith.constant dense<0.000000e+00> : vector<64x384xf32>
    %21 = tpu.matmul %14, %20, %cst_15 {dimension_numbers = #tpu.dot_dimension_numbers<[1], [0], [0], [1], [0, 0, 1, 1], [], []>} : vector<64x12xf32>, vector<12x384xf32>, vector<64x384xf32> -> vector<64x384xf32>
    %c0_16 = arith.constant 0 : index
    %c0_17 = arith.constant 0 : index
    %22 = vector.load %arg5[%c0_16, %c0_17] : memref<1x384xf32, #tpu.memory_space<vmem>>, vector<1x384xf32>
    %23 = vector.broadcast %22 : vector<1x384xf32> to vector<64x384xf32>
    %24 = arith.addf %21, %23 : vector<64x384xf32>
    %c0_18 = arith.constant 0 : index
    %c0_19 = arith.constant 0 : index
    %25 = vector.load %arg6[%c0_18, %c0_19] : memref<1x128xf32, #tpu.memory_space<vmem>>, vector<1x128xf32>
    %26 = vector.shape_cast %25 : vector<1x128xf32> to vector<1x128xf32>
    %27 = vector.broadcast %26 : vector<1x128xf32> to vector<8x128xf32>
    %c0_20 = arith.constant 0 : index
    %c0_21 = arith.constant 0 : index
    %28 = vector.load %arg7[%c0_20, %c0_21] : memref<1x128xf32, #tpu.memory_space<vmem>>, vector<1x128xf32>
    %29 = vector.shape_cast %28 : vector<1x128xf32> to vector<1x128xf32>
    %30 = vector.broadcast %29 : vector<1x128xf32> to vector<8x128xf32>
    %c0_22 = arith.constant 0 : index
    %c0_23 = arith.constant 0 : index
    %31 = vector.load %arg3[%c0_22, %c0_23] : memref<256x768xbf16, #tpu.memory_space<vmem>>, vector<256x768xbf16>
    %c0_24 = arith.constant 0 : index
    %c0_25 = arith.constant 0 : index
    %32 = vector.load %arg8[%c0_24, %c0_25] : memref<128x768xbf16, #tpu.memory_space<vmem>>, vector<128x768xbf16>
    %c0_26 = arith.constant 0 : index
    %c0_27 = arith.constant 0 : index
    %33 = vector.load %arg9[%c0_26, %c0_27] : memref<128x768xbf16, #tpu.memory_space<vmem>>, vector<128x768xbf16>
    %cst_28 = arith.constant 0.000000e+00 : f32
    %34 = vector.broadcast %cst_28 : f32 to vector<8x128xf32>
    %cst_29 = arith.constant 0.000000e+00 : f32
    %35 = vector.broadcast %cst_29 : f32 to vector<8x128xf32>
    %36 = tpu.concatenate %34, %35 in 1 : vector<8x128xf32>, vector<8x128xf32> -> vector<8x256xf32>
    %37 = arith.truncf %36 : vector<8x256xf32> to vector<8x256xbf16>
    %cst_30 = arith.constant dense<0.000000e+00> : vector<8x768xf32>
    %38 = tpu.matmul %37, %31, %cst_30 {dimension_numbers = #tpu.dot_dimension_numbers<[1], [0], [0], [1], [0, 0, 1, 1], [], []>} : vector<8x256xbf16>, vector<256x768xbf16>, vector<8x768xf32> -> vector<8x768xf32>
    %39 = vector.extract_strided_slice %19 {offsets = [0, 0], sizes = [8, 384], strides = [1, 1]} : vector<64x384xf32> to vector<8x384xf32>
    %40 = vector.extract_strided_slice %38 {offsets = [0, 0], sizes = [8, 384], strides = [1, 1]} : vector<8x768xf32> to vector<8x384xf32>
    %41 = vector.extract_strided_slice %39 {offsets = [0, 0], sizes = [8, 128], strides = [1, 1]} : vector<8x384xf32> to vector<8x128xf32>
    %42 = vector.extract_strided_slice %40 {offsets = [0, 0], sizes = [8, 128], strides = [1, 1]} : vector<8x384xf32> to vector<8x128xf32>
    %43 = arith.addf %41, %42 : vector<8x128xf32>
    %44 = arith.negf %43 : vector<8x128xf32>
    %45 = math.exp %44 : vector<8x128xf32>
    %cst_31 = arith.constant 1.000000e+00 : f32
    %46 = vector.broadcast %cst_31 : f32 to vector<8x128xf32>
    %47 = arith.addf %46, %45 : vector<8x128xf32>
    %48 = arith.divf %46, %47 : vector<8x128xf32>
    %49 = vector.extract_strided_slice %39 {offsets = [0, 128], sizes = [8, 128], strides = [1, 1]} : vector<8x384xf32> to vector<8x128xf32>
    %50 = vector.extract_strided_slice %40 {offsets = [0, 128], sizes = [8, 128], strides = [1, 1]} : vector<8x384xf32> to vector<8x128xf32>
    %51 = arith.addf %49, %50 : vector<8x128xf32>
    %52 = arith.negf %51 : vector<8x128xf32>
    %53 = math.exp %52 : vector<8x128xf32>
    %cst_32 = arith.constant 1.000000e+00 : f32
    %54 = vector.broadcast %cst_32 : f32 to vector<8x128xf32>
    %55 = arith.addf %54, %53 : vector<8x128xf32>
    %56 = arith.divf %54, %55 : vector<8x128xf32>
    %57 = vector.extract_strided_slice %39 {offsets = [0, 256], sizes = [8, 128], strides = [1, 1]} : vector<8x384xf32> to vector<8x128xf32>
    %58 = vector.extract_strided_slice %40 {offsets = [0, 256], sizes = [8, 128], strides = [1, 1]} : vector<8x384xf32> to vector<8x128xf32>
    %59 = arith.addf %58, %27 : vector<8x128xf32>
    %60 = arith.mulf %48, %59 : vector<8x128xf32>
    %61 = arith.addf %57, %60 : vector<8x128xf32>
    %62 = math.tanh %61 : vector<8x128xf32>
    %cst_33 = arith.constant 1.000000e+00 : f32
    %63 = vector.broadcast %cst_33 : f32 to vector<8x128xf32>
    %64 = arith.subf %63, %56 : vector<8x128xf32>
    %65 = arith.mulf %64, %62 : vector<8x128xf32>
    %66 = arith.mulf %56, %34 : vector<8x128xf32>
    %67 = arith.addf %65, %66 : vector<8x128xf32>
    %68 = vector.extract_strided_slice %24 {offsets = [56, 0], sizes = [8, 384], strides = [1, 1]} : vector<64x384xf32> to vector<8x384xf32>
    %69 = vector.extract_strided_slice %38 {offsets = [0, 384], sizes = [8, 384], strides = [1, 1]} : vector<8x768xf32> to vector<8x384xf32>
    %70 = vector.extract_strided_slice %68 {offsets = [0, 0], sizes = [8, 128], strides = [1, 1]} : vector<8x384xf32> to vector<8x128xf32>
    %71 = vector.extract_strided_slice %69 {offsets = [0, 0], sizes = [8, 128], strides = [1, 1]} : vector<8x384xf32> to vector<8x128xf32>
    %72 = arith.addf %70, %71 : vector<8x128xf32>
    %73 = arith.negf %72 : vector<8x128xf32>
    %74 = math.exp %73 : vector<8x128xf32>
    %cst_34 = arith.constant 1.000000e+00 : f32
    %75 = vector.broadcast %cst_34 : f32 to vector<8x128xf32>
    %76 = arith.addf %75, %74 : vector<8x128xf32>
    %77 = arith.divf %75, %76 : vector<8x128xf32>
    %78 = vector.extract_strided_slice %68 {offsets = [0, 128], sizes = [8, 128], strides = [1, 1]} : vector<8x384xf32> to vector<8x128xf32>
    %79 = vector.extract_strided_slice %69 {offsets = [0, 128], sizes = [8, 128], strides = [1, 1]} : vector<8x384xf32> to vector<8x128xf32>
    %80 = arith.addf %78, %79 : vector<8x128xf32>
    %81 = arith.negf %80 : vector<8x128xf32>
    %82 = math.exp %81 : vector<8x128xf32>
    %cst_35 = arith.constant 1.000000e+00 : f32
    %83 = vector.broadcast %cst_35 : f32 to vector<8x128xf32>
    %84 = arith.addf %83, %82 : vector<8x128xf32>
    %85 = arith.divf %83, %84 : vector<8x128xf32>
    %86 = vector.extract_strided_slice %68 {offsets = [0, 256], sizes = [8, 128], strides = [1, 1]} : vector<8x384xf32> to vector<8x128xf32>
    %87 = vector.extract_strided_slice %69 {offsets = [0, 256], sizes = [8, 128], strides = [1, 1]} : vector<8x384xf32> to vector<8x128xf32>
    %88 = arith.addf %87, %30 : vector<8x128xf32>
    %89 = arith.mulf %77, %88 : vector<8x128xf32>
    %90 = arith.addf %86, %89 : vector<8x128xf32>
    %91 = math.tanh %90 : vector<8x128xf32>
    %cst_36 = arith.constant 1.000000e+00 : f32
    %92 = vector.broadcast %cst_36 : f32 to vector<8x128xf32>
    %93 = arith.subf %92, %85 : vector<8x128xf32>
    %94 = arith.mulf %93, %91 : vector<8x128xf32>
    %95 = arith.mulf %85, %35 : vector<8x128xf32>
    %96 = arith.addf %94, %95 : vector<8x128xf32>
    %97 = arith.truncf %67 : vector<8x128xf32> to vector<8x128xbf16>
    %cst_37 = arith.constant dense<0.000000e+00> : vector<8x768xf32>
    %98 = tpu.matmul %97, %32, %cst_37 {dimension_numbers = #tpu.dot_dimension_numbers<[1], [0], [0], [1], [0, 0, 1, 1], [], []>} : vector<8x128xbf16>, vector<128x768xbf16>, vector<8x768xf32> -> vector<8x768xf32>
    %99 = arith.truncf %96 : vector<8x128xf32> to vector<8x128xbf16>
    %cst_38 = arith.constant dense<0.000000e+00> : vector<8x768xf32>
    %100 = tpu.matmul %99, %33, %cst_38 {dimension_numbers = #tpu.dot_dimension_numbers<[1], [0], [0], [1], [0, 0, 1, 1], [], []>} : vector<8x128xbf16>, vector<128x768xbf16>, vector<8x768xf32> -> vector<8x768xf32>
    %c0_39 = arith.constant 0 : index
    %c0_40 = arith.constant 0 : index
    %101 = vector.load %arg20[%c0_39, %c0_40] : memref<64x384xf32, #tpu.memory_space<vmem>>, vector<8x384xf32>
    %102 = vector.extract_strided_slice %98 {offsets = [0, 0], sizes = [8, 384], strides = [1, 1]} : vector<8x768xf32> to vector<8x384xf32>
    %103 = arith.addf %101, %102 : vector<8x384xf32>
    %c0_41 = arith.constant 0 : index
    %c0_42 = arith.constant 0 : index
    %104 = vector.load %arg20[%c0_41, %c0_42] : memref<64x384xf32, #tpu.memory_space<vmem>>, vector<8x384xf32>
    tpu.vector_store %arg20[%c0_41, %c0_42], %103 {strides = array<i32>} : memref<64x384xf32, #tpu.memory_space<vmem>>, vector<8x384xf32>,
    %c0_43 = arith.constant 0 : index
    %c0_44 = arith.constant 0 : index
    %105 = vector.load %arg21[%c0_43, %c0_44] : memref<64x384xf32, #tpu.memory_space<vmem>>, vector<8x384xf32>
    %106 = vector.extract_strided_slice %98 {offsets = [0, 384], sizes = [8, 384], strides = [1, 1]} : vector<8x768xf32> to vector<8x384xf32>
    %107 = arith.addf %105, %106 : vector<8x384xf32>
    %c0_45 = arith.constant 0 : index
    %c0_46 = arith.constant 0 : index
    %108 = vector.load %arg21[%c0_45, %c0_46] : memref<64x384xf32, #tpu.memory_space<vmem>>, vector<8x384xf32>
    tpu.vector_store %arg21[%c0_45, %c0_46], %107 {strides = array<i32>} : memref<64x384xf32, #tpu.memory_space<vmem>>, vector<8x384xf32>,
    %c56 = arith.constant 56 : index
    %c0_47 = arith.constant 0 : index
    %109 = vector.load %arg20[%c56, %c0_47] : memref<64x384xf32, #tpu.memory_space<vmem>>, vector<8x384xf32>
    %110 = vector.extract_strided_slice %100 {offsets = [0, 0], sizes = [8, 384], strides = [1, 1]} : vector<8x768xf32> to vector<8x384xf32>
    %111 = arith.addf %109, %110 : vector<8x384xf32>
    %c56_48 = arith.constant 56 : index
    %c0_49 = arith.constant 0 : index
    %112 = vector.load %arg20[%c56_48, %c0_49] : memref<64x384xf32, #tpu.memory_space<vmem>>, vector<8x384xf32>
    tpu.vector_store %arg20[%c56_48, %c0_49], %111 {strides = array<i32>} : memref<64x384xf32, #tpu.memory_space<vmem>>, vector<8x384xf32>,
    %c56_50 = arith.constant 56 : index
    %c0_51 = arith.constant 0 : index
    %113 = vector.load %arg21[%c56_50, %c0_51] : memref<64x384xf32, #tpu.memory_space<vmem>>, vector<8x384xf32>
    %114 = vector.extract_strided_slice %100 {offsets = [0, 384], sizes = [8, 384], strides = [1, 1]} : vector<8x768xf32> to vector<8x384xf32>
    %115 = arith.addf %113, %114 : vector<8x384xf32>
    %c56_52 = arith.constant 56 : index
    %c0_53 = arith.constant 0 : index
    %116 = vector.load %arg21[%c56_52, %c0_53] : memref<64x384xf32, #tpu.memory_space<vmem>>, vector<8x384xf32>
    tpu.vector_store %arg21[%c56_52, %c0_53], %115 {strides = array<i32>} : memref<64x384xf32, #tpu.memory_space<vmem>>, vector<8x384xf32>,
    %117 = tpu.concatenate %67, %96 in 1 : vector<8x128xf32>, vector<8x128xf32> -> vector<8x256xf32>
    %118 = arith.truncf %117 : vector<8x256xf32> to vector<8x256xbf16>
    %cst_54 = arith.constant dense<0.000000e+00> : vector<8x768xf32>
    %119 = tpu.matmul %118, %31, %cst_54 {dimension_numbers = #tpu.dot_dimension_numbers<[1], [0], [0], [1], [0, 0, 1, 1], [], []>} : vector<8x256xbf16>, vector<256x768xbf16>, vector<8x768xf32> -> vector<8x768xf32>
    %120 = vector.extract_strided_slice %19 {offsets = [8, 0], sizes = [8, 384], strides = [1, 1]} : vector<64x384xf32> to vector<8x384xf32>
    %121 = vector.extract_strided_slice %119 {offsets = [0, 0], sizes = [8, 384], strides = [1, 1]} : vector<8x768xf32> to vector<8x384xf32>
    %122 = vector.extract_strided_slice %120 {offsets = [0, 0], sizes = [8, 128], strides = [1, 1]} : vector<8x384xf32> to vector<8x128xf32>
    %123 = vector.extract_strided_slice %121 {offsets = [0, 0], sizes = [8, 128], strides = [1, 1]} : vector<8x384xf32> to vector<8x128xf32>
    %124 = arith.addf %122, %123 : vector<8x128xf32>
    %125 = arith.negf %124 : vector<8x128xf32>
    %126 = math.exp %125 : vector<8x128xf32>
    %cst_55 = arith.constant 1.000000e+00 : f32
    %127 = vector.broadcast %cst_55 : f32 to vector<8x128xf32>
    %128 = arith.addf %127, %126 : vector<8x128xf32>
    %129 = arith.divf %127, %128 : vector<8x128xf32>
    %130 = vector.extract_strided_slice %120 {offsets = [0, 128], sizes = [8, 128], strides = [1, 1]} : vector<8x384xf32> to vector<8x128xf32>
    %131 = vector.extract_strided_slice %121 {offsets = [0, 128], sizes = [8, 128], strides = [1, 1]} : vector<8x384xf32> to vector<8x128xf32>
    %132 = arith.addf %130, %131 : vector<8x128xf32>
    %133 = arith.negf %132 : vector<8x128xf32>
    %134 = math.exp %133 : vector<8x128xf32>
    %cst_56 = arith.constant 1.000000e+00 : f32
    %135 = vector.broadcast %cst_56 : f32 to vector<8x128xf32>
    %136 = arith.addf %135, %134 : vector<8x128xf32>
    %137 = arith.divf %135, %136 : vector<8x128xf32>
    %138 = vector.extract_strided_slice %120 {offsets = [0, 256], sizes = [8, 128], strides = [1, 1]} : vector<8x384xf32> to vector<8x128xf32>
    %139 = vector.extract_strided_slice %121 {offsets = [0, 256], sizes = [8, 128], strides = [1, 1]} : vector<8x384xf32> to vector<8x128xf32>
    %140 = arith.addf %139, %27 : vector<8x128xf32>
    %141 = arith.mulf %129, %140 : vector<8x128xf32>
    %142 = arith.addf %138, %141 : vector<8x128xf32>
    %143 = math.tanh %142 : vector<8x128xf32>
    %cst_57 = arith.constant 1.000000e+00 : f32
    %144 = vector.broadcast %cst_57 : f32 to vector<8x128xf32>
    %145 = arith.subf %144, %137 : vector<8x128xf32>
    %146 = arith.mulf %145, %143 : vector<8x128xf32>
    %147 = arith.mulf %137, %67 : vector<8x128xf32>
    %148 = arith.addf %146, %147 : vector<8x128xf32>
    %149 = vector.extract_strided_slice %24 {offsets = [48, 0], sizes = [8, 384], strides = [1, 1]} : vector<64x384xf32> to vector<8x384xf32>
    %150 = vector.extract_strided_slice %119 {offsets = [0, 384], sizes = [8, 384], strides = [1, 1]} : vector<8x768xf32> to vector<8x384xf32>
    %151 = vector.extract_strided_slice %149 {offsets = [0, 0], sizes = [8, 128], strides = [1, 1]} : vector<8x384xf32> to vector<8x128xf32>
    %152 = vector.extract_strided_slice %150 {offsets = [0, 0], sizes = [8, 128], strides = [1, 1]} : vector<8x384xf32> to vector<8x128xf32>
    %153 = arith.addf %151, %152 : vector<8x128xf32>
    %154 = arith.negf %153 : vector<8x128xf32>
    %155 = math.exp %154 : vector<8x128xf32>
    %cst_58 = arith.constant 1.000000e+00 : f32
    %156 = vector.broadcast %cst_58 : f32 to vector<8x128xf32>
    %157 = arith.addf %156, %155 : vector<8x128xf32>
    %158 = arith.divf %156, %157 : vector<8x128xf32>
    %159 = vector.extract_strided_slice %149 {offsets = [0, 128], sizes = [8, 128], strides = [1, 1]} : vector<8x384xf32> to vector<8x128xf32>
    %160 = vector.extract_strided_slice %150 {offsets = [0, 128], sizes = [8, 128], strides = [1, 1]} : vector<8x384xf32> to vector<8x128xf32>
    %161 = arith.addf %159, %160 : vector<8x128xf32>
    %162 = arith.negf %161 : vector<8x128xf32>
    %163 = math.exp %162 : vector<8x128xf32>
    %cst_59 = arith.constant 1.000000e+00 : f32
    %164 = vector.broadcast %cst_59 : f32 to vector<8x128xf32>
    %165 = arith.addf %164, %163 : vector<8x128xf32>
    %166 = arith.divf %164, %165 : vector<8x128xf32>
    %167 = vector.extract_strided_slice %149 {offsets = [0, 256], sizes = [8, 128], strides = [1, 1]} : vector<8x384xf32> to vector<8x128xf32>
    %168 = vector.extract_strided_slice %150 {offsets = [0, 256], sizes = [8, 128], strides = [1, 1]} : vector<8x384xf32> to vector<8x128xf32>
    %169 = arith.addf %168, %30 : vector<8x128xf32>
    %170 = arith.mulf %158, %169 : vector<8x128xf32>
    %171 = arith.addf %167, %170 : vector<8x128xf32>
    %172 = math.tanh %171 : vector<8x128xf32>
    %cst_60 = arith.constant 1.000000e+00 : f32
    %173 = vector.broadcast %cst_60 : f32 to vector<8x128xf32>
    %174 = arith.subf %173, %166 : vector<8x128xf32>
    %175 = arith.mulf %174, %172 : vector<8x128xf32>
    %176 = arith.mulf %166, %96 : vector<8x128xf32>
    %177 = arith.addf %175, %176 : vector<8x128xf32>
    %178 = arith.truncf %148 : vector<8x128xf32> to vector<8x128xbf16>
    %cst_61 = arith.constant dense<0.000000e+00> : vector<8x768xf32>
    %179 = tpu.matmul %178, %32, %cst_61 {dimension_numbers = #tpu.dot_dimension_numbers<[1], [0], [0], [1], [0, 0, 1, 1], [], []>} : vector<8x128xbf16>, vector<128x768xbf16>, vector<8x768xf32> -> vector<8x768xf32>
    %180 = arith.truncf %177 : vector<8x128xf32> to vector<8x128xbf16>
    %cst_62 = arith.constant dense<0.000000e+00> : vector<8x768xf32>
    %181 = tpu.matmul %180, %33, %cst_62 {dimension_numbers = #tpu.dot_dimension_numbers<[1], [0], [0], [1], [0, 0, 1, 1], [], []>} : vector<8x128xbf16>, vector<128x768xbf16>, vector<8x768xf32> -> vector<8x768xf32>
    %c8 = arith.constant 8 : index
    %c0_63 = arith.constant 0 : index
    %182 = vector.load %arg20[%c8, %c0_63] : memref<64x384xf32, #tpu.memory_space<vmem>>, vector<8x384xf32>
    %183 = vector.extract_strided_slice %179 {offsets = [0, 0], sizes = [8, 384], strides = [1, 1]} : vector<8x768xf32> to vector<8x384xf32>
    %184 = arith.addf %182, %183 : vector<8x384xf32>
    %c8_64 = arith.constant 8 : index
    %c0_65 = arith.constant 0 : index
    %185 = vector.load %arg20[%c8_64, %c0_65] : memref<64x384xf32, #tpu.memory_space<vmem>>, vector<8x384xf32>
    tpu.vector_store %arg20[%c8_64, %c0_65], %184 {strides = array<i32>} : memref<64x384xf32, #tpu.memory_space<vmem>>, vector<8x384xf32>,
    %c8_66 = arith.constant 8 : index
    %c0_67 = arith.constant 0 : index
    %186 = vector.load %arg21[%c8_66, %c0_67] : memref<64x384xf32, #tpu.memory_space<vmem>>, vector<8x384xf32>
    %187 = vector.extract_strided_slice %179 {offsets = [0, 384], sizes = [8, 384], strides = [1, 1]} : vector<8x768xf32> to vector<8x384xf32>
    %188 = arith.addf %186, %187 : vector<8x384xf32>
    %c8_68 = arith.constant 8 : index
    %c0_69 = arith.constant 0 : index
    %189 = vector.load %arg21[%c8_68, %c0_69] : memref<64x384xf32, #tpu.memory_space<vmem>>, vector<8x384xf32>
    tpu.vector_store %arg21[%c8_68, %c0_69], %188 {strides = array<i32>} : memref<64x384xf32, #tpu.memory_space<vmem>>, vector<8x384xf32>,
    %c48 = arith.constant 48 : index
    %c0_70 = arith.constant 0 : index
    %190 = vector.load %arg20[%c48, %c0_70] : memref<64x384xf32, #tpu.memory_space<vmem>>, vector<8x384xf32>
    %191 = vector.extract_strided_slice %181 {offsets = [0, 0], sizes = [8, 384], strides = [1, 1]} : vector<8x768xf32> to vector<8x384xf32>
    %192 = arith.addf %190, %191 : vector<8x384xf32>
    %c48_71 = arith.constant 48 : index
    %c0_72 = arith.constant 0 : index
    %193 = vector.load %arg20[%c48_71, %c0_72] : memref<64x384xf32, #tpu.memory_space<vmem>>, vector<8x384xf32>
    tpu.vector_store %arg20[%c48_71, %c0_72], %192 {strides = array<i32>} : memref<64x384xf32, #tpu.memory_space<vmem>>, vector<8x384xf32>,
    %c48_73 = arith.constant 48 : index
    %c0_74 = arith.constant 0 : index
    %194 = vector.load %arg21[%c48_73, %c0_74] : memref<64x384xf32, #tpu.memory_space<vmem>>, vector<8x384xf32>
    %195 = vector.extract_strided_slice %181 {offsets = [0, 384], sizes = [8, 384], strides = [1, 1]} : vector<8x768xf32> to vector<8x384xf32>
    %196 = arith.addf %194, %195 : vector<8x384xf32>
    %c48_75 = arith.constant 48 : index
    %c0_76 = arith.constant 0 : index
    %197 = vector.load %arg21[%c48_75, %c0_76] : memref<64x384xf32, #tpu.memory_space<vmem>>, vector<8x384xf32>
    tpu.vector_store %arg21[%c48_75, %c0_76], %196 {strides = array<i32>} : memref<64x384xf32, #tpu.memory_space<vmem>>, vector<8x384xf32>,
    %198 = tpu.concatenate %148, %177 in 1 : vector<8x128xf32>, vector<8x128xf32> -> vector<8x256xf32>
    %199 = arith.truncf %198 : vector<8x256xf32> to vector<8x256xbf16>
    %cst_77 = arith.constant dense<0.000000e+00> : vector<8x768xf32>
    %200 = tpu.matmul %199, %31, %cst_77 {dimension_numbers = #tpu.dot_dimension_numbers<[1], [0], [0], [1], [0, 0, 1, 1], [], []>} : vector<8x256xbf16>, vector<256x768xbf16>, vector<8x768xf32> -> vector<8x768xf32>
    %201 = vector.extract_strided_slice %19 {offsets = [16, 0], sizes = [8, 384], strides = [1, 1]} : vector<64x384xf32> to vector<8x384xf32>
    %202 = vector.extract_strided_slice %200 {offsets = [0, 0], sizes = [8, 384], strides = [1, 1]} : vector<8x768xf32> to vector<8x384xf32>
    %203 = vector.extract_strided_slice %201 {offsets = [0, 0], sizes = [8, 128], strides = [1, 1]} : vector<8x384xf32> to vector<8x128xf32>
    %204 = vector.extract_strided_slice %202 {offsets = [0, 0], sizes = [8, 128], strides = [1, 1]} : vector<8x384xf32> to vector<8x128xf32>
    %205 = arith.addf %203, %204 : vector<8x128xf32>
    %206 = arith.negf %205 : vector<8x128xf32>
    %207 = math.exp %206 : vector<8x128xf32>
    %cst_78 = arith.constant 1.000000e+00 : f32
    %208 = vector.broadcast %cst_78 : f32 to vector<8x128xf32>
    %209 = arith.addf %208, %207 : vector<8x128xf32>
    %210 = arith.divf %208, %209 : vector<8x128xf32>
    %211 = vector.extract_strided_slice %201 {offsets = [0, 128], sizes = [8, 128], strides = [1, 1]} : vector<8x384xf32> to vector<8x128xf32>
    %212 = vector.extract_strided_slice %202 {offsets = [0, 128], sizes = [8, 128], strides = [1, 1]} : vector<8x384xf32> to vector<8x128xf32>
    %213 = arith.addf %211, %212 : vector<8x128xf32>
    %214 = arith.negf %213 : vector<8x128xf32>
    %215 = math.exp %214 : vector<8x128xf32>
    %cst_79 = arith.constant 1.000000e+00 : f32
    %216 = vector.broadcast %cst_79 : f32 to vector<8x128xf32>
    %217 = arith.addf %216, %215 : vector<8x128xf32>
    %218 = arith.divf %216, %217 : vector<8x128xf32>
    %219 = vector.extract_strided_slice %201 {offsets = [0, 256], sizes = [8, 128], strides = [1, 1]} : vector<8x384xf32> to vector<8x128xf32>
    %220 = vector.extract_strided_slice %202 {offsets = [0, 256], sizes = [8, 128], strides = [1, 1]} : vector<8x384xf32> to vector<8x128xf32>
    %221 = arith.addf %220, %27 : vector<8x128xf32>
    %222 = arith.mulf %210, %221 : vector<8x128xf32>
    %223 = arith.addf %219, %222 : vector<8x128xf32>
    %224 = math.tanh %223 : vector<8x128xf32>
    %cst_80 = arith.constant 1.000000e+00 : f32
    %225 = vector.broadcast %cst_80 : f32 to vector<8x128xf32>
    %226 = arith.subf %225, %218 : vector<8x128xf32>
    %227 = arith.mulf %226, %224 : vector<8x128xf32>
    %228 = arith.mulf %218, %148 : vector<8x128xf32>
    %229 = arith.addf %227, %228 : vector<8x128xf32>
    %230 = vector.extract_strided_slice %24 {offsets = [40, 0], sizes = [8, 384], strides = [1, 1]} : vector<64x384xf32> to vector<8x384xf32>
    %231 = vector.extract_strided_slice %200 {offsets = [0, 384], sizes = [8, 384], strides = [1, 1]} : vector<8x768xf32> to vector<8x384xf32>
    %232 = vector.extract_strided_slice %230 {offsets = [0, 0], sizes = [8, 128], strides = [1, 1]} : vector<8x384xf32> to vector<8x128xf32>
    %233 = vector.extract_strided_slice %231 {offsets = [0, 0], sizes = [8, 128], strides = [1, 1]} : vector<8x384xf32> to vector<8x128xf32>
    %234 = arith.addf %232, %233 : vector<8x128xf32>
    %235 = arith.negf %234 : vector<8x128xf32>
    %236 = math.exp %235 : vector<8x128xf32>
    %cst_81 = arith.constant 1.000000e+00 : f32
    %237 = vector.broadcast %cst_81 : f32 to vector<8x128xf32>
    %238 = arith.addf %237, %236 : vector<8x128xf32>
    %239 = arith.divf %237, %238 : vector<8x128xf32>
    %240 = vector.extract_strided_slice %230 {offsets = [0, 128], sizes = [8, 128], strides = [1, 1]} : vector<8x384xf32> to vector<8x128xf32>
    %241 = vector.extract_strided_slice %231 {offsets = [0, 128], sizes = [8, 128], strides = [1, 1]} : vector<8x384xf32> to vector<8x128xf32>
    %242 = arith.addf %240, %241 : vector<8x128xf32>
    %243 = arith.negf %242 : vector<8x128xf32>
    %244 = math.exp %243 : vector<8x128xf32>
    %cst_82 = arith.constant 1.000000e+00 : f32
    %245 = vector.broadcast %cst_82 : f32 to vector<8x128xf32>
    %246 = arith.addf %245, %244 : vector<8x128xf32>
    %247 = arith.divf %245, %246 : vector<8x128xf32>
    %248 = vector.extract_strided_slice %230 {offsets = [0, 256], sizes = [8, 128], strides = [1, 1]} : vector<8x384xf32> to vector<8x128xf32>
    %249 = vector.extract_strided_slice %231 {offsets = [0, 256], sizes = [8, 128], strides = [1, 1]} : vector<8x384xf32> to vector<8x128xf32>
    %250 = arith.addf %249, %30 : vector<8x128xf32>
    %251 = arith.mulf %239, %250 : vector<8x128xf32>
    %252 = arith.addf %248, %251 : vector<8x128xf32>
    %253 = math.tanh %252 : vector<8x128xf32>
    %cst_83 = arith.constant 1.000000e+00 : f32
    %254 = vector.broadcast %cst_83 : f32 to vector<8x128xf32>
    %255 = arith.subf %254, %247 : vector<8x128xf32>
    %256 = arith.mulf %255, %253 : vector<8x128xf32>
    %257 = arith.mulf %247, %177 : vector<8x128xf32>
    %258 = arith.addf %256, %257 : vector<8x128xf32>
    %259 = arith.truncf %229 : vector<8x128xf32> to vector<8x128xbf16>
    %cst_84 = arith.constant dense<0.000000e+00> : vector<8x768xf32>
    %260 = tpu.matmul %259, %32, %cst_84 {dimension_numbers = #tpu.dot_dimension_numbers<[1], [0], [0], [1], [0, 0, 1, 1], [], []>} : vector<8x128xbf16>, vector<128x768xbf16>, vector<8x768xf32> -> vector<8x768xf32>
    %261 = arith.truncf %258 : vector<8x128xf32> to vector<8x128xbf16>
    %cst_85 = arith.constant dense<0.000000e+00> : vector<8x768xf32>
    %262 = tpu.matmul %261, %33, %cst_85 {dimension_numbers = #tpu.dot_dimension_numbers<[1], [0], [0], [1], [0, 0, 1, 1], [], []>} : vector<8x128xbf16>, vector<128x768xbf16>, vector<8x768xf32> -> vector<8x768xf32>
    %c16 = arith.constant 16 : index
    %c0_86 = arith.constant 0 : index
    %263 = vector.load %arg20[%c16, %c0_86] : memref<64x384xf32, #tpu.memory_space<vmem>>, vector<8x384xf32>
    %264 = vector.extract_strided_slice %260 {offsets = [0, 0], sizes = [8, 384], strides = [1, 1]} : vector<8x768xf32> to vector<8x384xf32>
    %265 = arith.addf %263, %264 : vector<8x384xf32>
    %c16_87 = arith.constant 16 : index
    %c0_88 = arith.constant 0 : index
    %266 = vector.load %arg20[%c16_87, %c0_88] : memref<64x384xf32, #tpu.memory_space<vmem>>, vector<8x384xf32>
    tpu.vector_store %arg20[%c16_87, %c0_88], %265 {strides = array<i32>} : memref<64x384xf32, #tpu.memory_space<vmem>>, vector<8x384xf32>,
    %c16_89 = arith.constant 16 : index
    %c0_90 = arith.constant 0 : index
    %267 = vector.load %arg21[%c16_89, %c0_90] : memref<64x384xf32, #tpu.memory_space<vmem>>, vector<8x384xf32>
    %268 = vector.extract_strided_slice %260 {offsets = [0, 384], sizes = [8, 384], strides = [1, 1]} : vector<8x768xf32> to vector<8x384xf32>
    %269 = arith.addf %267, %268 : vector<8x384xf32>
    %c16_91 = arith.constant 16 : index
    %c0_92 = arith.constant 0 : index
    %270 = vector.load %arg21[%c16_91, %c0_92] : memref<64x384xf32, #tpu.memory_space<vmem>>, vector<8x384xf32>
    tpu.vector_store %arg21[%c16_91, %c0_92], %269 {strides = array<i32>} : memref<64x384xf32, #tpu.memory_space<vmem>>, vector<8x384xf32>,
    %c40 = arith.constant 40 : index
    %c0_93 = arith.constant 0 : index
    %271 = vector.load %arg20[%c40, %c0_93] : memref<64x384xf32, #tpu.memory_space<vmem>>, vector<8x384xf32>
    %272 = vector.extract_strided_slice %262 {offsets = [0, 0], sizes = [8, 384], strides = [1, 1]} : vector<8x768xf32> to vector<8x384xf32>
    %273 = arith.addf %271, %272 : vector<8x384xf32>
    %c40_94 = arith.constant 40 : index
    %c0_95 = arith.constant 0 : index
    %274 = vector.load %arg20[%c40_94, %c0_95] : memref<64x384xf32, #tpu.memory_space<vmem>>, vector<8x384xf32>
    tpu.vector_store %arg20[%c40_94, %c0_95], %273 {strides = array<i32>} : memref<64x384xf32, #tpu.memory_space<vmem>>, vector<8x384xf32>,
    %c40_96 = arith.constant 40 : index
    %c0_97 = arith.constant 0 : index
    %275 = vector.load %arg21[%c40_96, %c0_97] : memref<64x384xf32, #tpu.memory_space<vmem>>, vector<8x384xf32>
    %276 = vector.extract_strided_slice %262 {offsets = [0, 384], sizes = [8, 384], strides = [1, 1]} : vector<8x768xf32> to vector<8x384xf32>
    %277 = arith.addf %275, %276 : vector<8x384xf32>
    %c40_98 = arith.constant 40 : index
    %c0_99 = arith.constant 0 : index
    %278 = vector.load %arg21[%c40_98, %c0_99] : memref<64x384xf32, #tpu.memory_space<vmem>>, vector<8x384xf32>
    tpu.vector_store %arg21[%c40_98, %c0_99], %277 {strides = array<i32>} : memref<64x384xf32, #tpu.memory_space<vmem>>, vector<8x384xf32>,
    %279 = tpu.concatenate %229, %258 in 1 : vector<8x128xf32>, vector<8x128xf32> -> vector<8x256xf32>
    %280 = arith.truncf %279 : vector<8x256xf32> to vector<8x256xbf16>
    %cst_100 = arith.constant dense<0.000000e+00> : vector<8x768xf32>
    %281 = tpu.matmul %280, %31, %cst_100 {dimension_numbers = #tpu.dot_dimension_numbers<[1], [0], [0], [1], [0, 0, 1, 1], [], []>} : vector<8x256xbf16>, vector<256x768xbf16>, vector<8x768xf32> -> vector<8x768xf32>
    %282 = vector.extract_strided_slice %19 {offsets = [24, 0], sizes = [8, 384], strides = [1, 1]} : vector<64x384xf32> to vector<8x384xf32>
    %283 = vector.extract_strided_slice %281 {offsets = [0, 0], sizes = [8, 384], strides = [1, 1]} : vector<8x768xf32> to vector<8x384xf32>
    %284 = vector.extract_strided_slice %282 {offsets = [0, 0], sizes = [8, 128], strides = [1, 1]} : vector<8x384xf32> to vector<8x128xf32>
    %285 = vector.extract_strided_slice %283 {offsets = [0, 0], sizes = [8, 128], strides = [1, 1]} : vector<8x384xf32> to vector<8x128xf32>
    %286 = arith.addf %284, %285 : vector<8x128xf32>
    %287 = arith.negf %286 : vector<8x128xf32>
    %288 = math.exp %287 : vector<8x128xf32>
    %cst_101 = arith.constant 1.000000e+00 : f32
    %289 = vector.broadcast %cst_101 : f32 to vector<8x128xf32>
    %290 = arith.addf %289, %288 : vector<8x128xf32>
    %291 = arith.divf %289, %290 : vector<8x128xf32>
    %292 = vector.extract_strided_slice %282 {offsets = [0, 128], sizes = [8, 128], strides = [1, 1]} : vector<8x384xf32> to vector<8x128xf32>
    %293 = vector.extract_strided_slice %283 {offsets = [0, 128], sizes = [8, 128], strides = [1, 1]} : vector<8x384xf32> to vector<8x128xf32>
    %294 = arith.addf %292, %293 : vector<8x128xf32>
    %295 = arith.negf %294 : vector<8x128xf32>
    %296 = math.exp %295 : vector<8x128xf32>
    %cst_102 = arith.constant 1.000000e+00 : f32
    %297 = vector.broadcast %cst_102 : f32 to vector<8x128xf32>
    %298 = arith.addf %297, %296 : vector<8x128xf32>
    %299 = arith.divf %297, %298 : vector<8x128xf32>
    %300 = vector.extract_strided_slice %282 {offsets = [0, 256], sizes = [8, 128], strides = [1, 1]} : vector<8x384xf32> to vector<8x128xf32>
    %301 = vector.extract_strided_slice %283 {offsets = [0, 256], sizes = [8, 128], strides = [1, 1]} : vector<8x384xf32> to vector<8x128xf32>
    %302 = arith.addf %301, %27 : vector<8x128xf32>
    %303 = arith.mulf %291, %302 : vector<8x128xf32>
    %304 = arith.addf %300, %303 : vector<8x128xf32>
    %305 = math.tanh %304 : vector<8x128xf32>
    %cst_103 = arith.constant 1.000000e+00 : f32
    %306 = vector.broadcast %cst_103 : f32 to vector<8x128xf32>
    %307 = arith.subf %306, %299 : vector<8x128xf32>
    %308 = arith.mulf %307, %305 : vector<8x128xf32>
    %309 = arith.mulf %299, %229 : vector<8x128xf32>
    %310 = arith.addf %308, %309 : vector<8x128xf32>
    %311 = vector.extract_strided_slice %24 {offsets = [32, 0], sizes = [8, 384], strides = [1, 1]} : vector<64x384xf32> to vector<8x384xf32>
    %312 = vector.extract_strided_slice %281 {offsets = [0, 384], sizes = [8, 384], strides = [1, 1]} : vector<8x768xf32> to vector<8x384xf32>
    %313 = vector.extract_strided_slice %311 {offsets = [0, 0], sizes = [8, 128], strides = [1, 1]} : vector<8x384xf32> to vector<8x128xf32>
    %314 = vector.extract_strided_slice %312 {offsets = [0, 0], sizes = [8, 128], strides = [1, 1]} : vector<8x384xf32> to vector<8x128xf32>
    %315 = arith.addf %313, %314 : vector<8x128xf32>
    %316 = arith.negf %315 : vector<8x128xf32>
    %317 = math.exp %316 : vector<8x128xf32>
    %cst_104 = arith.constant 1.000000e+00 : f32
    %318 = vector.broadcast %cst_104 : f32 to vector<8x128xf32>
    %319 = arith.addf %318, %317 : vector<8x128xf32>
    %320 = arith.divf %318, %319 : vector<8x128xf32>
    %321 = vector.extract_strided_slice %311 {offsets = [0, 128], sizes = [8, 128], strides = [1, 1]} : vector<8x384xf32> to vector<8x128xf32>
    %322 = vector.extract_strided_slice %312 {offsets = [0, 128], sizes = [8, 128], strides = [1, 1]} : vector<8x384xf32> to vector<8x128xf32>
    %323 = arith.addf %321, %322 : vector<8x128xf32>
    %324 = arith.negf %323 : vector<8x128xf32>
    %325 = math.exp %324 : vector<8x128xf32>
    %cst_105 = arith.constant 1.000000e+00 : f32
    %326 = vector.broadcast %cst_105 : f32 to vector<8x128xf32>
    %327 = arith.addf %326, %325 : vector<8x128xf32>
    %328 = arith.divf %326, %327 : vector<8x128xf32>
    %329 = vector.extract_strided_slice %311 {offsets = [0, 256], sizes = [8, 128], strides = [1, 1]} : vector<8x384xf32> to vector<8x128xf32>
    %330 = vector.extract_strided_slice %312 {offsets = [0, 256], sizes = [8, 128], strides = [1, 1]} : vector<8x384xf32> to vector<8x128xf32>
    %331 = arith.addf %330, %30 : vector<8x128xf32>
    %332 = arith.mulf %320, %331 : vector<8x128xf32>
    %333 = arith.addf %329, %332 : vector<8x128xf32>
    %334 = math.tanh %333 : vector<8x128xf32>
    %cst_106 = arith.constant 1.000000e+00 : f32
    %335 = vector.broadcast %cst_106 : f32 to vector<8x128xf32>
    %336 = arith.subf %335, %328 : vector<8x128xf32>
    %337 = arith.mulf %336, %334 : vector<8x128xf32>
    %338 = arith.mulf %328, %258 : vector<8x128xf32>
    %339 = arith.addf %337, %338 : vector<8x128xf32>
    %340 = arith.truncf %310 : vector<8x128xf32> to vector<8x128xbf16>
    %cst_107 = arith.constant dense<0.000000e+00> : vector<8x768xf32>
    %341 = tpu.matmul %340, %32, %cst_107 {dimension_numbers = #tpu.dot_dimension_numbers<[1], [0], [0], [1], [0, 0, 1, 1], [], []>} : vector<8x128xbf16>, vector<128x768xbf16>, vector<8x768xf32> -> vector<8x768xf32>
    %342 = arith.truncf %339 : vector<8x128xf32> to vector<8x128xbf16>
    %cst_108 = arith.constant dense<0.000000e+00> : vector<8x768xf32>
    %343 = tpu.matmul %342, %33, %cst_108 {dimension_numbers = #tpu.dot_dimension_numbers<[1], [0], [0], [1], [0, 0, 1, 1], [], []>} : vector<8x128xbf16>, vector<128x768xbf16>, vector<8x768xf32> -> vector<8x768xf32>
    %c24 = arith.constant 24 : index
    %c0_109 = arith.constant 0 : index
    %344 = vector.load %arg20[%c24, %c0_109] : memref<64x384xf32, #tpu.memory_space<vmem>>, vector<8x384xf32>
    %345 = vector.extract_strided_slice %341 {offsets = [0, 0], sizes = [8, 384], strides = [1, 1]} : vector<8x768xf32> to vector<8x384xf32>
    %346 = arith.addf %344, %345 : vector<8x384xf32>
    %c24_110 = arith.constant 24 : index
    %c0_111 = arith.constant 0 : index
    %347 = vector.load %arg20[%c24_110, %c0_111] : memref<64x384xf32, #tpu.memory_space<vmem>>, vector<8x384xf32>
    tpu.vector_store %arg20[%c24_110, %c0_111], %346 {strides = array<i32>} : memref<64x384xf32, #tpu.memory_space<vmem>>, vector<8x384xf32>,
    %c24_112 = arith.constant 24 : index
    %c0_113 = arith.constant 0 : index
    %348 = vector.load %arg21[%c24_112, %c0_113] : memref<64x384xf32, #tpu.memory_space<vmem>>, vector<8x384xf32>
    %349 = vector.extract_strided_slice %341 {offsets = [0, 384], sizes = [8, 384], strides = [1, 1]} : vector<8x768xf32> to vector<8x384xf32>
    %350 = arith.addf %348, %349 : vector<8x384xf32>
    %c24_114 = arith.constant 24 : index
    %c0_115 = arith.constant 0 : index
    %351 = vector.load %arg21[%c24_114, %c0_115] : memref<64x384xf32, #tpu.memory_space<vmem>>, vector<8x384xf32>
    tpu.vector_store %arg21[%c24_114, %c0_115], %350 {strides = array<i32>} : memref<64x384xf32, #tpu.memory_space<vmem>>, vector<8x384xf32>,
    %c32 = arith.constant 32 : index
    %c0_116 = arith.constant 0 : index
    %352 = vector.load %arg20[%c32, %c0_116] : memref<64x384xf32, #tpu.memory_space<vmem>>, vector<8x384xf32>
    %353 = vector.extract_strided_slice %343 {offsets = [0, 0], sizes = [8, 384], strides = [1, 1]} : vector<8x768xf32> to vector<8x384xf32>
    %354 = arith.addf %352, %353 : vector<8x384xf32>
    %c32_117 = arith.constant 32 : index
    %c0_118 = arith.constant 0 : index
    %355 = vector.load %arg20[%c32_117, %c0_118] : memref<64x384xf32, #tpu.memory_space<vmem>>, vector<8x384xf32>
    tpu.vector_store %arg20[%c32_117, %c0_118], %354 {strides = array<i32>} : memref<64x384xf32, #tpu.memory_space<vmem>>, vector<8x384xf32>,
    %c32_119 = arith.constant 32 : index
    %c0_120 = arith.constant 0 : index
    %356 = vector.load %arg21[%c32_119, %c0_120] : memref<64x384xf32, #tpu.memory_space<vmem>>, vector<8x384xf32>
    %357 = vector.extract_strided_slice %343 {offsets = [0, 384], sizes = [8, 384], strides = [1, 1]} : vector<8x768xf32> to vector<8x384xf32>
    %358 = arith.addf %356, %357 : vector<8x384xf32>
    %c32_121 = arith.constant 32 : index
    %c0_122 = arith.constant 0 : index
    %359 = vector.load %arg21[%c32_121, %c0_122] : memref<64x384xf32, #tpu.memory_space<vmem>>, vector<8x384xf32>
    tpu.vector_store %arg21[%c32_121, %c0_122], %358 {strides = array<i32>} : memref<64x384xf32, #tpu.memory_space<vmem>>, vector<8x384xf32>,
    %360 = tpu.concatenate %310, %339 in 1 : vector<8x128xf32>, vector<8x128xf32> -> vector<8x256xf32>
    %361 = arith.truncf %360 : vector<8x256xf32> to vector<8x256xbf16>
    %cst_123 = arith.constant dense<0.000000e+00> : vector<8x768xf32>
    %362 = tpu.matmul %361, %31, %cst_123 {dimension_numbers = #tpu.dot_dimension_numbers<[1], [0], [0], [1], [0, 0, 1, 1], [], []>} : vector<8x256xbf16>, vector<256x768xbf16>, vector<8x768xf32> -> vector<8x768xf32>
    %363 = vector.extract_strided_slice %19 {offsets = [32, 0], sizes = [8, 384], strides = [1, 1]} : vector<64x384xf32> to vector<8x384xf32>
    %364 = vector.extract_strided_slice %362 {offsets = [0, 0], sizes = [8, 384], strides = [1, 1]} : vector<8x768xf32> to vector<8x384xf32>
    %365 = vector.extract_strided_slice %363 {offsets = [0, 0], sizes = [8, 128], strides = [1, 1]} : vector<8x384xf32> to vector<8x128xf32>
    %366 = vector.extract_strided_slice %364 {offsets = [0, 0], sizes = [8, 128], strides = [1, 1]} : vector<8x384xf32> to vector<8x128xf32>
    %367 = arith.addf %365, %366 : vector<8x128xf32>
    %368 = arith.negf %367 : vector<8x128xf32>
    %369 = math.exp %368 : vector<8x128xf32>
    %cst_124 = arith.constant 1.000000e+00 : f32
    %370 = vector.broadcast %cst_124 : f32 to vector<8x128xf32>
    %371 = arith.addf %370, %369 : vector<8x128xf32>
    %372 = arith.divf %370, %371 : vector<8x128xf32>
    %373 = vector.extract_strided_slice %363 {offsets = [0, 128], sizes = [8, 128], strides = [1, 1]} : vector<8x384xf32> to vector<8x128xf32>
    %374 = vector.extract_strided_slice %364 {offsets = [0, 128], sizes = [8, 128], strides = [1, 1]} : vector<8x384xf32> to vector<8x128xf32>
    %375 = arith.addf %373, %374 : vector<8x128xf32>
    %376 = arith.negf %375 : vector<8x128xf32>
    %377 = math.exp %376 : vector<8x128xf32>
    %cst_125 = arith.constant 1.000000e+00 : f32
    %378 = vector.broadcast %cst_125 : f32 to vector<8x128xf32>
    %379 = arith.addf %378, %377 : vector<8x128xf32>
    %380 = arith.divf %378, %379 : vector<8x128xf32>
    %381 = vector.extract_strided_slice %363 {offsets = [0, 256], sizes = [8, 128], strides = [1, 1]} : vector<8x384xf32> to vector<8x128xf32>
    %382 = vector.extract_strided_slice %364 {offsets = [0, 256], sizes = [8, 128], strides = [1, 1]} : vector<8x384xf32> to vector<8x128xf32>
    %383 = arith.addf %382, %27 : vector<8x128xf32>
    %384 = arith.mulf %372, %383 : vector<8x128xf32>
    %385 = arith.addf %381, %384 : vector<8x128xf32>
    %386 = math.tanh %385 : vector<8x128xf32>
    %cst_126 = arith.constant 1.000000e+00 : f32
    %387 = vector.broadcast %cst_126 : f32 to vector<8x128xf32>
    %388 = arith.subf %387, %380 : vector<8x128xf32>
    %389 = arith.mulf %388, %386 : vector<8x128xf32>
    %390 = arith.mulf %380, %310 : vector<8x128xf32>
    %391 = arith.addf %389, %390 : vector<8x128xf32>
    %392 = vector.extract_strided_slice %24 {offsets = [24, 0], sizes = [8, 384], strides = [1, 1]} : vector<64x384xf32> to vector<8x384xf32>
    %393 = vector.extract_strided_slice %362 {offsets = [0, 384], sizes = [8, 384], strides = [1, 1]} : vector<8x768xf32> to vector<8x384xf32>
    %394 = vector.extract_strided_slice %392 {offsets = [0, 0], sizes = [8, 128], strides = [1, 1]} : vector<8x384xf32> to vector<8x128xf32>
    %395 = vector.extract_strided_slice %393 {offsets = [0, 0], sizes = [8, 128], strides = [1, 1]} : vector<8x384xf32> to vector<8x128xf32>
    %396 = arith.addf %394, %395 : vector<8x128xf32>
    %397 = arith.negf %396 : vector<8x128xf32>
    %398 = math.exp %397 : vector<8x128xf32>
    %cst_127 = arith.constant 1.000000e+00 : f32
    %399 = vector.broadcast %cst_127 : f32 to vector<8x128xf32>
    %400 = arith.addf %399, %398 : vector<8x128xf32>
    %401 = arith.divf %399, %400 : vector<8x128xf32>
    %402 = vector.extract_strided_slice %392 {offsets = [0, 128], sizes = [8, 128], strides = [1, 1]} : vector<8x384xf32> to vector<8x128xf32>
    %403 = vector.extract_strided_slice %393 {offsets = [0, 128], sizes = [8, 128], strides = [1, 1]} : vector<8x384xf32> to vector<8x128xf32>
    %404 = arith.addf %402, %403 : vector<8x128xf32>
    %405 = arith.negf %404 : vector<8x128xf32>
    %406 = math.exp %405 : vector<8x128xf32>
    %cst_128 = arith.constant 1.000000e+00 : f32
    %407 = vector.broadcast %cst_128 : f32 to vector<8x128xf32>
    %408 = arith.addf %407, %406 : vector<8x128xf32>
    %409 = arith.divf %407, %408 : vector<8x128xf32>
    %410 = vector.extract_strided_slice %392 {offsets = [0, 256], sizes = [8, 128], strides = [1, 1]} : vector<8x384xf32> to vector<8x128xf32>
    %411 = vector.extract_strided_slice %393 {offsets = [0, 256], sizes = [8, 128], strides = [1, 1]} : vector<8x384xf32> to vector<8x128xf32>
    %412 = arith.addf %411, %30 : vector<8x128xf32>
    %413 = arith.mulf %401, %412 : vector<8x128xf32>
    %414 = arith.addf %410, %413 : vector<8x128xf32>
    %415 = math.tanh %414 : vector<8x128xf32>
    %cst_129 = arith.constant 1.000000e+00 : f32
    %416 = vector.broadcast %cst_129 : f32 to vector<8x128xf32>
    %417 = arith.subf %416, %409 : vector<8x128xf32>
    %418 = arith.mulf %417, %415 : vector<8x128xf32>
    %419 = arith.mulf %409, %339 : vector<8x128xf32>
    %420 = arith.addf %418, %419 : vector<8x128xf32>
    %421 = arith.truncf %391 : vector<8x128xf32> to vector<8x128xbf16>
    %cst_130 = arith.constant dense<0.000000e+00> : vector<8x768xf32>
    %422 = tpu.matmul %421, %32, %cst_130 {dimension_numbers = #tpu.dot_dimension_numbers<[1], [0], [0], [1], [0, 0, 1, 1], [], []>} : vector<8x128xbf16>, vector<128x768xbf16>, vector<8x768xf32> -> vector<8x768xf32>
    %423 = arith.truncf %420 : vector<8x128xf32> to vector<8x128xbf16>
    %cst_131 = arith.constant dense<0.000000e+00> : vector<8x768xf32>
    %424 = tpu.matmul %423, %33, %cst_131 {dimension_numbers = #tpu.dot_dimension_numbers<[1], [0], [0], [1], [0, 0, 1, 1], [], []>} : vector<8x128xbf16>, vector<128x768xbf16>, vector<8x768xf32> -> vector<8x768xf32>
    %c32_132 = arith.constant 32 : index
    %c0_133 = arith.constant 0 : index
    %425 = vector.load %arg20[%c32_132, %c0_133] : memref<64x384xf32, #tpu.memory_space<vmem>>, vector<8x384xf32>
    %426 = vector.extract_strided_slice %422 {offsets = [0, 0], sizes = [8, 384], strides = [1, 1]} : vector<8x768xf32> to vector<8x384xf32>
    %427 = arith.addf %425, %426 : vector<8x384xf32>
    %c32_134 = arith.constant 32 : index
    %c0_135 = arith.constant 0 : index
    %428 = vector.load %arg20[%c32_134, %c0_135] : memref<64x384xf32, #tpu.memory_space<vmem>>, vector<8x384xf32>
    tpu.vector_store %arg20[%c32_134, %c0_135], %427 {strides = array<i32>} : memref<64x384xf32, #tpu.memory_space<vmem>>, vector<8x384xf32>,
    %c32_136 = arith.constant 32 : index
    %c0_137 = arith.constant 0 : index
    %429 = vector.load %arg21[%c32_136, %c0_137] : memref<64x384xf32, #tpu.memory_space<vmem>>, vector<8x384xf32>
    %430 = vector.extract_strided_slice %422 {offsets = [0, 384], sizes = [8, 384], strides = [1, 1]} : vector<8x768xf32> to vector<8x384xf32>
    %431 = arith.addf %429, %430 : vector<8x384xf32>
    %c32_138 = arith.constant 32 : index
    %c0_139 = arith.constant 0 : index
    %432 = vector.load %arg21[%c32_138, %c0_139] : memref<64x384xf32, #tpu.memory_space<vmem>>, vector<8x384xf32>
    tpu.vector_store %arg21[%c32_138, %c0_139], %431 {strides = array<i32>} : memref<64x384xf32, #tpu.memory_space<vmem>>, vector<8x384xf32>,
    %c24_140 = arith.constant 24 : index
    %c0_141 = arith.constant 0 : index
    %433 = vector.load %arg20[%c24_140, %c0_141] : memref<64x384xf32, #tpu.memory_space<vmem>>, vector<8x384xf32>
    %434 = vector.extract_strided_slice %424 {offsets = [0, 0], sizes = [8, 384], strides = [1, 1]} : vector<8x768xf32> to vector<8x384xf32>
    %435 = arith.addf %433, %434 : vector<8x384xf32>
    %c24_142 = arith.constant 24 : index
    %c0_143 = arith.constant 0 : index
    %436 = vector.load %arg20[%c24_142, %c0_143] : memref<64x384xf32, #tpu.memory_space<vmem>>, vector<8x384xf32>
    tpu.vector_store %arg20[%c24_142, %c0_143], %435 {strides = array<i32>} : memref<64x384xf32, #tpu.memory_space<vmem>>, vector<8x384xf32>,
    %c24_144 = arith.constant 24 : index
    %c0_145 = arith.constant 0 : index
    %437 = vector.load %arg21[%c24_144, %c0_145] : memref<64x384xf32, #tpu.memory_space<vmem>>, vector<8x384xf32>
    %438 = vector.extract_strided_slice %424 {offsets = [0, 384], sizes = [8, 384], strides = [1, 1]} : vector<8x768xf32> to vector<8x384xf32>
    %439 = arith.addf %437, %438 : vector<8x384xf32>
    %c24_146 = arith.constant 24 : index
    %c0_147 = arith.constant 0 : index
    %440 = vector.load %arg21[%c24_146, %c0_147] : memref<64x384xf32, #tpu.memory_space<vmem>>, vector<8x384xf32>
    tpu.vector_store %arg21[%c24_146, %c0_147], %439 {strides = array<i32>} : memref<64x384xf32, #tpu.memory_space<vmem>>, vector<8x384xf32>,
    %441 = tpu.concatenate %391, %420 in 1 : vector<8x128xf32>, vector<8x128xf32> -> vector<8x256xf32>
    %442 = arith.truncf %441 : vector<8x256xf32> to vector<8x256xbf16>
    %cst_148 = arith.constant dense<0.000000e+00> : vector<8x768xf32>
    %443 = tpu.matmul %442, %31, %cst_148 {dimension_numbers = #tpu.dot_dimension_numbers<[1], [0], [0], [1], [0, 0, 1, 1], [], []>} : vector<8x256xbf16>, vector<256x768xbf16>, vector<8x768xf32> -> vector<8x768xf32>
    %444 = vector.extract_strided_slice %19 {offsets = [40, 0], sizes = [8, 384], strides = [1, 1]} : vector<64x384xf32> to vector<8x384xf32>
    %445 = vector.extract_strided_slice %443 {offsets = [0, 0], sizes = [8, 384], strides = [1, 1]} : vector<8x768xf32> to vector<8x384xf32>
    %446 = vector.extract_strided_slice %444 {offsets = [0, 0], sizes = [8, 128], strides = [1, 1]} : vector<8x384xf32> to vector<8x128xf32>
    %447 = vector.extract_strided_slice %445 {offsets = [0, 0], sizes = [8, 128], strides = [1, 1]} : vector<8x384xf32> to vector<8x128xf32>
    %448 = arith.addf %446, %447 : vector<8x128xf32>
    %449 = arith.negf %448 : vector<8x128xf32>
    %450 = math.exp %449 : vector<8x128xf32>
    %cst_149 = arith.constant 1.000000e+00 : f32
    %451 = vector.broadcast %cst_149 : f32 to vector<8x128xf32>
    %452 = arith.addf %451, %450 : vector<8x128xf32>
    %453 = arith.divf %451, %452 : vector<8x128xf32>
    %454 = vector.extract_strided_slice %444 {offsets = [0, 128], sizes = [8, 128], strides = [1, 1]} : vector<8x384xf32> to vector<8x128xf32>
    %455 = vector.extract_strided_slice %445 {offsets = [0, 128], sizes = [8, 128], strides = [1, 1]} : vector<8x384xf32> to vector<8x128xf32>
    %456 = arith.addf %454, %455 : vector<8x128xf32>
    %457 = arith.negf %456 : vector<8x128xf32>
    %458 = math.exp %457 : vector<8x128xf32>
    %cst_150 = arith.constant 1.000000e+00 : f32
    %459 = vector.broadcast %cst_150 : f32 to vector<8x128xf32>
    %460 = arith.addf %459, %458 : vector<8x128xf32>
    %461 = arith.divf %459, %460 : vector<8x128xf32>
    %462 = vector.extract_strided_slice %444 {offsets = [0, 256], sizes = [8, 128], strides = [1, 1]} : vector<8x384xf32> to vector<8x128xf32>
    %463 = vector.extract_strided_slice %445 {offsets = [0, 256], sizes = [8, 128], strides = [1, 1]} : vector<8x384xf32> to vector<8x128xf32>
    %464 = arith.addf %463, %27 : vector<8x128xf32>
    %465 = arith.mulf %453, %464 : vector<8x128xf32>
    %466 = arith.addf %462, %465 : vector<8x128xf32>
    %467 = math.tanh %466 : vector<8x128xf32>
    %cst_151 = arith.constant 1.000000e+00 : f32
    %468 = vector.broadcast %cst_151 : f32 to vector<8x128xf32>
    %469 = arith.subf %468, %461 : vector<8x128xf32>
    %470 = arith.mulf %469, %467 : vector<8x128xf32>
    %471 = arith.mulf %461, %391 : vector<8x128xf32>
    %472 = arith.addf %470, %471 : vector<8x128xf32>
    %473 = vector.extract_strided_slice %24 {offsets = [16, 0], sizes = [8, 384], strides = [1, 1]} : vector<64x384xf32> to vector<8x384xf32>
    %474 = vector.extract_strided_slice %443 {offsets = [0, 384], sizes = [8, 384], strides = [1, 1]} : vector<8x768xf32> to vector<8x384xf32>
    %475 = vector.extract_strided_slice %473 {offsets = [0, 0], sizes = [8, 128], strides = [1, 1]} : vector<8x384xf32> to vector<8x128xf32>
    %476 = vector.extract_strided_slice %474 {offsets = [0, 0], sizes = [8, 128], strides = [1, 1]} : vector<8x384xf32> to vector<8x128xf32>
    %477 = arith.addf %475, %476 : vector<8x128xf32>
    %478 = arith.negf %477 : vector<8x128xf32>
    %479 = math.exp %478 : vector<8x128xf32>
    %cst_152 = arith.constant 1.000000e+00 : f32
    %480 = vector.broadcast %cst_152 : f32 to vector<8x128xf32>
    %481 = arith.addf %480, %479 : vector<8x128xf32>
    %482 = arith.divf %480, %481 : vector<8x128xf32>
    %483 = vector.extract_strided_slice %473 {offsets = [0, 128], sizes = [8, 128], strides = [1, 1]} : vector<8x384xf32> to vector<8x128xf32>
    %484 = vector.extract_strided_slice %474 {offsets = [0, 128], sizes = [8, 128], strides = [1, 1]} : vector<8x384xf32> to vector<8x128xf32>
    %485 = arith.addf %483, %484 : vector<8x128xf32>
    %486 = arith.negf %485 : vector<8x128xf32>
    %487 = math.exp %486 : vector<8x128xf32>
    %cst_153 = arith.constant 1.000000e+00 : f32
    %488 = vector.broadcast %cst_153 : f32 to vector<8x128xf32>
    %489 = arith.addf %488, %487 : vector<8x128xf32>
    %490 = arith.divf %488, %489 : vector<8x128xf32>
    %491 = vector.extract_strided_slice %473 {offsets = [0, 256], sizes = [8, 128], strides = [1, 1]} : vector<8x384xf32> to vector<8x128xf32>
    %492 = vector.extract_strided_slice %474 {offsets = [0, 256], sizes = [8, 128], strides = [1, 1]} : vector<8x384xf32> to vector<8x128xf32>
    %493 = arith.addf %492, %30 : vector<8x128xf32>
    %494 = arith.mulf %482, %493 : vector<8x128xf32>
    %495 = arith.addf %491, %494 : vector<8x128xf32>
    %496 = math.tanh %495 : vector<8x128xf32>
    %cst_154 = arith.constant 1.000000e+00 : f32
    %497 = vector.broadcast %cst_154 : f32 to vector<8x128xf32>
    %498 = arith.subf %497, %490 : vector<8x128xf32>
    %499 = arith.mulf %498, %496 : vector<8x128xf32>
    %500 = arith.mulf %490, %420 : vector<8x128xf32>
    %501 = arith.addf %499, %500 : vector<8x128xf32>
    %502 = arith.truncf %472 : vector<8x128xf32> to vector<8x128xbf16>
    %cst_155 = arith.constant dense<0.000000e+00> : vector<8x768xf32>
    %503 = tpu.matmul %502, %32, %cst_155 {dimension_numbers = #tpu.dot_dimension_numbers<[1], [0], [0], [1], [0, 0, 1, 1], [], []>} : vector<8x128xbf16>, vector<128x768xbf16>, vector<8x768xf32> -> vector<8x768xf32>
    %504 = arith.truncf %501 : vector<8x128xf32> to vector<8x128xbf16>
    %cst_156 = arith.constant dense<0.000000e+00> : vector<8x768xf32>
    %505 = tpu.matmul %504, %33, %cst_156 {dimension_numbers = #tpu.dot_dimension_numbers<[1], [0], [0], [1], [0, 0, 1, 1], [], []>} : vector<8x128xbf16>, vector<128x768xbf16>, vector<8x768xf32> -> vector<8x768xf32>
    %c40_157 = arith.constant 40 : index
    %c0_158 = arith.constant 0 : index
    %506 = vector.load %arg20[%c40_157, %c0_158] : memref<64x384xf32, #tpu.memory_space<vmem>>, vector<8x384xf32>
    %507 = vector.extract_strided_slice %503 {offsets = [0, 0], sizes = [8, 384], strides = [1, 1]} : vector<8x768xf32> to vector<8x384xf32>
    %508 = arith.addf %506, %507 : vector<8x384xf32>
    %c40_159 = arith.constant 40 : index
    %c0_160 = arith.constant 0 : index
    %509 = vector.load %arg20[%c40_159, %c0_160] : memref<64x384xf32, #tpu.memory_space<vmem>>, vector<8x384xf32>
    tpu.vector_store %arg20[%c40_159, %c0_160], %508 {strides = array<i32>} : memref<64x384xf32, #tpu.memory_space<vmem>>, vector<8x384xf32>,
    %c40_161 = arith.constant 40 : index
    %c0_162 = arith.constant 0 : index
    %510 = vector.load %arg21[%c40_161, %c0_162] : memref<64x384xf32, #tpu.memory_space<vmem>>, vector<8x384xf32>
    %511 = vector.extract_strided_slice %503 {offsets = [0, 384], sizes = [8, 384], strides = [1, 1]} : vector<8x768xf32> to vector<8x384xf32>
    %512 = arith.addf %510, %511 : vector<8x384xf32>
    %c40_163 = arith.constant 40 : index
    %c0_164 = arith.constant 0 : index
    %513 = vector.load %arg21[%c40_163, %c0_164] : memref<64x384xf32, #tpu.memory_space<vmem>>, vector<8x384xf32>
    tpu.vector_store %arg21[%c40_163, %c0_164], %512 {strides = array<i32>} : memref<64x384xf32, #tpu.memory_space<vmem>>, vector<8x384xf32>,
    %c16_165 = arith.constant 16 : index
    %c0_166 = arith.constant 0 : index
    %514 = vector.load %arg20[%c16_165, %c0_166] : memref<64x384xf32, #tpu.memory_space<vmem>>, vector<8x384xf32>
    %515 = vector.extract_strided_slice %505 {offsets = [0, 0], sizes = [8, 384], strides = [1, 1]} : vector<8x768xf32> to vector<8x384xf32>
    %516 = arith.addf %514, %515 : vector<8x384xf32>
    %c16_167 = arith.constant 16 : index
    %c0_168 = arith.constant 0 : index
    %517 = vector.load %arg20[%c16_167, %c0_168] : memref<64x384xf32, #tpu.memory_space<vmem>>, vector<8x384xf32>
    tpu.vector_store %arg20[%c16_167, %c0_168], %516 {strides = array<i32>} : memref<64x384xf32, #tpu.memory_space<vmem>>, vector<8x384xf32>,
    %c16_169 = arith.constant 16 : index
    %c0_170 = arith.constant 0 : index
    %518 = vector.load %arg21[%c16_169, %c0_170] : memref<64x384xf32, #tpu.memory_space<vmem>>, vector<8x384xf32>
    %519 = vector.extract_strided_slice %505 {offsets = [0, 384], sizes = [8, 384], strides = [1, 1]} : vector<8x768xf32> to vector<8x384xf32>
    %520 = arith.addf %518, %519 : vector<8x384xf32>
    %c16_171 = arith.constant 16 : index
    %c0_172 = arith.constant 0 : index
    %521 = vector.load %arg21[%c16_171, %c0_172] : memref<64x384xf32, #tpu.memory_space<vmem>>, vector<8x384xf32>
    tpu.vector_store %arg21[%c16_171, %c0_172], %520 {strides = array<i32>} : memref<64x384xf32, #tpu.memory_space<vmem>>, vector<8x384xf32>,
    %522 = tpu.concatenate %472, %501 in 1 : vector<8x128xf32>, vector<8x128xf32> -> vector<8x256xf32>
    %523 = arith.truncf %522 : vector<8x256xf32> to vector<8x256xbf16>
    %cst_173 = arith.constant dense<0.000000e+00> : vector<8x768xf32>
    %524 = tpu.matmul %523, %31, %cst_173 {dimension_numbers = #tpu.dot_dimension_numbers<[1], [0], [0], [1], [0, 0, 1, 1], [], []>} : vector<8x256xbf16>, vector<256x768xbf16>, vector<8x768xf32> -> vector<8x768xf32>
    %525 = vector.extract_strided_slice %19 {offsets = [48, 0], sizes = [8, 384], strides = [1, 1]} : vector<64x384xf32> to vector<8x384xf32>
    %526 = vector.extract_strided_slice %524 {offsets = [0, 0], sizes = [8, 384], strides = [1, 1]} : vector<8x768xf32> to vector<8x384xf32>
    %527 = vector.extract_strided_slice %525 {offsets = [0, 0], sizes = [8, 128], strides = [1, 1]} : vector<8x384xf32> to vector<8x128xf32>
    %528 = vector.extract_strided_slice %526 {offsets = [0, 0], sizes = [8, 128], strides = [1, 1]} : vector<8x384xf32> to vector<8x128xf32>
    %529 = arith.addf %527, %528 : vector<8x128xf32>
    %530 = arith.negf %529 : vector<8x128xf32>
    %531 = math.exp %530 : vector<8x128xf32>
    %cst_174 = arith.constant 1.000000e+00 : f32
    %532 = vector.broadcast %cst_174 : f32 to vector<8x128xf32>
    %533 = arith.addf %532, %531 : vector<8x128xf32>
    %534 = arith.divf %532, %533 : vector<8x128xf32>
    %535 = vector.extract_strided_slice %525 {offsets = [0, 128], sizes = [8, 128], strides = [1, 1]} : vector<8x384xf32> to vector<8x128xf32>
    %536 = vector.extract_strided_slice %526 {offsets = [0, 128], sizes = [8, 128], strides = [1, 1]} : vector<8x384xf32> to vector<8x128xf32>
    %537 = arith.addf %535, %536 : vector<8x128xf32>
    %538 = arith.negf %537 : vector<8x128xf32>
    %539 = math.exp %538 : vector<8x128xf32>
    %cst_175 = arith.constant 1.000000e+00 : f32
    %540 = vector.broadcast %cst_175 : f32 to vector<8x128xf32>
    %541 = arith.addf %540, %539 : vector<8x128xf32>
    %542 = arith.divf %540, %541 : vector<8x128xf32>
    %543 = vector.extract_strided_slice %525 {offsets = [0, 256], sizes = [8, 128], strides = [1, 1]} : vector<8x384xf32> to vector<8x128xf32>
    %544 = vector.extract_strided_slice %526 {offsets = [0, 256], sizes = [8, 128], strides = [1, 1]} : vector<8x384xf32> to vector<8x128xf32>
    %545 = arith.addf %544, %27 : vector<8x128xf32>
    %546 = arith.mulf %534, %545 : vector<8x128xf32>
    %547 = arith.addf %543, %546 : vector<8x128xf32>
    %548 = math.tanh %547 : vector<8x128xf32>
    %cst_176 = arith.constant 1.000000e+00 : f32
    %549 = vector.broadcast %cst_176 : f32 to vector<8x128xf32>
    %550 = arith.subf %549, %542 : vector<8x128xf32>
    %551 = arith.mulf %550, %548 : vector<8x128xf32>
    %552 = arith.mulf %542, %472 : vector<8x128xf32>
    %553 = arith.addf %551, %552 : vector<8x128xf32>
    %554 = vector.extract_strided_slice %24 {offsets = [8, 0], sizes = [8, 384], strides = [1, 1]} : vector<64x384xf32> to vector<8x384xf32>
    %555 = vector.extract_strided_slice %524 {offsets = [0, 384], sizes = [8, 384], strides = [1, 1]} : vector<8x768xf32> to vector<8x384xf32>
    %556 = vector.extract_strided_slice %554 {offsets = [0, 0], sizes = [8, 128], strides = [1, 1]} : vector<8x384xf32> to vector<8x128xf32>
    %557 = vector.extract_strided_slice %555 {offsets = [0, 0], sizes = [8, 128], strides = [1, 1]} : vector<8x384xf32> to vector<8x128xf32>
    %558 = arith.addf %556, %557 : vector<8x128xf32>
    %559 = arith.negf %558 : vector<8x128xf32>
    %560 = math.exp %559 : vector<8x128xf32>
    %cst_177 = arith.constant 1.000000e+00 : f32
    %561 = vector.broadcast %cst_177 : f32 to vector<8x128xf32>
    %562 = arith.addf %561, %560 : vector<8x128xf32>
    %563 = arith.divf %561, %562 : vector<8x128xf32>
    %564 = vector.extract_strided_slice %554 {offsets = [0, 128], sizes = [8, 128], strides = [1, 1]} : vector<8x384xf32> to vector<8x128xf32>
    %565 = vector.extract_strided_slice %555 {offsets = [0, 128], sizes = [8, 128], strides = [1, 1]} : vector<8x384xf32> to vector<8x128xf32>
    %566 = arith.addf %564, %565 : vector<8x128xf32>
    %567 = arith.negf %566 : vector<8x128xf32>
    %568 = math.exp %567 : vector<8x128xf32>
    %cst_178 = arith.constant 1.000000e+00 : f32
    %569 = vector.broadcast %cst_178 : f32 to vector<8x128xf32>
    %570 = arith.addf %569, %568 : vector<8x128xf32>
    %571 = arith.divf %569, %570 : vector<8x128xf32>
    %572 = vector.extract_strided_slice %554 {offsets = [0, 256], sizes = [8, 128], strides = [1, 1]} : vector<8x384xf32> to vector<8x128xf32>
    %573 = vector.extract_strided_slice %555 {offsets = [0, 256], sizes = [8, 128], strides = [1, 1]} : vector<8x384xf32> to vector<8x128xf32>
    %574 = arith.addf %573, %30 : vector<8x128xf32>
    %575 = arith.mulf %563, %574 : vector<8x128xf32>
    %576 = arith.addf %572, %575 : vector<8x128xf32>
    %577 = math.tanh %576 : vector<8x128xf32>
    %cst_179 = arith.constant 1.000000e+00 : f32
    %578 = vector.broadcast %cst_179 : f32 to vector<8x128xf32>
    %579 = arith.subf %578, %571 : vector<8x128xf32>
    %580 = arith.mulf %579, %577 : vector<8x128xf32>
    %581 = arith.mulf %571, %501 : vector<8x128xf32>
    %582 = arith.addf %580, %581 : vector<8x128xf32>
    %583 = arith.truncf %553 : vector<8x128xf32> to vector<8x128xbf16>
    %cst_180 = arith.constant dense<0.000000e+00> : vector<8x768xf32>
    %584 = tpu.matmul %583, %32, %cst_180 {dimension_numbers = #tpu.dot_dimension_numbers<[1], [0], [0], [1], [0, 0, 1, 1], [], []>} : vector<8x128xbf16>, vector<128x768xbf16>, vector<8x768xf32> -> vector<8x768xf32>
    %585 = arith.truncf %582 : vector<8x128xf32> to vector<8x128xbf16>
    %cst_181 = arith.constant dense<0.000000e+00> : vector<8x768xf32>
    %586 = tpu.matmul %585, %33, %cst_181 {dimension_numbers = #tpu.dot_dimension_numbers<[1], [0], [0], [1], [0, 0, 1, 1], [], []>} : vector<8x128xbf16>, vector<128x768xbf16>, vector<8x768xf32> -> vector<8x768xf32>
    %c48_182 = arith.constant 48 : index
    %c0_183 = arith.constant 0 : index
    %587 = vector.load %arg20[%c48_182, %c0_183] : memref<64x384xf32, #tpu.memory_space<vmem>>, vector<8x384xf32>
    %588 = vector.extract_strided_slice %584 {offsets = [0, 0], sizes = [8, 384], strides = [1, 1]} : vector<8x768xf32> to vector<8x384xf32>
    %589 = arith.addf %587, %588 : vector<8x384xf32>
    %c48_184 = arith.constant 48 : index
    %c0_185 = arith.constant 0 : index
    %590 = vector.load %arg20[%c48_184, %c0_185] : memref<64x384xf32, #tpu.memory_space<vmem>>, vector<8x384xf32>
    tpu.vector_store %arg20[%c48_184, %c0_185], %589 {strides = array<i32>} : memref<64x384xf32, #tpu.memory_space<vmem>>, vector<8x384xf32>,
    %c48_186 = arith.constant 48 : index
    %c0_187 = arith.constant 0 : index
    %591 = vector.load %arg21[%c48_186, %c0_187] : memref<64x384xf32, #tpu.memory_space<vmem>>, vector<8x384xf32>
    %592 = vector.extract_strided_slice %584 {offsets = [0, 384], sizes = [8, 384], strides = [1, 1]} : vector<8x768xf32> to vector<8x384xf32>
    %593 = arith.addf %591, %592 : vector<8x384xf32>
    %c48_188 = arith.constant 48 : index
    %c0_189 = arith.constant 0 : index
    %594 = vector.load %arg21[%c48_188, %c0_189] : memref<64x384xf32, #tpu.memory_space<vmem>>, vector<8x384xf32>
    tpu.vector_store %arg21[%c48_188, %c0_189], %593 {strides = array<i32>} : memref<64x384xf32, #tpu.memory_space<vmem>>, vector<8x384xf32>,
    %c8_190 = arith.constant 8 : index
    %c0_191 = arith.constant 0 : index
    %595 = vector.load %arg20[%c8_190, %c0_191] : memref<64x384xf32, #tpu.memory_space<vmem>>, vector<8x384xf32>
    %596 = vector.extract_strided_slice %586 {offsets = [0, 0], sizes = [8, 384], strides = [1, 1]} : vector<8x768xf32> to vector<8x384xf32>
    %597 = arith.addf %595, %596 : vector<8x384xf32>
    %c8_192 = arith.constant 8 : index
    %c0_193 = arith.constant 0 : index
    %598 = vector.load %arg20[%c8_192, %c0_193] : memref<64x384xf32, #tpu.memory_space<vmem>>, vector<8x384xf32>
    tpu.vector_store %arg20[%c8_192, %c0_193], %597 {strides = array<i32>} : memref<64x384xf32, #tpu.memory_space<vmem>>, vector<8x384xf32>,
    %c8_194 = arith.constant 8 : index
    %c0_195 = arith.constant 0 : index
    %599 = vector.load %arg21[%c8_194, %c0_195] : memref<64x384xf32, #tpu.memory_space<vmem>>, vector<8x384xf32>
    %600 = vector.extract_strided_slice %586 {offsets = [0, 384], sizes = [8, 384], strides = [1, 1]} : vector<8x768xf32> to vector<8x384xf32>
    %601 = arith.addf %599, %600 : vector<8x384xf32>
    %c8_196 = arith.constant 8 : index
    %c0_197 = arith.constant 0 : index
    %602 = vector.load %arg21[%c8_196, %c0_197] : memref<64x384xf32, #tpu.memory_space<vmem>>, vector<8x384xf32>
    tpu.vector_store %arg21[%c8_196, %c0_197], %601 {strides = array<i32>} : memref<64x384xf32, #tpu.memory_space<vmem>>, vector<8x384xf32>,
    %603 = tpu.concatenate %553, %582 in 1 : vector<8x128xf32>, vector<8x128xf32> -> vector<8x256xf32>
    %604 = arith.truncf %603 : vector<8x256xf32> to vector<8x256xbf16>
    %cst_198 = arith.constant dense<0.000000e+00> : vector<8x768xf32>
    %605 = tpu.matmul %604, %31, %cst_198 {dimension_numbers = #tpu.dot_dimension_numbers<[1], [0], [0], [1], [0, 0, 1, 1], [], []>} : vector<8x256xbf16>, vector<256x768xbf16>, vector<8x768xf32> -> vector<8x768xf32>
    %606 = vector.extract_strided_slice %19 {offsets = [56, 0], sizes = [8, 384], strides = [1, 1]} : vector<64x384xf32> to vector<8x384xf32>
    %607 = vector.extract_strided_slice %605 {offsets = [0, 0], sizes = [8, 384], strides = [1, 1]} : vector<8x768xf32> to vector<8x384xf32>
    %608 = vector.extract_strided_slice %606 {offsets = [0, 0], sizes = [8, 128], strides = [1, 1]} : vector<8x384xf32> to vector<8x128xf32>
    %609 = vector.extract_strided_slice %607 {offsets = [0, 0], sizes = [8, 128], strides = [1, 1]} : vector<8x384xf32> to vector<8x128xf32>
    %610 = arith.addf %608, %609 : vector<8x128xf32>
    %611 = arith.negf %610 : vector<8x128xf32>
    %612 = math.exp %611 : vector<8x128xf32>
    %cst_199 = arith.constant 1.000000e+00 : f32
    %613 = vector.broadcast %cst_199 : f32 to vector<8x128xf32>
    %614 = arith.addf %613, %612 : vector<8x128xf32>
    %615 = arith.divf %613, %614 : vector<8x128xf32>
    %616 = vector.extract_strided_slice %606 {offsets = [0, 128], sizes = [8, 128], strides = [1, 1]} : vector<8x384xf32> to vector<8x128xf32>
    %617 = vector.extract_strided_slice %607 {offsets = [0, 128], sizes = [8, 128], strides = [1, 1]} : vector<8x384xf32> to vector<8x128xf32>
    %618 = arith.addf %616, %617 : vector<8x128xf32>
    %619 = arith.negf %618 : vector<8x128xf32>
    %620 = math.exp %619 : vector<8x128xf32>
    %cst_200 = arith.constant 1.000000e+00 : f32
    %621 = vector.broadcast %cst_200 : f32 to vector<8x128xf32>
    %622 = arith.addf %621, %620 : vector<8x128xf32>
    %623 = arith.divf %621, %622 : vector<8x128xf32>
    %624 = vector.extract_strided_slice %606 {offsets = [0, 256], sizes = [8, 128], strides = [1, 1]} : vector<8x384xf32> to vector<8x128xf32>
    %625 = vector.extract_strided_slice %607 {offsets = [0, 256], sizes = [8, 128], strides = [1, 1]} : vector<8x384xf32> to vector<8x128xf32>
    %626 = arith.addf %625, %27 : vector<8x128xf32>
    %627 = arith.mulf %615, %626 : vector<8x128xf32>
    %628 = arith.addf %624, %627 : vector<8x128xf32>
    %629 = math.tanh %628 : vector<8x128xf32>
    %cst_201 = arith.constant 1.000000e+00 : f32
    %630 = vector.broadcast %cst_201 : f32 to vector<8x128xf32>
    %631 = arith.subf %630, %623 : vector<8x128xf32>
    %632 = arith.mulf %631, %629 : vector<8x128xf32>
    %633 = arith.mulf %623, %553 : vector<8x128xf32>
    %634 = arith.addf %632, %633 : vector<8x128xf32>
    %635 = vector.extract_strided_slice %24 {offsets = [0, 0], sizes = [8, 384], strides = [1, 1]} : vector<64x384xf32> to vector<8x384xf32>
    %636 = vector.extract_strided_slice %605 {offsets = [0, 384], sizes = [8, 384], strides = [1, 1]} : vector<8x768xf32> to vector<8x384xf32>
    %637 = vector.extract_strided_slice %635 {offsets = [0, 0], sizes = [8, 128], strides = [1, 1]} : vector<8x384xf32> to vector<8x128xf32>
    %638 = vector.extract_strided_slice %636 {offsets = [0, 0], sizes = [8, 128], strides = [1, 1]} : vector<8x384xf32> to vector<8x128xf32>
    %639 = arith.addf %637, %638 : vector<8x128xf32>
    %640 = arith.negf %639 : vector<8x128xf32>
    %641 = math.exp %640 : vector<8x128xf32>
    %cst_202 = arith.constant 1.000000e+00 : f32
    %642 = vector.broadcast %cst_202 : f32 to vector<8x128xf32>
    %643 = arith.addf %642, %641 : vector<8x128xf32>
    %644 = arith.divf %642, %643 : vector<8x128xf32>
    %645 = vector.extract_strided_slice %635 {offsets = [0, 128], sizes = [8, 128], strides = [1, 1]} : vector<8x384xf32> to vector<8x128xf32>
    %646 = vector.extract_strided_slice %636 {offsets = [0, 128], sizes = [8, 128], strides = [1, 1]} : vector<8x384xf32> to vector<8x128xf32>
    %647 = arith.addf %645, %646 : vector<8x128xf32>
    %648 = arith.negf %647 : vector<8x128xf32>
    %649 = math.exp %648 : vector<8x128xf32>
    %cst_203 = arith.constant 1.000000e+00 : f32
    %650 = vector.broadcast %cst_203 : f32 to vector<8x128xf32>
    %651 = arith.addf %650, %649 : vector<8x128xf32>
    %652 = arith.divf %650, %651 : vector<8x128xf32>
    %653 = vector.extract_strided_slice %635 {offsets = [0, 256], sizes = [8, 128], strides = [1, 1]} : vector<8x384xf32> to vector<8x128xf32>
    %654 = vector.extract_strided_slice %636 {offsets = [0, 256], sizes = [8, 128], strides = [1, 1]} : vector<8x384xf32> to vector<8x128xf32>
    %655 = arith.addf %654, %30 : vector<8x128xf32>
    %656 = arith.mulf %644, %655 : vector<8x128xf32>
    %657 = arith.addf %653, %656 : vector<8x128xf32>
    %658 = math.tanh %657 : vector<8x128xf32>
    %cst_204 = arith.constant 1.000000e+00 : f32
    %659 = vector.broadcast %cst_204 : f32 to vector<8x128xf32>
    %660 = arith.subf %659, %652 : vector<8x128xf32>
    %661 = arith.mulf %660, %658 : vector<8x128xf32>
    %662 = arith.mulf %652, %582 : vector<8x128xf32>
    %663 = arith.addf %661, %662 : vector<8x128xf32>
    %664 = arith.truncf %634 : vector<8x128xf32> to vector<8x128xbf16>
    %cst_205 = arith.constant dense<0.000000e+00> : vector<8x768xf32>
    %665 = tpu.matmul %664, %32, %cst_205 {dimension_numbers = #tpu.dot_dimension_numbers<[1], [0], [0], [1], [0, 0, 1, 1], [], []>} : vector<8x128xbf16>, vector<128x768xbf16>, vector<8x768xf32> -> vector<8x768xf32>
    %666 = arith.truncf %663 : vector<8x128xf32> to vector<8x128xbf16>
    %cst_206 = arith.constant dense<0.000000e+00> : vector<8x768xf32>
    %667 = tpu.matmul %666, %33, %cst_206 {dimension_numbers = #tpu.dot_dimension_numbers<[1], [0], [0], [1], [0, 0, 1, 1], [], []>} : vector<8x128xbf16>, vector<128x768xbf16>, vector<8x768xf32> -> vector<8x768xf32>
    %c56_207 = arith.constant 56 : index
    %c0_208 = arith.constant 0 : index
    %668 = vector.load %arg20[%c56_207, %c0_208] : memref<64x384xf32, #tpu.memory_space<vmem>>, vector<8x384xf32>
    %669 = vector.extract_strided_slice %665 {offsets = [0, 0], sizes = [8, 384], strides = [1, 1]} : vector<8x768xf32> to vector<8x384xf32>
    %670 = arith.addf %668, %669 : vector<8x384xf32>
    %c56_209 = arith.constant 56 : index
    %c0_210 = arith.constant 0 : index
    %671 = vector.load %arg20[%c56_209, %c0_210] : memref<64x384xf32, #tpu.memory_space<vmem>>, vector<8x384xf32>
    tpu.vector_store %arg20[%c56_209, %c0_210], %670 {strides = array<i32>} : memref<64x384xf32, #tpu.memory_space<vmem>>, vector<8x384xf32>,
    %c56_211 = arith.constant 56 : index
    %c0_212 = arith.constant 0 : index
    %672 = vector.load %arg21[%c56_211, %c0_212] : memref<64x384xf32, #tpu.memory_space<vmem>>, vector<8x384xf32>
    %673 = vector.extract_strided_slice %665 {offsets = [0, 384], sizes = [8, 384], strides = [1, 1]} : vector<8x768xf32> to vector<8x384xf32>
    %674 = arith.addf %672, %673 : vector<8x384xf32>
    %c56_213 = arith.constant 56 : index
    %c0_214 = arith.constant 0 : index
    %675 = vector.load %arg21[%c56_213, %c0_214] : memref<64x384xf32, #tpu.memory_space<vmem>>, vector<8x384xf32>
    tpu.vector_store %arg21[%c56_213, %c0_214], %674 {strides = array<i32>} : memref<64x384xf32, #tpu.memory_space<vmem>>, vector<8x384xf32>,
    %c0_215 = arith.constant 0 : index
    %c0_216 = arith.constant 0 : index
    %676 = vector.load %arg20[%c0_215, %c0_216] : memref<64x384xf32, #tpu.memory_space<vmem>>, vector<8x384xf32>
    %677 = vector.extract_strided_slice %667 {offsets = [0, 0], sizes = [8, 384], strides = [1, 1]} : vector<8x768xf32> to vector<8x384xf32>
    %678 = arith.addf %676, %677 : vector<8x384xf32>
    %c0_217 = arith.constant 0 : index
    %c0_218 = arith.constant 0 : index
    %679 = vector.load %arg20[%c0_217, %c0_218] : memref<64x384xf32, #tpu.memory_space<vmem>>, vector<8x384xf32>
    tpu.vector_store %arg20[%c0_217, %c0_218], %678 {strides = array<i32>} : memref<64x384xf32, #tpu.memory_space<vmem>>, vector<8x384xf32>,
    %c0_219 = arith.constant 0 : index
    %c0_220 = arith.constant 0 : index
    %680 = vector.load %arg21[%c0_219, %c0_220] : memref<64x384xf32, #tpu.memory_space<vmem>>, vector<8x384xf32>
    %681 = vector.extract_strided_slice %667 {offsets = [0, 384], sizes = [8, 384], strides = [1, 1]} : vector<8x768xf32> to vector<8x384xf32>
    %682 = arith.addf %680, %681 : vector<8x384xf32>
    %c0_221 = arith.constant 0 : index
    %c0_222 = arith.constant 0 : index
    %683 = vector.load %arg21[%c0_221, %c0_222] : memref<64x384xf32, #tpu.memory_space<vmem>>, vector<8x384xf32>
    tpu.vector_store %arg21[%c0_221, %c0_222], %682 {strides = array<i32>} : memref<64x384xf32, #tpu.memory_space<vmem>>, vector<8x384xf32>,
    %c0_i32_223 = arith.constant 0 : i32
    %684 = tpu.memref_slice %arg25[%c0_i32_223] : memref<3x!tpu.dma_semaphore, #tpu.memory_space<semaphore_mem>> -> memref<1x!tpu.dma_semaphore, #tpu.memory_space<semaphore_mem>>
    %685 = tpu.memref_squeeze %684 : memref<1x!tpu.dma_semaphore, #tpu.memory_space<semaphore_mem>> -> memref<!tpu.dma_semaphore, #tpu.memory_space<semaphore_mem>>
    tpu.wait_dma2 semaphore(%685 : memref<!tpu.dma_semaphore, #tpu.memory_space<semaphore_mem>>) src(%arg14 : memref<256x768xbf16, #tpu.memory_space<any>>) dst(%arg22 : memref<256x768xbf16, #tpu.memory_space<vmem>>)
    %c0_224 = arith.constant 0 : index
    %c0_225 = arith.constant 0 : index
    %686 = vector.load %arg22[%c0_224, %c0_225] : memref<256x768xbf16, #tpu.memory_space<vmem>>, vector<256x768xbf16>
    %c0_226 = arith.constant 0 : index
    %c0_227 = arith.constant 0 : index
    %687 = vector.load %arg12[%c0_226, %c0_227] : memref<1x128xf32, #tpu.memory_space<vmem>>, vector<1x128xf32>
    %688 = vector.shape_cast %687 : vector<1x128xf32> to vector<1x128xf32>
    %689 = vector.broadcast %688 : vector<1x128xf32> to vector<8x128xf32>
    %c0_228 = arith.constant 0 : index
    %c0_229 = arith.constant 0 : index
    %690 = vector.load %arg13[%c0_228, %c0_229] : memref<1x128xf32, #tpu.memory_space<vmem>>, vector<1x128xf32>
    %691 = vector.shape_cast %690 : vector<1x128xf32> to vector<1x128xf32>
    %692 = vector.broadcast %691 : vector<1x128xf32> to vector<8x128xf32>
    %cst_230 = arith.constant 0.000000e+00 : f32
    %693 = vector.broadcast %cst_230 : f32 to vector<8x128xf32>
    %cst_231 = arith.constant 0.000000e+00 : f32
    %694 = vector.broadcast %cst_231 : f32 to vector<8x128xf32>
    %695 = tpu.concatenate %693, %694 in 1 : vector<8x128xf32>, vector<8x128xf32> -> vector<8x256xf32>
    %696 = arith.truncf %695 : vector<8x256xf32> to vector<8x256xbf16>
    %cst_232 = arith.constant dense<0.000000e+00> : vector<8x768xf32>
    %697 = tpu.matmul %696, %686, %cst_232 {dimension_numbers = #tpu.dot_dimension_numbers<[1], [0], [0], [1], [0, 0, 1, 1], [], []>} : vector<8x256xbf16>, vector<256x768xbf16>, vector<8x768xf32> -> vector<8x768xf32>
    %c0_233 = arith.constant 0 : index
    %c0_234 = arith.constant 0 : index
    %698 = vector.load %arg20[%c0_233, %c0_234] : memref<64x384xf32, #tpu.memory_space<vmem>>, vector<8x384xf32>
    %699 = vector.extract_strided_slice %697 {offsets = [0, 0], sizes = [8, 384], strides = [1, 1]} : vector<8x768xf32> to vector<8x384xf32>
    %700 = vector.extract_strided_slice %698 {offsets = [0, 0], sizes = [8, 128], strides = [1, 1]} : vector<8x384xf32> to vector<8x128xf32>
    %701 = vector.extract_strided_slice %699 {offsets = [0, 0], sizes = [8, 128], strides = [1, 1]} : vector<8x384xf32> to vector<8x128xf32>
    %702 = arith.addf %700, %701 : vector<8x128xf32>
    %703 = arith.negf %702 : vector<8x128xf32>
    %704 = math.exp %703 : vector<8x128xf32>
    %cst_235 = arith.constant 1.000000e+00 : f32
    %705 = vector.broadcast %cst_235 : f32 to vector<8x128xf32>
    %706 = arith.addf %705, %704 : vector<8x128xf32>
    %707 = arith.divf %705, %706 : vector<8x128xf32>
    %708 = vector.extract_strided_slice %698 {offsets = [0, 128], sizes = [8, 128], strides = [1, 1]} : vector<8x384xf32> to vector<8x128xf32>
    %709 = vector.extract_strided_slice %699 {offsets = [0, 128], sizes = [8, 128], strides = [1, 1]} : vector<8x384xf32> to vector<8x128xf32>
    %710 = arith.addf %708, %709 : vector<8x128xf32>
    %711 = arith.negf %710 : vector<8x128xf32>
    %712 = math.exp %711 : vector<8x128xf32>
    %cst_236 = arith.constant 1.000000e+00 : f32
    %713 = vector.broadcast %cst_236 : f32 to vector<8x128xf32>
    %714 = arith.addf %713, %712 : vector<8x128xf32>
    %715 = arith.divf %713, %714 : vector<8x128xf32>
    %716 = vector.extract_strided_slice %698 {offsets = [0, 256], sizes = [8, 128], strides = [1, 1]} : vector<8x384xf32> to vector<8x128xf32>
    %717 = vector.extract_strided_slice %699 {offsets = [0, 256], sizes = [8, 128], strides = [1, 1]} : vector<8x384xf32> to vector<8x128xf32>
    %718 = arith.addf %717, %689 : vector<8x128xf32>
    %719 = arith.mulf %707, %718 : vector<8x128xf32>
    %720 = arith.addf %716, %719 : vector<8x128xf32>
    %721 = math.tanh %720 : vector<8x128xf32>
    %cst_237 = arith.constant 1.000000e+00 : f32
    %722 = vector.broadcast %cst_237 : f32 to vector<8x128xf32>
    %723 = arith.subf %722, %715 : vector<8x128xf32>
    %724 = arith.mulf %723, %721 : vector<8x128xf32>
    %725 = arith.mulf %715, %693 : vector<8x128xf32>
    %726 = arith.addf %724, %725 : vector<8x128xf32>
    %c56_238 = arith.constant 56 : index
    %c0_239 = arith.constant 0 : index
    %727 = vector.load %arg21[%c56_238, %c0_239] : memref<64x384xf32, #tpu.memory_space<vmem>>, vector<8x384xf32>
    %728 = vector.extract_strided_slice %697 {offsets = [0, 384], sizes = [8, 384], strides = [1, 1]} : vector<8x768xf32> to vector<8x384xf32>
    %729 = vector.extract_strided_slice %727 {offsets = [0, 0], sizes = [8, 128], strides = [1, 1]} : vector<8x384xf32> to vector<8x128xf32>
    %730 = vector.extract_strided_slice %728 {offsets = [0, 0], sizes = [8, 128], strides = [1, 1]} : vector<8x384xf32> to vector<8x128xf32>
    %731 = arith.addf %729, %730 : vector<8x128xf32>
    %732 = arith.negf %731 : vector<8x128xf32>
    %733 = math.exp %732 : vector<8x128xf32>
    %cst_240 = arith.constant 1.000000e+00 : f32
    %734 = vector.broadcast %cst_240 : f32 to vector<8x128xf32>
    %735 = arith.addf %734, %733 : vector<8x128xf32>
    %736 = arith.divf %734, %735 : vector<8x128xf32>
    %737 = vector.extract_strided_slice %727 {offsets = [0, 128], sizes = [8, 128], strides = [1, 1]} : vector<8x384xf32> to vector<8x128xf32>
    %738 = vector.extract_strided_slice %728 {offsets = [0, 128], sizes = [8, 128], strides = [1, 1]} : vector<8x384xf32> to vector<8x128xf32>
    %739 = arith.addf %737, %738 : vector<8x128xf32>
    %740 = arith.negf %739 : vector<8x128xf32>
    %741 = math.exp %740 : vector<8x128xf32>
    %cst_241 = arith.constant 1.000000e+00 : f32
    %742 = vector.broadcast %cst_241 : f32 to vector<8x128xf32>
    %743 = arith.addf %742, %741 : vector<8x128xf32>
    %744 = arith.divf %742, %743 : vector<8x128xf32>
    %745 = vector.extract_strided_slice %727 {offsets = [0, 256], sizes = [8, 128], strides = [1, 1]} : vector<8x384xf32> to vector<8x128xf32>
    %746 = vector.extract_strided_slice %728 {offsets = [0, 256], sizes = [8, 128], strides = [1, 1]} : vector<8x384xf32> to vector<8x128xf32>
    %747 = arith.addf %746, %692 : vector<8x128xf32>
    %748 = arith.mulf %736, %747 : vector<8x128xf32>
    %749 = arith.addf %745, %748 : vector<8x128xf32>
    %750 = math.tanh %749 : vector<8x128xf32>
    %cst_242 = arith.constant 1.000000e+00 : f32
    %751 = vector.broadcast %cst_242 : f32 to vector<8x128xf32>
    %752 = arith.subf %751, %744 : vector<8x128xf32>
    %753 = arith.mulf %752, %750 : vector<8x128xf32>
    %754 = arith.mulf %744, %694 : vector<8x128xf32>
    %755 = arith.addf %753, %754 : vector<8x128xf32>
    %756 = tpu.concatenate %726, %755 in 1 : vector<8x128xf32>, vector<8x128xf32> -> vector<8x256xf32>
    %757 = arith.truncf %756 : vector<8x256xf32> to vector<8x256xbf16>
    %cst_243 = arith.constant dense<0.000000e+00> : vector<8x768xf32>
    %758 = tpu.matmul %757, %686, %cst_243 {dimension_numbers = #tpu.dot_dimension_numbers<[1], [0], [0], [1], [0, 0, 1, 1], [], []>} : vector<8x256xbf16>, vector<256x768xbf16>, vector<8x768xf32> -> vector<8x768xf32>
    %c8_244 = arith.constant 8 : index
    %c0_245 = arith.constant 0 : index
    %759 = vector.load %arg20[%c8_244, %c0_245] : memref<64x384xf32, #tpu.memory_space<vmem>>, vector<8x384xf32>
    %760 = vector.extract_strided_slice %758 {offsets = [0, 0], sizes = [8, 384], strides = [1, 1]} : vector<8x768xf32> to vector<8x384xf32>
    %761 = vector.extract_strided_slice %759 {offsets = [0, 0], sizes = [8, 128], strides = [1, 1]} : vector<8x384xf32> to vector<8x128xf32>
    %762 = vector.extract_strided_slice %760 {offsets = [0, 0], sizes = [8, 128], strides = [1, 1]} : vector<8x384xf32> to vector<8x128xf32>
    %763 = arith.addf %761, %762 : vector<8x128xf32>
    %764 = arith.negf %763 : vector<8x128xf32>
    %765 = math.exp %764 : vector<8x128xf32>
    %cst_246 = arith.constant 1.000000e+00 : f32
    %766 = vector.broadcast %cst_246 : f32 to vector<8x128xf32>
    %767 = arith.addf %766, %765 : vector<8x128xf32>
    %768 = arith.divf %766, %767 : vector<8x128xf32>
    %769 = vector.extract_strided_slice %759 {offsets = [0, 128], sizes = [8, 128], strides = [1, 1]} : vector<8x384xf32> to vector<8x128xf32>
    %770 = vector.extract_strided_slice %760 {offsets = [0, 128], sizes = [8, 128], strides = [1, 1]} : vector<8x384xf32> to vector<8x128xf32>
    %771 = arith.addf %769, %770 : vector<8x128xf32>
    %772 = arith.negf %771 : vector<8x128xf32>
    %773 = math.exp %772 : vector<8x128xf32>
    %cst_247 = arith.constant 1.000000e+00 : f32
    %774 = vector.broadcast %cst_247 : f32 to vector<8x128xf32>
    %775 = arith.addf %774, %773 : vector<8x128xf32>
    %776 = arith.divf %774, %775 : vector<8x128xf32>
    %777 = vector.extract_strided_slice %759 {offsets = [0, 256], sizes = [8, 128], strides = [1, 1]} : vector<8x384xf32> to vector<8x128xf32>
    %778 = vector.extract_strided_slice %760 {offsets = [0, 256], sizes = [8, 128], strides = [1, 1]} : vector<8x384xf32> to vector<8x128xf32>
    %779 = arith.addf %778, %689 : vector<8x128xf32>
    %780 = arith.mulf %768, %779 : vector<8x128xf32>
    %781 = arith.addf %777, %780 : vector<8x128xf32>
    %782 = math.tanh %781 : vector<8x128xf32>
    %cst_248 = arith.constant 1.000000e+00 : f32
    %783 = vector.broadcast %cst_248 : f32 to vector<8x128xf32>
    %784 = arith.subf %783, %776 : vector<8x128xf32>
    %785 = arith.mulf %784, %782 : vector<8x128xf32>
    %786 = arith.mulf %776, %726 : vector<8x128xf32>
    %787 = arith.addf %785, %786 : vector<8x128xf32>
    %c48_249 = arith.constant 48 : index
    %c0_250 = arith.constant 0 : index
    %788 = vector.load %arg21[%c48_249, %c0_250] : memref<64x384xf32, #tpu.memory_space<vmem>>, vector<8x384xf32>
    %789 = vector.extract_strided_slice %758 {offsets = [0, 384], sizes = [8, 384], strides = [1, 1]} : vector<8x768xf32> to vector<8x384xf32>
    %790 = vector.extract_strided_slice %788 {offsets = [0, 0], sizes = [8, 128], strides = [1, 1]} : vector<8x384xf32> to vector<8x128xf32>
    %791 = vector.extract_strided_slice %789 {offsets = [0, 0], sizes = [8, 128], strides = [1, 1]} : vector<8x384xf32> to vector<8x128xf32>
    %792 = arith.addf %790, %791 : vector<8x128xf32>
    %793 = arith.negf %792 : vector<8x128xf32>
    %794 = math.exp %793 : vector<8x128xf32>
    %cst_251 = arith.constant 1.000000e+00 : f32
    %795 = vector.broadcast %cst_251 : f32 to vector<8x128xf32>
    %796 = arith.addf %795, %794 : vector<8x128xf32>
    %797 = arith.divf %795, %796 : vector<8x128xf32>
    %798 = vector.extract_strided_slice %788 {offsets = [0, 128], sizes = [8, 128], strides = [1, 1]} : vector<8x384xf32> to vector<8x128xf32>
    %799 = vector.extract_strided_slice %789 {offsets = [0, 128], sizes = [8, 128], strides = [1, 1]} : vector<8x384xf32> to vector<8x128xf32>
    %800 = arith.addf %798, %799 : vector<8x128xf32>
    %801 = arith.negf %800 : vector<8x128xf32>
    %802 = math.exp %801 : vector<8x128xf32>
    %cst_252 = arith.constant 1.000000e+00 : f32
    %803 = vector.broadcast %cst_252 : f32 to vector<8x128xf32>
    %804 = arith.addf %803, %802 : vector<8x128xf32>
    %805 = arith.divf %803, %804 : vector<8x128xf32>
    %806 = vector.extract_strided_slice %788 {offsets = [0, 256], sizes = [8, 128], strides = [1, 1]} : vector<8x384xf32> to vector<8x128xf32>
    %807 = vector.extract_strided_slice %789 {offsets = [0, 256], sizes = [8, 128], strides = [1, 1]} : vector<8x384xf32> to vector<8x128xf32>
    %808 = arith.addf %807, %692 : vector<8x128xf32>
    %809 = arith.mulf %797, %808 : vector<8x128xf32>
    %810 = arith.addf %806, %809 : vector<8x128xf32>
    %811 = math.tanh %810 : vector<8x128xf32>
    %cst_253 = arith.constant 1.000000e+00 : f32
    %812 = vector.broadcast %cst_253 : f32 to vector<8x128xf32>
    %813 = arith.subf %812, %805 : vector<8x128xf32>
    %814 = arith.mulf %813, %811 : vector<8x128xf32>
    %815 = arith.mulf %805, %755 : vector<8x128xf32>
    %816 = arith.addf %814, %815 : vector<8x128xf32>
    %817 = tpu.concatenate %787, %816 in 1 : vector<8x128xf32>, vector<8x128xf32> -> vector<8x256xf32>
    %818 = arith.truncf %817 : vector<8x256xf32> to vector<8x256xbf16>
    %cst_254 = arith.constant dense<0.000000e+00> : vector<8x768xf32>
    %819 = tpu.matmul %818, %686, %cst_254 {dimension_numbers = #tpu.dot_dimension_numbers<[1], [0], [0], [1], [0, 0, 1, 1], [], []>} : vector<8x256xbf16>, vector<256x768xbf16>, vector<8x768xf32> -> vector<8x768xf32>
    %c16_255 = arith.constant 16 : index
    %c0_256 = arith.constant 0 : index
    %820 = vector.load %arg20[%c16_255, %c0_256] : memref<64x384xf32, #tpu.memory_space<vmem>>, vector<8x384xf32>
    %821 = vector.extract_strided_slice %819 {offsets = [0, 0], sizes = [8, 384], strides = [1, 1]} : vector<8x768xf32> to vector<8x384xf32>
    %822 = vector.extract_strided_slice %820 {offsets = [0, 0], sizes = [8, 128], strides = [1, 1]} : vector<8x384xf32> to vector<8x128xf32>
    %823 = vector.extract_strided_slice %821 {offsets = [0, 0], sizes = [8, 128], strides = [1, 1]} : vector<8x384xf32> to vector<8x128xf32>
    %824 = arith.addf %822, %823 : vector<8x128xf32>
    %825 = arith.negf %824 : vector<8x128xf32>
    %826 = math.exp %825 : vector<8x128xf32>
    %cst_257 = arith.constant 1.000000e+00 : f32
    %827 = vector.broadcast %cst_257 : f32 to vector<8x128xf32>
    %828 = arith.addf %827, %826 : vector<8x128xf32>
    %829 = arith.divf %827, %828 : vector<8x128xf32>
    %830 = vector.extract_strided_slice %820 {offsets = [0, 128], sizes = [8, 128], strides = [1, 1]} : vector<8x384xf32> to vector<8x128xf32>
    %831 = vector.extract_strided_slice %821 {offsets = [0, 128], sizes = [8, 128], strides = [1, 1]} : vector<8x384xf32> to vector<8x128xf32>
    %832 = arith.addf %830, %831 : vector<8x128xf32>
    %833 = arith.negf %832 : vector<8x128xf32>
    %834 = math.exp %833 : vector<8x128xf32>
    %cst_258 = arith.constant 1.000000e+00 : f32
    %835 = vector.broadcast %cst_258 : f32 to vector<8x128xf32>
    %836 = arith.addf %835, %834 : vector<8x128xf32>
    %837 = arith.divf %835, %836 : vector<8x128xf32>
    %838 = vector.extract_strided_slice %820 {offsets = [0, 256], sizes = [8, 128], strides = [1, 1]} : vector<8x384xf32> to vector<8x128xf32>
    %839 = vector.extract_strided_slice %821 {offsets = [0, 256], sizes = [8, 128], strides = [1, 1]} : vector<8x384xf32> to vector<8x128xf32>
    %840 = arith.addf %839, %689 : vector<8x128xf32>
    %841 = arith.mulf %829, %840 : vector<8x128xf32>
    %842 = arith.addf %838, %841 : vector<8x128xf32>
    %843 = math.tanh %842 : vector<8x128xf32>
    %cst_259 = arith.constant 1.000000e+00 : f32
    %844 = vector.broadcast %cst_259 : f32 to vector<8x128xf32>
    %845 = arith.subf %844, %837 : vector<8x128xf32>
    %846 = arith.mulf %845, %843 : vector<8x128xf32>
    %847 = arith.mulf %837, %787 : vector<8x128xf32>
    %848 = arith.addf %846, %847 : vector<8x128xf32>
    %c40_260 = arith.constant 40 : index
    %c0_261 = arith.constant 0 : index
    %849 = vector.load %arg21[%c40_260, %c0_261] : memref<64x384xf32, #tpu.memory_space<vmem>>, vector<8x384xf32>
    %850 = vector.extract_strided_slice %819 {offsets = [0, 384], sizes = [8, 384], strides = [1, 1]} : vector<8x768xf32> to vector<8x384xf32>
    %851 = vector.extract_strided_slice %849 {offsets = [0, 0], sizes = [8, 128], strides = [1, 1]} : vector<8x384xf32> to vector<8x128xf32>
    %852 = vector.extract_strided_slice %850 {offsets = [0, 0], sizes = [8, 128], strides = [1, 1]} : vector<8x384xf32> to vector<8x128xf32>
    %853 = arith.addf %851, %852 : vector<8x128xf32>
    %854 = arith.negf %853 : vector<8x128xf32>
    %855 = math.exp %854 : vector<8x128xf32>
    %cst_262 = arith.constant 1.000000e+00 : f32
    %856 = vector.broadcast %cst_262 : f32 to vector<8x128xf32>
    %857 = arith.addf %856, %855 : vector<8x128xf32>
    %858 = arith.divf %856, %857 : vector<8x128xf32>
    %859 = vector.extract_strided_slice %849 {offsets = [0, 128], sizes = [8, 128], strides = [1, 1]} : vector<8x384xf32> to vector<8x128xf32>
    %860 = vector.extract_strided_slice %850 {offsets = [0, 128], sizes = [8, 128], strides = [1, 1]} : vector<8x384xf32> to vector<8x128xf32>
    %861 = arith.addf %859, %860 : vector<8x128xf32>
    %862 = arith.negf %861 : vector<8x128xf32>
    %863 = math.exp %862 : vector<8x128xf32>
    %cst_263 = arith.constant 1.000000e+00 : f32
    %864 = vector.broadcast %cst_263 : f32 to vector<8x128xf32>
    %865 = arith.addf %864, %863 : vector<8x128xf32>
    %866 = arith.divf %864, %865 : vector<8x128xf32>
    %867 = vector.extract_strided_slice %849 {offsets = [0, 256], sizes = [8, 128], strides = [1, 1]} : vector<8x384xf32> to vector<8x128xf32>
    %868 = vector.extract_strided_slice %850 {offsets = [0, 256], sizes = [8, 128], strides = [1, 1]} : vector<8x384xf32> to vector<8x128xf32>
    %869 = arith.addf %868, %692 : vector<8x128xf32>
    %870 = arith.mulf %858, %869 : vector<8x128xf32>
    %871 = arith.addf %867, %870 : vector<8x128xf32>
    %872 = math.tanh %871 : vector<8x128xf32>
    %cst_264 = arith.constant 1.000000e+00 : f32
    %873 = vector.broadcast %cst_264 : f32 to vector<8x128xf32>
    %874 = arith.subf %873, %866 : vector<8x128xf32>
    %875 = arith.mulf %874, %872 : vector<8x128xf32>
    %876 = arith.mulf %866, %816 : vector<8x128xf32>
    %877 = arith.addf %875, %876 : vector<8x128xf32>
    %878 = tpu.concatenate %848, %877 in 1 : vector<8x128xf32>, vector<8x128xf32> -> vector<8x256xf32>
    %879 = arith.truncf %878 : vector<8x256xf32> to vector<8x256xbf16>
    %cst_265 = arith.constant dense<0.000000e+00> : vector<8x768xf32>
    %880 = tpu.matmul %879, %686, %cst_265 {dimension_numbers = #tpu.dot_dimension_numbers<[1], [0], [0], [1], [0, 0, 1, 1], [], []>} : vector<8x256xbf16>, vector<256x768xbf16>, vector<8x768xf32> -> vector<8x768xf32>
    %c24_266 = arith.constant 24 : index
    %c0_267 = arith.constant 0 : index
    %881 = vector.load %arg20[%c24_266, %c0_267] : memref<64x384xf32, #tpu.memory_space<vmem>>, vector<8x384xf32>
    %882 = vector.extract_strided_slice %880 {offsets = [0, 0], sizes = [8, 384], strides = [1, 1]} : vector<8x768xf32> to vector<8x384xf32>
    %883 = vector.extract_strided_slice %881 {offsets = [0, 0], sizes = [8, 128], strides = [1, 1]} : vector<8x384xf32> to vector<8x128xf32>
    %884 = vector.extract_strided_slice %882 {offsets = [0, 0], sizes = [8, 128], strides = [1, 1]} : vector<8x384xf32> to vector<8x128xf32>
    %885 = arith.addf %883, %884 : vector<8x128xf32>
    %886 = arith.negf %885 : vector<8x128xf32>
    %887 = math.exp %886 : vector<8x128xf32>
    %cst_268 = arith.constant 1.000000e+00 : f32
    %888 = vector.broadcast %cst_268 : f32 to vector<8x128xf32>
    %889 = arith.addf %888, %887 : vector<8x128xf32>
    %890 = arith.divf %888, %889 : vector<8x128xf32>
    %891 = vector.extract_strided_slice %881 {offsets = [0, 128], sizes = [8, 128], strides = [1, 1]} : vector<8x384xf32> to vector<8x128xf32>
    %892 = vector.extract_strided_slice %882 {offsets = [0, 128], sizes = [8, 128], strides = [1, 1]} : vector<8x384xf32> to vector<8x128xf32>
    %893 = arith.addf %891, %892 : vector<8x128xf32>
    %894 = arith.negf %893 : vector<8x128xf32>
    %895 = math.exp %894 : vector<8x128xf32>
    %cst_269 = arith.constant 1.000000e+00 : f32
    %896 = vector.broadcast %cst_269 : f32 to vector<8x128xf32>
    %897 = arith.addf %896, %895 : vector<8x128xf32>
    %898 = arith.divf %896, %897 : vector<8x128xf32>
    %899 = vector.extract_strided_slice %881 {offsets = [0, 256], sizes = [8, 128], strides = [1, 1]} : vector<8x384xf32> to vector<8x128xf32>
    %900 = vector.extract_strided_slice %882 {offsets = [0, 256], sizes = [8, 128], strides = [1, 1]} : vector<8x384xf32> to vector<8x128xf32>
    %901 = arith.addf %900, %689 : vector<8x128xf32>
    %902 = arith.mulf %890, %901 : vector<8x128xf32>
    %903 = arith.addf %899, %902 : vector<8x128xf32>
    %904 = math.tanh %903 : vector<8x128xf32>
    %cst_270 = arith.constant 1.000000e+00 : f32
    %905 = vector.broadcast %cst_270 : f32 to vector<8x128xf32>
    %906 = arith.subf %905, %898 : vector<8x128xf32>
    %907 = arith.mulf %906, %904 : vector<8x128xf32>
    %908 = arith.mulf %898, %848 : vector<8x128xf32>
    %909 = arith.addf %907, %908 : vector<8x128xf32>
    %c32_271 = arith.constant 32 : index
    %c0_272 = arith.constant 0 : index
    %910 = vector.load %arg21[%c32_271, %c0_272] : memref<64x384xf32, #tpu.memory_space<vmem>>, vector<8x384xf32>
    %911 = vector.extract_strided_slice %880 {offsets = [0, 384], sizes = [8, 384], strides = [1, 1]} : vector<8x768xf32> to vector<8x384xf32>
    %912 = vector.extract_strided_slice %910 {offsets = [0, 0], sizes = [8, 128], strides = [1, 1]} : vector<8x384xf32> to vector<8x128xf32>
    %913 = vector.extract_strided_slice %911 {offsets = [0, 0], sizes = [8, 128], strides = [1, 1]} : vector<8x384xf32> to vector<8x128xf32>
    %914 = arith.addf %912, %913 : vector<8x128xf32>
    %915 = arith.negf %914 : vector<8x128xf32>
    %916 = math.exp %915 : vector<8x128xf32>
    %cst_273 = arith.constant 1.000000e+00 : f32
    %917 = vector.broadcast %cst_273 : f32 to vector<8x128xf32>
    %918 = arith.addf %917, %916 : vector<8x128xf32>
    %919 = arith.divf %917, %918 : vector<8x128xf32>
    %920 = vector.extract_strided_slice %910 {offsets = [0, 128], sizes = [8, 128], strides = [1, 1]} : vector<8x384xf32> to vector<8x128xf32>
    %921 = vector.extract_strided_slice %911 {offsets = [0, 128], sizes = [8, 128], strides = [1, 1]} : vector<8x384xf32> to vector<8x128xf32>
    %922 = arith.addf %920, %921 : vector<8x128xf32>
    %923 = arith.negf %922 : vector<8x128xf32>
    %924 = math.exp %923 : vector<8x128xf32>
    %cst_274 = arith.constant 1.000000e+00 : f32
    %925 = vector.broadcast %cst_274 : f32 to vector<8x128xf32>
    %926 = arith.addf %925, %924 : vector<8x128xf32>
    %927 = arith.divf %925, %926 : vector<8x128xf32>
    %928 = vector.extract_strided_slice %910 {offsets = [0, 256], sizes = [8, 128], strides = [1, 1]} : vector<8x384xf32> to vector<8x128xf32>
    %929 = vector.extract_strided_slice %911 {offsets = [0, 256], sizes = [8, 128], strides = [1, 1]} : vector<8x384xf32> to vector<8x128xf32>
    %930 = arith.addf %929, %692 : vector<8x128xf32>
    %931 = arith.mulf %919, %930 : vector<8x128xf32>
    %932 = arith.addf %928, %931 : vector<8x128xf32>
    %933 = math.tanh %932 : vector<8x128xf32>
    %cst_275 = arith.constant 1.000000e+00 : f32
    %934 = vector.broadcast %cst_275 : f32 to vector<8x128xf32>
    %935 = arith.subf %934, %927 : vector<8x128xf32>
    %936 = arith.mulf %935, %933 : vector<8x128xf32>
    %937 = arith.mulf %927, %877 : vector<8x128xf32>
    %938 = arith.addf %936, %937 : vector<8x128xf32>
    %939 = tpu.concatenate %909, %938 in 1 : vector<8x128xf32>, vector<8x128xf32> -> vector<8x256xf32>
    %940 = arith.truncf %939 : vector<8x256xf32> to vector<8x256xbf16>
    %cst_276 = arith.constant dense<0.000000e+00> : vector<8x768xf32>
    %941 = tpu.matmul %940, %686, %cst_276 {dimension_numbers = #tpu.dot_dimension_numbers<[1], [0], [0], [1], [0, 0, 1, 1], [], []>} : vector<8x256xbf16>, vector<256x768xbf16>, vector<8x768xf32> -> vector<8x768xf32>
    %c32_277 = arith.constant 32 : index
    %c0_278 = arith.constant 0 : index
    %942 = vector.load %arg20[%c32_277, %c0_278] : memref<64x384xf32, #tpu.memory_space<vmem>>, vector<8x384xf32>
    %943 = vector.extract_strided_slice %941 {offsets = [0, 0], sizes = [8, 384], strides = [1, 1]} : vector<8x768xf32> to vector<8x384xf32>
    %944 = vector.extract_strided_slice %942 {offsets = [0, 0], sizes = [8, 128], strides = [1, 1]} : vector<8x384xf32> to vector<8x128xf32>
    %945 = vector.extract_strided_slice %943 {offsets = [0, 0], sizes = [8, 128], strides = [1, 1]} : vector<8x384xf32> to vector<8x128xf32>
    %946 = arith.addf %944, %945 : vector<8x128xf32>
    %947 = arith.negf %946 : vector<8x128xf32>
    %948 = math.exp %947 : vector<8x128xf32>
    %cst_279 = arith.constant 1.000000e+00 : f32
    %949 = vector.broadcast %cst_279 : f32 to vector<8x128xf32>
    %950 = arith.addf %949, %948 : vector<8x128xf32>
    %951 = arith.divf %949, %950 : vector<8x128xf32>
    %952 = vector.extract_strided_slice %942 {offsets = [0, 128], sizes = [8, 128], strides = [1, 1]} : vector<8x384xf32> to vector<8x128xf32>
    %953 = vector.extract_strided_slice %943 {offsets = [0, 128], sizes = [8, 128], strides = [1, 1]} : vector<8x384xf32> to vector<8x128xf32>
    %954 = arith.addf %952, %953 : vector<8x128xf32>
    %955 = arith.negf %954 : vector<8x128xf32>
    %956 = math.exp %955 : vector<8x128xf32>
    %cst_280 = arith.constant 1.000000e+00 : f32
    %957 = vector.broadcast %cst_280 : f32 to vector<8x128xf32>
    %958 = arith.addf %957, %956 : vector<8x128xf32>
    %959 = arith.divf %957, %958 : vector<8x128xf32>
    %960 = vector.extract_strided_slice %942 {offsets = [0, 256], sizes = [8, 128], strides = [1, 1]} : vector<8x384xf32> to vector<8x128xf32>
    %961 = vector.extract_strided_slice %943 {offsets = [0, 256], sizes = [8, 128], strides = [1, 1]} : vector<8x384xf32> to vector<8x128xf32>
    %962 = arith.addf %961, %689 : vector<8x128xf32>
    %963 = arith.mulf %951, %962 : vector<8x128xf32>
    %964 = arith.addf %960, %963 : vector<8x128xf32>
    %965 = math.tanh %964 : vector<8x128xf32>
    %cst_281 = arith.constant 1.000000e+00 : f32
    %966 = vector.broadcast %cst_281 : f32 to vector<8x128xf32>
    %967 = arith.subf %966, %959 : vector<8x128xf32>
    %968 = arith.mulf %967, %965 : vector<8x128xf32>
    %969 = arith.mulf %959, %909 : vector<8x128xf32>
    %970 = arith.addf %968, %969 : vector<8x128xf32>
    %c24_282 = arith.constant 24 : index
    %c0_283 = arith.constant 0 : index
    %971 = vector.load %arg21[%c24_282, %c0_283] : memref<64x384xf32, #tpu.memory_space<vmem>>, vector<8x384xf32>
    %972 = vector.extract_strided_slice %941 {offsets = [0, 384], sizes = [8, 384], strides = [1, 1]} : vector<8x768xf32> to vector<8x384xf32>
    %973 = vector.extract_strided_slice %971 {offsets = [0, 0], sizes = [8, 128], strides = [1, 1]} : vector<8x384xf32> to vector<8x128xf32>
    %974 = vector.extract_strided_slice %972 {offsets = [0, 0], sizes = [8, 128], strides = [1, 1]} : vector<8x384xf32> to vector<8x128xf32>
    %975 = arith.addf %973, %974 : vector<8x128xf32>
    %976 = arith.negf %975 : vector<8x128xf32>
    %977 = math.exp %976 : vector<8x128xf32>
    %cst_284 = arith.constant 1.000000e+00 : f32
    %978 = vector.broadcast %cst_284 : f32 to vector<8x128xf32>
    %979 = arith.addf %978, %977 : vector<8x128xf32>
    %980 = arith.divf %978, %979 : vector<8x128xf32>
    %981 = vector.extract_strided_slice %971 {offsets = [0, 128], sizes = [8, 128], strides = [1, 1]} : vector<8x384xf32> to vector<8x128xf32>
    %982 = vector.extract_strided_slice %972 {offsets = [0, 128], sizes = [8, 128], strides = [1, 1]} : vector<8x384xf32> to vector<8x128xf32>
    %983 = arith.addf %981, %982 : vector<8x128xf32>
    %984 = arith.negf %983 : vector<8x128xf32>
    %985 = math.exp %984 : vector<8x128xf32>
    %cst_285 = arith.constant 1.000000e+00 : f32
    %986 = vector.broadcast %cst_285 : f32 to vector<8x128xf32>
    %987 = arith.addf %986, %985 : vector<8x128xf32>
    %988 = arith.divf %986, %987 : vector<8x128xf32>
    %989 = vector.extract_strided_slice %971 {offsets = [0, 256], sizes = [8, 128], strides = [1, 1]} : vector<8x384xf32> to vector<8x128xf32>
    %990 = vector.extract_strided_slice %972 {offsets = [0, 256], sizes = [8, 128], strides = [1, 1]} : vector<8x384xf32> to vector<8x128xf32>
    %991 = arith.addf %990, %692 : vector<8x128xf32>
    %992 = arith.mulf %980, %991 : vector<8x128xf32>
    %993 = arith.addf %989, %992 : vector<8x128xf32>
    %994 = math.tanh %993 : vector<8x128xf32>
    %cst_286 = arith.constant 1.000000e+00 : f32
    %995 = vector.broadcast %cst_286 : f32 to vector<8x128xf32>
    %996 = arith.subf %995, %988 : vector<8x128xf32>
    %997 = arith.mulf %996, %994 : vector<8x128xf32>
    %998 = arith.mulf %988, %938 : vector<8x128xf32>
    %999 = arith.addf %997, %998 : vector<8x128xf32>
    %1000 = tpu.concatenate %970, %999 in 1 : vector<8x128xf32>, vector<8x128xf32> -> vector<8x256xf32>
    %1001 = arith.truncf %1000 : vector<8x256xf32> to vector<8x256xbf16>
    %cst_287 = arith.constant dense<0.000000e+00> : vector<8x768xf32>
    %1002 = tpu.matmul %1001, %686, %cst_287 {dimension_numbers = #tpu.dot_dimension_numbers<[1], [0], [0], [1], [0, 0, 1, 1], [], []>} : vector<8x256xbf16>, vector<256x768xbf16>, vector<8x768xf32> -> vector<8x768xf32>
    %c40_288 = arith.constant 40 : index
    %c0_289 = arith.constant 0 : index
    %1003 = vector.load %arg20[%c40_288, %c0_289] : memref<64x384xf32, #tpu.memory_space<vmem>>, vector<8x384xf32>
    %1004 = vector.extract_strided_slice %1002 {offsets = [0, 0], sizes = [8, 384], strides = [1, 1]} : vector<8x768xf32> to vector<8x384xf32>
    %1005 = vector.extract_strided_slice %1003 {offsets = [0, 0], sizes = [8, 128], strides = [1, 1]} : vector<8x384xf32> to vector<8x128xf32>
    %1006 = vector.extract_strided_slice %1004 {offsets = [0, 0], sizes = [8, 128], strides = [1, 1]} : vector<8x384xf32> to vector<8x128xf32>
    %1007 = arith.addf %1005, %1006 : vector<8x128xf32>
    %1008 = arith.negf %1007 : vector<8x128xf32>
    %1009 = math.exp %1008 : vector<8x128xf32>
    %cst_290 = arith.constant 1.000000e+00 : f32
    %1010 = vector.broadcast %cst_290 : f32 to vector<8x128xf32>
    %1011 = arith.addf %1010, %1009 : vector<8x128xf32>
    %1012 = arith.divf %1010, %1011 : vector<8x128xf32>
    %1013 = vector.extract_strided_slice %1003 {offsets = [0, 128], sizes = [8, 128], strides = [1, 1]} : vector<8x384xf32> to vector<8x128xf32>
    %1014 = vector.extract_strided_slice %1004 {offsets = [0, 128], sizes = [8, 128], strides = [1, 1]} : vector<8x384xf32> to vector<8x128xf32>
    %1015 = arith.addf %1013, %1014 : vector<8x128xf32>
    %1016 = arith.negf %1015 : vector<8x128xf32>
    %1017 = math.exp %1016 : vector<8x128xf32>
    %cst_291 = arith.constant 1.000000e+00 : f32
    %1018 = vector.broadcast %cst_291 : f32 to vector<8x128xf32>
    %1019 = arith.addf %1018, %1017 : vector<8x128xf32>
    %1020 = arith.divf %1018, %1019 : vector<8x128xf32>
    %1021 = vector.extract_strided_slice %1003 {offsets = [0, 256], sizes = [8, 128], strides = [1, 1]} : vector<8x384xf32> to vector<8x128xf32>
    %1022 = vector.extract_strided_slice %1004 {offsets = [0, 256], sizes = [8, 128], strides = [1, 1]} : vector<8x384xf32> to vector<8x128xf32>
    %1023 = arith.addf %1022, %689 : vector<8x128xf32>
    %1024 = arith.mulf %1012, %1023 : vector<8x128xf32>
    %1025 = arith.addf %1021, %1024 : vector<8x128xf32>
    %1026 = math.tanh %1025 : vector<8x128xf32>
    %cst_292 = arith.constant 1.000000e+00 : f32
    %1027 = vector.broadcast %cst_292 : f32 to vector<8x128xf32>
    %1028 = arith.subf %1027, %1020 : vector<8x128xf32>
    %1029 = arith.mulf %1028, %1026 : vector<8x128xf32>
    %1030 = arith.mulf %1020, %970 : vector<8x128xf32>
    %1031 = arith.addf %1029, %1030 : vector<8x128xf32>
    %c16_293 = arith.constant 16 : index
    %c0_294 = arith.constant 0 : index
    %1032 = vector.load %arg21[%c16_293, %c0_294] : memref<64x384xf32, #tpu.memory_space<vmem>>, vector<8x384xf32>
    %1033 = vector.extract_strided_slice %1002 {offsets = [0, 384], sizes = [8, 384], strides = [1, 1]} : vector<8x768xf32> to vector<8x384xf32>
    %1034 = vector.extract_strided_slice %1032 {offsets = [0, 0], sizes = [8, 128], strides = [1, 1]} : vector<8x384xf32> to vector<8x128xf32>
    %1035 = vector.extract_strided_slice %1033 {offsets = [0, 0], sizes = [8, 128], strides = [1, 1]} : vector<8x384xf32> to vector<8x128xf32>
    %1036 = arith.addf %1034, %1035 : vector<8x128xf32>
    %1037 = arith.negf %1036 : vector<8x128xf32>
    %1038 = math.exp %1037 : vector<8x128xf32>
    %cst_295 = arith.constant 1.000000e+00 : f32
    %1039 = vector.broadcast %cst_295 : f32 to vector<8x128xf32>
    %1040 = arith.addf %1039, %1038 : vector<8x128xf32>
    %1041 = arith.divf %1039, %1040 : vector<8x128xf32>
    %1042 = vector.extract_strided_slice %1032 {offsets = [0, 128], sizes = [8, 128], strides = [1, 1]} : vector<8x384xf32> to vector<8x128xf32>
    %1043 = vector.extract_strided_slice %1033 {offsets = [0, 128], sizes = [8, 128], strides = [1, 1]} : vector<8x384xf32> to vector<8x128xf32>
    %1044 = arith.addf %1042, %1043 : vector<8x128xf32>
    %1045 = arith.negf %1044 : vector<8x128xf32>
    %1046 = math.exp %1045 : vector<8x128xf32>
    %cst_296 = arith.constant 1.000000e+00 : f32
    %1047 = vector.broadcast %cst_296 : f32 to vector<8x128xf32>
    %1048 = arith.addf %1047, %1046 : vector<8x128xf32>
    %1049 = arith.divf %1047, %1048 : vector<8x128xf32>
    %1050 = vector.extract_strided_slice %1032 {offsets = [0, 256], sizes = [8, 128], strides = [1, 1]} : vector<8x384xf32> to vector<8x128xf32>
    %1051 = vector.extract_strided_slice %1033 {offsets = [0, 256], sizes = [8, 128], strides = [1, 1]} : vector<8x384xf32> to vector<8x128xf32>
    %1052 = arith.addf %1051, %692 : vector<8x128xf32>
    %1053 = arith.mulf %1041, %1052 : vector<8x128xf32>
    %1054 = arith.addf %1050, %1053 : vector<8x128xf32>
    %1055 = math.tanh %1054 : vector<8x128xf32>
    %cst_297 = arith.constant 1.000000e+00 : f32
    %1056 = vector.broadcast %cst_297 : f32 to vector<8x128xf32>
    %1057 = arith.subf %1056, %1049 : vector<8x128xf32>
    %1058 = arith.mulf %1057, %1055 : vector<8x128xf32>
    %1059 = arith.mulf %1049, %999 : vector<8x128xf32>
    %1060 = arith.addf %1058, %1059 : vector<8x128xf32>
    %1061 = tpu.concatenate %1031, %1060 in 1 : vector<8x128xf32>, vector<8x128xf32> -> vector<8x256xf32>
    %1062 = arith.truncf %1061 : vector<8x256xf32> to vector<8x256xbf16>
    %cst_298 = arith.constant dense<0.000000e+00> : vector<8x768xf32>
    %1063 = tpu.matmul %1062, %686, %cst_298 {dimension_numbers = #tpu.dot_dimension_numbers<[1], [0], [0], [1], [0, 0, 1, 1], [], []>} : vector<8x256xbf16>, vector<256x768xbf16>, vector<8x768xf32> -> vector<8x768xf32>
    %c48_299 = arith.constant 48 : index
    %c0_300 = arith.constant 0 : index
    %1064 = vector.load %arg20[%c48_299, %c0_300] : memref<64x384xf32, #tpu.memory_space<vmem>>, vector<8x384xf32>
    %1065 = vector.extract_strided_slice %1063 {offsets = [0, 0], sizes = [8, 384], strides = [1, 1]} : vector<8x768xf32> to vector<8x384xf32>
    %1066 = vector.extract_strided_slice %1064 {offsets = [0, 0], sizes = [8, 128], strides = [1, 1]} : vector<8x384xf32> to vector<8x128xf32>
    %1067 = vector.extract_strided_slice %1065 {offsets = [0, 0], sizes = [8, 128], strides = [1, 1]} : vector<8x384xf32> to vector<8x128xf32>
    %1068 = arith.addf %1066, %1067 : vector<8x128xf32>
    %1069 = arith.negf %1068 : vector<8x128xf32>
    %1070 = math.exp %1069 : vector<8x128xf32>
    %cst_301 = arith.constant 1.000000e+00 : f32
    %1071 = vector.broadcast %cst_301 : f32 to vector<8x128xf32>
    %1072 = arith.addf %1071, %1070 : vector<8x128xf32>
    %1073 = arith.divf %1071, %1072 : vector<8x128xf32>
    %1074 = vector.extract_strided_slice %1064 {offsets = [0, 128], sizes = [8, 128], strides = [1, 1]} : vector<8x384xf32> to vector<8x128xf32>
    %1075 = vector.extract_strided_slice %1065 {offsets = [0, 128], sizes = [8, 128], strides = [1, 1]} : vector<8x384xf32> to vector<8x128xf32>
    %1076 = arith.addf %1074, %1075 : vector<8x128xf32>
    %1077 = arith.negf %1076 : vector<8x128xf32>
    %1078 = math.exp %1077 : vector<8x128xf32>
    %cst_302 = arith.constant 1.000000e+00 : f32
    %1079 = vector.broadcast %cst_302 : f32 to vector<8x128xf32>
    %1080 = arith.addf %1079, %1078 : vector<8x128xf32>
    %1081 = arith.divf %1079, %1080 : vector<8x128xf32>
    %1082 = vector.extract_strided_slice %1064 {offsets = [0, 256], sizes = [8, 128], strides = [1, 1]} : vector<8x384xf32> to vector<8x128xf32>
    %1083 = vector.extract_strided_slice %1065 {offsets = [0, 256], sizes = [8, 128], strides = [1, 1]} : vector<8x384xf32> to vector<8x128xf32>
    %1084 = arith.addf %1083, %689 : vector<8x128xf32>
    %1085 = arith.mulf %1073, %1084 : vector<8x128xf32>
    %1086 = arith.addf %1082, %1085 : vector<8x128xf32>
    %1087 = math.tanh %1086 : vector<8x128xf32>
    %cst_303 = arith.constant 1.000000e+00 : f32
    %1088 = vector.broadcast %cst_303 : f32 to vector<8x128xf32>
    %1089 = arith.subf %1088, %1081 : vector<8x128xf32>
    %1090 = arith.mulf %1089, %1087 : vector<8x128xf32>
    %1091 = arith.mulf %1081, %1031 : vector<8x128xf32>
    %1092 = arith.addf %1090, %1091 : vector<8x128xf32>
    %c8_304 = arith.constant 8 : index
    %c0_305 = arith.constant 0 : index
    %1093 = vector.load %arg21[%c8_304, %c0_305] : memref<64x384xf32, #tpu.memory_space<vmem>>, vector<8x384xf32>
    %1094 = vector.extract_strided_slice %1063 {offsets = [0, 384], sizes = [8, 384], strides = [1, 1]} : vector<8x768xf32> to vector<8x384xf32>
    %1095 = vector.extract_strided_slice %1093 {offsets = [0, 0], sizes = [8, 128], strides = [1, 1]} : vector<8x384xf32> to vector<8x128xf32>
    %1096 = vector.extract_strided_slice %1094 {offsets = [0, 0], sizes = [8, 128], strides = [1, 1]} : vector<8x384xf32> to vector<8x128xf32>
    %1097 = arith.addf %1095, %1096 : vector<8x128xf32>
    %1098 = arith.negf %1097 : vector<8x128xf32>
    %1099 = math.exp %1098 : vector<8x128xf32>
    %cst_306 = arith.constant 1.000000e+00 : f32
    %1100 = vector.broadcast %cst_306 : f32 to vector<8x128xf32>
    %1101 = arith.addf %1100, %1099 : vector<8x128xf32>
    %1102 = arith.divf %1100, %1101 : vector<8x128xf32>
    %1103 = vector.extract_strided_slice %1093 {offsets = [0, 128], sizes = [8, 128], strides = [1, 1]} : vector<8x384xf32> to vector<8x128xf32>
    %1104 = vector.extract_strided_slice %1094 {offsets = [0, 128], sizes = [8, 128], strides = [1, 1]} : vector<8x384xf32> to vector<8x128xf32>
    %1105 = arith.addf %1103, %1104 : vector<8x128xf32>
    %1106 = arith.negf %1105 : vector<8x128xf32>
    %1107 = math.exp %1106 : vector<8x128xf32>
    %cst_307 = arith.constant 1.000000e+00 : f32
    %1108 = vector.broadcast %cst_307 : f32 to vector<8x128xf32>
    %1109 = arith.addf %1108, %1107 : vector<8x128xf32>
    %1110 = arith.divf %1108, %1109 : vector<8x128xf32>
    %1111 = vector.extract_strided_slice %1093 {offsets = [0, 256], sizes = [8, 128], strides = [1, 1]} : vector<8x384xf32> to vector<8x128xf32>
    %1112 = vector.extract_strided_slice %1094 {offsets = [0, 256], sizes = [8, 128], strides = [1, 1]} : vector<8x384xf32> to vector<8x128xf32>
    %1113 = arith.addf %1112, %692 : vector<8x128xf32>
    %1114 = arith.mulf %1102, %1113 : vector<8x128xf32>
    %1115 = arith.addf %1111, %1114 : vector<8x128xf32>
    %1116 = math.tanh %1115 : vector<8x128xf32>
    %cst_308 = arith.constant 1.000000e+00 : f32
    %1117 = vector.broadcast %cst_308 : f32 to vector<8x128xf32>
    %1118 = arith.subf %1117, %1110 : vector<8x128xf32>
    %1119 = arith.mulf %1118, %1116 : vector<8x128xf32>
    %1120 = arith.mulf %1110, %1060 : vector<8x128xf32>
    %1121 = arith.addf %1119, %1120 : vector<8x128xf32>
    %1122 = tpu.concatenate %1092, %1121 in 1 : vector<8x128xf32>, vector<8x128xf32> -> vector<8x256xf32>
    %1123 = arith.truncf %1122 : vector<8x256xf32> to vector<8x256xbf16>
    %cst_309 = arith.constant dense<0.000000e+00> : vector<8x768xf32>
    %1124 = tpu.matmul %1123, %686, %cst_309 {dimension_numbers = #tpu.dot_dimension_numbers<[1], [0], [0], [1], [0, 0, 1, 1], [], []>} : vector<8x256xbf16>, vector<256x768xbf16>, vector<8x768xf32> -> vector<8x768xf32>
    %c56_310 = arith.constant 56 : index
    %c0_311 = arith.constant 0 : index
    %1125 = vector.load %arg20[%c56_310, %c0_311] : memref<64x384xf32, #tpu.memory_space<vmem>>, vector<8x384xf32>
    %1126 = vector.extract_strided_slice %1124 {offsets = [0, 0], sizes = [8, 384], strides = [1, 1]} : vector<8x768xf32> to vector<8x384xf32>
    %1127 = vector.extract_strided_slice %1125 {offsets = [0, 0], sizes = [8, 128], strides = [1, 1]} : vector<8x384xf32> to vector<8x128xf32>
    %1128 = vector.extract_strided_slice %1126 {offsets = [0, 0], sizes = [8, 128], strides = [1, 1]} : vector<8x384xf32> to vector<8x128xf32>
    %1129 = arith.addf %1127, %1128 : vector<8x128xf32>
    %1130 = arith.negf %1129 : vector<8x128xf32>
    %1131 = math.exp %1130 : vector<8x128xf32>
    %cst_312 = arith.constant 1.000000e+00 : f32
    %1132 = vector.broadcast %cst_312 : f32 to vector<8x128xf32>
    %1133 = arith.addf %1132, %1131 : vector<8x128xf32>
    %1134 = arith.divf %1132, %1133 : vector<8x128xf32>
    %1135 = vector.extract_strided_slice %1125 {offsets = [0, 128], sizes = [8, 128], strides = [1, 1]} : vector<8x384xf32> to vector<8x128xf32>
    %1136 = vector.extract_strided_slice %1126 {offsets = [0, 128], sizes = [8, 128], strides = [1, 1]} : vector<8x384xf32> to vector<8x128xf32>
    %1137 = arith.addf %1135, %1136 : vector<8x128xf32>
    %1138 = arith.negf %1137 : vector<8x128xf32>
    %1139 = math.exp %1138 : vector<8x128xf32>
    %cst_313 = arith.constant 1.000000e+00 : f32
    %1140 = vector.broadcast %cst_313 : f32 to vector<8x128xf32>
    %1141 = arith.addf %1140, %1139 : vector<8x128xf32>
    %1142 = arith.divf %1140, %1141 : vector<8x128xf32>
    %1143 = vector.extract_strided_slice %1125 {offsets = [0, 256], sizes = [8, 128], strides = [1, 1]} : vector<8x384xf32> to vector<8x128xf32>
    %1144 = vector.extract_strided_slice %1126 {offsets = [0, 256], sizes = [8, 128], strides = [1, 1]} : vector<8x384xf32> to vector<8x128xf32>
    %1145 = arith.addf %1144, %689 : vector<8x128xf32>
    %1146 = arith.mulf %1134, %1145 : vector<8x128xf32>
    %1147 = arith.addf %1143, %1146 : vector<8x128xf32>
    %1148 = math.tanh %1147 : vector<8x128xf32>
    %cst_314 = arith.constant 1.000000e+00 : f32
    %1149 = vector.broadcast %cst_314 : f32 to vector<8x128xf32>
    %1150 = arith.subf %1149, %1142 : vector<8x128xf32>
    %1151 = arith.mulf %1150, %1148 : vector<8x128xf32>
    %1152 = arith.mulf %1142, %1092 : vector<8x128xf32>
    %1153 = arith.addf %1151, %1152 : vector<8x128xf32>
    %c0_315 = arith.constant 0 : index
    %c0_316 = arith.constant 0 : index
    %1154 = vector.load %arg21[%c0_315, %c0_316] : memref<64x384xf32, #tpu.memory_space<vmem>>, vector<8x384xf32>
    %1155 = vector.extract_strided_slice %1124 {offsets = [0, 384], sizes = [8, 384], strides = [1, 1]} : vector<8x768xf32> to vector<8x384xf32>
    %1156 = vector.extract_strided_slice %1154 {offsets = [0, 0], sizes = [8, 128], strides = [1, 1]} : vector<8x384xf32> to vector<8x128xf32>
    %1157 = vector.extract_strided_slice %1155 {offsets = [0, 0], sizes = [8, 128], strides = [1, 1]} : vector<8x384xf32> to vector<8x128xf32>
    %1158 = arith.addf %1156, %1157 : vector<8x128xf32>
    %1159 = arith.negf %1158 : vector<8x128xf32>
    %1160 = math.exp %1159 : vector<8x128xf32>
    %cst_317 = arith.constant 1.000000e+00 : f32
    %1161 = vector.broadcast %cst_317 : f32 to vector<8x128xf32>
    %1162 = arith.addf %1161, %1160 : vector<8x128xf32>
    %1163 = arith.divf %1161, %1162 : vector<8x128xf32>
    %1164 = vector.extract_strided_slice %1154 {offsets = [0, 128], sizes = [8, 128], strides = [1, 1]} : vector<8x384xf32> to vector<8x128xf32>
    %1165 = vector.extract_strided_slice %1155 {offsets = [0, 128], sizes = [8, 128], strides = [1, 1]} : vector<8x384xf32> to vector<8x128xf32>
    %1166 = arith.addf %1164, %1165 : vector<8x128xf32>
    %1167 = arith.negf %1166 : vector<8x128xf32>
    %1168 = math.exp %1167 : vector<8x128xf32>
    %cst_318 = arith.constant 1.000000e+00 : f32
    %1169 = vector.broadcast %cst_318 : f32 to vector<8x128xf32>
    %1170 = arith.addf %1169, %1168 : vector<8x128xf32>
    %1171 = arith.divf %1169, %1170 : vector<8x128xf32>
    %1172 = vector.extract_strided_slice %1154 {offsets = [0, 256], sizes = [8, 128], strides = [1, 1]} : vector<8x384xf32> to vector<8x128xf32>
    %1173 = vector.extract_strided_slice %1155 {offsets = [0, 256], sizes = [8, 128], strides = [1, 1]} : vector<8x384xf32> to vector<8x128xf32>
    %1174 = arith.addf %1173, %692 : vector<8x128xf32>
    %1175 = arith.mulf %1163, %1174 : vector<8x128xf32>
    %1176 = arith.addf %1172, %1175 : vector<8x128xf32>
    %1177 = math.tanh %1176 : vector<8x128xf32>
    %cst_319 = arith.constant 1.000000e+00 : f32
    %1178 = vector.broadcast %cst_319 : f32 to vector<8x128xf32>
    %1179 = arith.subf %1178, %1171 : vector<8x128xf32>
    %1180 = arith.mulf %1179, %1177 : vector<8x128xf32>
    %1181 = arith.mulf %1171, %1121 : vector<8x128xf32>
    %1182 = arith.addf %1180, %1181 : vector<8x128xf32>
    %c1_i32_320 = arith.constant 1 : i32
    %1183 = tpu.memref_slice %arg25[%c1_i32_320] : memref<3x!tpu.dma_semaphore, #tpu.memory_space<semaphore_mem>> -> memref<1x!tpu.dma_semaphore, #tpu.memory_space<semaphore_mem>>
    %1184 = tpu.memref_squeeze %1183 : memref<1x!tpu.dma_semaphore, #tpu.memory_space<semaphore_mem>> -> memref<!tpu.dma_semaphore, #tpu.memory_space<semaphore_mem>>
    tpu.wait_dma2 semaphore(%1184 : memref<!tpu.dma_semaphore, #tpu.memory_space<semaphore_mem>>) src(%arg15 : memref<512x256xbf16, #tpu.memory_space<any>>) dst(%arg23 : memref<512x256xbf16, #tpu.memory_space<vmem>>)
    %c2_i32_321 = arith.constant 2 : i32
    %1185 = tpu.memref_slice %arg25[%c2_i32_321] : memref<3x!tpu.dma_semaphore, #tpu.memory_space<semaphore_mem>> -> memref<1x!tpu.dma_semaphore, #tpu.memory_space<semaphore_mem>>
    %1186 = tpu.memref_squeeze %1185 : memref<1x!tpu.dma_semaphore, #tpu.memory_space<semaphore_mem>> -> memref<!tpu.dma_semaphore, #tpu.memory_space<semaphore_mem>>
    tpu.wait_dma2 semaphore(%1186 : memref<!tpu.dma_semaphore, #tpu.memory_space<semaphore_mem>>) src(%arg16 : memref<256x128xbf16, #tpu.memory_space<any>>) dst(%arg24 : memref<256x128xbf16, #tpu.memory_space<vmem>>)
    %1187 = tpu.concatenate %634, %663, %1153, %1182 in 1 : vector<8x128xf32>, vector<8x128xf32>, vector<8x128xf32>, vector<8x128xf32> -> vector<8x512xf32>
    %1188 = arith.truncf %1187 : vector<8x512xf32> to vector<8x512xbf16>
    %c0_322 = arith.constant 0 : index
    %c0_323 = arith.constant 0 : index
    %1189 = vector.load %arg23[%c0_322, %c0_323] : memref<512x256xbf16, #tpu.memory_space<vmem>>, vector<512x256xbf16>
    %cst_324 = arith.constant dense<0.000000e+00> : vector<8x256xf32>
    %1190 = tpu.matmul %1188, %1189, %cst_324 {dimension_numbers = #tpu.dot_dimension_numbers<[1], [0], [0], [1], [0, 0, 1, 1], [], []>} : vector<8x512xbf16>, vector<512x256xbf16>, vector<8x256xf32> -> vector<8x256xf32>
    %c0_325 = arith.constant 0 : index
    %c0_326 = arith.constant 0 : index
    %1191 = vector.load %arg17[%c0_325, %c0_326] : memref<1x256xf32, #tpu.memory_space<vmem>>, vector<1x256xf32>
    %1192 = vector.broadcast %1191 : vector<1x256xf32> to vector<8x256xf32>
    %1193 = arith.addf %1190, %1192 : vector<8x256xf32>
    %1194 = arith.truncf %1193 : vector<8x256xf32> to vector<8x256xbf16>
    %c0_327 = arith.constant 0 : index
    %c0_328 = arith.constant 0 : index
    %1195 = vector.load %arg24[%c0_327, %c0_328] : memref<256x128xbf16, #tpu.memory_space<vmem>>, vector<256x128xbf16>
    %cst_329 = arith.constant dense<0.000000e+00> : vector<8x128xf32>
    %1196 = tpu.matmul %1194, %1195, %cst_329 {dimension_numbers = #tpu.dot_dimension_numbers<[1], [0], [0], [1], [0, 0, 1, 1], [], []>} : vector<8x256xbf16>, vector<256x128xbf16>, vector<8x128xf32> -> vector<8x128xf32>
    %c0_330 = arith.constant 0 : index
    %c0_331 = arith.constant 0 : index
    %1197 = vector.load %arg18[%c0_330, %c0_331] : memref<1x128xf32, #tpu.memory_space<vmem>>, vector<1x128xf32>
    %1198 = vector.broadcast %1197 : vector<1x128xf32> to vector<8x128xf32>
    %1199 = arith.addf %1196, %1198 : vector<8x128xf32>
    %c0_332 = arith.constant 0 : index
    %c0_333 = arith.constant 0 : index
    %1200 = vector.load %arg19[%c0_332, %c0_333] : memref<8x128xf32, #tpu.memory_space<vmem>>, vector<8x128xf32>
    tpu.vector_store %arg19[%c0_332, %c0_333], %1199 {strides = array<i32>} : memref<8x128xf32, #tpu.memory_space<vmem>>, vector<8x128xf32>,
    return
  }
}

</mosaic_0001>

<llo_original>
// kernel: rnn_forward.1
$region0: #{rnn_forward.1}
  #allocation0 [shape = 'u32[]', space=smem, size = 0x4, offset = 0x4, fixed_abs, tag = 'smem constant byte address 0x4 - core index']
  #allocation1 [shape = 'u32[144,128]{1,0:T(1,128)}', space=vmem, size = 0x12000, scoped, tag = 'internal scratch']
  #allocation2 [shape = 'f32[64,384]{1,0:T(8,128)}', space=vmem, size = 0x18000, scoped, tag = 'scratch operand']
  #allocation3 [shape = 'f32[64,384]{1,0:T(8,128)}', space=vmem, size = 0x18000, scoped, tag = 'scratch operand']
  #allocation4 [shape = 'bf16[256,768]{1,0:T(16,128)(2,1)}', space=vmem, size = 0x60000, scoped, tag = 'scratch operand']
  #allocation5 [shape = 'bf16[512,256]{1,0:T(16,128)(2,1)}', space=vmem, size = 0x40000, scoped, tag = 'scratch operand']
  #allocation6 [shape = 'bf16[256,128]{1,0:T(16,128)(2,1)}', space=vmem, size = 0x10000, scoped, tag = 'scratch operand']
  #allocation7 [shape = 's32[3]{0}', space=sflag, size = 0xc, scoped, tag = 'scratch operand']
  #allocation16 [shape = 's32[]', space=sflag, size = 0x4, offset = 0, fixed_abs, tag = 'sflag constant byte address 0x0 - dummy sync flag']
  #allocation18 [shape = 's32[]', space=sflag, size = 0x4, offset = 0, fixed_abs, tag = 'sflag constant byte address 0x0 - dummy sync flag']
  #allocation20 [shape = 's32[]', space=sflag, size = 0x4, offset = 0, fixed_abs, tag = 'sflag constant byte address 0x0 - dummy sync flag']
  %s0 = inlined_call_operand.vmem [shape: f32[64,12], index: 0, kind: input, shape index: {}]
  %s1 = inlined_call_operand.hbm [shape: f32[12,384], index: 1, kind: input, shape index: {}]
  %s2 = inlined_call_operand.hbm [shape: f32[12,384], index: 2, kind: input, shape index: {}]
  %s3 = inlined_call_operand.hbm [shape: bf16[256,768], index: 3, kind: input, shape index: {}]
  %s4 = inlined_call_operand.vmem [shape: f32[1,384], index: 4, kind: input, shape index: {}]
  %s5 = inlined_call_operand.vmem [shape: f32[1,384], index: 5, kind: input, shape index: {}]
  %s6 = inlined_call_operand.vmem [shape: f32[1,128], index: 6, kind: input, shape index: {}]
  %s7 = inlined_call_operand.vmem [shape: f32[1,128], index: 7, kind: input, shape index: {}]
  %s8 = inlined_call_operand.hbm [shape: bf16[128,768], index: 8, kind: input, shape index: {}]
  %s9 = inlined_call_operand.hbm [shape: bf16[128,768], index: 9, kind: input, shape index: {}]
  %s10 = inlined_call_operand.vmem [shape: f32[1,384], index: 10, kind: input, shape index: {}]
  %s11 = inlined_call_operand.vmem [shape: f32[1,384], index: 11, kind: input, shape index: {}]
  %s12 = inlined_call_operand.vmem [shape: f32[1,128], index: 12, kind: input, shape index: {}]
  %s13 = inlined_call_operand.vmem [shape: f32[1,128], index: 13, kind: input, shape index: {}]
  %s14 = inlined_call_operand.hbm [shape: bf16[256,768], index: 14, kind: input, shape index: {}]
  %s15 = inlined_call_operand.hbm [shape: bf16[512,256], index: 15, kind: input, shape index: {}]
  %s16 = inlined_call_operand.vmem [shape: bf16[256,128], index: 16, kind: input, shape index: {}]
  %s17 = inlined_call_operand.vmem [shape: f32[1,256], index: 17, kind: input, shape index: {}]
  %s18 = inlined_call_operand.vmem [shape: f32[1,128], index: 18, kind: input, shape index: {}]
  %s19 = inlined_call_operand.vmem [shape: f32[8,128], index: 19, kind: output, shape index: {}]
  %s20 = sld [smem:[#allocation0]]
  $region128: #{rnn_forward.1} parent=0
    _
  %s22 = ssub.s32 1, %s20
  %s23 = scalar_select 0, %s22, %s20
  $region1: #{rnn_forward.1} parent=0
    #allocation8 [shape = 'u8[24576]{0}', space=vmem, size = 0x6000, scoped, tag = 'input window, operand 1, single buffered']
    #allocation9 [shape = 's32[1]{0}', space=sflag, size = 0x4, scoped, tag = 'scoped memory for rnn_forward.1']
    #allocation10 [shape = 'u8[24576]{0}', space=vmem, size = 0x6000, scoped, tag = 'input window, operand 2, single buffered']
    #allocation11 [shape = 's32[1]{0}', space=sflag, size = 0x4, scoped, tag = 'scoped memory for rnn_forward.1']
    #allocation12 [shape = 'u8[393216]{0}', space=vmem, size = 0x60000, scoped, tag = 'input window, operand 3, single buffered']
    #allocation13 [shape = 'u8[196608]{0}', space=vmem, size = 0x30000, scoped, tag = 'input window, operand 8, single buffered']
    #allocation14 [shape = 's32[1]{0}', space=sflag, size = 0x4, scoped, tag = 'scoped memory for rnn_forward.1']
    #allocation15 [shape = 'u8[196608]{0}', space=vmem, size = 0x30000, scoped, tag = 'input window, operand 9, single buffered']
    #allocation17 [shape = 'u32[9]{0}', space=smem, size = 0x24, scoped, tag = 'DMA stride descriptor']
    #allocation19 [shape = 'u32[9]{0}', space=smem, size = 0x24, scoped, tag = 'DMA stride descriptor']
    %24 = vsyncpa [#allocation9], 0
    %25 = vsyncpa [#allocation11], 0
    %26 = vsyncpa [#allocation14], 0
    // Predicated region
    $region2: #{rnn_forward.1} parent=1 // pred_check
      _
    $region3: #{rnn_forward.1} parent=1 // pred_check_branch
      %28 = sbr.rel (0) target = $region5
    $region4: #{rnn_forward.1} parent=1 // pred_region
      _
    $region5: #{rnn_forward.1} parent=1 // pred_fallthru
      _
    // Predicated region
    $region6: #{rnn_forward.1} parent=1 // pred_check
      _
    $region7: #{rnn_forward.1} parent=1 // pred_check_branch
      %30 = sbr.rel (0) target = $region9
    $region8: #{rnn_forward.1} parent=1 // pred_region
      %s32 = ssub.s32 768, 768
      %33 = vsyncadd [#allocation9], %s32
      %s34 = sshll.u32 [#allocation8], 4
      %s35 = int_to_ptr.vmem [resolvable:$true] %s34
      %40 = dma.hbm_to_vmem [thread:$0]  %s1, 768, %s35, [#allocation9], 384, 384, 24
    $region9: #{rnn_forward.1} parent=1 // pred_fallthru
      _
    // Predicated region
    $region10: #{rnn_forward.1} parent=1 // pred_check
      _
    $region11: #{rnn_forward.1} parent=1 // pred_check_branch
      %42 = sbr.rel (0) target = $region13
    $region12: #{rnn_forward.1} parent=1 // pred_region
      %s44 = ssub.s32 768, 768
      %45 = vsyncadd [#allocation11], %s44
      %s46 = sshll.u32 [#allocation10], 4
      %s47 = int_to_ptr.vmem [resolvable:$true] %s46
      %52 = dma.hbm_to_vmem [thread:$0]  %s2, 768, %s47, [#allocation11], 384, 384, 24
    $region13: #{rnn_forward.1} parent=1 // pred_fallthru
      _
    // Predicated region
    $region14: #{rnn_forward.1} parent=1 // pred_check
      _
    $region15: #{rnn_forward.1} parent=1 // pred_check_branch
      %54 = sbr.rel (0) target = $region17
    $region16: #{rnn_forward.1} parent=1 // pred_region
      %s56 = ssub.s32 12288, 12288
      %57 = vsyncadd [#allocation11], %s56
      %s58 = sshll.u32 [#allocation12], 4
      %s59 = int_to_ptr.vmem [resolvable:$true] %s58
      %64 = dma.hbm_to_vmem [thread:$0]  %s3, 12288, %s59, [#allocation11], 384, 384, 24
    $region17: #{rnn_forward.1} parent=1 // pred_fallthru
      _
    // Predicated region
    $region18: #{rnn_forward.1} parent=1 // pred_check
      _
    $region19: #{rnn_forward.1} parent=1 // pred_check_branch
      %66 = sbr.rel (0) target = $region21
    $region20: #{rnn_forward.1} parent=1 // pred_region
      _
    $region21: #{rnn_forward.1} parent=1 // pred_fallthru
      _
    // Predicated region
    $region22: #{rnn_forward.1} parent=1 // pred_check
      _
    $region23: #{rnn_forward.1} parent=1 // pred_check_branch
      %68 = sbr.rel (0) target = $region25
    $region24: #{rnn_forward.1} parent=1 // pred_region
      _
    $region25: #{rnn_forward.1} parent=1 // pred_fallthru
      _
    // Predicated region
    $region26: #{rnn_forward.1} parent=1 // pred_check
      _
    $region27: #{rnn_forward.1} parent=1 // pred_check_branch
      %70 = sbr.rel (0) target = $region29
    $region28: #{rnn_forward.1} parent=1 // pred_region
      _
    $region29: #{rnn_forward.1} parent=1 // pred_fallthru
      _
    // Predicated region
    $region30: #{rnn_forward.1} parent=1 // pred_check
      _
    $region31: #{rnn_forward.1} parent=1 // pred_check_branch
      %72 = sbr.rel (0) target = $region33
    $region32: #{rnn_forward.1} parent=1 // pred_region
      _
    $region33: #{rnn_forward.1} parent=1 // pred_fallthru
      _
    // Predicated region
    $region34: #{rnn_forward.1} parent=1 // pred_check
      _
    $region35: #{rnn_forward.1} parent=1 // pred_check_branch
      %74 = sbr.rel (0) target = $region37
    $region36: #{rnn_forward.1} parent=1 // pred_region
      %s76 = ssub.s32 6144, 6144
      %77 = vsyncadd [#allocation14], %s76
      %s78 = sshll.u32 [#allocation13], 4
      %s79 = int_to_ptr.vmem [resolvable:$true] %s78
      %84 = dma.hbm_to_vmem [thread:$0]  %s8, 6144, %s79, [#allocation14], 384, 384, 24
    $region37: #{rnn_forward.1} parent=1 // pred_fallthru
      _
    // Predicated region
    $region38: #{rnn_forward.1} parent=1 // pred_check
      _
    $region39: #{rnn_forward.1} parent=1 // pred_check_branch
      %86 = sbr.rel (0) target = $region41
    $region40: #{rnn_forward.1} parent=1 // pred_region
      %s88 = ssub.s32 6144, 6144
      %89 = vsyncadd [#allocation14], %s88
      %s90 = sshll.u32 [#allocation15], 4
      %s91 = int_to_ptr.vmem [resolvable:$true] %s90
      %96 = dma.hbm_to_vmem [thread:$0]  %s9, 6144, %s91, [#allocation14], 384, 384, 24
    $region41: #{rnn_forward.1} parent=1 // pred_fallthru
      _
    // Predicated region
    $region42: #{rnn_forward.1} parent=1 // pred_check
      _
    $region43: #{rnn_forward.1} parent=1 // pred_check_branch
      %98 = sbr.rel (0) target = $region45
    $region44: #{rnn_forward.1} parent=1 // pred_region
      _
    $region45: #{rnn_forward.1} parent=1 // pred_fallthru
      _
    // Predicated region
    $region46: #{rnn_forward.1} parent=1 // pred_check
      _
    $region47: #{rnn_forward.1} parent=1 // pred_check_branch
      %100 = sbr.rel (0) target = $region49
    $region48: #{rnn_forward.1} parent=1 // pred_region
      _
    $region49: #{rnn_forward.1} parent=1 // pred_fallthru
      _
    // Predicated region
    $region50: #{rnn_forward.1} parent=1 // pred_check
      _
    $region51: #{rnn_forward.1} parent=1 // pred_check_branch
      %102 = sbr.rel (0) target = $region53
    $region52: #{rnn_forward.1} parent=1 // pred_region
      _
    $region53: #{rnn_forward.1} parent=1 // pred_fallthru
      _
    // Predicated region
    $region54: #{rnn_forward.1} parent=1 // pred_check
      _
    $region55: #{rnn_forward.1} parent=1 // pred_check_branch
      %104 = sbr.rel (0) target = $region57
    $region56: #{rnn_forward.1} parent=1 // pred_region
      _
    $region57: #{rnn_forward.1} parent=1 // pred_fallthru
      _
    // Predicated region
    $region58: #{rnn_forward.1} parent=1 // pred_check
      _
    $region59: #{rnn_forward.1} parent=1 // pred_check_branch
      %106 = sbr.rel (0) target = $region61
    $region60: #{rnn_forward.1} parent=1 // pred_region
      _
    $region61: #{rnn_forward.1} parent=1 // pred_fallthru
      _
    // Predicated region
    $region62: #{rnn_forward.1} parent=1 // pred_check
      _
    $region63: #{rnn_forward.1} parent=1 // pred_check_branch
      %108 = sbr.rel (0) target = $region65
    $region64: #{rnn_forward.1} parent=1 // pred_region
      _
    $region65: #{rnn_forward.1} parent=1 // pred_fallthru
      _
    // Predicated region
    $region66: #{rnn_forward.1} parent=1 // pred_check
      _
    $region67: #{rnn_forward.1} parent=1 // pred_check_branch
      %110 = sbr.rel (0) target = $region69
    $region68: #{rnn_forward.1} parent=1 // pred_region
      %111 = dma.done [#allocation9], 768
    $region69: #{rnn_forward.1} parent=1 // pred_fallthru
      _
    // Predicated region
    $region70: #{rnn_forward.1} parent=1 // pred_check
      _
    $region71: #{rnn_forward.1} parent=1 // pred_check_branch
      %113 = sbr.rel (0) target = $region73
    $region72: #{rnn_forward.1} parent=1 // pred_region
      %114 = dma.done [#allocation11], 768
    $region73: #{rnn_forward.1} parent=1 // pred_fallthru
      _
    // Predicated region
    $region74: #{rnn_forward.1} parent=1 // pred_check
      _
    $region75: #{rnn_forward.1} parent=1 // pred_check_branch
      %116 = sbr.rel (0) target = $region77
    $region76: #{rnn_forward.1} parent=1 // pred_region
      %117 = dma.done [#allocation11], 12288
    $region77: #{rnn_forward.1} parent=1 // pred_fallthru
      _
    // Predicated region
    $region78: #{rnn_forward.1} parent=1 // pred_check
      _
    $region79: #{rnn_forward.1} parent=1 // pred_check_branch
      %119 = sbr.rel (0) target = $region81
    $region80: #{rnn_forward.1} parent=1 // pred_region
      %120 = dma.done [#allocation14], 6144
    $region81: #{rnn_forward.1} parent=1 // pred_fallthru
      _
    // Predicated region
    $region82: #{rnn_forward.1} parent=1 // pred_check
      _
    $region83: #{rnn_forward.1} parent=1 // pred_check_branch
      %122 = sbr.rel (0) target = $region85
    $region84: #{rnn_forward.1} parent=1 // pred_region
      %123 = dma.done [#allocation14], 6144
    $region85: #{rnn_forward.1} parent=1 // pred_fallthru
      _
    %s126 = sshll.u32 1, 14
    %s127 = sxor.u32 4294967295, %s126
    %s129 = sld [smem:[#allocation0]]
    %s130 = sadd.s32 2, %s129
    %s132 = sshll.u32 7, 26
    %s133 = sxor.u32 4294967295, %s132
    %s134 = sand.u32 0, %s133
    %s135 = sshll.u32 %s130, 26
    %s136 = sor.u32 %s134, %s135
    %s137 = sshll.u32 [#allocation4], 4
    %s138 = int_to_ptr.vmem [resolvable:$true] %s137
    %141 = sst [smem:[#allocation17]] 768
    %s142 = scalar_lea.smem [#allocation17], 1
    %143 = sst [smem:[%s142]] 768
    %s144 = scalar_lea.smem [#allocation17], 2
    %145 = sst [smem:[%s144]] 6
    %s146 = scalar_lea.smem [#allocation17], 3
    %147 = sst [smem:[%s146]] 64
    %s148 = scalar_lea.smem [#allocation17], 4
    %149 = sst [smem:[%s148]] 128
    %s150 = scalar_lea.smem [#allocation17], 5
    %151 = sst [smem:[%s150]] 2
    %s152 = scalar_lea.smem [#allocation17], 6
    %153 = sst [smem:[%s152]] 384
    %s154 = scalar_lea.smem [#allocation17], 7
    %155 = sst [smem:[%s154]] 64
    %s156 = scalar_lea.smem [#allocation17], 8
    %157 = sst [smem:[%s156]] 4
    %159 = dma.general %s14, 12288, %s138, [#allocation7], [#allocation16], [#allocation17], %s136, 0
    %s160 = scalar_lea.sflag [#allocation7], 1
    %s162 = sshll.u32 1, 14
    %s163 = sxor.u32 4294967295, %s162
    %s165 = sadd.s32 2, %s129
    %s167 = sshll.u32 7, 26
    %s168 = sxor.u32 4294967295, %s167
    %s169 = sand.u32 0, %s168
    %s170 = sshll.u32 %s165, 26
    %s171 = sor.u32 %s169, %s170
    %s172 = sshll.u32 [#allocation5], 4
    %s173 = int_to_ptr.vmem [resolvable:$true] %s172
    %176 = sst [smem:[#allocation19]] 256
    %s177 = scalar_lea.smem [#allocation19], 1
    %178 = sst [smem:[%s177]] 256
    %s179 = scalar_lea.smem [#allocation19], 2
    %180 = sst [smem:[%s179]] 2
    %s181 = scalar_lea.smem [#allocation19], 3
    %182 = sst [smem:[%s181]] 64
    %s183 = scalar_lea.smem [#allocation19], 4
    %184 = sst [smem:[%s183]] 128
    %s185 = scalar_lea.smem [#allocation19], 5
    %186 = sst [smem:[%s185]] 2
    %s187 = scalar_lea.smem [#allocation19], 6
    %188 = sst [smem:[%s187]] 128
    %s189 = scalar_lea.smem [#allocation19], 7
    %190 = sst [smem:[%s189]] 64
    %s191 = scalar_lea.smem [#allocation19], 8
    %192 = sst [smem:[%s191]] 4
    %194 = dma.general %s15, 8192, %s173, %s160, [#allocation18], [#allocation19], %s171, 0
    %s195 = scalar_lea.sflag [#allocation7], 2
    %p197 = scmp.lt.u32.totalorder 128, 8
    %p198 = pneg %p197
    // Predicated region
    $region86: #{rnn_forward.1} parent=1 // pred_check
      _
    $region87: #{rnn_forward.1} parent=1 // pred_check_branch
      %200 = sbr.rel (%p197) target = $region89
    $region88: #{rnn_forward.1} parent=1 // pred_region
      %s215 = sand.u32 128, 7
      %p216 = scmp.eq.s32.totalorder %s215, 0
      // Predicated region
      $region101: #{rnn_forward.1} parent=88 // pred_check
        %p217 = pneg %p216
      $region102: #{rnn_forward.1} parent=88 // pred_check_branch
        %219 = sbr.rel (%p217) target = $region104
      $region103: #{rnn_forward.1} parent=88 // pred_region
        loop: start=0, step=1, limit=1
        $region105: #{rnn_forward.1} parent=103 // loop_pre_header
          _
        $region106: #{rnn_forward.1} parent=103 // loop_header
          %s221 = sphi 0, %s225
          %p222 = scmp.ge.s32.totalorder %s221, 1
          %s226 = sphi %s16, %s16
          %s227 = sphi [#allocation6], [#allocation6]
        $region107: #{rnn_forward.1} parent=103 // loop_header_branch
          %224 = sbr.rel (%p222) target = $region111
        $region108: #{rnn_forward.1} parent=103 // loop_body
          %v228 = vld [vmem:[%s226] sm:$0xff]
          %229 = vst [vmem:[%s227] sm:$0xff] %v228
          %v230 = vld [vmem:[%s226 + $0x8] sm:$0xff]
          %231 = vst [vmem:[%s227 + $0x8] sm:$0xff] %v230
          %v232 = vld [vmem:[%s226 + $0x10] sm:$0xff]
          %233 = vst [vmem:[%s227 + $0x10] sm:$0xff] %v232
          %v234 = vld [vmem:[%s226 + $0x18] sm:$0xff]
          %235 = vst [vmem:[%s227 + $0x18] sm:$0xff] %v234
          %v236 = vld [vmem:[%s226 + $0x20] sm:$0xff]
          %237 = vst [vmem:[%s227 + $0x20] sm:$0xff] %v236
          %v238 = vld [vmem:[%s226 + $0x28] sm:$0xff]
          %239 = vst [vmem:[%s227 + $0x28] sm:$0xff] %v238
          %v240 = vld [vmem:[%s226 + $0x30] sm:$0xff]
          %241 = vst [vmem:[%s227 + $0x30] sm:$0xff] %v240
          %v242 = vld [vmem:[%s226 + $0x38] sm:$0xff]
          %243 = vst [vmem:[%s227 + $0x38] sm:$0xff] %v242
          %v244 = vld [vmem:[%s226 + $0x40] sm:$0xff]
          %245 = vst [vmem:[%s227 + $0x40] sm:$0xff] %v244
          %v246 = vld [vmem:[%s226 + $0x48] sm:$0xff]
          %247 = vst [vmem:[%s227 + $0x48] sm:$0xff] %v246
          %v248 = vld [vmem:[%s226 + $0x50] sm:$0xff]
          %249 = vst [vmem:[%s227 + $0x50] sm:$0xff] %v248
          %v250 = vld [vmem:[%s226 + $0x58] sm:$0xff]
          %251 = vst [vmem:[%s227 + $0x58] sm:$0xff] %v250
          %v252 = vld [vmem:[%s226 + $0x60] sm:$0xff]
          %253 = vst [vmem:[%s227 + $0x60] sm:$0xff] %v252
          %v254 = vld [vmem:[%s226 + $0x68] sm:$0xff]
          %255 = vst [vmem:[%s227 + $0x68] sm:$0xff] %v254
          %v256 = vld [vmem:[%s226 + $0x70] sm:$0xff]
          %257 = vst [vmem:[%s227 + $0x70] sm:$0xff] %v256
          %v258 = vld [vmem:[%s226 + $0x78] sm:$0xff]
          %259 = vst [vmem:[%s227 + $0x78] sm:$0xff] %v258
        $region109: #{rnn_forward.1} parent=103 // loop_footer
          %s225 = sadd.s32 1, %s221
        $region110: #{rnn_forward.1} parent=103 // loop_footer_branch
          %220 = sbr.rel target = $region106
        $region111: #{rnn_forward.1} parent=103 // loop_exit
          _
      $region104: #{rnn_forward.1} parent=88 // pred_fallthru
        _
      %p260 = pneg %p216
      // Predicated region
      $region112: #{rnn_forward.1} parent=88 // pred_check
        _
      $region113: #{rnn_forward.1} parent=88 // pred_check_branch
        %262 = sbr.rel (%p216) target = $region115
      $region114: #{rnn_forward.1} parent=88 // pred_region
        %s263 = sand.u32 128, 7
      $region115: #{rnn_forward.1} parent=88 // pred_fallthru
        _
    $region89: #{rnn_forward.1} parent=1 // pred_fallthru
      _
    // Predicated region
    $region90: #{rnn_forward.1} parent=1 // pred_check
      %p201 = pneg %p197
    $region91: #{rnn_forward.1} parent=1 // pred_check_branch
      %203 = sbr.rel (%p201) target = $region93
    $region92: #{rnn_forward.1} parent=1 // pred_region
      %s204 = sshllo.u32 0, 128
      loop: start=0, step=1, limit=1
      $region94: #{rnn_forward.1} parent=92 // loop_pre_header
        _
      $region95: #{rnn_forward.1} parent=92 // loop_header
        %s206 = sphi 0, %s210
        %p207 = scmp.ge.s32.totalorder %s206, 1
        %s211 = sphi %s16, %s16
        %s212 = sphi [#allocation6], [#allocation6]
      $region96: #{rnn_forward.1} parent=92 // loop_header_branch
        %209 = sbr.rel (%p207) target = $region100
      $region97: #{rnn_forward.1} parent=92 // loop_body
        %v213 = vld [vmem:[%s211] sm:%s204]
        %214 = vst [vmem:[%s212] sm:%s204] %v213
      $region98: #{rnn_forward.1} parent=92 // loop_footer
        %s210 = sadd.s32 1, %s206
      $region99: #{rnn_forward.1} parent=92 // loop_footer_branch
        %205 = sbr.rel target = $region95
      $region100: #{rnn_forward.1} parent=92 // loop_exit
        _
    $region93: #{rnn_forward.1} parent=1 // pred_fallthru
      _
    // Predicated region
    $region116: #{rnn_forward.1} parent=1 // pred_check
      _
    $region117: #{rnn_forward.1} parent=1 // pred_check_branch
      %266 = sbr.rel (0) target = $region119
    $region118: #{rnn_forward.1} parent=1 // pred_region
      %267 = vsyncadd %s195, 2048
    $region119: #{rnn_forward.1} parent=1 // pred_fallthru
      _
    %v268 = vld [vmem:[%s10] sm:$0x7]
    %v270 = vlaneseq
    %v271 = vshrl.u32 %v270, 7
    %v272 = vsub.s32 0, %v271
    %v273 = vrot.slane %v268, %v272
    %v274 = vlaneseq
    %v275 = vshrl.u32 %v274, 7
    %v276 = vsub.s32 1, %v275
    %v277 = vrot.slane %v268, %v276
    %v278 = vlaneseq
    %v279 = vshrl.u32 %v278, 7
    %v280 = vsub.s32 2, %v279
    %v281 = vrot.slane %v268, %v280
    %285 = vst [vmem:[#allocation2] sm:$0xff] %v273
    %286 = vst [vmem:[#allocation2 + $0x8] sm:$0xff] %v277
    %287 = vst [vmem:[#allocation2 + $0x10] sm:$0xff] %v281
    %288 = vst [vmem:[#allocation2 + $0x18] sm:$0xff] %v273
    %289 = vst [vmem:[#allocation2 + $0x20] sm:$0xff] %v277
    %290 = vst [vmem:[#allocation2 + $0x28] sm:$0xff] %v281
    %291 = vst [vmem:[#allocation2 + $0x30] sm:$0xff] %v273
    %292 = vst [vmem:[#allocation2 + $0x38] sm:$0xff] %v277
    %293 = vst [vmem:[#allocation2 + $0x40] sm:$0xff] %v281
    %294 = vst [vmem:[#allocation2 + $0x48] sm:$0xff] %v273
    %295 = vst [vmem:[#allocation2 + $0x50] sm:$0xff] %v277
    %296 = vst [vmem:[#allocation2 + $0x58] sm:$0xff] %v281
    %297 = vst [vmem:[#allocation2 + $0x60] sm:$0xff] %v273
    %298 = vst [vmem:[#allocation2 + $0x68] sm:$0xff] %v277
    %299 = vst [vmem:[#allocation2 + $0x70] sm:$0xff] %v281
    %300 = vst [vmem:[#allocation2 + $0x78] sm:$0xff] %v273
    %301 = vst [vmem:[#allocation2 + $0x80] sm:$0xff] %v277
    %302 = vst [vmem:[#allocation2 + $0x88] sm:$0xff] %v281
    %303 = vst [vmem:[#allocation2 + $0x90] sm:$0xff] %v273
    %304 = vst [vmem:[#allocation2 + $0x98] sm:$0xff] %v277
    %305 = vst [vmem:[#allocation2 + $0xa0] sm:$0xff] %v281
    %306 = vst [vmem:[#allocation2 + $0xa8] sm:$0xff] %v273
    %307 = vst [vmem:[#allocation2 + $0xb0] sm:$0xff] %v277
    %308 = vst [vmem:[#allocation2 + $0xb8] sm:$0xff] %v281
    %v309 = vld [vmem:[%s11] sm:$0x7]
    %v311 = vlaneseq
    %v312 = vshrl.u32 %v311, 7
    %v313 = vsub.s32 0, %v312
    %v314 = vrot.slane %v309, %v313
    %v315 = vlaneseq
    %v316 = vshrl.u32 %v315, 7
    %v317 = vsub.s32 1, %v316
    %v318 = vrot.slane %v309, %v317
    %v319 = vlaneseq
    %v320 = vshrl.u32 %v319, 7
    %v321 = vsub.s32 2, %v320
    %v322 = vrot.slane %v309, %v321
    %326 = vst [vmem:[#allocation3] sm:$0xff] %v314
    %327 = vst [vmem:[#allocation3 + $0x8] sm:$0xff] %v318
    %328 = vst [vmem:[#allocation3 + $0x10] sm:$0xff] %v322
    %329 = vst [vmem:[#allocation3 + $0x18] sm:$0xff] %v314
    %330 = vst [vmem:[#allocation3 + $0x20] sm:$0xff] %v318
    %331 = vst [vmem:[#allocation3 + $0x28] sm:$0xff] %v322
    %332 = vst [vmem:[#allocation3 + $0x30] sm:$0xff] %v314
    %333 = vst [vmem:[#allocation3 + $0x38] sm:$0xff] %v318
    %334 = vst [vmem:[#allocation3 + $0x40] sm:$0xff] %v322
    %335 = vst [vmem:[#allocation3 + $0x48] sm:$0xff] %v314
    %336 = vst [vmem:[#allocation3 + $0x50] sm:$0xff] %v318
    %337 = vst [vmem:[#allocation3 + $0x58] sm:$0xff] %v322
    %338 = vst [vmem:[#allocation3 + $0x60] sm:$0xff] %v314
    %339 = vst [vmem:[#allocation3 + $0x68] sm:$0xff] %v318
    %340 = vst [vmem:[#allocation3 + $0x70] sm:$0xff] %v322
    %341 = vst [vmem:[#allocation3 + $0x78] sm:$0xff] %v314
    %342 = vst [vmem:[#allocation3 + $0x80] sm:$0xff] %v318
    %343 = vst [vmem:[#allocation3 + $0x88] sm:$0xff] %v322
    %344 = vst [vmem:[#allocation3 + $0x90] sm:$0xff] %v314
    %345 = vst [vmem:[#allocation3 + $0x98] sm:$0xff] %v318
    %346 = vst [vmem:[#allocation3 + $0xa0] sm:$0xff] %v322
    %347 = vst [vmem:[#allocation3 + $0xa8] sm:$0xff] %v314
    %348 = vst [vmem:[#allocation3 + $0xb0] sm:$0xff] %v318
    %349 = vst [vmem:[#allocation3 + $0xb8] sm:$0xff] %v322
    %v350 = vld [vmem:[%s0] sm:$0xff]
    %v351 = vld [vmem:[%s0 + $0x8] sm:$0xff]
    %v352 = vld [vmem:[%s0 + $0x10] sm:$0xff]
    %v353 = vld [vmem:[%s0 + $0x18] sm:$0xff]
    %v354 = vld [vmem:[%s0 + $0x20] sm:$0xff]
    %v355 = vld [vmem:[%s0 + $0x28] sm:$0xff]
    %v356 = vld [vmem:[%s0 + $0x30] sm:$0xff]
    %v357 = vld [vmem:[%s0 + $0x38] sm:$0xff]
    %v358 = vld [vmem:[#allocation8] sm:$0xff]
    %v359 = vld [vmem:[#allocation8 + $0x8] sm:$0xff]
    %v360 = vld [vmem:[#allocation8 + $0x10] sm:$0xff]
    %v361 = vld [vmem:[#allocation8 + $0x18] sm:$0xf]
    %v362 = vld [vmem:[#allocation8 + $0x20] sm:$0xf]
    %v363 = vld [vmem:[#allocation8 + $0x28] sm:$0xf]
    %v364 = vld [vmem:[%s4] sm:$0x7]
    %v366 = vlaneseq
    %v367 = vshrl.u32 %v366, 7
    %v368 = vsub.s32 0, %v367
    %v369 = vrot.slane %v364, %v368
    %v370 = vlaneseq
    %v371 = vshrl.u32 %v370, 7
    %v372 = vsub.s32 1, %v371
    %v373 = vrot.slane %v364, %v372
    %v374 = vlaneseq
    %v375 = vshrl.u32 %v374, 7
    %v376 = vsub.s32 2, %v375
    %v377 = vrot.slane %v364, %v376
    %vm381 = vcmask 97280
    %v383 = vsel %vm381, %v350, 0
    %v386 = vsel %vm381, %v351, 0
    %v389 = vsel %vm381, %v352, 0
    %v392 = vsel %vm381, %v353, 0
    %v395 = vsel %vm381, %v354, 0
    %v398 = vsel %vm381, %v355, 0
    %v401 = vsel %vm381, %v356, 0
    %v404 = vsel %vm381, %v357, 0
    %vm406 = vcmask 1043456
    %v408 = vsel %vm406, %v361, 0
    %v411 = vsel %vm406, %v362, 0
    %v414 = vsel %vm406, %v363, 0
    %416 = vmatprep.subr.mxu0 %v359
    %417 = vmatpush1.msra.mxu0 %v358
    %418 = vmatprep.subr.mxu0 %v411
    %419 = vmatpush1.msra.mxu0 %v408
    %420 = vmatprep.subr.mxu0 0.0
    %421 = vmatpush1.msra.mxu0 0.0
    %422 = vmatprep.subr.mxu0 0.0
    %423 = vmatpush1.msra.mxu0 0.0
    %424 = vmatprep.subr.mxu0 0.0
    %425 = vmatpush1.msra.mxu0 0.0
    %426 = vmatprep.subr.mxu0 0.0
    %427 = vmatpush1.msra.mxu0 0.0
    %428 = vmatprep.subr.mxu0 0.0
    %429 = vmatpush1.msra.mxu0 0.0
    %430 = vmatprep.subr.mxu0 0.0
    %431 = vmatpush1.msra.mxu0 0.0
    %432 = vmatprep.subr.mxu0 0.0
    %433 = vmatpush1.msra.mxu0 0.0
    %434 = vmatprep.subr.mxu0 0.0
    %435 = vmatpush1.msra.mxu0 0.0
    %436 = vmatprep.subr.mxu0 0.0
    %437 = vmatpush1.msra.mxu0 0.0
    %438 = vmatprep.subr.mxu0 0.0
    %439 = vmatpush1.msra.mxu0 0.0
    %440 = vmatprep.subr.mxu0 0.0
    %441 = vmatpush1.msra.mxu0 0.0
    %442 = vmatprep.subr.mxu0 0.0
    %443 = vmatpush1.msra.mxu0 0.0
    %444 = vmatprep.subr.mxu0 0.0
    %445 = vmatpush1.msra.mxu0 0.0
    %446 = vmatprep.subr.mxu0 0.0
    %447 = vmatpush1.msra.mxu0 0.0
    %448 = vmatprep.subr.mxu0 0.0
    %449 = vmatpush1.msra.mxu0 0.0
    %450 = vmatprep.subr.mxu0 0.0
    %451 = vmatpush1.msra.mxu0 0.0
    %452 = vmatprep.subr.mxu0 0.0
    %453 = vmatpush1.msra.mxu0 0.0
    %454 = vmatprep.subr.mxu0 0.0
    %455 = vmatpush1.msra.mxu0 0.0
    %456 = vmatprep.subr.mxu0 0.0
    %457 = vmatpush1.msra.mxu0 0.0
    %458 = vmatprep.subr.mxu0 0.0
    %459 = vmatpush1.msra.mxu0 0.0
    %460 = vmatprep.subr.mxu0 0.0
    %461 = vmatpush1.msra.mxu0 0.0
    %462 = vmatprep.subr.mxu0 0.0
    %463 = vmatpush1.msra.mxu0 0.0
    %464 = vmatprep.subr.mxu0 0.0
    %465 = vmatpush1.msra.mxu0 0.0
    %466 = vmatprep.subr.mxu0 0.0
    %467 = vmatpush1.msra.mxu0 0.0
    %468 = vmatprep.subr.mxu0 0.0
    %469 = vmatpush1.msra.mxu0 0.0
    %470 = vmatprep.subr.mxu0 0.0
    %471 = vmatpush1.msra.mxu0 0.0
    %472 = vmatprep.subr.mxu0 0.0
    %473 = vmatpush1.msra.mxu0 0.0
    %474 = vmatprep.subr.mxu0 0.0
    %475 = vmatpush1.msra.mxu0 0.0
    %476 = vmatprep.subr.mxu0 0.0
    %477 = vmatpush1.msra.mxu0 0.0
    %478 = vmatprep.subr.mxu0 0.0
    %479 = vmatpush1.msra.mxu0 0.0
    %480 = vmatprep.mubr.f32.mxu0 0.0
    %481 = vmatmul.mubr.f32.gmra.mrb[0].mxu0 %v383
    %v482 = vpop.f32.mrb[0].mxu0
    %v483 = vadd.f32 %v369, %v482
    %v484 = vpop.f32.mrb[0].mxu0
    %v485 = vadd.f32 %v373, %v484
    %486 = vmatprep.mubr.f32.mxu0 0.0
    %487 = vmatmul.mubr.f32.gmra.mrb[0].mxu0 %v386
    %v488 = vpop.f32.mrb[0].mxu0
    %v489 = vadd.f32 %v369, %v488
    %v490 = vpop.f32.mrb[0].mxu0
    %v491 = vadd.f32 %v373, %v490
    %492 = vmatprep.mubr.f32.mxu0 0.0
    %493 = vmatmul.mubr.f32.gmra.mrb[0].mxu0 %v389
    %v494 = vpop.f32.mrb[0].mxu0
    %v495 = vadd.f32 %v369, %v494
    %v496 = vpop.f32.mrb[0].mxu0
    %v497 = vadd.f32 %v373, %v496
    %498 = vmatprep.mubr.f32.mxu0 0.0
    %499 = vmatmul.mubr.f32.gmra.mrb[0].mxu0 %v392
    %v500 = vpop.f32.mrb[0].mxu0
    %v501 = vadd.f32 %v369, %v500
    %v502 = vpop.f32.mrb[0].mxu0
    %v503 = vadd.f32 %v373, %v502
    %504 = vmatprep.mubr.f32.mxu0 0.0
    %505 = vmatmul.mubr.f32.gmra.mrb[0].mxu0 %v395
    %v506 = vpop.f32.mrb[0].mxu0
    %v507 = vadd.f32 %v369, %v506
    %v508 = vpop.f32.mrb[0].mxu0
    %v509 = vadd.f32 %v373, %v508
    %510 = vmatprep.mubr.f32.mxu0 0.0
    %511 = vmatmul.mubr.f32.gmra.mrb[0].mxu0 %v398
    %v512 = vpop.f32.mrb[0].mxu0
    %v513 = vadd.f32 %v369, %v512
    %v514 = vpop.f32.mrb[0].mxu0
    %v515 = vadd.f32 %v373, %v514
    %516 = vmatprep.mubr.f32.mxu0 0.0
    %517 = vmatmul.mubr.f32.gmra.mrb[0].mxu0 %v401
    %v518 = vpop.f32.mrb[0].mxu0
    %v519 = vadd.f32 %v369, %v518
    %v520 = vpop.f32.mrb[0].mxu0
    %v521 = vadd.f32 %v373, %v520
    %522 = vmatprep.mubr.f32.mxu0 0.0
    %523 = vmatmul.mubr.f32.gmra.mrb[0].mxu0 %v404
    %v524 = vpop.f32.mrb[0].mxu0
    %v525 = vadd.f32 %v369, %v524
    %v526 = vpop.f32.mrb[0].mxu0
    %v527 = vadd.f32 %v373, %v526
    %528 = vdwg.mxu0
    %529 = vmatprep.subr.mxu0 0.0
    %530 = vmatpush1.msra.mxu0 %v360
    %531 = vmatprep.subr.mxu0 0.0
    %532 = vmatpush1.msra.mxu0 %v414
    %533 = vmatprep.subr.mxu0 0.0
    %534 = vmatpush1.msra.mxu0 0.0
    %535 = vmatprep.subr.mxu0 0.0
    %536 = vmatpush1.msra.mxu0 0.0
    %537 = vmatprep.subr.mxu0 0.0
    %538 = vmatpush1.msra.mxu0 0.0
    %539 = vmatprep.subr.mxu0 0.0
    %540 = vmatpush1.msra.mxu0 0.0
    %541 = vmatprep.subr.mxu0 0.0
    %542 = vmatpush1.msra.mxu0 0.0
    %543 = vmatprep.subr.mxu0 0.0
    %544 = vmatpush1.msra.mxu0 0.0
    %545 = vmatprep.subr.mxu0 0.0
    %546 = vmatpush1.msra.mxu0 0.0
    %547 = vmatprep.subr.mxu0 0.0
    %548 = vmatpush1.msra.mxu0 0.0
    %549 = vmatprep.subr.mxu0 0.0
    %550 = vmatpush1.msra.mxu0 0.0
    %551 = vmatprep.subr.mxu0 0.0
    %552 = vmatpush1.msra.mxu0 0.0
    %553 = vmatprep.subr.mxu0 0.0
    %554 = vmatpush1.msra.mxu0 0.0
    %555 = vmatprep.subr.mxu0 0.0
    %556 = vmatpush1.msra.mxu0 0.0
    %557 = vmatprep.subr.mxu0 0.0
    %558 = vmatpush1.msra.mxu0 0.0
    %559 = vmatprep.subr.mxu0 0.0
    %560 = vmatpush1.msra.mxu0 0.0
    %561 = vmatprep.subr.mxu0 0.0
    %562 = vmatpush1.msra.mxu0 0.0
    %563 = vmatprep.subr.mxu0 0.0
    %564 = vmatpush1.msra.mxu0 0.0
    %565 = vmatprep.subr.mxu0 0.0
    %566 = vmatpush1.msra.mxu0 0.0
    %567 = vmatprep.subr.mxu0 0.0
    %568 = vmatpush1.msra.mxu0 0.0
    %569 = vmatprep.subr.mxu0 0.0
    %570 = vmatpush1.msra.mxu0 0.0
    %571 = vmatprep.subr.mxu0 0.0
    %572 = vmatpush1.msra.mxu0 0.0
    %573 = vmatprep.subr.mxu0 0.0
    %574 = vmatpush1.msra.mxu0 0.0
    %575 = vmatprep.subr.mxu0 0.0
    %576 = vmatpush1.msra.mxu0 0.0
    %577 = vmatprep.subr.mxu0 0.0
    %578 = vmatpush1.msra.mxu0 0.0
    %579 = vmatprep.subr.mxu0 0.0
    %580 = vmatpush1.msra.mxu0 0.0
    %581 = vmatprep.subr.mxu0 0.0
    %582 = vmatpush1.msra.mxu0 0.0
    %583 = vmatprep.subr.mxu0 0.0
    %584 = vmatpush1.msra.mxu0 0.0
    %585 = vmatprep.subr.mxu0 0.0
    %586 = vmatpush1.msra.mxu0 0.0
    %587 = vmatprep.subr.mxu0 0.0
    %588 = vmatpush1.msra.mxu0 0.0
    %589 = vmatprep.subr.mxu0 0.0
    %590 = vmatpush1.msra.mxu0 0.0
    %591 = vmatprep.subr.mxu0 0.0
    %592 = vmatpush1.msra.mxu0 0.0
    %593 = vmatprep.mubr.f32.mxu0 0.0
    %594 = vmatmul.mubr.f32.gmra.mrb[0].mxu0 %v383
    %v595 = vpop.f32.mrb[0].mxu0
    %v596 = vadd.f32 %v377, %v595
    %v597 = vpop.f32.mrb[0].mxu0
    %598 = vmatprep.mubr.f32.mxu0 0.0
    %599 = vmatmul.mubr.f32.gmra.mrb[0].mxu0 %v386
    %v600 = vpop.f32.mrb[0].mxu0
    %v601 = vadd.f32 %v377, %v600
    %v602 = vpop.f32.mrb[0].mxu0
    %603 = vmatprep.mubr.f32.mxu0 0.0
    %604 = vmatmul.mubr.f32.gmra.mrb[0].mxu0 %v389
    %v605 = vpop.f32.mrb[0].mxu0
    %v606 = vadd.f32 %v377, %v605
    %v607 = vpop.f32.mrb[0].mxu0
    %608 = vmatprep.mubr.f32.mxu0 0.0
    %609 = vmatmul.mubr.f32.gmra.mrb[0].mxu0 %v392
    %v610 = vpop.f32.mrb[0].mxu0
    %v611 = vadd.f32 %v377, %v610
    %v612 = vpop.f32.mrb[0].mxu0
    %613 = vmatprep.mubr.f32.mxu0 0.0
    %614 = vmatmul.mubr.f32.gmra.mrb[0].mxu0 %v395
    %v615 = vpop.f32.mrb[0].mxu0
    %v616 = vadd.f32 %v377, %v615
    %v617 = vpop.f32.mrb[0].mxu0
    %618 = vmatprep.mubr.f32.mxu0 0.0
    %619 = vmatmul.mubr.f32.gmra.mrb[0].mxu0 %v398
    %v620 = vpop.f32.mrb[0].mxu0
    %v621 = vadd.f32 %v377, %v620
    %v622 = vpop.f32.mrb[0].mxu0
    %623 = vmatprep.mubr.f32.mxu0 0.0
    %624 = vmatmul.mubr.f32.gmra.mrb[0].mxu0 %v401
    %v625 = vpop.f32.mrb[0].mxu0
    %v626 = vadd.f32 %v377, %v625
    %v627 = vpop.f32.mrb[0].mxu0
    %628 = vmatprep.mubr.f32.mxu0 0.0
    %629 = vmatmul.mubr.f32.gmra.mrb[0].mxu0 %v404
    %v630 = vpop.f32.mrb[0].mxu0
    %v631 = vadd.f32 %v377, %v630
    %v632 = vpop.f32.mrb[0].mxu0
    %633 = vdwg.mxu0
    %v634 = vld [vmem:[#allocation10] sm:$0xff]
    %v635 = vld [vmem:[#allocation10 + $0x8] sm:$0xff]
    %v636 = vld [vmem:[#allocation10 + $0x10] sm:$0xff]
    %v637 = vld [vmem:[#allocation10 + $0x18] sm:$0xf]
    %v638 = vld [vmem:[#allocation10 + $0x20] sm:$0xf]
    %v639 = vld [vmem:[#allocation10 + $0x28] sm:$0xf]
    %v640 = vld [vmem:[%s5] sm:$0x7]
    %v642 = vlaneseq
    %v643 = vshrl.u32 %v642, 7
    %v644 = vsub.s32 0, %v643
    %v645 = vrot.slane %v640, %v644
    %v646 = vlaneseq
    %v647 = vshrl.u32 %v646, 7
    %v648 = vsub.s32 1, %v647
    %v649 = vrot.slane %v640, %v648
    %v650 = vlaneseq
    %v651 = vshrl.u32 %v650, 7
    %v652 = vsub.s32 2, %v651
    %v653 = vrot.slane %v640, %v652
    %v658 = vsel %vm406, %v637, 0
    %v661 = vsel %vm406, %v638, 0
    %v664 = vsel %vm406, %v639, 0
    %666 = vmatprep.subr.mxu0 %v635
    %667 = vmatpush1.msra.mxu0 %v634
    %668 = vmatprep.subr.mxu0 %v661
    %669 = vmatpush1.msra.mxu0 %v658
    %670 = vmatprep.subr.mxu0 0.0
    %671 = vmatpush1.msra.mxu0 0.0
    %672 = vmatprep.subr.mxu0 0.0
    %673 = vmatpush1.msra.mxu0 0.0
    %674 = vmatprep.subr.mxu0 0.0
    %675 = vmatpush1.msra.mxu0 0.0
    %676 = vmatprep.subr.mxu0 0.0
    %677 = vmatpush1.msra.mxu0 0.0
    %678 = vmatprep.subr.mxu0 0.0
    %679 = vmatpush1.msra.mxu0 0.0
    %680 = vmatprep.subr.mxu0 0.0
    %681 = vmatpush1.msra.mxu0 0.0
    %682 = vmatprep.subr.mxu0 0.0
    %683 = vmatpush1.msra.mxu0 0.0
    %684 = vmatprep.subr.mxu0 0.0
    %685 = vmatpush1.msra.mxu0 0.0
    %686 = vmatprep.subr.mxu0 0.0
    %687 = vmatpush1.msra.mxu0 0.0
    %688 = vmatprep.subr.mxu0 0.0
    %689 = vmatpush1.msra.mxu0 0.0
    %690 = vmatprep.subr.mxu0 0.0
    %691 = vmatpush1.msra.mxu0 0.0
    %692 = vmatprep.subr.mxu0 0.0
    %693 = vmatpush1.msra.mxu0 0.0
    %694 = vmatprep.subr.mxu0 0.0
    %695 = vmatpush1.msra.mxu0 0.0
    %696 = vmatprep.subr.mxu0 0.0
    %697 = vmatpush1.msra.mxu0 0.0
    %698 = vmatprep.subr.mxu0 0.0
    %699 = vmatpush1.msra.mxu0 0.0
    %700 = vmatprep.subr.mxu0 0.0
    %701 = vmatpush1.msra.mxu0 0.0
    %702 = vmatprep.subr.mxu0 0.0
    %703 = vmatpush1.msra.mxu0 0.0
    %704 = vmatprep.subr.mxu0 0.0
    %705 = vmatpush1.msra.mxu0 0.0
    %706 = vmatprep.subr.mxu0 0.0
    %707 = vmatpush1.msra.mxu0 0.0
    %708 = vmatprep.subr.mxu0 0.0
    %709 = vmatpush1.msra.mxu0 0.0
    %710 = vmatprep.subr.mxu0 0.0
    %711 = vmatpush1.msra.mxu0 0.0
    %712 = vmatprep.subr.mxu0 0.0
    %713 = vmatpush1.msra.mxu0 0.0
    %714 = vmatprep.subr.mxu0 0.0
    %715 = vmatpush1.msra.mxu0 0.0
    %716 = vmatprep.subr.mxu0 0.0
    %717 = vmatpush1.msra.mxu0 0.0
    %718 = vmatprep.subr.mxu0 0.0
    %719 = vmatpush1.msra.mxu0 0.0
    %720 = vmatprep.subr.mxu0 0.0
    %721 = vmatpush1.msra.mxu0 0.0
    %722 = vmatprep.subr.mxu0 0.0
    %723 = vmatpush1.msra.mxu0 0.0
    %724 = vmatprep.subr.mxu0 0.0
    %725 = vmatpush1.msra.mxu0 0.0
    %726 = vmatprep.subr.mxu0 0.0
    %727 = vmatpush1.msra.mxu0 0.0
    %728 = vmatprep.subr.mxu0 0.0
    %729 = vmatpush1.msra.mxu0 0.0
    %730 = vmatprep.mubr.f32.mxu0 0.0
    %731 = vmatmul.mubr.f32.gmra.mrb[0].mxu0 %v383
    %v732 = vpop.f32.mrb[0].mxu0
    %v733 = vadd.f32 %v645, %v732
    %v734 = vpop.f32.mrb[0].mxu0
    %v735 = vadd.f32 %v649, %v734
    %736 = vmatprep.mubr.f32.mxu0 0.0
    %737 = vmatmul.mubr.f32.gmra.mrb[0].mxu0 %v386
    %v738 = vpop.f32.mrb[0].mxu0
    %v739 = vadd.f32 %v645, %v738
    %v740 = vpop.f32.mrb[0].mxu0
    %v741 = vadd.f32 %v649, %v740
    %742 = vmatprep.mubr.f32.mxu0 0.0
    %743 = vmatmul.mubr.f32.gmra.mrb[0].mxu0 %v389
    %v744 = vpop.f32.mrb[0].mxu0
    %v745 = vadd.f32 %v645, %v744
    %v746 = vpop.f32.mrb[0].mxu0
    %v747 = vadd.f32 %v649, %v746
    %748 = vmatprep.mubr.f32.mxu0 0.0
    %749 = vmatmul.mubr.f32.gmra.mrb[0].mxu0 %v392
    %v750 = vpop.f32.mrb[0].mxu0
    %v751 = vadd.f32 %v645, %v750
    %v752 = vpop.f32.mrb[0].mxu0
    %v753 = vadd.f32 %v649, %v752
    %754 = vmatprep.mubr.f32.mxu0 0.0
    %755 = vmatmul.mubr.f32.gmra.mrb[0].mxu0 %v395
    %v756 = vpop.f32.mrb[0].mxu0
    %v757 = vadd.f32 %v645, %v756
    %v758 = vpop.f32.mrb[0].mxu0
    %v759 = vadd.f32 %v649, %v758
    %760 = vmatprep.mubr.f32.mxu0 0.0
    %761 = vmatmul.mubr.f32.gmra.mrb[0].mxu0 %v398
    %v762 = vpop.f32.mrb[0].mxu0
    %v763 = vadd.f32 %v645, %v762
    %v764 = vpop.f32.mrb[0].mxu0
    %v765 = vadd.f32 %v649, %v764
    %766 = vmatprep.mubr.f32.mxu0 0.0
    %767 = vmatmul.mubr.f32.gmra.mrb[0].mxu0 %v401
    %v768 = vpop.f32.mrb[0].mxu0
    %v769 = vadd.f32 %v645, %v768
    %v770 = vpop.f32.mrb[0].mxu0
    %v771 = vadd.f32 %v649, %v770
    %772 = vmatprep.mubr.f32.mxu0 0.0
    %773 = vmatmul.mubr.f32.gmra.mrb[0].mxu0 %v404
    %v774 = vpop.f32.mrb[0].mxu0
    %v775 = vadd.f32 %v645, %v774
    %v776 = vpop.f32.mrb[0].mxu0
    %v777 = vadd.f32 %v649, %v776
    %778 = vdwg.mxu0
    %779 = vmatprep.subr.mxu0 0.0
    %780 = vmatpush1.msra.mxu0 %v636
    %781 = vmatprep.subr.mxu0 0.0
    %782 = vmatpush1.msra.mxu0 %v664
    %783 = vmatprep.subr.mxu0 0.0
    %784 = vmatpush1.msra.mxu0 0.0
    %785 = vmatprep.subr.mxu0 0.0
    %786 = vmatpush1.msra.mxu0 0.0
    %787 = vmatprep.subr.mxu0 0.0
    %788 = vmatpush1.msra.mxu0 0.0
    %789 = vmatprep.subr.mxu0 0.0
    %790 = vmatpush1.msra.mxu0 0.0
    %791 = vmatprep.subr.mxu0 0.0
    %792 = vmatpush1.msra.mxu0 0.0
    %793 = vmatprep.subr.mxu0 0.0
    %794 = vmatpush1.msra.mxu0 0.0
    %795 = vmatprep.subr.mxu0 0.0
    %796 = vmatpush1.msra.mxu0 0.0
    %797 = vmatprep.subr.mxu0 0.0
    %798 = vmatpush1.msra.mxu0 0.0
    %799 = vmatprep.subr.mxu0 0.0
    %800 = vmatpush1.msra.mxu0 0.0
    %801 = vmatprep.subr.mxu0 0.0
    %802 = vmatpush1.msra.mxu0 0.0
    %803 = vmatprep.subr.mxu0 0.0
    %804 = vmatpush1.msra.mxu0 0.0
    %805 = vmatprep.subr.mxu0 0.0
    %806 = vmatpush1.msra.mxu0 0.0
    %807 = vmatprep.subr.mxu0 0.0
    %808 = vmatpush1.msra.mxu0 0.0
    %809 = vmatprep.subr.mxu0 0.0
    %810 = vmatpush1.msra.mxu0 0.0
    %811 = vmatprep.subr.mxu0 0.0
    %812 = vmatpush1.msra.mxu0 0.0
    %813 = vmatprep.subr.mxu0 0.0
    %814 = vmatpush1.msra.mxu0 0.0
    %815 = vmatprep.subr.mxu0 0.0
    %816 = vmatpush1.msra.mxu0 0.0
    %817 = vmatprep.subr.mxu0 0.0
    %818 = vmatpush1.msra.mxu0 0.0
    %819 = vmatprep.subr.mxu0 0.0
    %820 = vmatpush1.msra.mxu0 0.0
    %821 = vmatprep.subr.mxu0 0.0
    %822 = vmatpush1.msra.mxu0 0.0
    %823 = vmatprep.subr.mxu0 0.0
    %824 = vmatpush1.msra.mxu0 0.0
    %825 = vmatprep.subr.mxu0 0.0
    %826 = vmatpush1.msra.mxu0 0.0
    %827 = vmatprep.subr.mxu0 0.0
    %828 = vmatpush1.msra.mxu0 0.0
    %829 = vmatprep.subr.mxu0 0.0
    %830 = vmatpush1.msra.mxu0 0.0
    %831 = vmatprep.subr.mxu0 0.0
    %832 = vmatpush1.msra.mxu0 0.0
    %833 = vmatprep.subr.mxu0 0.0
    %834 = vmatpush1.msra.mxu0 0.0
    %835 = vmatprep.subr.mxu0 0.0
    %836 = vmatpush1.msra.mxu0 0.0
    %837 = vmatprep.subr.mxu0 0.0
    %838 = vmatpush1.msra.mxu0 0.0
    %839 = vmatprep.subr.mxu0 0.0
    %840 = vmatpush1.msra.mxu0 0.0
    %841 = vmatprep.subr.mxu0 0.0
    %842 = vmatpush1.msra.mxu0 0.0
    %843 = vmatprep.mubr.f32.mxu0 0.0
    %844 = vmatmul.mubr.f32.gmra.mrb[0].mxu0 %v383
    %v845 = vpop.f32.mrb[0].mxu0
    %v846 = vadd.f32 %v653, %v845
    %v847 = vpop.f32.mrb[0].mxu0
    %848 = vmatprep.mubr.f32.mxu0 0.0
    %849 = vmatmul.mubr.f32.gmra.mrb[0].mxu0 %v386
    %v850 = vpop.f32.mrb[0].mxu0
    %v851 = vadd.f32 %v653, %v850
    %v852 = vpop.f32.mrb[0].mxu0
    %853 = vmatprep.mubr.f32.mxu0 0.0
    %854 = vmatmul.mubr.f32.gmra.mrb[0].mxu0 %v389
    %v855 = vpop.f32.mrb[0].mxu0
    %v856 = vadd.f32 %v653, %v855
    %v857 = vpop.f32.mrb[0].mxu0
    %858 = vmatprep.mubr.f32.mxu0 0.0
    %859 = vmatmul.mubr.f32.gmra.mrb[0].mxu0 %v392
    %v860 = vpop.f32.mrb[0].mxu0
    %v861 = vadd.f32 %v653, %v860
    %v862 = vpop.f32.mrb[0].mxu0
    %863 = vmatprep.mubr.f32.mxu0 0.0
    %864 = vmatmul.mubr.f32.gmra.mrb[0].mxu0 %v395
    %v865 = vpop.f32.mrb[0].mxu0
    %v866 = vadd.f32 %v653, %v865
    %v867 = vpop.f32.mrb[0].mxu0
    %868 = vmatprep.mubr.f32.mxu0 0.0
    %869 = vmatmul.mubr.f32.gmra.mrb[0].mxu0 %v398
    %v870 = vpop.f32.mrb[0].mxu0
    %v871 = vadd.f32 %v653, %v870
    %v872 = vpop.f32.mrb[0].mxu0
    %873 = vmatprep.mubr.f32.mxu0 0.0
    %874 = vmatmul.mubr.f32.gmra.mrb[0].mxu0 %v401
    %v875 = vpop.f32.mrb[0].mxu0
    %v876 = vadd.f32 %v653, %v875
    %v877 = vpop.f32.mrb[0].mxu0
    %878 = vmatprep.mubr.f32.mxu0 0.0
    %879 = vmatmul.mubr.f32.gmra.mrb[0].mxu0 %v404
    %v880 = vpop.f32.mrb[0].mxu0
    %v881 = vadd.f32 %v653, %v880
    %v882 = vpop.f32.mrb[0].mxu0
    %883 = vdwg.mxu0
    %v884 = vld [vmem:[%s6] sm:$0x1]
    %v886 = vlaneseq
    %v887 = vshrl.u32 %v886, 7
    %v888 = vsub.s32 0, %v887
    %v889 = vrot.slane %v884, %v888
    %v891 = vld [vmem:[%s7] sm:$0x1]
    %v893 = vlaneseq
    %v894 = vshrl.u32 %v893, 7
    %v895 = vsub.s32 0, %v894
    %v896 = vrot.slane %v891, %v895
    %v898 = vld [vmem:[#allocation12] sm:$0xff]
    %v899 = vld [vmem:[#allocation12 + $0x8] sm:$0xff]
    %v900 = vld [vmem:[#allocation12 + $0x10] sm:$0xff]
    %v901 = vld [vmem:[#allocation12 + $0x18] sm:$0xff]
    %v902 = vld [vmem:[#allocation12 + $0x20] sm:$0xff]
    %v903 = vld [vmem:[#allocation12 + $0x28] sm:$0xff]
    %v904 = vld [vmem:[#allocation12 + $0x30] sm:$0xff]
    %v905 = vld [vmem:[#allocation12 + $0x38] sm:$0xff]
    %v906 = vld [vmem:[#allocation12 + $0x40] sm:$0xff]
    %v907 = vld [vmem:[#allocation12 + $0x48] sm:$0xff]
    %v908 = vld [vmem:[#allocation12 + $0x50] sm:$0xff]
    %v909 = vld [vmem:[#allocation12 + $0x58] sm:$0xff]
    %v910 = vld [vmem:[#allocation12 + $0x60] sm:$0xff]
    %v911 = vld [vmem:[#allocation12 + $0x68] sm:$0xff]
    %v912 = vld [vmem:[#allocation12 + $0x70] sm:$0xff]
    %v913 = vld [vmem:[#allocation12 + $0x78] sm:$0xff]
    %v914 = vld [vmem:[#allocation12 + $0x80] sm:$0xff]
    %v915 = vld [vmem:[#allocation12 + $0x88] sm:$0xff]
    %v916 = vld [vmem:[#allocation12 + $0x90] sm:$0xff]
    %v917 = vld [vmem:[#allocation12 + $0x98] sm:$0xff]
    %v918 = vld [vmem:[#allocation12 + $0xa0] sm:$0xff]
    %v919 = vld [vmem:[#allocation12 + $0xa8] sm:$0xff]
    %v920 = vld [vmem:[#allocation12 + $0xb0] sm:$0xff]
    %v921 = vld [vmem:[#allocation12 + $0xb8] sm:$0xff]
    %v922 = vld [vmem:[#allocation12 + $0xc0] sm:$0xff]
    %v923 = vld [vmem:[#allocation12 + $0xc8] sm:$0xff]
    %v924 = vld [vmem:[#allocation12 + $0xd0] sm:$0xff]
    %v925 = vld [vmem:[#allocation12 + $0xd8] sm:$0xff]
    %v926 = vld [vmem:[#allocation12 + $0xe0] sm:$0xff]
    %v927 = vld [vmem:[#allocation12 + $0xe8] sm:$0xff]
    %v928 = vld [vmem:[#allocation12 + $0xf0] sm:$0xff]
    %v929 = vld [vmem:[#allocation12 + $0xf8] sm:$0xff]
    %v930 = vld [vmem:[#allocation12 + $0x100] sm:$0xff]
    %v931 = vld [vmem:[#allocation12 + $0x108] sm:$0xff]
    %v932 = vld [vmem:[#allocation12 + $0x110] sm:$0xff]
    %v933 = vld [vmem:[#allocation12 + $0x118] sm:$0xff]
    %v934 = vld [vmem:[#allocation12 + $0x120] sm:$0xff]
    %v935 = vld [vmem:[#allocation12 + $0x128] sm:$0xff]
    %v936 = vld [vmem:[#allocation12 + $0x130] sm:$0xff]
    %v937 = vld [vmem:[#allocation12 + $0x138] sm:$0xff]
    %v938 = vld [vmem:[#allocation12 + $0x140] sm:$0xff]
    %v939 = vld [vmem:[#allocation12 + $0x148] sm:$0xff]
    %v940 = vld [vmem:[#allocation12 + $0x150] sm:$0xff]
    %v941 = vld [vmem:[#allocation12 + $0x158] sm:$0xff]
    %v942 = vld [vmem:[#allocation12 + $0x160] sm:$0xff]
    %v943 = vld [vmem:[#allocation12 + $0x168] sm:$0xff]
    %v944 = vld [vmem:[#allocation12 + $0x170] sm:$0xff]
    %v945 = vld [vmem:[#allocation12 + $0x178] sm:$0xff]
    %v946 = vld [vmem:[#allocation12 + $0x180] sm:$0xff]
    %v947 = vld [vmem:[#allocation12 + $0x188] sm:$0xff]
    %v948 = vld [vmem:[#allocation12 + $0x190] sm:$0xff]
    %v949 = vld [vmem:[#allocation12 + $0x198] sm:$0xff]
    %v950 = vld [vmem:[#allocation12 + $0x1a0] sm:$0xff]
    %v951 = vld [vmem:[#allocation12 + $0x1a8] sm:$0xff]
    %v952 = vld [vmem:[#allocation12 + $0x1b0] sm:$0xff]
    %v953 = vld [vmem:[#allocation12 + $0x1b8] sm:$0xff]
    %v954 = vld [vmem:[#allocation12 + $0x1c0] sm:$0xff]
    %v955 = vld [vmem:[#allocation12 + $0x1c8] sm:$0xff]
    %v956 = vld [vmem:[#allocation12 + $0x1d0] sm:$0xff]
    %v957 = vld [vmem:[#allocation12 + $0x1d8] sm:$0xff]
    %v958 = vld [vmem:[#allocation12 + $0x1e0] sm:$0xff]
    %v959 = vld [vmem:[#allocation12 + $0x1e8] sm:$0xff]
    %v960 = vld [vmem:[#allocation12 + $0x1f0] sm:$0xff]
    %v961 = vld [vmem:[#allocation12 + $0x1f8] sm:$0xff]
    %v962 = vld [vmem:[#allocation12 + $0x200] sm:$0xff]
    %v963 = vld [vmem:[#allocation12 + $0x208] sm:$0xff]
    %v964 = vld [vmem:[#allocation12 + $0x210] sm:$0xff]
    %v965 = vld [vmem:[#allocation12 + $0x218] sm:$0xff]
    %v966 = vld [vmem:[#allocation12 + $0x220] sm:$0xff]
    %v967 = vld [vmem:[#allocation12 + $0x228] sm:$0xff]
    %v968 = vld [vmem:[#allocation12 + $0x230] sm:$0xff]
    %v969 = vld [vmem:[#allocation12 + $0x238] sm:$0xff]
    %v970 = vld [vmem:[#allocation12 + $0x240] sm:$0xff]
    %v971 = vld [vmem:[#allocation12 + $0x248] sm:$0xff]
    %v972 = vld [vmem:[#allocation12 + $0x250] sm:$0xff]
    %v973 = vld [vmem:[#allocation12 + $0x258] sm:$0xff]
    %v974 = vld [vmem:[#allocation12 + $0x260] sm:$0xff]
    %v975 = vld [vmem:[#allocation12 + $0x268] sm:$0xff]
    %v976 = vld [vmem:[#allocation12 + $0x270] sm:$0xff]
    %v977 = vld [vmem:[#allocation12 + $0x278] sm:$0xff]
    %v978 = vld [vmem:[#allocation12 + $0x280] sm:$0xff]
    %v979 = vld [vmem:[#allocation12 + $0x288] sm:$0xff]
    %v980 = vld [vmem:[#allocation12 + $0x290] sm:$0xff]
    %v981 = vld [vmem:[#allocation12 + $0x298] sm:$0xff]
    %v982 = vld [vmem:[#allocation12 + $0x2a0] sm:$0xff]
    %v983 = vld [vmem:[#allocation12 + $0x2a8] sm:$0xff]
    %v984 = vld [vmem:[#allocation12 + $0x2b0] sm:$0xff]
    %v985 = vld [vmem:[#allocation12 + $0x2b8] sm:$0xff]
    %v986 = vld [vmem:[#allocation12 + $0x2c0] sm:$0xff]
    %v987 = vld [vmem:[#allocation12 + $0x2c8] sm:$0xff]
    %v988 = vld [vmem:[#allocation12 + $0x2d0] sm:$0xff]
    %v989 = vld [vmem:[#allocation12 + $0x2d8] sm:$0xff]
    %v990 = vld [vmem:[#allocation12 + $0x2e0] sm:$0xff]
    %v991 = vld [vmem:[#allocation12 + $0x2e8] sm:$0xff]
    %v992 = vld [vmem:[#allocation12 + $0x2f0] sm:$0xff]
    %v993 = vld [vmem:[#allocation12 + $0x2f8] sm:$0xff]
    %v994 = vld [vmem:[#allocation13] sm:$0xff]
    %v995 = vld [vmem:[#allocation13 + $0x8] sm:$0xff]
    %v996 = vld [vmem:[#allocation13 + $0x10] sm:$0xff]
    %v997 = vld [vmem:[#allocation13 + $0x18] sm:$0xff]
    %v998 = vld [vmem:[#allocation13 + $0x20] sm:$0xff]
    %v999 = vld [vmem:[#allocation13 + $0x28] sm:$0xff]
    %v1000 = vld [vmem:[#allocation13 + $0x30] sm:$0xff]
    %v1001 = vld [vmem:[#allocation13 + $0x38] sm:$0xff]
    %v1002 = vld [vmem:[#allocation13 + $0x40] sm:$0xff]
    %v1003 = vld [vmem:[#allocation13 + $0x48] sm:$0xff]
    %v1004 = vld [vmem:[#allocation13 + $0x50] sm:$0xff]
    %v1005 = vld [vmem:[#allocation13 + $0x58] sm:$0xff]
    %v1006 = vld [vmem:[#allocation13 + $0x60] sm:$0xff]
    %v1007 = vld [vmem:[#allocation13 + $0x68] sm:$0xff]
    %v1008 = vld [vmem:[#allocation13 + $0x70] sm:$0xff]
    %v1009 = vld [vmem:[#allocation13 + $0x78] sm:$0xff]
    %v1010 = vld [vmem:[#allocation13 + $0x80] sm:$0xff]
    %v1011 = vld [vmem:[#allocation13 + $0x88] sm:$0xff]
    %v1012 = vld [vmem:[#allocation13 + $0x90] sm:$0xff]
    %v1013 = vld [vmem:[#allocation13 + $0x98] sm:$0xff]
    %v1014 = vld [vmem:[#allocation13 + $0xa0] sm:$0xff]
    %v1015 = vld [vmem:[#allocation13 + $0xa8] sm:$0xff]
    %v1016 = vld [vmem:[#allocation13 + $0xb0] sm:$0xff]
    %v1017 = vld [vmem:[#allocation13 + $0xb8] sm:$0xff]
    %v1018 = vld [vmem:[#allocation13 + $0xc0] sm:$0xff]
    %v1019 = vld [vmem:[#allocation13 + $0xc8] sm:$0xff]
    %v1020 = vld [vmem:[#allocation13 + $0xd0] sm:$0xff]
    %v1021 = vld [vmem:[#allocation13 + $0xd8] sm:$0xff]
    %v1022 = vld [vmem:[#allocation13 + $0xe0] sm:$0xff]
    %v1023 = vld [vmem:[#allocation13 + $0xe8] sm:$0xff]
    %v1024 = vld [vmem:[#allocation13 + $0xf0] sm:$0xff]
    %v1025 = vld [vmem:[#allocation13 + $0xf8] sm:$0xff]
    %v1026 = vld [vmem:[#allocation13 + $0x100] sm:$0xff]
    %v1027 = vld [vmem:[#allocation13 + $0x108] sm:$0xff]
    %v1028 = vld [vmem:[#allocation13 + $0x110] sm:$0xff]
    %v1029 = vld [vmem:[#allocation13 + $0x118] sm:$0xff]
    %v1030 = vld [vmem:[#allocation13 + $0x120] sm:$0xff]
    %v1031 = vld [vmem:[#allocation13 + $0x128] sm:$0xff]
    %v1032 = vld [vmem:[#allocation13 + $0x130] sm:$0xff]
    %v1033 = vld [vmem:[#allocation13 + $0x138] sm:$0xff]
    %v1034 = vld [vmem:[#allocation13 + $0x140] sm:$0xff]
    %v1035 = vld [vmem:[#allocation13 + $0x148] sm:$0xff]
    %v1036 = vld [vmem:[#allocation13 + $0x150] sm:$0xff]
    %v1037 = vld [vmem:[#allocation13 + $0x158] sm:$0xff]
    %v1038 = vld [vmem:[#allocation13 + $0x160] sm:$0xff]
    %v1039 = vld [vmem:[#allocation13 + $0x168] sm:$0xff]
    %v1040 = vld [vmem:[#allocation13 + $0x170] sm:$0xff]
    %v1041 = vld [vmem:[#allocation13 + $0x178] sm:$0xff]
    %v1042 = vld [vmem:[#allocation15] sm:$0xff]
    %v1043 = vld [vmem:[#allocation15 + $0x8] sm:$0xff]
    %v1044 = vld [vmem:[#allocation15 + $0x10] sm:$0xff]
    %v1045 = vld [vmem:[#allocation15 + $0x18] sm:$0xff]
    %v1046 = vld [vmem:[#allocation15 + $0x20] sm:$0xff]
    %v1047 = vld [vmem:[#allocation15 + $0x28] sm:$0xff]
    %v1048 = vld [vmem:[#allocation15 + $0x30] sm:$0xff]
    %v1049 = vld [vmem:[#allocation15 + $0x38] sm:$0xff]
    %v1050 = vld [vmem:[#allocation15 + $0x40] sm:$0xff]
    %v1051 = vld [vmem:[#allocation15 + $0x48] sm:$0xff]
    %v1052 = vld [vmem:[#allocation15 + $0x50] sm:$0xff]
    %v1053 = vld [vmem:[#allocation15 + $0x58] sm:$0xff]
    %v1054 = vld [vmem:[#allocation15 + $0x60] sm:$0xff]
    %v1055 = vld [vmem:[#allocation15 + $0x68] sm:$0xff]
    %v1056 = vld [vmem:[#allocation15 + $0x70] sm:$0xff]
    %v1057 = vld [vmem:[#allocation15 + $0x78] sm:$0xff]
    %v1058 = vld [vmem:[#allocation15 + $0x80] sm:$0xff]
    %v1059 = vld [vmem:[#allocation15 + $0x88] sm:$0xff]
    %v1060 = vld [vmem:[#allocation15 + $0x90] sm:$0xff]
    %v1061 = vld [vmem:[#allocation15 + $0x98] sm:$0xff]
    %v1062 = vld [vmem:[#allocation15 + $0xa0] sm:$0xff]
    %v1063 = vld [vmem:[#allocation15 + $0xa8] sm:$0xff]
    %v1064 = vld [vmem:[#allocation15 + $0xb0] sm:$0xff]
    %v1065 = vld [vmem:[#allocation15 + $0xb8] sm:$0xff]
    %v1066 = vld [vmem:[#allocation15 + $0xc0] sm:$0xff]
    %v1067 = vld [vmem:[#allocation15 + $0xc8] sm:$0xff]
    %v1068 = vld [vmem:[#allocation15 + $0xd0] sm:$0xff]
    %v1069 = vld [vmem:[#allocation15 + $0xd8] sm:$0xff]
    %v1070 = vld [vmem:[#allocation15 + $0xe0] sm:$0xff]
    %v1071 = vld [vmem:[#allocation15 + $0xe8] sm:$0xff]
    %v1072 = vld [vmem:[#allocation15 + $0xf0] sm:$0xff]
    %v1073 = vld [vmem:[#allocation15 + $0xf8] sm:$0xff]
    %v1074 = vld [vmem:[#allocation15 + $0x100] sm:$0xff]
    %v1075 = vld [vmem:[#allocation15 + $0x108] sm:$0xff]
    %v1076 = vld [vmem:[#allocation15 + $0x110] sm:$0xff]
    %v1077 = vld [vmem:[#allocation15 + $0x118] sm:$0xff]
    %v1078 = vld [vmem:[#allocation15 + $0x120] sm:$0xff]
    %v1079 = vld [vmem:[#allocation15 + $0x128] sm:$0xff]
    %v1080 = vld [vmem:[#allocation15 + $0x130] sm:$0xff]
    %v1081 = vld [vmem:[#allocation15 + $0x138] sm:$0xff]
    %v1082 = vld [vmem:[#allocation15 + $0x140] sm:$0xff]
    %v1083 = vld [vmem:[#allocation15 + $0x148] sm:$0xff]
    %v1084 = vld [vmem:[#allocation15 + $0x150] sm:$0xff]
    %v1085 = vld [vmem:[#allocation15 + $0x158] sm:$0xff]
    %v1086 = vld [vmem:[#allocation15 + $0x160] sm:$0xff]
    %v1087 = vld [vmem:[#allocation15 + $0x168] sm:$0xff]
    %v1088 = vld [vmem:[#allocation15 + $0x170] sm:$0xff]
    %v1089 = vld [vmem:[#allocation15 + $0x178] sm:$0xff]
    %v1090 = vpack.c.bf16 0.0, 0.0
    %v1187 = vunpack.c.l.b16 %v898
    %v1188 = vunpack.c.h.b16 %v898
    %v1189 = vunpack.c.l.b16 %v899
    %v1190 = vunpack.c.h.b16 %v899
    %v1191 = vunpack.c.l.b16 %v900
    %v1192 = vunpack.c.h.b16 %v900
    %v1193 = vunpack.c.l.b16 %v901
    %v1194 = vunpack.c.h.b16 %v901
    %v1195 = vunpack.c.l.b16 %v902
    %v1196 = vunpack.c.h.b16 %v902
    %v1197 = vunpack.c.l.b16 %v903
    %v1198 = vunpack.c.h.b16 %v903
    %v1199 = vunpack.c.l.b16 %v904
    %v1200 = vunpack.c.h.b16 %v904
    %v1201 = vunpack.c.l.b16 %v905
    %v1202 = vunpack.c.h.b16 %v905
    %v1203 = vunpack.c.l.b16 %v906
    %v1204 = vunpack.c.h.b16 %v906
    %v1205 = vunpack.c.l.b16 %v907
    %v1206 = vunpack.c.h.b16 %v907
    %v1207 = vunpack.c.l.b16 %v908
    %v1208 = vunpack.c.h.b16 %v908
    %v1209 = vunpack.c.l.b16 %v909
    %v1210 = vunpack.c.h.b16 %v909
    %v1211 = vunpack.c.l.b16 %v910
    %v1212 = vunpack.c.h.b16 %v910
    %v1213 = vunpack.c.l.b16 %v911
    %v1214 = vunpack.c.h.b16 %v911
    %v1215 = vunpack.c.l.b16 %v912
    %v1216 = vunpack.c.h.b16 %v912
    %v1217 = vunpack.c.l.b16 %v913
    %v1218 = vunpack.c.h.b16 %v913
    %v1219 = vunpack.c.l.b16 %v914
    %v1220 = vunpack.c.h.b16 %v914
    %v1221 = vunpack.c.l.b16 %v915
    %v1222 = vunpack.c.h.b16 %v915
    %v1223 = vunpack.c.l.b16 %v916
    %v1224 = vunpack.c.h.b16 %v916
    %v1225 = vunpack.c.l.b16 %v917
    %v1226 = vunpack.c.h.b16 %v917
    %v1227 = vunpack.c.l.b16 %v918
    %v1228 = vunpack.c.h.b16 %v918
    %v1229 = vunpack.c.l.b16 %v919
    %v1230 = vunpack.c.h.b16 %v919
    %v1231 = vunpack.c.l.b16 %v920
    %v1232 = vunpack.c.h.b16 %v920
    %v1233 = vunpack.c.l.b16 %v921
    %v1234 = vunpack.c.h.b16 %v921
    %v1235 = vunpack.c.l.b16 %v922
    %v1236 = vunpack.c.h.b16 %v922
    %v1237 = vunpack.c.l.b16 %v923
    %v1238 = vunpack.c.h.b16 %v923
    %v1239 = vunpack.c.l.b16 %v924
    %v1240 = vunpack.c.h.b16 %v924
    %v1241 = vunpack.c.l.b16 %v925
    %v1242 = vunpack.c.h.b16 %v925
    %v1243 = vunpack.c.l.b16 %v926
    %v1244 = vunpack.c.h.b16 %v926
    %v1245 = vunpack.c.l.b16 %v927
    %v1246 = vunpack.c.h.b16 %v927
    %v1247 = vunpack.c.l.b16 %v928
    %v1248 = vunpack.c.h.b16 %v928
    %v1249 = vunpack.c.l.b16 %v929
    %v1250 = vunpack.c.h.b16 %v929
    %v1251 = vunpack.c.l.b16 %v930
    %v1252 = vunpack.c.h.b16 %v930
    %v1253 = vunpack.c.l.b16 %v931
    %v1254 = vunpack.c.h.b16 %v931
    %v1255 = vunpack.c.l.b16 %v932
    %v1256 = vunpack.c.h.b16 %v932
    %v1257 = vunpack.c.l.b16 %v933
    %v1258 = vunpack.c.h.b16 %v933
    %v1259 = vunpack.c.l.b16 %v934
    %v1260 = vunpack.c.h.b16 %v934
    %v1261 = vunpack.c.l.b16 %v935
    %v1262 = vunpack.c.h.b16 %v935
    %v1263 = vunpack.c.l.b16 %v936
    %v1264 = vunpack.c.h.b16 %v936
    %v1265 = vunpack.c.l.b16 %v937
    %v1266 = vunpack.c.h.b16 %v937
    %v1267 = vunpack.c.l.b16 %v938
    %v1268 = vunpack.c.h.b16 %v938
    %v1269 = vunpack.c.l.b16 %v939
    %v1270 = vunpack.c.h.b16 %v939
    %v1271 = vunpack.c.l.b16 %v940
    %v1272 = vunpack.c.h.b16 %v940
    %v1273 = vunpack.c.l.b16 %v941
    %v1274 = vunpack.c.h.b16 %v941
    %v1275 = vunpack.c.l.b16 %v942
    %v1276 = vunpack.c.h.b16 %v942
    %v1277 = vunpack.c.l.b16 %v943
    %v1278 = vunpack.c.h.b16 %v943
    %v1279 = vunpack.c.l.b16 %v944
    %v1280 = vunpack.c.h.b16 %v944
    %v1281 = vunpack.c.l.b16 %v945
    %v1282 = vunpack.c.h.b16 %v945
    %v1283 = vunpack.c.l.b16 %v946
    %v1284 = vunpack.c.h.b16 %v946
    %v1285 = vunpack.c.l.b16 %v947
    %v1286 = vunpack.c.h.b16 %v947
    %v1287 = vunpack.c.l.b16 %v948
    %v1288 = vunpack.c.h.b16 %v948
    %v1289 = vunpack.c.l.b16 %v949
    %v1290 = vunpack.c.h.b16 %v949
    %v1291 = vunpack.c.l.b16 %v950
    %v1292 = vunpack.c.h.b16 %v950
    %v1293 = vunpack.c.l.b16 %v951
    %v1294 = vunpack.c.h.b16 %v951
    %v1295 = vunpack.c.l.b16 %v952
    %v1296 = vunpack.c.h.b16 %v952
    %v1297 = vunpack.c.l.b16 %v953
    %v1298 = vunpack.c.h.b16 %v953
    %v1299 = vunpack.c.l.b16 %v954
    %v1300 = vunpack.c.h.b16 %v954
    %v1301 = vunpack.c.l.b16 %v955
    %v1302 = vunpack.c.h.b16 %v955
    %v1303 = vunpack.c.l.b16 %v956
    %v1304 = vunpack.c.h.b16 %v956
    %v1305 = vunpack.c.l.b16 %v957
    %v1306 = vunpack.c.h.b16 %v957
    %v1307 = vunpack.c.l.b16 %v958
    %v1308 = vunpack.c.h.b16 %v958
    %v1309 = vunpack.c.l.b16 %v959
    %v1310 = vunpack.c.h.b16 %v959
    %v1311 = vunpack.c.l.b16 %v960
    %v1312 = vunpack.c.h.b16 %v960
    %v1313 = vunpack.c.l.b16 %v961
    %v1314 = vunpack.c.h.b16 %v961
    %v1315 = vunpack.c.l.b16 %v962
    %v1316 = vunpack.c.h.b16 %v962
    %v1317 = vunpack.c.l.b16 %v963
    %v1318 = vunpack.c.h.b16 %v963
    %v1319 = vunpack.c.l.b16 %v964
    %v1320 = vunpack.c.h.b16 %v964
    %v1321 = vunpack.c.l.b16 %v965
    %v1322 = vunpack.c.h.b16 %v965
    %v1323 = vunpack.c.l.b16 %v966
    %v1324 = vunpack.c.h.b16 %v966
    %v1325 = vunpack.c.l.b16 %v967
    %v1326 = vunpack.c.h.b16 %v967
    %v1327 = vunpack.c.l.b16 %v968
    %v1328 = vunpack.c.h.b16 %v968
    %v1329 = vunpack.c.l.b16 %v969
    %v1330 = vunpack.c.h.b16 %v969
    %v1331 = vunpack.c.l.b16 %v970
    %v1332 = vunpack.c.h.b16 %v970
    %v1333 = vunpack.c.l.b16 %v971
    %v1334 = vunpack.c.h.b16 %v971
    %v1335 = vunpack.c.l.b16 %v972
    %v1336 = vunpack.c.h.b16 %v972
    %v1337 = vunpack.c.l.b16 %v973
    %v1338 = vunpack.c.h.b16 %v973
    %v1339 = vunpack.c.l.b16 %v974
    %v1340 = vunpack.c.h.b16 %v974
    %v1341 = vunpack.c.l.b16 %v975
    %v1342 = vunpack.c.h.b16 %v975
    %v1343 = vunpack.c.l.b16 %v976
    %v1344 = vunpack.c.h.b16 %v976
    %v1345 = vunpack.c.l.b16 %v977
    %v1346 = vunpack.c.h.b16 %v977
    %v1347 = vunpack.c.l.b16 %v978
    %v1348 = vunpack.c.h.b16 %v978
    %v1349 = vunpack.c.l.b16 %v979
    %v1350 = vunpack.c.h.b16 %v979
    %v1351 = vunpack.c.l.b16 %v980
    %v1352 = vunpack.c.h.b16 %v980
    %v1353 = vunpack.c.l.b16 %v981
    %v1354 = vunpack.c.h.b16 %v981
    %v1355 = vunpack.c.l.b16 %v982
    %v1356 = vunpack.c.h.b16 %v982
    %v1357 = vunpack.c.l.b16 %v983
    %v1358 = vunpack.c.h.b16 %v983
    %v1359 = vunpack.c.l.b16 %v984
    %v1360 = vunpack.c.h.b16 %v984
    %v1361 = vunpack.c.l.b16 %v985
    %v1362 = vunpack.c.h.b16 %v985
    %v1363 = vunpack.c.l.b16 %v986
    %v1364 = vunpack.c.h.b16 %v986
    %v1365 = vunpack.c.l.b16 %v987
    %v1366 = vunpack.c.h.b16 %v987
    %v1367 = vunpack.c.l.b16 %v988
    %v1368 = vunpack.c.h.b16 %v988
    %v1369 = vunpack.c.l.b16 %v989
    %v1370 = vunpack.c.h.b16 %v989
    %v1371 = vunpack.c.l.b16 %v990
    %v1372 = vunpack.c.h.b16 %v990
    %v1373 = vunpack.c.l.b16 %v991
    %v1374 = vunpack.c.h.b16 %v991
    %v1375 = vunpack.c.l.b16 %v992
    %v1376 = vunpack.c.h.b16 %v992
    %v1377 = vunpack.c.l.b16 %v993
    %v1378 = vunpack.c.h.b16 %v993
    %v1379 = vpack.c.b16 %v1193, %v1187
    %v1380 = vpack.c.b16 %v1194, %v1188
    %v1381 = vpack.c.b16 %v1195, %v1189
    %v1382 = vpack.c.b16 %v1196, %v1190
    %v1383 = vpack.c.b16 %v1197, %v1191
    %v1384 = vpack.c.b16 %v1198, %v1192
    %v1385 = vpack.c.b16 %v1205, %v1199
    %v1386 = vpack.c.b16 %v1206, %v1200
    %v1387 = vpack.c.b16 %v1207, %v1201
    %v1388 = vpack.c.b16 %v1208, %v1202
    %v1389 = vpack.c.b16 %v1209, %v1203
    %v1390 = vpack.c.b16 %v1210, %v1204
    %v1391 = vpack.c.b16 %v1217, %v1211
    %v1392 = vpack.c.b16 %v1218, %v1212
    %v1393 = vpack.c.b16 %v1219, %v1213
    %v1394 = vpack.c.b16 %v1220, %v1214
    %v1395 = vpack.c.b16 %v1221, %v1215
    %v1396 = vpack.c.b16 %v1222, %v1216
    %v1397 = vpack.c.b16 %v1229, %v1223
    %v1398 = vpack.c.b16 %v1230, %v1224
    %v1399 = vpack.c.b16 %v1231, %v1225
    %v1400 = vpack.c.b16 %v1232, %v1226
    %v1401 = vpack.c.b16 %v1233, %v1227
    %v1402 = vpack.c.b16 %v1234, %v1228
    %v1403 = vpack.c.b16 %v1241, %v1235
    %v1404 = vpack.c.b16 %v1242, %v1236
    %v1405 = vpack.c.b16 %v1243, %v1237
    %v1406 = vpack.c.b16 %v1244, %v1238
    %v1407 = vpack.c.b16 %v1245, %v1239
    %v1408 = vpack.c.b16 %v1246, %v1240
    %v1409 = vpack.c.b16 %v1253, %v1247
    %v1410 = vpack.c.b16 %v1254, %v1248
    %v1411 = vpack.c.b16 %v1255, %v1249
    %v1412 = vpack.c.b16 %v1256, %v1250
    %v1413 = vpack.c.b16 %v1257, %v1251
    %v1414 = vpack.c.b16 %v1258, %v1252
    %v1415 = vpack.c.b16 %v1265, %v1259
    %v1416 = vpack.c.b16 %v1266, %v1260
    %v1417 = vpack.c.b16 %v1267, %v1261
    %v1418 = vpack.c.b16 %v1268, %v1262
    %v1419 = vpack.c.b16 %v1269, %v1263
    %v1420 = vpack.c.b16 %v1270, %v1264
    %v1421 = vpack.c.b16 %v1277, %v1271
    %v1422 = vpack.c.b16 %v1278, %v1272
    %v1423 = vpack.c.b16 %v1279, %v1273
    %v1424 = vpack.c.b16 %v1280, %v1274
    %v1425 = vpack.c.b16 %v1281, %v1275
    %v1426 = vpack.c.b16 %v1282, %v1276
    %v1427 = vpack.c.b16 %v1289, %v1283
    %v1428 = vpack.c.b16 %v1290, %v1284
    %v1429 = vpack.c.b16 %v1291, %v1285
    %v1430 = vpack.c.b16 %v1292, %v1286
    %v1431 = vpack.c.b16 %v1293, %v1287
    %v1432 = vpack.c.b16 %v1294, %v1288
    %v1433 = vpack.c.b16 %v1301, %v1295
    %v1434 = vpack.c.b16 %v1302, %v1296
    %v1435 = vpack.c.b16 %v1303, %v1297
    %v1436 = vpack.c.b16 %v1304, %v1298
    %v1437 = vpack.c.b16 %v1305, %v1299
    %v1438 = vpack.c.b16 %v1306, %v1300
    %v1439 = vpack.c.b16 %v1313, %v1307
    %v1440 = vpack.c.b16 %v1314, %v1308
    %v1441 = vpack.c.b16 %v1315, %v1309
    %v1442 = vpack.c.b16 %v1316, %v1310
    %v1443 = vpack.c.b16 %v1317, %v1311
    %v1444 = vpack.c.b16 %v1318, %v1312
    %v1445 = vpack.c.b16 %v1325, %v1319
    %v1446 = vpack.c.b16 %v1326, %v1320
    %v1447 = vpack.c.b16 %v1327, %v1321
    %v1448 = vpack.c.b16 %v1328, %v1322
    %v1449 = vpack.c.b16 %v1329, %v1323
    %v1450 = vpack.c.b16 %v1330, %v1324
    %v1451 = vpack.c.b16 %v1337, %v1331
    %v1452 = vpack.c.b16 %v1338, %v1332
    %v1453 = vpack.c.b16 %v1339, %v1333
    %v1454 = vpack.c.b16 %v1340, %v1334
    %v1455 = vpack.c.b16 %v1341, %v1335
    %v1456 = vpack.c.b16 %v1342, %v1336
    %v1457 = vpack.c.b16 %v1349, %v1343
    %v1458 = vpack.c.b16 %v1350, %v1344
    %v1459 = vpack.c.b16 %v1351, %v1345
    %v1460 = vpack.c.b16 %v1352, %v1346
    %v1461 = vpack.c.b16 %v1353, %v1347
    %v1462 = vpack.c.b16 %v1354, %v1348
    %v1463 = vpack.c.b16 %v1361, %v1355
    %v1464 = vpack.c.b16 %v1362, %v1356
    %v1465 = vpack.c.b16 %v1363, %v1357
    %v1466 = vpack.c.b16 %v1364, %v1358
    %v1467 = vpack.c.b16 %v1365, %v1359
    %v1468 = vpack.c.b16 %v1366, %v1360
    %v1469 = vpack.c.b16 %v1373, %v1367
    %v1470 = vpack.c.b16 %v1374, %v1368
    %v1471 = vpack.c.b16 %v1375, %v1369
    %v1472 = vpack.c.b16 %v1376, %v1370
    %v1473 = vpack.c.b16 %v1377, %v1371
    %v1474 = vpack.c.b16 %v1378, %v1372
    %1571 = vmatprep.subr.bf16.mxu0 %v1380
    %1572 = vmatpush1.bf16.msra.mxu0 %v1379
    %1573 = vmatprep.subr.bf16.mxu0 %v1386
    %1574 = vmatpush1.bf16.msra.mxu0 %v1385
    %1575 = vmatprep.subr.bf16.mxu0 %v1392
    %1576 = vmatpush1.bf16.msra.mxu0 %v1391
    %1577 = vmatprep.subr.bf16.mxu0 %v1398
    %1578 = vmatpush1.bf16.msra.mxu0 %v1397
    %1579 = vmatprep.subr.bf16.mxu0 %v1404
    %1580 = vmatpush1.bf16.msra.mxu0 %v1403
    %1581 = vmatprep.subr.bf16.mxu0 %v1410
    %1582 = vmatpush1.bf16.msra.mxu0 %v1409
    %1583 = vmatprep.subr.bf16.mxu0 %v1416
    %1584 = vmatpush1.bf16.msra.mxu0 %v1415
    %1585 = vmatprep.subr.bf16.mxu0 %v1422
    %1586 = vmatpush1.bf16.msra.mxu0 %v1421
    %1587 = vmatprep.subr.bf16.mxu0 %v1428
    %1588 = vmatpush1.bf16.msra.mxu0 %v1427
    %1589 = vmatprep.subr.bf16.mxu0 %v1434
    %1590 = vmatpush1.bf16.msra.mxu0 %v1433
    %1591 = vmatprep.subr.bf16.mxu0 %v1440
    %1592 = vmatpush1.bf16.msra.mxu0 %v1439
    %1593 = vmatprep.subr.bf16.mxu0 %v1446
    %1594 = vmatpush1.bf16.msra.mxu0 %v1445
    %1595 = vmatprep.subr.bf16.mxu0 %v1452
    %1596 = vmatpush1.bf16.msra.mxu0 %v1451
    %1597 = vmatprep.subr.bf16.mxu0 %v1458
    %1598 = vmatpush1.bf16.msra.mxu0 %v1457
    %1599 = vmatprep.subr.bf16.mxu0 %v1464
    %1600 = vmatpush1.bf16.msra.mxu0 %v1463
    %1601 = vmatprep.subr.bf16.mxu0 %v1470
    %1602 = vmatpush1.bf16.msra.mxu0 %v1469
    %1603 = vmatprep.mubr.bf16.mxu0 %v1090
    %1604 = vmatmul.mubr.bf16.gmra.mrb[0].mxu0 %v1090
    %v1605 = vpop.f32.mrb[0].mxu0
    %v1606 = vadd.f32 0.0, %v1605
    %v1607 = vpop.f32.mrb[0].mxu0
    %v1608 = vadd.f32 0.0, %v1607
    %v1609 = vpop.f32.mrb[0].mxu0
    %v1610 = vpop.f32.mrb[0].mxu0
    %1611 = vdwg.mxu0
    %1612 = vmatprep.subr.bf16.mxu0 %v1382
    %1613 = vmatpush1.bf16.msra.mxu0 %v1381
    %1614 = vmatprep.subr.bf16.mxu0 %v1388
    %1615 = vmatpush1.bf16.msra.mxu0 %v1387
    %1616 = vmatprep.subr.bf16.mxu0 %v1394
    %1617 = vmatpush1.bf16.msra.mxu0 %v1393
    %1618 = vmatprep.subr.bf16.mxu0 %v1400
    %1619 = vmatpush1.bf16.msra.mxu0 %v1399
    %1620 = vmatprep.subr.bf16.mxu0 %v1406
    %1621 = vmatpush1.bf16.msra.mxu0 %v1405
    %1622 = vmatprep.subr.bf16.mxu0 %v1412
    %1623 = vmatpush1.bf16.msra.mxu0 %v1411
    %1624 = vmatprep.subr.bf16.mxu0 %v1418
    %1625 = vmatpush1.bf16.msra.mxu0 %v1417
    %1626 = vmatprep.subr.bf16.mxu0 %v1424
    %1627 = vmatpush1.bf16.msra.mxu0 %v1423
    %1628 = vmatprep.subr.bf16.mxu0 %v1430
    %1629 = vmatpush1.bf16.msra.mxu0 %v1429
    %1630 = vmatprep.subr.bf16.mxu0 %v1436
    %1631 = vmatpush1.bf16.msra.mxu0 %v1435
    %1632 = vmatprep.subr.bf16.mxu0 %v1442
    %1633 = vmatpush1.bf16.msra.mxu0 %v1441
    %1634 = vmatprep.subr.bf16.mxu0 %v1448
    %1635 = vmatpush1.bf16.msra.mxu0 %v1447
    %1636 = vmatprep.subr.bf16.mxu0 %v1454
    %1637 = vmatpush1.bf16.msra.mxu0 %v1453
    %1638 = vmatprep.subr.bf16.mxu0 %v1460
    %1639 = vmatpush1.bf16.msra.mxu0 %v1459
    %1640 = vmatprep.subr.bf16.mxu0 %v1466
    %1641 = vmatpush1.bf16.msra.mxu0 %v1465
    %1642 = vmatprep.subr.bf16.mxu0 %v1472
    %1643 = vmatpush1.bf16.msra.mxu0 %v1471
    %1644 = vmatprep.mubr.bf16.mxu0 %v1090
    %1645 = vmatmul.mubr.bf16.gmra.mrb[0].mxu0 %v1090
    %v1646 = vpop.f32.mrb[0].mxu0
    %v1647 = vadd.f32 0.0, %v1646
    %v1648 = vpop.f32.mrb[0].mxu0
    %v1649 = vadd.f32 0.0, %v1648
    %v1650 = vpop.f32.mrb[0].mxu0
    %v1651 = vpop.f32.mrb[0].mxu0
    %1652 = vdwg.mxu0
    %1653 = vmatprep.subr.bf16.mxu0 %v1384
    %1654 = vmatpush1.bf16.msra.mxu0 %v1383
    %1655 = vmatprep.subr.bf16.mxu0 %v1390
    %1656 = vmatpush1.bf16.msra.mxu0 %v1389
    %1657 = vmatprep.subr.bf16.mxu0 %v1396
    %1658 = vmatpush1.bf16.msra.mxu0 %v1395
    %1659 = vmatprep.subr.bf16.mxu0 %v1402
    %1660 = vmatpush1.bf16.msra.mxu0 %v1401
    %1661 = vmatprep.subr.bf16.mxu0 %v1408
    %1662 = vmatpush1.bf16.msra.mxu0 %v1407
    %1663 = vmatprep.subr.bf16.mxu0 %v1414
    %1664 = vmatpush1.bf16.msra.mxu0 %v1413
    %1665 = vmatprep.subr.bf16.mxu0 %v1420
    %1666 = vmatpush1.bf16.msra.mxu0 %v1419
    %1667 = vmatprep.subr.bf16.mxu0 %v1426
    %1668 = vmatpush1.bf16.msra.mxu0 %v1425
    %1669 = vmatprep.subr.bf16.mxu0 %v1432
    %1670 = vmatpush1.bf16.msra.mxu0 %v1431
    %1671 = vmatprep.subr.bf16.mxu0 %v1438
    %1672 = vmatpush1.bf16.msra.mxu0 %v1437
    %1673 = vmatprep.subr.bf16.mxu0 %v1444
    %1674 = vmatpush1.bf16.msra.mxu0 %v1443
    %1675 = vmatprep.subr.bf16.mxu0 %v1450
    %1676 = vmatpush1.bf16.msra.mxu0 %v1449
    %1677 = vmatprep.subr.bf16.mxu0 %v1456
    %1678 = vmatpush1.bf16.msra.mxu0 %v1455
    %1679 = vmatprep.subr.bf16.mxu0 %v1462
    %1680 = vmatpush1.bf16.msra.mxu0 %v1461
    %1681 = vmatprep.subr.bf16.mxu0 %v1468
    %1682 = vmatpush1.bf16.msra.mxu0 %v1467
    %1683 = vmatprep.subr.bf16.mxu0 %v1474
    %1684 = vmatpush1.bf16.msra.mxu0 %v1473
    %1685 = vmatprep.mubr.bf16.mxu0 %v1090
    %1686 = vmatmul.mubr.bf16.gmra.mrb[0].mxu0 %v1090
    %v1687 = vpop.f32.mrb[0].mxu0
    %v1688 = vadd.f32 0.0, %v1687
    %v1689 = vpop.f32.mrb[0].mxu0
    %v1690 = vadd.f32 0.0, %v1689
    %v1691 = vpop.f32.mrb[0].mxu0
    %v1692 = vpop.f32.mrb[0].mxu0
    %1693 = vdwg.mxu0
    %v1694 = vadd.f32 %v483, %v1606
    %v1695 = vxor.u32 %v1694, 2147483648
    %v1696 = vmul.f32 %v1695, 1.442695
    %v1697 = vpow.pop %v1696
    %v1698 = vadd.f32 %v1697, 1.0
    %v1699 = vrcp.pop %v1698
    %v1700 = vmul.f32 1.0, %v1699
    %v1701 = vadd.f32 %v485, %v1608
    %v1702 = vxor.u32 %v1701, 2147483648
    %v1703 = vmul.f32 %v1702, 1.442695
    %v1704 = vpow.pop %v1703
    %v1705 = vadd.f32 %v1704, 1.0
    %v1706 = vrcp.pop %v1705
    %v1707 = vmul.f32 1.0, %v1706
    %v1708 = vadd.f32 %v1647, %v889
    %v1709 = vmul.f32 %v1700, %v1708
    %v1710 = vadd.f32 %v596, %v1709
    %v1711 = vtanh.pop %v1710
    %v1712 = vsub.f32 1.0, %v1707
    %v1713 = vmul.f32 %v1712, %v1711
    %v1714 = vmul.f32 %v1707, 0.0
    %v1715 = vadd.f32 %v1713, %v1714
    %v1716 = vadd.f32 %v775, %v1649
    %v1717 = vxor.u32 %v1716, 2147483648
    %v1718 = vmul.f32 %v1717, 1.442695
    %v1719 = vpow.pop %v1718
    %v1720 = vadd.f32 %v1719, 1.0
    %v1721 = vrcp.pop %v1720
    %v1722 = vmul.f32 1.0, %v1721
    %v1723 = vadd.f32 %v777, %v1688
    %v1724 = vxor.u32 %v1723, 2147483648
    %v1725 = vmul.f32 %v1724, 1.442695
    %v1726 = vpow.pop %v1725
    %v1727 = vadd.f32 %v1726, 1.0
    %v1728 = vrcp.pop %v1727
    %v1729 = vmul.f32 1.0, %v1728
    %v1730 = vadd.f32 %v1690, %v896
    %v1731 = vmul.f32 %v1722, %v1730
    %v1732 = vadd.f32 %v881, %v1731
    %v1733 = vtanh.pop %v1732
    %v1734 = vsub.f32 1.0, %v1729
    %v1735 = vmul.f32 %v1734, %v1733
    %v1736 = vmul.f32 %v1729, 0.0
    %v1737 = vadd.f32 %v1735, %v1736
    %v1738 = vpack.c.bf16 %v1715, %v1715
    %v1787 = vunpack.c.l.b16 %v994
    %v1788 = vunpack.c.h.b16 %v994
    %v1789 = vunpack.c.l.b16 %v995
    %v1790 = vunpack.c.h.b16 %v995
    %v1791 = vunpack.c.l.b16 %v996
    %v1792 = vunpack.c.h.b16 %v996
    %v1793 = vunpack.c.l.b16 %v997
    %v1794 = vunpack.c.h.b16 %v997
    %v1795 = vunpack.c.l.b16 %v998
    %v1796 = vunpack.c.h.b16 %v998
    %v1797 = vunpack.c.l.b16 %v999
    %v1798 = vunpack.c.h.b16 %v999
    %v1799 = vunpack.c.l.b16 %v1000
    %v1800 = vunpack.c.h.b16 %v1000
    %v1801 = vunpack.c.l.b16 %v1001
    %v1802 = vunpack.c.h.b16 %v1001
    %v1803 = vunpack.c.l.b16 %v1002
    %v1804 = vunpack.c.h.b16 %v1002
    %v1805 = vunpack.c.l.b16 %v1003
    %v1806 = vunpack.c.h.b16 %v1003
    %v1807 = vunpack.c.l.b16 %v1004
    %v1808 = vunpack.c.h.b16 %v1004
    %v1809 = vunpack.c.l.b16 %v1005
    %v1810 = vunpack.c.h.b16 %v1005
    %v1811 = vunpack.c.l.b16 %v1006
    %v1812 = vunpack.c.h.b16 %v1006
    %v1813 = vunpack.c.l.b16 %v1007
    %v1814 = vunpack.c.h.b16 %v1007
    %v1815 = vunpack.c.l.b16 %v1008
    %v1816 = vunpack.c.h.b16 %v1008
    %v1817 = vunpack.c.l.b16 %v1009
    %v1818 = vunpack.c.h.b16 %v1009
    %v1819 = vunpack.c.l.b16 %v1010
    %v1820 = vunpack.c.h.b16 %v1010
    %v1821 = vunpack.c.l.b16 %v1011
    %v1822 = vunpack.c.h.b16 %v1011
    %v1823 = vunpack.c.l.b16 %v1012
    %v1824 = vunpack.c.h.b16 %v1012
    %v1825 = vunpack.c.l.b16 %v1013
    %v1826 = vunpack.c.h.b16 %v1013
    %v1827 = vunpack.c.l.b16 %v1014
    %v1828 = vunpack.c.h.b16 %v1014
    %v1829 = vunpack.c.l.b16 %v1015
    %v1830 = vunpack.c.h.b16 %v1015
    %v1831 = vunpack.c.l.b16 %v1016
    %v1832 = vunpack.c.h.b16 %v1016
    %v1833 = vunpack.c.l.b16 %v1017
    %v1834 = vunpack.c.h.b16 %v1017
    %v1835 = vunpack.c.l.b16 %v1018
    %v1836 = vunpack.c.h.b16 %v1018
    %v1837 = vunpack.c.l.b16 %v1019
    %v1838 = vunpack.c.h.b16 %v1019
    %v1839 = vunpack.c.l.b16 %v1020
    %v1840 = vunpack.c.h.b16 %v1020
    %v1841 = vunpack.c.l.b16 %v1021
    %v1842 = vunpack.c.h.b16 %v1021
    %v1843 = vunpack.c.l.b16 %v1022
    %v1844 = vunpack.c.h.b16 %v1022
    %v1845 = vunpack.c.l.b16 %v1023
    %v1846 = vunpack.c.h.b16 %v1023
    %v1847 = vunpack.c.l.b16 %v1024
    %v1848 = vunpack.c.h.b16 %v1024
    %v1849 = vunpack.c.l.b16 %v1025
    %v1850 = vunpack.c.h.b16 %v1025
    %v1851 = vunpack.c.l.b16 %v1026
    %v1852 = vunpack.c.h.b16 %v1026
    %v1853 = vunpack.c.l.b16 %v1027
    %v1854 = vunpack.c.h.b16 %v1027
    %v1855 = vunpack.c.l.b16 %v1028
    %v1856 = vunpack.c.h.b16 %v1028
    %v1857 = vunpack.c.l.b16 %v1029
    %v1858 = vunpack.c.h.b16 %v1029
    %v1859 = vunpack.c.l.b16 %v1030
    %v1860 = vunpack.c.h.b16 %v1030
    %v1861 = vunpack.c.l.b16 %v1031
    %v1862 = vunpack.c.h.b16 %v1031
    %v1863 = vunpack.c.l.b16 %v1032
    %v1864 = vunpack.c.h.b16 %v1032
    %v1865 = vunpack.c.l.b16 %v1033
    %v1866 = vunpack.c.h.b16 %v1033
    %v1867 = vunpack.c.l.b16 %v1034
    %v1868 = vunpack.c.h.b16 %v1034
    %v1869 = vunpack.c.l.b16 %v1035
    %v1870 = vunpack.c.h.b16 %v1035
    %v1871 = vunpack.c.l.b16 %v1036
    %v1872 = vunpack.c.h.b16 %v1036
    %v1873 = vunpack.c.l.b16 %v1037
    %v1874 = vunpack.c.h.b16 %v1037
    %v1875 = vunpack.c.l.b16 %v1038
    %v1876 = vunpack.c.h.b16 %v1038
    %v1877 = vunpack.c.l.b16 %v1039
    %v1878 = vunpack.c.h.b16 %v1039
    %v1879 = vunpack.c.l.b16 %v1040
    %v1880 = vunpack.c.h.b16 %v1040
    %v1881 = vunpack.c.l.b16 %v1041
    %v1882 = vunpack.c.h.b16 %v1041
    %v1883 = vpack.c.b16 %v1793, %v1787
    %v1884 = vpack.c.b16 %v1794, %v1788
    %v1885 = vpack.c.b16 %v1795, %v1789
    %v1886 = vpack.c.b16 %v1796, %v1790
    %v1887 = vpack.c.b16 %v1797, %v1791
    %v1888 = vpack.c.b16 %v1798, %v1792
    %v1889 = vpack.c.b16 %v1805, %v1799
    %v1890 = vpack.c.b16 %v1806, %v1800
    %v1891 = vpack.c.b16 %v1807, %v1801
    %v1892 = vpack.c.b16 %v1808, %v1802
    %v1893 = vpack.c.b16 %v1809, %v1803
    %v1894 = vpack.c.b16 %v1810, %v1804
    %v1895 = vpack.c.b16 %v1817, %v1811
    %v1896 = vpack.c.b16 %v1818, %v1812
    %v1897 = vpack.c.b16 %v1819, %v1813
    %v1898 = vpack.c.b16 %v1820, %v1814
    %v1899 = vpack.c.b16 %v1821, %v1815
    %v1900 = vpack.c.b16 %v1822, %v1816
    %v1901 = vpack.c.b16 %v1829, %v1823
    %v1902 = vpack.c.b16 %v1830, %v1824
    %v1903 = vpack.c.b16 %v1831, %v1825
    %v1904 = vpack.c.b16 %v1832, %v1826
    %v1905 = vpack.c.b16 %v1833, %v1827
    %v1906 = vpack.c.b16 %v1834, %v1828
    %v1907 = vpack.c.b16 %v1841, %v1835
    %v1908 = vpack.c.b16 %v1842, %v1836
    %v1909 = vpack.c.b16 %v1843, %v1837
    %v1910 = vpack.c.b16 %v1844, %v1838
    %v1911 = vpack.c.b16 %v1845, %v1839
    %v1912 = vpack.c.b16 %v1846, %v1840
    %v1913 = vpack.c.b16 %v1853, %v1847
    %v1914 = vpack.c.b16 %v1854, %v1848
    %v1915 = vpack.c.b16 %v1855, %v1849
    %v1916 = vpack.c.b16 %v1856, %v1850
    %v1917 = vpack.c.b16 %v1857, %v1851
    %v1918 = vpack.c.b16 %v1858, %v1852
    %v1919 = vpack.c.b16 %v1865, %v1859
    %v1920 = vpack.c.b16 %v1866, %v1860
    %v1921 = vpack.c.b16 %v1867, %v1861
    %v1922 = vpack.c.b16 %v1868, %v1862
    %v1923 = vpack.c.b16 %v1869, %v1863
    %v1924 = vpack.c.b16 %v1870, %v1864
    %v1925 = vpack.c.b16 %v1877, %v1871
    %v1926 = vpack.c.b16 %v1878, %v1872
    %v1927 = vpack.c.b16 %v1879, %v1873
    %v1928 = vpack.c.b16 %v1880, %v1874
    %v1929 = vpack.c.b16 %v1881, %v1875
    %v1930 = vpack.c.b16 %v1882, %v1876
    %1979 = vmatprep.subr.bf16.mxu0 %v1884
    %1980 = vmatpush1.bf16.msra.mxu0 %v1883
    %1981 = vmatprep.subr.bf16.mxu0 %v1890
    %1982 = vmatpush1.bf16.msra.mxu0 %v1889
    %1983 = vmatprep.subr.bf16.mxu0 %v1896
    %1984 = vmatpush1.bf16.msra.mxu0 %v1895
    %1985 = vmatprep.subr.bf16.mxu0 %v1902
    %1986 = vmatpush1.bf16.msra.mxu0 %v1901
    %1987 = vmatprep.subr.bf16.mxu0 %v1908
    %1988 = vmatpush1.bf16.msra.mxu0 %v1907
    %1989 = vmatprep.subr.bf16.mxu0 %v1914
    %1990 = vmatpush1.bf16.msra.mxu0 %v1913
    %1991 = vmatprep.subr.bf16.mxu0 %v1920
    %1992 = vmatpush1.bf16.msra.mxu0 %v1919
    %1993 = vmatprep.subr.bf16.mxu0 %v1926
    %1994 = vmatpush1.bf16.msra.mxu0 %v1925
    %1995 = vmatprep.subr.bf16.mxu0 0
    %1996 = vmatpush1.bf16.msra.mxu0 0
    %1997 = vmatprep.subr.bf16.mxu0 0
    %1998 = vmatpush1.bf16.msra.mxu0 0
    %1999 = vmatprep.subr.bf16.mxu0 0
    %2000 = vmatpush1.bf16.msra.mxu0 0
    %2001 = vmatprep.subr.bf16.mxu0 0
    %2002 = vmatpush1.bf16.msra.mxu0 0
    %2003 = vmatprep.subr.bf16.mxu0 0
    %2004 = vmatpush1.bf16.msra.mxu0 0
    %2005 = vmatprep.subr.bf16.mxu0 0
    %2006 = vmatpush1.bf16.msra.mxu0 0
    %2007 = vmatprep.subr.bf16.mxu0 0
    %2008 = vmatpush1.bf16.msra.mxu0 0
    %2009 = vmatprep.subr.bf16.mxu0 0
    %2010 = vmatpush1.bf16.msra.mxu0 0
    %2011 = vmatprep.mubr.bf16.mxu0 0
    %2012 = vmatmul.mubr.bf16.gmra.mrb[0].mxu0 %v1738
    %v2013 = vpop.f32.mrb[0].mxu0
    %v2014 = vadd.f32 0.0, %v2013
    %v2015 = vpop.f32.mrb[0].mxu0
    %v2016 = vadd.f32 0.0, %v2015
    %v2017 = vpop.f32.mrb[0].mxu0
    %v2018 = vpop.f32.mrb[0].mxu0
    %2019 = vdwg.mxu0
    %2020 = vmatprep.subr.bf16.mxu0 %v1886
    %2021 = vmatpush1.bf16.msra.mxu0 %v1885
    %2022 = vmatprep.subr.bf16.mxu0 %v1892
    %2023 = vmatpush1.bf16.msra.mxu0 %v1891
    %2024 = vmatprep.subr.bf16.mxu0 %v1898
    %2025 = vmatpush1.bf16.msra.mxu0 %v1897
    %2026 = vmatprep.subr.bf16.mxu0 %v1904
    %2027 = vmatpush1.bf16.msra.mxu0 %v1903
    %2028 = vmatprep.subr.bf16.mxu0 %v1910
    %2029 = vmatpush1.bf16.msra.mxu0 %v1909
    %2030 = vmatprep.subr.bf16.mxu0 %v1916
    %2031 = vmatpush1.bf16.msra.mxu0 %v1915
    %2032 = vmatprep.subr.bf16.mxu0 %v1922
    %2033 = vmatpush1.bf16.msra.mxu0 %v1921
    %2034 = vmatprep.subr.bf16.mxu0 %v1928
    %2035 = vmatpush1.bf16.msra.mxu0 %v1927
    %2036 = vmatprep.subr.bf16.mxu0 0
    %2037 = vmatpush1.bf16.msra.mxu0 0
    %2038 = vmatprep.subr.bf16.mxu0 0
    %2039 = vmatpush1.bf16.msra.mxu0 0
    %2040 = vmatprep.subr.bf16.mxu0 0
    %2041 = vmatpush1.bf16.msra.mxu0 0
    %2042 = vmatprep.subr.bf16.mxu0 0
    %2043 = vmatpush1.bf16.msra.mxu0 0
    %2044 = vmatprep.subr.bf16.mxu0 0
    %2045 = vmatpush1.bf16.msra.mxu0 0
    %2046 = vmatprep.subr.bf16.mxu0 0
    %2047 = vmatpush1.bf16.msra.mxu0 0
    %2048 = vmatprep.subr.bf16.mxu0 0
    %2049 = vmatpush1.bf16.msra.mxu0 0
    %2050 = vmatprep.subr.bf16.mxu0 0
    %2051 = vmatpush1.bf16.msra.mxu0 0
    %2052 = vmatprep.mubr.bf16.mxu0 0
    %2053 = vmatmul.mubr.bf16.gmra.mrb[0].mxu0 %v1738
    %v2054 = vpop.f32.mrb[0].mxu0
    %v2055 = vadd.f32 0.0, %v2054
    %v2056 = vpop.f32.mrb[0].mxu0
    %v2057 = vadd.f32 0.0, %v2056
    %v2058 = vpop.f32.mrb[0].mxu0
    %v2059 = vpop.f32.mrb[0].mxu0
    %2060 = vdwg.mxu0
    %2061 = vmatprep.subr.bf16.mxu0 %v1888
    %2062 = vmatpush1.bf16.msra.mxu0 %v1887
    %2063 = vmatprep.subr.bf16.mxu0 %v1894
    %2064 = vmatpush1.bf16.msra.mxu0 %v1893
    %2065 = vmatprep.subr.bf16.mxu0 %v1900
    %2066 = vmatpush1.bf16.msra.mxu0 %v1899
    %2067 = vmatprep.subr.bf16.mxu0 %v1906
    %2068 = vmatpush1.bf16.msra.mxu0 %v1905
    %2069 = vmatprep.subr.bf16.mxu0 %v1912
    %2070 = vmatpush1.bf16.msra.mxu0 %v1911
    %2071 = vmatprep.subr.bf16.mxu0 %v1918
    %2072 = vmatpush1.bf16.msra.mxu0 %v1917
    %2073 = vmatprep.subr.bf16.mxu0 %v1924
    %2074 = vmatpush1.bf16.msra.mxu0 %v1923
    %2075 = vmatprep.subr.bf16.mxu0 %v1930
    %2076 = vmatpush1.bf16.msra.mxu0 %v1929
    %2077 = vmatprep.subr.bf16.mxu0 0
    %2078 = vmatpush1.bf16.msra.mxu0 0
    %2079 = vmatprep.subr.bf16.mxu0 0
    %2080 = vmatpush1.bf16.msra.mxu0 0
    %2081 = vmatprep.subr.bf16.mxu0 0
    %2082 = vmatpush1.bf16.msra.mxu0 0
    %2083 = vmatprep.subr.bf16.mxu0 0
    %2084 = vmatpush1.bf16.msra.mxu0 0
    %2085 = vmatprep.subr.bf16.mxu0 0
    %2086 = vmatpush1.bf16.msra.mxu0 0
    %2087 = vmatprep.subr.bf16.mxu0 0
    %2088 = vmatpush1.bf16.msra.mxu0 0
    %2089 = vmatprep.subr.bf16.mxu0 0
    %2090 = vmatpush1.bf16.msra.mxu0 0
    %2091 = vmatprep.subr.bf16.mxu0 0
    %2092 = vmatpush1.bf16.msra.mxu0 0
    %2093 = vmatprep.mubr.bf16.mxu0 0
    %2094 = vmatmul.mubr.bf16.gmra.mrb[0].mxu0 %v1738
    %v2095 = vpop.f32.mrb[0].mxu0
    %v2096 = vadd.f32 0.0, %v2095
    %v2097 = vpop.f32.mrb[0].mxu0
    %v2098 = vadd.f32 0.0, %v2097
    %v2099 = vpop.f32.mrb[0].mxu0
    %v2100 = vpop.f32.mrb[0].mxu0
    %2101 = vdwg.mxu0
    %v2102 = vpack.c.bf16 %v1737, %v1737
    %v2151 = vunpack.c.l.b16 %v1042
    %v2152 = vunpack.c.h.b16 %v1042
    %v2153 = vunpack.c.l.b16 %v1043
    %v2154 = vunpack.c.h.b16 %v1043
    %v2155 = vunpack.c.l.b16 %v1044
    %v2156 = vunpack.c.h.b16 %v1044
    %v2157 = vunpack.c.l.b16 %v1045
    %v2158 = vunpack.c.h.b16 %v1045
    %v2159 = vunpack.c.l.b16 %v1046
    %v2160 = vunpack.c.h.b16 %v1046
    %v2161 = vunpack.c.l.b16 %v1047
    %v2162 = vunpack.c.h.b16 %v1047
    %v2163 = vunpack.c.l.b16 %v1048
    %v2164 = vunpack.c.h.b16 %v1048
    %v2165 = vunpack.c.l.b16 %v1049
    %v2166 = vunpack.c.h.b16 %v1049
    %v2167 = vunpack.c.l.b16 %v1050
    %v2168 = vunpack.c.h.b16 %v1050
    %v2169 = vunpack.c.l.b16 %v1051
    %v2170 = vunpack.c.h.b16 %v1051
    %v2171 = vunpack.c.l.b16 %v1052
    %v2172 = vunpack.c.h.b16 %v1052
    %v2173 = vunpack.c.l.b16 %v1053
    %v2174 = vunpack.c.h.b16 %v1053
    %v2175 = vunpack.c.l.b16 %v1054
    %v2176 = vunpack.c.h.b16 %v1054
    %v2177 = vunpack.c.l.b16 %v1055
    %v2178 = vunpack.c.h.b16 %v1055
    %v2179 = vunpack.c.l.b16 %v1056
    %v2180 = vunpack.c.h.b16 %v1056
    %v2181 = vunpack.c.l.b16 %v1057
    %v2182 = vunpack.c.h.b16 %v1057
    %v2183 = vunpack.c.l.b16 %v1058
    %v2184 = vunpack.c.h.b16 %v1058
    %v2185 = vunpack.c.l.b16 %v1059
    %v2186 = vunpack.c.h.b16 %v1059
    %v2187 = vunpack.c.l.b16 %v1060
    %v2188 = vunpack.c.h.b16 %v1060
    %v2189 = vunpack.c.l.b16 %v1061
    %v2190 = vunpack.c.h.b16 %v1061
    %v2191 = vunpack.c.l.b16 %v1062
    %v2192 = vunpack.c.h.b16 %v1062
    %v2193 = vunpack.c.l.b16 %v1063
    %v2194 = vunpack.c.h.b16 %v1063
    %v2195 = vunpack.c.l.b16 %v1064
    %v2196 = vunpack.c.h.b16 %v1064
    %v2197 = vunpack.c.l.b16 %v1065
    %v2198 = vunpack.c.h.b16 %v1065
    %v2199 = vunpack.c.l.b16 %v1066
    %v2200 = vunpack.c.h.b16 %v1066
    %v2201 = vunpack.c.l.b16 %v1067
    %v2202 = vunpack.c.h.b16 %v1067
    %v2203 = vunpack.c.l.b16 %v1068
    %v2204 = vunpack.c.h.b16 %v1068
    %v2205 = vunpack.c.l.b16 %v1069
    %v2206 = vunpack.c.h.b16 %v1069
    %v2207 = vunpack.c.l.b16 %v1070
    %v2208 = vunpack.c.h.b16 %v1070
    %v2209 = vunpack.c.l.b16 %v1071
    %v2210 = vunpack.c.h.b16 %v1071
    %v2211 = vunpack.c.l.b16 %v1072
    %v2212 = vunpack.c.h.b16 %v1072
    %v2213 = vunpack.c.l.b16 %v1073
    %v2214 = vunpack.c.h.b16 %v1073
    %v2215 = vunpack.c.l.b16 %v1074
    %v2216 = vunpack.c.h.b16 %v1074
    %v2217 = vunpack.c.l.b16 %v1075
    %v2218 = vunpack.c.h.b16 %v1075
    %v2219 = vunpack.c.l.b16 %v1076
    %v2220 = vunpack.c.h.b16 %v1076
    %v2221 = vunpack.c.l.b16 %v1077
    %v2222 = vunpack.c.h.b16 %v1077
    %v2223 = vunpack.c.l.b16 %v1078
    %v2224 = vunpack.c.h.b16 %v1078
    %v2225 = vunpack.c.l.b16 %v1079
    %v2226 = vunpack.c.h.b16 %v1079
    %v2227 = vunpack.c.l.b16 %v1080
    %v2228 = vunpack.c.h.b16 %v1080
    %v2229 = vunpack.c.l.b16 %v1081
    %v2230 = vunpack.c.h.b16 %v1081
    %v2231 = vunpack.c.l.b16 %v1082
    %v2232 = vunpack.c.h.b16 %v1082
    %v2233 = vunpack.c.l.b16 %v1083
    %v2234 = vunpack.c.h.b16 %v1083
    %v2235 = vunpack.c.l.b16 %v1084
    %v2236 = vunpack.c.h.b16 %v1084
    %v2237 = vunpack.c.l.b16 %v1085
    %v2238 = vunpack.c.h.b16 %v1085
    %v2239 = vunpack.c.l.b16 %v1086
    %v2240 = vunpack.c.h.b16 %v1086
    %v2241 = vunpack.c.l.b16 %v1087
    %v2242 = vunpack.c.h.b16 %v1087
    %v2243 = vunpack.c.l.b16 %v1088
    %v2244 = vunpack.c.h.b16 %v1088
    %v2245 = vunpack.c.l.b16 %v1089
    %v2246 = vunpack.c.h.b16 %v1089
    %v2247 = vpack.c.b16 %v2157, %v2151
    %v2248 = vpack.c.b16 %v2158, %v2152
    %v2249 = vpack.c.b16 %v2159, %v2153
    %v2250 = vpack.c.b16 %v2160, %v2154
    %v2251 = vpack.c.b16 %v2161, %v2155
    %v2252 = vpack.c.b16 %v2162, %v2156
    %v2253 = vpack.c.b16 %v2169, %v2163
    %v2254 = vpack.c.b16 %v2170, %v2164
    %v2255 = vpack.c.b16 %v2171, %v2165
    %v2256 = vpack.c.b16 %v2172, %v2166
    %v2257 = vpack.c.b16 %v2173, %v2167
    %v2258 = vpack.c.b16 %v2174, %v2168
    %v2259 = vpack.c.b16 %v2181, %v2175
    %v2260 = vpack.c.b16 %v2182, %v2176
    %v2261 = vpack.c.b16 %v2183, %v2177
    %v2262 = vpack.c.b16 %v2184, %v2178
    %v2263 = vpack.c.b16 %v2185, %v2179
    %v2264 = vpack.c.b16 %v2186, %v2180
    %v2265 = vpack.c.b16 %v2193, %v2187
    %v2266 = vpack.c.b16 %v2194, %v2188
    %v2267 = vpack.c.b16 %v2195, %v2189
    %v2268 = vpack.c.b16 %v2196, %v2190
    %v2269 = vpack.c.b16 %v2197, %v2191
    %v2270 = vpack.c.b16 %v2198, %v2192
    %v2271 = vpack.c.b16 %v2205, %v2199
    %v2272 = vpack.c.b16 %v2206, %v2200
    %v2273 = vpack.c.b16 %v2207, %v2201
    %v2274 = vpack.c.b16 %v2208, %v2202
    %v2275 = vpack.c.b16 %v2209, %v2203
    %v2276 = vpack.c.b16 %v2210, %v2204
    %v2277 = vpack.c.b16 %v2217, %v2211
    %v2278 = vpack.c.b16 %v2218, %v2212
    %v2279 = vpack.c.b16 %v2219, %v2213
    %v2280 = vpack.c.b16 %v2220, %v2214
    %v2281 = vpack.c.b16 %v2221, %v2215
    %v2282 = vpack.c.b16 %v2222, %v2216
    %v2283 = vpack.c.b16 %v2229, %v2223
    %v2284 = vpack.c.b16 %v2230, %v2224
    %v2285 = vpack.c.b16 %v2231, %v2225
    %v2286 = vpack.c.b16 %v2232, %v2226
    %v2287 = vpack.c.b16 %v2233, %v2227
    %v2288 = vpack.c.b16 %v2234, %v2228
    %v2289 = vpack.c.b16 %v2241, %v2235
    %v2290 = vpack.c.b16 %v2242, %v2236
    %v2291 = vpack.c.b16 %v2243, %v2237
    %v2292 = vpack.c.b16 %v2244, %v2238
    %v2293 = vpack.c.b16 %v2245, %v2239
    %v2294 = vpack.c.b16 %v2246, %v2240
    %2343 = vmatprep.subr.bf16.mxu0 %v2248
    %2344 = vmatpush1.bf16.msra.mxu0 %v2247
    %2345 = vmatprep.subr.bf16.mxu0 %v2254
    %2346 = vmatpush1.bf16.msra.mxu0 %v2253
    %2347 = vmatprep.subr.bf16.mxu0 %v2260
    %2348 = vmatpush1.bf16.msra.mxu0 %v2259
    %2349 = vmatprep.subr.bf16.mxu0 %v2266
    %2350 = vmatpush1.bf16.msra.mxu0 %v2265
    %2351 = vmatprep.subr.bf16.mxu0 %v2272
    %2352 = vmatpush1.bf16.msra.mxu0 %v2271
    %2353 = vmatprep.subr.bf16.mxu0 %v2278
    %2354 = vmatpush1.bf16.msra.mxu0 %v2277
    %2355 = vmatprep.subr.bf16.mxu0 %v2284
    %2356 = vmatpush1.bf16.msra.mxu0 %v2283
    %2357 = vmatprep.subr.bf16.mxu0 %v2290
    %2358 = vmatpush1.bf16.msra.mxu0 %v2289
    %2359 = vmatprep.subr.bf16.mxu0 0
    %2360 = vmatpush1.bf16.msra.mxu0 0
    %2361 = vmatprep.subr.bf16.mxu0 0
    %2362 = vmatpush1.bf16.msra.mxu0 0
    %2363 = vmatprep.subr.bf16.mxu0 0
    %2364 = vmatpush1.bf16.msra.mxu0 0
    %2365 = vmatprep.subr.bf16.mxu0 0
    %2366 = vmatpush1.bf16.msra.mxu0 0
    %2367 = vmatprep.subr.bf16.mxu0 0
    %2368 = vmatpush1.bf16.msra.mxu0 0
    %2369 = vmatprep.subr.bf16.mxu0 0
    %2370 = vmatpush1.bf16.msra.mxu0 0
    %2371 = vmatprep.subr.bf16.mxu0 0
    %2372 = vmatpush1.bf16.msra.mxu0 0
    %2373 = vmatprep.subr.bf16.mxu0 0
    %2374 = vmatpush1.bf16.msra.mxu0 0
    %2375 = vmatprep.mubr.bf16.mxu0 0
    %2376 = vmatmul.mubr.bf16.gmra.mrb[0].mxu0 %v2102
    %v2377 = vpop.f32.mrb[0].mxu0
    %v2378 = vadd.f32 0.0, %v2377
    %v2379 = vpop.f32.mrb[0].mxu0
    %v2380 = vadd.f32 0.0, %v2379
    %v2381 = vpop.f32.mrb[0].mxu0
    %v2382 = vpop.f32.mrb[0].mxu0
    %2383 = vdwg.mxu0
    %2384 = vmatprep.subr.bf16.mxu0 %v2250
    %2385 = vmatpush1.bf16.msra.mxu0 %v2249
    %2386 = vmatprep.subr.bf16.mxu0 %v2256
    %2387 = vmatpush1.bf16.msra.mxu0 %v2255
    %2388 = vmatprep.subr.bf16.mxu0 %v2262
    %2389 = vmatpush1.bf16.msra.mxu0 %v2261
    %2390 = vmatprep.subr.bf16.mxu0 %v2268
    %2391 = vmatpush1.bf16.msra.mxu0 %v2267
    %2392 = vmatprep.subr.bf16.mxu0 %v2274
    %2393 = vmatpush1.bf16.msra.mxu0 %v2273
    %2394 = vmatprep.subr.bf16.mxu0 %v2280
    %2395 = vmatpush1.bf16.msra.mxu0 %v2279
    %2396 = vmatprep.subr.bf16.mxu0 %v2286
    %2397 = vmatpush1.bf16.msra.mxu0 %v2285
    %2398 = vmatprep.subr.bf16.mxu0 %v2292
    %2399 = vmatpush1.bf16.msra.mxu0 %v2291
    %2400 = vmatprep.subr.bf16.mxu0 0
    %2401 = vmatpush1.bf16.msra.mxu0 0
    %2402 = vmatprep.subr.bf16.mxu0 0
    %2403 = vmatpush1.bf16.msra.mxu0 0
    %2404 = vmatprep.subr.bf16.mxu0 0
    %2405 = vmatpush1.bf16.msra.mxu0 0
    %2406 = vmatprep.subr.bf16.mxu0 0
    %2407 = vmatpush1.bf16.msra.mxu0 0
    %2408 = vmatprep.subr.bf16.mxu0 0
    %2409 = vmatpush1.bf16.msra.mxu0 0
    %2410 = vmatprep.subr.bf16.mxu0 0
    %2411 = vmatpush1.bf16.msra.mxu0 0
    %2412 = vmatprep.subr.bf16.mxu0 0
    %2413 = vmatpush1.bf16.msra.mxu0 0
    %2414 = vmatprep.subr.bf16.mxu0 0
    %2415 = vmatpush1.bf16.msra.mxu0 0
    %2416 = vmatprep.mubr.bf16.mxu0 0
    %2417 = vmatmul.mubr.bf16.gmra.mrb[0].mxu0 %v2102
    %v2418 = vpop.f32.mrb[0].mxu0
    %v2419 = vadd.f32 0.0, %v2418
    %v2420 = vpop.f32.mrb[0].mxu0
    %v2421 = vadd.f32 0.0, %v2420
    %v2422 = vpop.f32.mrb[0].mxu0
    %v2423 = vpop.f32.mrb[0].mxu0
    %2424 = vdwg.mxu0
    %2425 = vmatprep.subr.bf16.mxu0 %v2252
    %2426 = vmatpush1.bf16.msra.mxu0 %v2251
    %2427 = vmatprep.subr.bf16.mxu0 %v2258
    %2428 = vmatpush1.bf16.msra.mxu0 %v2257
    %2429 = vmatprep.subr.bf16.mxu0 %v2264
    %2430 = vmatpush1.bf16.msra.mxu0 %v2263
    %2431 = vmatprep.subr.bf16.mxu0 %v2270
    %2432 = vmatpush1.bf16.msra.mxu0 %v2269
    %2433 = vmatprep.subr.bf16.mxu0 %v2276
    %2434 = vmatpush1.bf16.msra.mxu0 %v2275
    %2435 = vmatprep.subr.bf16.mxu0 %v2282
    %2436 = vmatpush1.bf16.msra.mxu0 %v2281
    %2437 = vmatprep.subr.bf16.mxu0 %v2288
    %2438 = vmatpush1.bf16.msra.mxu0 %v2287
    %2439 = vmatprep.subr.bf16.mxu0 %v2294
    %2440 = vmatpush1.bf16.msra.mxu0 %v2293
    %2441 = vmatprep.subr.bf16.mxu0 0
    %2442 = vmatpush1.bf16.msra.mxu0 0
    %2443 = vmatprep.subr.bf16.mxu0 0
    %2444 = vmatpush1.bf16.msra.mxu0 0
    %2445 = vmatprep.subr.bf16.mxu0 0
    %2446 = vmatpush1.bf16.msra.mxu0 0
    %2447 = vmatprep.subr.bf16.mxu0 0
    %2448 = vmatpush1.bf16.msra.mxu0 0
    %2449 = vmatprep.subr.bf16.mxu0 0
    %2450 = vmatpush1.bf16.msra.mxu0 0
    %2451 = vmatprep.subr.bf16.mxu0 0
    %2452 = vmatpush1.bf16.msra.mxu0 0
    %2453 = vmatprep.subr.bf16.mxu0 0
    %2454 = vmatpush1.bf16.msra.mxu0 0
    %2455 = vmatprep.subr.bf16.mxu0 0
    %2456 = vmatpush1.bf16.msra.mxu0 0
    %2457 = vmatprep.mubr.bf16.mxu0 0
    %2458 = vmatmul.mubr.bf16.gmra.mrb[0].mxu0 %v2102
    %v2459 = vpop.f32.mrb[0].mxu0
    %v2460 = vadd.f32 0.0, %v2459
    %v2461 = vpop.f32.mrb[0].mxu0
    %v2462 = vadd.f32 0.0, %v2461
    %v2463 = vpop.f32.mrb[0].mxu0
    %v2464 = vpop.f32.mrb[0].mxu0
    %2465 = vdwg.mxu0
    %v2466 = vld [vmem:[#allocation2] sm:$0xff]
    %v2467 = vld [vmem:[#allocation2 + $0x8] sm:$0xff]
    %v2468 = vld [vmem:[#allocation2 + $0x10] sm:$0xff]
    %v2469 = vadd.f32 %v2466, %v2014
    %v2470 = vadd.f32 %v2467, %v2016
    %v2471 = vadd.f32 %v2468, %v2055
    %2472 = vst [vmem:[#allocation2] sm:$0xff] %v2469
    %2473 = vst [vmem:[#allocation2 + $0x8] sm:$0xff] %v2470
    %2474 = vst [vmem:[#allocation2 + $0x10] sm:$0xff] %v2471
    %v2475 = vld [vmem:[#allocation3] sm:$0xff]
    %v2476 = vld [vmem:[#allocation3 + $0x8] sm:$0xff]
    %v2477 = vld [vmem:[#allocation3 + $0x10] sm:$0xff]
    %v2478 = vadd.f32 %v2475, %v2057
    %v2479 = vadd.f32 %v2476, %v2096
    %v2480 = vadd.f32 %v2477, %v2098
    %2481 = vst [vmem:[#allocation3] sm:$0xff] %v2478
    %2482 = vst [vmem:[#allocation3 + $0x8] sm:$0xff] %v2479
    %2483 = vst [vmem:[#allocation3 + $0x10] sm:$0xff] %v2480
    %v2484 = vld [vmem:[#allocation2 + $0xa8] sm:$0xff]
    %v2485 = vld [vmem:[#allocation2 + $0xb0] sm:$0xff]
    %v2486 = vld [vmem:[#allocation2 + $0xb8] sm:$0xff]
    %v2487 = vadd.f32 %v2484, %v2378
    %v2488 = vadd.f32 %v2485, %v2380
    %v2489 = vadd.f32 %v2486, %v2419
    %2490 = vst [vmem:[#allocation2 + $0xa8] sm:$0xff] %v2487
    %2491 = vst [vmem:[#allocation2 + $0xb0] sm:$0xff] %v2488
    %2492 = vst [vmem:[#allocation2 + $0xb8] sm:$0xff] %v2489
    %v2493 = vld [vmem:[#allocation3 + $0xa8] sm:$0xff]
    %v2494 = vld [vmem:[#allocation3 + $0xb0] sm:$0xff]
    %v2495 = vld [vmem:[#allocation3 + $0xb8] sm:$0xff]
    %v2496 = vadd.f32 %v2493, %v2421
    %v2497 = vadd.f32 %v2494, %v2460
    %v2498 = vadd.f32 %v2495, %v2462
    %2499 = vst [vmem:[#allocation3 + $0xa8] sm:$0xff] %v2496
    %2500 = vst [vmem:[#allocation3 + $0xb0] sm:$0xff] %v2497
    %2501 = vst [vmem:[#allocation3 + $0xb8] sm:$0xff] %v2498
    %2502 = vmatprep.subr.bf16.mxu0 %v1380
    %2503 = vmatpush1.bf16.msra.mxu0 %v1379
    %2504 = vmatprep.subr.bf16.mxu0 %v1386
    %2505 = vmatpush1.bf16.msra.mxu0 %v1385
    %2506 = vmatprep.subr.bf16.mxu0 %v1392
    %2507 = vmatpush1.bf16.msra.mxu0 %v1391
    %2508 = vmatprep.subr.bf16.mxu0 %v1398
    %2509 = vmatpush1.bf16.msra.mxu0 %v1397
    %2510 = vmatprep.subr.bf16.mxu0 %v1404
    %2511 = vmatpush1.bf16.msra.mxu0 %v1403
    %2512 = vmatprep.subr.bf16.mxu0 %v1410
    %2513 = vmatpush1.bf16.msra.mxu0 %v1409
    %2514 = vmatprep.subr.bf16.mxu0 %v1416
    %2515 = vmatpush1.bf16.msra.mxu0 %v1415
    %2516 = vmatprep.subr.bf16.mxu0 %v1422
    %2517 = vmatpush1.bf16.msra.mxu0 %v1421
    %2518 = vmatprep.subr.bf16.mxu0 %v1428
    %2519 = vmatpush1.bf16.msra.mxu0 %v1427
    %2520 = vmatprep.subr.bf16.mxu0 %v1434
    %2521 = vmatpush1.bf16.msra.mxu0 %v1433
    %2522 = vmatprep.subr.bf16.mxu0 %v1440
    %2523 = vmatpush1.bf16.msra.mxu0 %v1439
    %2524 = vmatprep.subr.bf16.mxu0 %v1446
    %2525 = vmatpush1.bf16.msra.mxu0 %v1445
    %2526 = vmatprep.subr.bf16.mxu0 %v1452
    %2527 = vmatpush1.bf16.msra.mxu0 %v1451
    %2528 = vmatprep.subr.bf16.mxu0 %v1458
    %2529 = vmatpush1.bf16.msra.mxu0 %v1457
    %2530 = vmatprep.subr.bf16.mxu0 %v1464
    %2531 = vmatpush1.bf16.msra.mxu0 %v1463
    %2532 = vmatprep.subr.bf16.mxu0 %v1470
    %2533 = vmatpush1.bf16.msra.mxu0 %v1469
    %2534 = vmatprep.mubr.bf16.mxu0 %v2102
    %2535 = vmatmul.mubr.bf16.gmra.mrb[0].mxu0 %v1738
    %v2536 = vpop.f32.mrb[0].mxu0
    %v2537 = vadd.f32 0.0, %v2536
    %v2538 = vpop.f32.mrb[0].mxu0
    %v2539 = vadd.f32 0.0, %v2538
    %v2540 = vpop.f32.mrb[0].mxu0
    %v2541 = vpop.f32.mrb[0].mxu0
    %2542 = vdwg.mxu0
    %2543 = vmatprep.subr.bf16.mxu0 %v1382
    %2544 = vmatpush1.bf16.msra.mxu0 %v1381
    %2545 = vmatprep.subr.bf16.mxu0 %v1388
    %2546 = vmatpush1.bf16.msra.mxu0 %v1387
    %2547 = vmatprep.subr.bf16.mxu0 %v1394
    %2548 = vmatpush1.bf16.msra.mxu0 %v1393
    %2549 = vmatprep.subr.bf16.mxu0 %v1400
    %2550 = vmatpush1.bf16.msra.mxu0 %v1399
    %2551 = vmatprep.subr.bf16.mxu0 %v1406
    %2552 = vmatpush1.bf16.msra.mxu0 %v1405
    %2553 = vmatprep.subr.bf16.mxu0 %v1412
    %2554 = vmatpush1.bf16.msra.mxu0 %v1411
    %2555 = vmatprep.subr.bf16.mxu0 %v1418
    %2556 = vmatpush1.bf16.msra.mxu0 %v1417
    %2557 = vmatprep.subr.bf16.mxu0 %v1424
    %2558 = vmatpush1.bf16.msra.mxu0 %v1423
    %2559 = vmatprep.subr.bf16.mxu0 %v1430
    %2560 = vmatpush1.bf16.msra.mxu0 %v1429
    %2561 = vmatprep.subr.bf16.mxu0 %v1436
    %2562 = vmatpush1.bf16.msra.mxu0 %v1435
    %2563 = vmatprep.subr.bf16.mxu0 %v1442
    %2564 = vmatpush1.bf16.msra.mxu0 %v1441
    %2565 = vmatprep.subr.bf16.mxu0 %v1448
    %2566 = vmatpush1.bf16.msra.mxu0 %v1447
    %2567 = vmatprep.subr.bf16.mxu0 %v1454
    %2568 = vmatpush1.bf16.msra.mxu0 %v1453
    %2569 = vmatprep.subr.bf16.mxu0 %v1460
    %2570 = vmatpush1.bf16.msra.mxu0 %v1459
    %2571 = vmatprep.subr.bf16.mxu0 %v1466
    %2572 = vmatpush1.bf16.msra.mxu0 %v1465
    %2573 = vmatprep.subr.bf16.mxu0 %v1472
    %2574 = vmatpush1.bf16.msra.mxu0 %v1471
    %2575 = vmatprep.mubr.bf16.mxu0 %v2102
    %2576 = vmatmul.mubr.bf16.gmra.mrb[0].mxu0 %v1738
    %v2577 = vpop.f32.mrb[0].mxu0
    %v2578 = vadd.f32 0.0, %v2577
    %v2579 = vpop.f32.mrb[0].mxu0
    %v2580 = vadd.f32 0.0, %v2579
    %v2581 = vpop.f32.mrb[0].mxu0
    %v2582 = vpop.f32.mrb[0].mxu0
    %2583 = vdwg.mxu0
    %2584 = vmatprep.subr.bf16.mxu0 %v1384
    %2585 = vmatpush1.bf16.msra.mxu0 %v1383
    %2586 = vmatprep.subr.bf16.mxu0 %v1390
    %2587 = vmatpush1.bf16.msra.mxu0 %v1389
    %2588 = vmatprep.subr.bf16.mxu0 %v1396
    %2589 = vmatpush1.bf16.msra.mxu0 %v1395
    %2590 = vmatprep.subr.bf16.mxu0 %v1402
    %2591 = vmatpush1.bf16.msra.mxu0 %v1401
    %2592 = vmatprep.subr.bf16.mxu0 %v1408
    %2593 = vmatpush1.bf16.msra.mxu0 %v1407
    %2594 = vmatprep.subr.bf16.mxu0 %v1414
    %2595 = vmatpush1.bf16.msra.mxu0 %v1413
    %2596 = vmatprep.subr.bf16.mxu0 %v1420
    %2597 = vmatpush1.bf16.msra.mxu0 %v1419
    %2598 = vmatprep.subr.bf16.mxu0 %v1426
    %2599 = vmatpush1.bf16.msra.mxu0 %v1425
    %2600 = vmatprep.subr.bf16.mxu0 %v1432
    %2601 = vmatpush1.bf16.msra.mxu0 %v1431
    %2602 = vmatprep.subr.bf16.mxu0 %v1438
    %2603 = vmatpush1.bf16.msra.mxu0 %v1437
    %2604 = vmatprep.subr.bf16.mxu0 %v1444
    %2605 = vmatpush1.bf16.msra.mxu0 %v1443
    %2606 = vmatprep.subr.bf16.mxu0 %v1450
    %2607 = vmatpush1.bf16.msra.mxu0 %v1449
    %2608 = vmatprep.subr.bf16.mxu0 %v1456
    %2609 = vmatpush1.bf16.msra.mxu0 %v1455
    %2610 = vmatprep.subr.bf16.mxu0 %v1462
    %2611 = vmatpush1.bf16.msra.mxu0 %v1461
    %2612 = vmatprep.subr.bf16.mxu0 %v1468
    %2613 = vmatpush1.bf16.msra.mxu0 %v1467
    %2614 = vmatprep.subr.bf16.mxu0 %v1474
    %2615 = vmatpush1.bf16.msra.mxu0 %v1473
    %2616 = vmatprep.mubr.bf16.mxu0 %v2102
    %2617 = vmatmul.mubr.bf16.gmra.mrb[0].mxu0 %v1738
    %v2618 = vpop.f32.mrb[0].mxu0
    %v2619 = vadd.f32 0.0, %v2618
    %v2620 = vpop.f32.mrb[0].mxu0
    %v2621 = vadd.f32 0.0, %v2620
    %v2622 = vpop.f32.mrb[0].mxu0
    %v2623 = vpop.f32.mrb[0].mxu0
    %2624 = vdwg.mxu0
    %v2625 = vadd.f32 %v489, %v2537
    %v2626 = vxor.u32 %v2625, 2147483648
    %v2627 = vmul.f32 %v2626, 1.442695
    %v2628 = vpow.pop %v2627
    %v2629 = vadd.f32 %v2628, 1.0
    %v2630 = vrcp.pop %v2629
    %v2631 = vmul.f32 1.0, %v2630
    %v2632 = vadd.f32 %v491, %v2539
    %v2633 = vxor.u32 %v2632, 2147483648
    %v2634 = vmul.f32 %v2633, 1.442695
    %v2635 = vpow.pop %v2634
    %v2636 = vadd.f32 %v2635, 1.0
    %v2637 = vrcp.pop %v2636
    %v2638 = vmul.f32 1.0, %v2637
    %v2639 = vadd.f32 %v2578, %v889
    %v2640 = vmul.f32 %v2631, %v2639
    %v2641 = vadd.f32 %v601, %v2640
    %v2642 = vtanh.pop %v2641
    %v2643 = vsub.f32 1.0, %v2638
    %v2644 = vmul.f32 %v2643, %v2642
    %v2645 = vmul.f32 %v2638, %v1715
    %v2646 = vadd.f32 %v2644, %v2645
    %v2647 = vadd.f32 %v769, %v2580
    %v2648 = vxor.u32 %v2647, 2147483648
    %v2649 = vmul.f32 %v2648, 1.442695
    %v2650 = vpow.pop %v2649
    %v2651 = vadd.f32 %v2650, 1.0
    %v2652 = vrcp.pop %v2651
    %v2653 = vmul.f32 1.0, %v2652
    %v2654 = vadd.f32 %v771, %v2619
    %v2655 = vxor.u32 %v2654, 2147483648
    %v2656 = vmul.f32 %v2655, 1.442695
    %v2657 = vpow.pop %v2656
    %v2658 = vadd.f32 %v2657, 1.0
    %v2659 = vrcp.pop %v2658
    %v2660 = vmul.f32 1.0, %v2659
    %v2661 = vadd.f32 %v2621, %v896
    %v2662 = vmul.f32 %v2653, %v2661
    %v2663 = vadd.f32 %v876, %v2662
    %v2664 = vtanh.pop %v2663
    %v2665 = vsub.f32 1.0, %v2660
    %v2666 = vmul.f32 %v2665, %v2664
    %v2667 = vmul.f32 %v2660, %v1737
    %v2668 = vadd.f32 %v2666, %v2667
    %v2669 = vpack.c.bf16 %v2646, %v2646
    %2670 = vmatprep.subr.bf16.mxu0 %v1884
    %2671 = vmatpush1.bf16.msra.mxu0 %v1883
    %2672 = vmatprep.subr.bf16.mxu0 %v1890
    %2673 = vmatpush1.bf16.msra.mxu0 %v1889
    %2674 = vmatprep.subr.bf16.mxu0 %v1896
    %2675 = vmatpush1.bf16.msra.mxu0 %v1895
    %2676 = vmatprep.subr.bf16.mxu0 %v1902
    %2677 = vmatpush1.bf16.msra.mxu0 %v1901
    %2678 = vmatprep.subr.bf16.mxu0 %v1908
    %2679 = vmatpush1.bf16.msra.mxu0 %v1907
    %2680 = vmatprep.subr.bf16.mxu0 %v1914
    %2681 = vmatpush1.bf16.msra.mxu0 %v1913
    %2682 = vmatprep.subr.bf16.mxu0 %v1920
    %2683 = vmatpush1.bf16.msra.mxu0 %v1919
    %2684 = vmatprep.subr.bf16.mxu0 %v1926
    %2685 = vmatpush1.bf16.msra.mxu0 %v1925
    %2686 = vmatprep.subr.bf16.mxu0 0
    %2687 = vmatpush1.bf16.msra.mxu0 0
    %2688 = vmatprep.subr.bf16.mxu0 0
    %2689 = vmatpush1.bf16.msra.mxu0 0
    %2690 = vmatprep.subr.bf16.mxu0 0
    %2691 = vmatpush1.bf16.msra.mxu0 0
    %2692 = vmatprep.subr.bf16.mxu0 0
    %2693 = vmatpush1.bf16.msra.mxu0 0
    %2694 = vmatprep.subr.bf16.mxu0 0
    %2695 = vmatpush1.bf16.msra.mxu0 0
    %2696 = vmatprep.subr.bf16.mxu0 0
    %2697 = vmatpush1.bf16.msra.mxu0 0
    %2698 = vmatprep.subr.bf16.mxu0 0
    %2699 = vmatpush1.bf16.msra.mxu0 0
    %2700 = vmatprep.subr.bf16.mxu0 0
    %2701 = vmatpush1.bf16.msra.mxu0 0
    %2702 = vmatprep.mubr.bf16.mxu0 0
    %2703 = vmatmul.mubr.bf16.gmra.mrb[0].mxu0 %v2669
    %v2704 = vpop.f32.mrb[0].mxu0
    %v2705 = vadd.f32 0.0, %v2704
    %v2706 = vpop.f32.mrb[0].mxu0
    %v2707 = vadd.f32 0.0, %v2706
    %v2708 = vpop.f32.mrb[0].mxu0
    %v2709 = vpop.f32.mrb[0].mxu0
    %2710 = vdwg.mxu0
    %2711 = vmatprep.subr.bf16.mxu0 %v1886
    %2712 = vmatpush1.bf16.msra.mxu0 %v1885
    %2713 = vmatprep.subr.bf16.mxu0 %v1892
    %2714 = vmatpush1.bf16.msra.mxu0 %v1891
    %2715 = vmatprep.subr.bf16.mxu0 %v1898
    %2716 = vmatpush1.bf16.msra.mxu0 %v1897
    %2717 = vmatprep.subr.bf16.mxu0 %v1904
    %2718 = vmatpush1.bf16.msra.mxu0 %v1903
    %2719 = vmatprep.subr.bf16.mxu0 %v1910
    %2720 = vmatpush1.bf16.msra.mxu0 %v1909
    %2721 = vmatprep.subr.bf16.mxu0 %v1916
    %2722 = vmatpush1.bf16.msra.mxu0 %v1915
    %2723 = vmatprep.subr.bf16.mxu0 %v1922
    %2724 = vmatpush1.bf16.msra.mxu0 %v1921
    %2725 = vmatprep.subr.bf16.mxu0 %v1928
    %2726 = vmatpush1.bf16.msra.mxu0 %v1927
    %2727 = vmatprep.subr.bf16.mxu0 0
    %2728 = vmatpush1.bf16.msra.mxu0 0
    %2729 = vmatprep.subr.bf16.mxu0 0
    %2730 = vmatpush1.bf16.msra.mxu0 0
    %2731 = vmatprep.subr.bf16.mxu0 0
    %2732 = vmatpush1.bf16.msra.mxu0 0
    %2733 = vmatprep.subr.bf16.mxu0 0
    %2734 = vmatpush1.bf16.msra.mxu0 0
    %2735 = vmatprep.subr.bf16.mxu0 0
    %2736 = vmatpush1.bf16.msra.mxu0 0
    %2737 = vmatprep.subr.bf16.mxu0 0
    %2738 = vmatpush1.bf16.msra.mxu0 0
    %2739 = vmatprep.subr.bf16.mxu0 0
    %2740 = vmatpush1.bf16.msra.mxu0 0
    %2741 = vmatprep.subr.bf16.mxu0 0
    %2742 = vmatpush1.bf16.msra.mxu0 0
    %2743 = vmatprep.mubr.bf16.mxu0 0
    %2744 = vmatmul.mubr.bf16.gmra.mrb[0].mxu0 %v2669
    %v2745 = vpop.f32.mrb[0].mxu0
    %v2746 = vadd.f32 0.0, %v2745
    %v2747 = vpop.f32.mrb[0].mxu0
    %v2748 = vadd.f32 0.0, %v2747
    %v2749 = vpop.f32.mrb[0].mxu0
    %v2750 = vpop.f32.mrb[0].mxu0
    %2751 = vdwg.mxu0
    %2752 = vmatprep.subr.bf16.mxu0 %v1888
    %2753 = vmatpush1.bf16.msra.mxu0 %v1887
    %2754 = vmatprep.subr.bf16.mxu0 %v1894
    %2755 = vmatpush1.bf16.msra.mxu0 %v1893
    %2756 = vmatprep.subr.bf16.mxu0 %v1900
    %2757 = vmatpush1.bf16.msra.mxu0 %v1899
    %2758 = vmatprep.subr.bf16.mxu0 %v1906
    %2759 = vmatpush1.bf16.msra.mxu0 %v1905
    %2760 = vmatprep.subr.bf16.mxu0 %v1912
    %2761 = vmatpush1.bf16.msra.mxu0 %v1911
    %2762 = vmatprep.subr.bf16.mxu0 %v1918
    %2763 = vmatpush1.bf16.msra.mxu0 %v1917
    %2764 = vmatprep.subr.bf16.mxu0 %v1924
    %2765 = vmatpush1.bf16.msra.mxu0 %v1923
    %2766 = vmatprep.subr.bf16.mxu0 %v1930
    %2767 = vmatpush1.bf16.msra.mxu0 %v1929
    %2768 = vmatprep.subr.bf16.mxu0 0
    %2769 = vmatpush1.bf16.msra.mxu0 0
    %2770 = vmatprep.subr.bf16.mxu0 0
    %2771 = vmatpush1.bf16.msra.mxu0 0
    %2772 = vmatprep.subr.bf16.mxu0 0
    %2773 = vmatpush1.bf16.msra.mxu0 0
    %2774 = vmatprep.subr.bf16.mxu0 0
    %2775 = vmatpush1.bf16.msra.mxu0 0
    %2776 = vmatprep.subr.bf16.mxu0 0
    %2777 = vmatpush1.bf16.msra.mxu0 0
    %2778 = vmatprep.subr.bf16.mxu0 0
    %2779 = vmatpush1.bf16.msra.mxu0 0
    %2780 = vmatprep.subr.bf16.mxu0 0
    %2781 = vmatpush1.bf16.msra.mxu0 0
    %2782 = vmatprep.subr.bf16.mxu0 0
    %2783 = vmatpush1.bf16.msra.mxu0 0
    %2784 = vmatprep.mubr.bf16.mxu0 0
    %2785 = vmatmul.mubr.bf16.gmra.mrb[0].mxu0 %v2669
    %v2786 = vpop.f32.mrb[0].mxu0
    %v2787 = vadd.f32 0.0, %v2786
    %v2788 = vpop.f32.mrb[0].mxu0
    %v2789 = vadd.f32 0.0, %v2788
    %v2790 = vpop.f32.mrb[0].mxu0
    %v2791 = vpop.f32.mrb[0].mxu0
    %2792 = vdwg.mxu0
    %v2793 = vpack.c.bf16 %v2668, %v2668
    %2794 = vmatprep.subr.bf16.mxu0 %v2248
    %2795 = vmatpush1.bf16.msra.mxu0 %v2247
    %2796 = vmatprep.subr.bf16.mxu0 %v2254
    %2797 = vmatpush1.bf16.msra.mxu0 %v2253
    %2798 = vmatprep.subr.bf16.mxu0 %v2260
    %2799 = vmatpush1.bf16.msra.mxu0 %v2259
    %2800 = vmatprep.subr.bf16.mxu0 %v2266
    %2801 = vmatpush1.bf16.msra.mxu0 %v2265
    %2802 = vmatprep.subr.bf16.mxu0 %v2272
    %2803 = vmatpush1.bf16.msra.mxu0 %v2271
    %2804 = vmatprep.subr.bf16.mxu0 %v2278
    %2805 = vmatpush1.bf16.msra.mxu0 %v2277
    %2806 = vmatprep.subr.bf16.mxu0 %v2284
    %2807 = vmatpush1.bf16.msra.mxu0 %v2283
    %2808 = vmatprep.subr.bf16.mxu0 %v2290
    %2809 = vmatpush1.bf16.msra.mxu0 %v2289
    %2810 = vmatprep.subr.bf16.mxu0 0
    %2811 = vmatpush1.bf16.msra.mxu0 0
    %2812 = vmatprep.subr.bf16.mxu0 0
    %2813 = vmatpush1.bf16.msra.mxu0 0
    %2814 = vmatprep.subr.bf16.mxu0 0
    %2815 = vmatpush1.bf16.msra.mxu0 0
    %2816 = vmatprep.subr.bf16.mxu0 0
    %2817 = vmatpush1.bf16.msra.mxu0 0
    %2818 = vmatprep.subr.bf16.mxu0 0
    %2819 = vmatpush1.bf16.msra.mxu0 0
    %2820 = vmatprep.subr.bf16.mxu0 0
    %2821 = vmatpush1.bf16.msra.mxu0 0
    %2822 = vmatprep.subr.bf16.mxu0 0
    %2823 = vmatpush1.bf16.msra.mxu0 0
    %2824 = vmatprep.subr.bf16.mxu0 0
    %2825 = vmatpush1.bf16.msra.mxu0 0
    %2826 = vmatprep.mubr.bf16.mxu0 0
    %2827 = vmatmul.mubr.bf16.gmra.mrb[0].mxu0 %v2793
    %v2828 = vpop.f32.mrb[0].mxu0
    %v2829 = vadd.f32 0.0, %v2828
    %v2830 = vpop.f32.mrb[0].mxu0
    %v2831 = vadd.f32 0.0, %v2830
    %v2832 = vpop.f32.mrb[0].mxu0
    %v2833 = vpop.f32.mrb[0].mxu0
    %2834 = vdwg.mxu0
    %2835 = vmatprep.subr.bf16.mxu0 %v2250
    %2836 = vmatpush1.bf16.msra.mxu0 %v2249
    %2837 = vmatprep.subr.bf16.mxu0 %v2256
    %2838 = vmatpush1.bf16.msra.mxu0 %v2255
    %2839 = vmatprep.subr.bf16.mxu0 %v2262
    %2840 = vmatpush1.bf16.msra.mxu0 %v2261
    %2841 = vmatprep.subr.bf16.mxu0 %v2268
    %2842 = vmatpush1.bf16.msra.mxu0 %v2267
    %2843 = vmatprep.subr.bf16.mxu0 %v2274
    %2844 = vmatpush1.bf16.msra.mxu0 %v2273
    %2845 = vmatprep.subr.bf16.mxu0 %v2280
    %2846 = vmatpush1.bf16.msra.mxu0 %v2279
    %2847 = vmatprep.subr.bf16.mxu0 %v2286
    %2848 = vmatpush1.bf16.msra.mxu0 %v2285
    %2849 = vmatprep.subr.bf16.mxu0 %v2292
    %2850 = vmatpush1.bf16.msra.mxu0 %v2291
    %2851 = vmatprep.subr.bf16.mxu0 0
    %2852 = vmatpush1.bf16.msra.mxu0 0
    %2853 = vmatprep.subr.bf16.mxu0 0
    %2854 = vmatpush1.bf16.msra.mxu0 0
    %2855 = vmatprep.subr.bf16.mxu0 0
    %2856 = vmatpush1.bf16.msra.mxu0 0
    %2857 = vmatprep.subr.bf16.mxu0 0
    %2858 = vmatpush1.bf16.msra.mxu0 0
    %2859 = vmatprep.subr.bf16.mxu0 0
    %2860 = vmatpush1.bf16.msra.mxu0 0
    %2861 = vmatprep.subr.bf16.mxu0 0
    %2862 = vmatpush1.bf16.msra.mxu0 0
    %2863 = vmatprep.subr.bf16.mxu0 0
    %2864 = vmatpush1.bf16.msra.mxu0 0
    %2865 = vmatprep.subr.bf16.mxu0 0
    %2866 = vmatpush1.bf16.msra.mxu0 0
    %2867 = vmatprep.mubr.bf16.mxu0 0
    %2868 = vmatmul.mubr.bf16.gmra.mrb[0].mxu0 %v2793
    %v2869 = vpop.f32.mrb[0].mxu0
    %v2870 = vadd.f32 0.0, %v2869
    %v2871 = vpop.f32.mrb[0].mxu0
    %v2872 = vadd.f32 0.0, %v2871
    %v2873 = vpop.f32.mrb[0].mxu0
    %v2874 = vpop.f32.mrb[0].mxu0
    %2875 = vdwg.mxu0
    %2876 = vmatprep.subr.bf16.mxu0 %v2252
    %2877 = vmatpush1.bf16.msra.mxu0 %v2251
    %2878 = vmatprep.subr.bf16.mxu0 %v2258
    %2879 = vmatpush1.bf16.msra.mxu0 %v2257
    %2880 = vmatprep.subr.bf16.mxu0 %v2264
    %2881 = vmatpush1.bf16.msra.mxu0 %v2263
    %2882 = vmatprep.subr.bf16.mxu0 %v2270
    %2883 = vmatpush1.bf16.msra.mxu0 %v2269
    %2884 = vmatprep.subr.bf16.mxu0 %v2276
    %2885 = vmatpush1.bf16.msra.mxu0 %v2275
    %2886 = vmatprep.subr.bf16.mxu0 %v2282
    %2887 = vmatpush1.bf16.msra.mxu0 %v2281
    %2888 = vmatprep.subr.bf16.mxu0 %v2288
    %2889 = vmatpush1.bf16.msra.mxu0 %v2287
    %2890 = vmatprep.subr.bf16.mxu0 %v2294
    %2891 = vmatpush1.bf16.msra.mxu0 %v2293
    %2892 = vmatprep.subr.bf16.mxu0 0
    %2893 = vmatpush1.bf16.msra.mxu0 0
    %2894 = vmatprep.subr.bf16.mxu0 0
    %2895 = vmatpush1.bf16.msra.mxu0 0
    %2896 = vmatprep.subr.bf16.mxu0 0
    %2897 = vmatpush1.bf16.msra.mxu0 0
    %2898 = vmatprep.subr.bf16.mxu0 0
    %2899 = vmatpush1.bf16.msra.mxu0 0
    %2900 = vmatprep.subr.bf16.mxu0 0
    %2901 = vmatpush1.bf16.msra.mxu0 0
    %2902 = vmatprep.subr.bf16.mxu0 0
    %2903 = vmatpush1.bf16.msra.mxu0 0
    %2904 = vmatprep.subr.bf16.mxu0 0
    %2905 = vmatpush1.bf16.msra.mxu0 0
    %2906 = vmatprep.subr.bf16.mxu0 0
    %2907 = vmatpush1.bf16.msra.mxu0 0
    %2908 = vmatprep.mubr.bf16.mxu0 0
    %2909 = vmatmul.mubr.bf16.gmra.mrb[0].mxu0 %v2793
    %v2910 = vpop.f32.mrb[0].mxu0
    %v2911 = vadd.f32 0.0, %v2910
    %v2912 = vpop.f32.mrb[0].mxu0
    %v2913 = vadd.f32 0.0, %v2912
    %v2914 = vpop.f32.mrb[0].mxu0
    %v2915 = vpop.f32.mrb[0].mxu0
    %2916 = vdwg.mxu0
    %v2917 = vld [vmem:[#allocation2 + $0x18] sm:$0xff]
    %v2918 = vld [vmem:[#allocation2 + $0x20] sm:$0xff]
    %v2919 = vld [vmem:[#allocation2 + $0x28] sm:$0xff]
    %v2920 = vadd.f32 %v2917, %v2705
    %v2921 = vadd.f32 %v2918, %v2707
    %v2922 = vadd.f32 %v2919, %v2746
    %2923 = vst [vmem:[#allocation2 + $0x18] sm:$0xff] %v2920
    %2924 = vst [vmem:[#allocation2 + $0x20] sm:$0xff] %v2921
    %2925 = vst [vmem:[#allocation2 + $0x28] sm:$0xff] %v2922
    %v2926 = vld [vmem:[#allocation3 + $0x18] sm:$0xff]
    %v2927 = vld [vmem:[#allocation3 + $0x20] sm:$0xff]
    %v2928 = vld [vmem:[#allocation3 + $0x28] sm:$0xff]
    %v2929 = vadd.f32 %v2926, %v2748
    %v2930 = vadd.f32 %v2927, %v2787
    %v2931 = vadd.f32 %v2928, %v2789
    %2932 = vst [vmem:[#allocation3 + $0x18] sm:$0xff] %v2929
    %2933 = vst [vmem:[#allocation3 + $0x20] sm:$0xff] %v2930
    %2934 = vst [vmem:[#allocation3 + $0x28] sm:$0xff] %v2931
    %v2935 = vld [vmem:[#allocation2 + $0x90] sm:$0xff]
    %v2936 = vld [vmem:[#allocation2 + $0x98] sm:$0xff]
    %v2937 = vld [vmem:[#allocation2 + $0xa0] sm:$0xff]
    %v2938 = vadd.f32 %v2935, %v2829
    %v2939 = vadd.f32 %v2936, %v2831
    %v2940 = vadd.f32 %v2937, %v2870
    %2941 = vst [vmem:[#allocation2 + $0x90] sm:$0xff] %v2938
    %2942 = vst [vmem:[#allocation2 + $0x98] sm:$0xff] %v2939
    %2943 = vst [vmem:[#allocation2 + $0xa0] sm:$0xff] %v2940
    %v2944 = vld [vmem:[#allocation3 + $0x90] sm:$0xff]
    %v2945 = vld [vmem:[#allocation3 + $0x98] sm:$0xff]
    %v2946 = vld [vmem:[#allocation3 + $0xa0] sm:$0xff]
    %v2947 = vadd.f32 %v2944, %v2872
    %v2948 = vadd.f32 %v2945, %v2911
    %v2949 = vadd.f32 %v2946, %v2913
    %2950 = vst [vmem:[#allocation3 + $0x90] sm:$0xff] %v2947
    %2951 = vst [vmem:[#allocation3 + $0x98] sm:$0xff] %v2948
    %2952 = vst [vmem:[#allocation3 + $0xa0] sm:$0xff] %v2949
    %2953 = vmatprep.subr.bf16.mxu0 %v1380
    %2954 = vmatpush1.bf16.msra.mxu0 %v1379
    %2955 = vmatprep.subr.bf16.mxu0 %v1386
    %2956 = vmatpush1.bf16.msra.mxu0 %v1385
    %2957 = vmatprep.subr.bf16.mxu0 %v1392
    %2958 = vmatpush1.bf16.msra.mxu0 %v1391
    %2959 = vmatprep.subr.bf16.mxu0 %v1398
    %2960 = vmatpush1.bf16.msra.mxu0 %v1397
    %2961 = vmatprep.subr.bf16.mxu0 %v1404
    %2962 = vmatpush1.bf16.msra.mxu0 %v1403
    %2963 = vmatprep.subr.bf16.mxu0 %v1410
    %2964 = vmatpush1.bf16.msra.mxu0 %v1409
    %2965 = vmatprep.subr.bf16.mxu0 %v1416
    %2966 = vmatpush1.bf16.msra.mxu0 %v1415
    %2967 = vmatprep.subr.bf16.mxu0 %v1422
    %2968 = vmatpush1.bf16.msra.mxu0 %v1421
    %2969 = vmatprep.subr.bf16.mxu0 %v1428
    %2970 = vmatpush1.bf16.msra.mxu0 %v1427
    %2971 = vmatprep.subr.bf16.mxu0 %v1434
    %2972 = vmatpush1.bf16.msra.mxu0 %v1433
    %2973 = vmatprep.subr.bf16.mxu0 %v1440
    %2974 = vmatpush1.bf16.msra.mxu0 %v1439
    %2975 = vmatprep.subr.bf16.mxu0 %v1446
    %2976 = vmatpush1.bf16.msra.mxu0 %v1445
    %2977 = vmatprep.subr.bf16.mxu0 %v1452
    %2978 = vmatpush1.bf16.msra.mxu0 %v1451
    %2979 = vmatprep.subr.bf16.mxu0 %v1458
    %2980 = vmatpush1.bf16.msra.mxu0 %v1457
    %2981 = vmatprep.subr.bf16.mxu0 %v1464
    %2982 = vmatpush1.bf16.msra.mxu0 %v1463
    %2983 = vmatprep.subr.bf16.mxu0 %v1470
    %2984 = vmatpush1.bf16.msra.mxu0 %v1469
    %2985 = vmatprep.mubr.bf16.mxu0 %v2793
    %2986 = vmatmul.mubr.bf16.gmra.mrb[0].mxu0 %v2669
    %v2987 = vpop.f32.mrb[0].mxu0
    %v2988 = vadd.f32 0.0, %v2987
    %v2989 = vpop.f32.mrb[0].mxu0
    %v2990 = vadd.f32 0.0, %v2989
    %v2991 = vpop.f32.mrb[0].mxu0
    %v2992 = vpop.f32.mrb[0].mxu0
    %2993 = vdwg.mxu0
    %2994 = vmatprep.subr.bf16.mxu0 %v1382
    %2995 = vmatpush1.bf16.msra.mxu0 %v1381
    %2996 = vmatprep.subr.bf16.mxu0 %v1388
    %2997 = vmatpush1.bf16.msra.mxu0 %v1387
    %2998 = vmatprep.subr.bf16.mxu0 %v1394
    %2999 = vmatpush1.bf16.msra.mxu0 %v1393
    %3000 = vmatprep.subr.bf16.mxu0 %v1400
    %3001 = vmatpush1.bf16.msra.mxu0 %v1399
    %3002 = vmatprep.subr.bf16.mxu0 %v1406
    %3003 = vmatpush1.bf16.msra.mxu0 %v1405
    %3004 = vmatprep.subr.bf16.mxu0 %v1412
    %3005 = vmatpush1.bf16.msra.mxu0 %v1411
    %3006 = vmatprep.subr.bf16.mxu0 %v1418
    %3007 = vmatpush1.bf16.msra.mxu0 %v1417
    %3008 = vmatprep.subr.bf16.mxu0 %v1424
    %3009 = vmatpush1.bf16.msra.mxu0 %v1423
    %3010 = vmatprep.subr.bf16.mxu0 %v1430
    %3011 = vmatpush1.bf16.msra.mxu0 %v1429
    %3012 = vmatprep.subr.bf16.mxu0 %v1436
    %3013 = vmatpush1.bf16.msra.mxu0 %v1435
    %3014 = vmatprep.subr.bf16.mxu0 %v1442
    %3015 = vmatpush1.bf16.msra.mxu0 %v1441
    %3016 = vmatprep.subr.bf16.mxu0 %v1448
    %3017 = vmatpush1.bf16.msra.mxu0 %v1447
    %3018 = vmatprep.subr.bf16.mxu0 %v1454
    %3019 = vmatpush1.bf16.msra.mxu0 %v1453
    %3020 = vmatprep.subr.bf16.mxu0 %v1460
    %3021 = vmatpush1.bf16.msra.mxu0 %v1459
    %3022 = vmatprep.subr.bf16.mxu0 %v1466
    %3023 = vmatpush1.bf16.msra.mxu0 %v1465
    %3024 = vmatprep.subr.bf16.mxu0 %v1472
    %3025 = vmatpush1.bf16.msra.mxu0 %v1471
    %3026 = vmatprep.mubr.bf16.mxu0 %v2793
    %3027 = vmatmul.mubr.bf16.gmra.mrb[0].mxu0 %v2669
    %v3028 = vpop.f32.mrb[0].mxu0
    %v3029 = vadd.f32 0.0, %v3028
    %v3030 = vpop.f32.mrb[0].mxu0
    %v3031 = vadd.f32 0.0, %v3030
    %v3032 = vpop.f32.mrb[0].mxu0
    %v3033 = vpop.f32.mrb[0].mxu0
    %3034 = vdwg.mxu0
    %3035 = vmatprep.subr.bf16.mxu0 %v1384
    %3036 = vmatpush1.bf16.msra.mxu0 %v1383
    %3037 = vmatprep.subr.bf16.mxu0 %v1390
    %3038 = vmatpush1.bf16.msra.mxu0 %v1389
    %3039 = vmatprep.subr.bf16.mxu0 %v1396
    %3040 = vmatpush1.bf16.msra.mxu0 %v1395
    %3041 = vmatprep.subr.bf16.mxu0 %v1402
    %3042 = vmatpush1.bf16.msra.mxu0 %v1401
    %3043 = vmatprep.subr.bf16.mxu0 %v1408
    %3044 = vmatpush1.bf16.msra.mxu0 %v1407
    %3045 = vmatprep.subr.bf16.mxu0 %v1414
    %3046 = vmatpush1.bf16.msra.mxu0 %v1413
    %3047 = vmatprep.subr.bf16.mxu0 %v1420
    %3048 = vmatpush1.bf16.msra.mxu0 %v1419
    %3049 = vmatprep.subr.bf16.mxu0 %v1426
    %3050 = vmatpush1.bf16.msra.mxu0 %v1425
    %3051 = vmatprep.subr.bf16.mxu0 %v1432
    %3052 = vmatpush1.bf16.msra.mxu0 %v1431
    %3053 = vmatprep.subr.bf16.mxu0 %v1438
    %3054 = vmatpush1.bf16.msra.mxu0 %v1437
    %3055 = vmatprep.subr.bf16.mxu0 %v1444
    %3056 = vmatpush1.bf16.msra.mxu0 %v1443
    %3057 = vmatprep.subr.bf16.mxu0 %v1450
    %3058 = vmatpush1.bf16.msra.mxu0 %v1449
    %3059 = vmatprep.subr.bf16.mxu0 %v1456
    %3060 = vmatpush1.bf16.msra.mxu0 %v1455
    %3061 = vmatprep.subr.bf16.mxu0 %v1462
    %3062 = vmatpush1.bf16.msra.mxu0 %v1461
    %3063 = vmatprep.subr.bf16.mxu0 %v1468
    %3064 = vmatpush1.bf16.msra.mxu0 %v1467
    %3065 = vmatprep.subr.bf16.mxu0 %v1474
    %3066 = vmatpush1.bf16.msra.mxu0 %v1473
    %3067 = vmatprep.mubr.bf16.mxu0 %v2793
    %3068 = vmatmul.mubr.bf16.gmra.mrb[0].mxu0 %v2669
    %v3069 = vpop.f32.mrb[0].mxu0
    %v3070 = vadd.f32 0.0, %v3069
    %v3071 = vpop.f32.mrb[0].mxu0
    %v3072 = vadd.f32 0.0, %v3071
    %v3073 = vpop.f32.mrb[0].mxu0
    %v3074 = vpop.f32.mrb[0].mxu0
    %3075 = vdwg.mxu0
    %v3076 = vadd.f32 %v495, %v2988
    %v3077 = vxor.u32 %v3076, 2147483648
    %v3078 = vmul.f32 %v3077, 1.442695
    %v3079 = vpow.pop %v3078
    %v3080 = vadd.f32 %v3079, 1.0
    %v3081 = vrcp.pop %v3080
    %v3082 = vmul.f32 1.0, %v3081
    %v3083 = vadd.f32 %v497, %v2990
    %v3084 = vxor.u32 %v3083, 2147483648
    %v3085 = vmul.f32 %v3084, 1.442695
    %v3086 = vpow.pop %v3085
    %v3087 = vadd.f32 %v3086, 1.0
    %v3088 = vrcp.pop %v3087
    %v3089 = vmul.f32 1.0, %v3088
    %v3090 = vadd.f32 %v3029, %v889
    %v3091 = vmul.f32 %v3082, %v3090
    %v3092 = vadd.f32 %v606, %v3091
    %v3093 = vtanh.pop %v3092
    %v3094 = vsub.f32 1.0, %v3089
    %v3095 = vmul.f32 %v3094, %v3093
    %v3096 = vmul.f32 %v3089, %v2646
    %v3097 = vadd.f32 %v3095, %v3096
    %v3098 = vadd.f32 %v763, %v3031
    %v3099 = vxor.u32 %v3098, 2147483648
    %v3100 = vmul.f32 %v3099, 1.442695
    %v3101 = vpow.pop %v3100
    %v3102 = vadd.f32 %v3101, 1.0
    %v3103 = vrcp.pop %v3102
    %v3104 = vmul.f32 1.0, %v3103
    %v3105 = vadd.f32 %v765, %v3070
    %v3106 = vxor.u32 %v3105, 2147483648
    %v3107 = vmul.f32 %v3106, 1.442695
    %v3108 = vpow.pop %v3107
    %v3109 = vadd.f32 %v3108, 1.0
    %v3110 = vrcp.pop %v3109
    %v3111 = vmul.f32 1.0, %v3110
    %v3112 = vadd.f32 %v3072, %v896
    %v3113 = vmul.f32 %v3104, %v3112
    %v3114 = vadd.f32 %v871, %v3113
    %v3115 = vtanh.pop %v3114
    %v3116 = vsub.f32 1.0, %v3111
    %v3117 = vmul.f32 %v3116, %v3115
    %v3118 = vmul.f32 %v3111, %v2668
    %v3119 = vadd.f32 %v3117, %v3118
    %v3120 = vpack.c.bf16 %v3097, %v3097
    %3121 = vmatprep.subr.bf16.mxu0 %v1884
    %3122 = vmatpush1.bf16.msra.mxu0 %v1883
    %3123 = vmatprep.subr.bf16.mxu0 %v1890
    %3124 = vmatpush1.bf16.msra.mxu0 %v1889
    %3125 = vmatprep.subr.bf16.mxu0 %v1896
    %3126 = vmatpush1.bf16.msra.mxu0 %v1895
    %3127 = vmatprep.subr.bf16.mxu0 %v1902
    %3128 = vmatpush1.bf16.msra.mxu0 %v1901
    %3129 = vmatprep.subr.bf16.mxu0 %v1908
    %3130 = vmatpush1.bf16.msra.mxu0 %v1907
    %3131 = vmatprep.subr.bf16.mxu0 %v1914
    %3132 = vmatpush1.bf16.msra.mxu0 %v1913
    %3133 = vmatprep.subr.bf16.mxu0 %v1920
    %3134 = vmatpush1.bf16.msra.mxu0 %v1919
    %3135 = vmatprep.subr.bf16.mxu0 %v1926
    %3136 = vmatpush1.bf16.msra.mxu0 %v1925
    %3137 = vmatprep.subr.bf16.mxu0 0
    %3138 = vmatpush1.bf16.msra.mxu0 0
    %3139 = vmatprep.subr.bf16.mxu0 0
    %3140 = vmatpush1.bf16.msra.mxu0 0
    %3141 = vmatprep.subr.bf16.mxu0 0
    %3142 = vmatpush1.bf16.msra.mxu0 0
    %3143 = vmatprep.subr.bf16.mxu0 0
    %3144 = vmatpush1.bf16.msra.mxu0 0
    %3145 = vmatprep.subr.bf16.mxu0 0
    %3146 = vmatpush1.bf16.msra.mxu0 0
    %3147 = vmatprep.subr.bf16.mxu0 0
    %3148 = vmatpush1.bf16.msra.mxu0 0
    %3149 = vmatprep.subr.bf16.mxu0 0
    %3150 = vmatpush1.bf16.msra.mxu0 0
    %3151 = vmatprep.subr.bf16.mxu0 0
    %3152 = vmatpush1.bf16.msra.mxu0 0
    %3153 = vmatprep.mubr.bf16.mxu0 0
    %3154 = vmatmul.mubr.bf16.gmra.mrb[0].mxu0 %v3120
    %v3155 = vpop.f32.mrb[0].mxu0
    %v3156 = vadd.f32 0.0, %v3155
    %v3157 = vpop.f32.mrb[0].mxu0
    %v3158 = vadd.f32 0.0, %v3157
    %v3159 = vpop.f32.mrb[0].mxu0
    %v3160 = vpop.f32.mrb[0].mxu0
    %3161 = vdwg.mxu0
    %3162 = vmatprep.subr.bf16.mxu0 %v1886
    %3163 = vmatpush1.bf16.msra.mxu0 %v1885
    %3164 = vmatprep.subr.bf16.mxu0 %v1892
    %3165 = vmatpush1.bf16.msra.mxu0 %v1891
    %3166 = vmatprep.subr.bf16.mxu0 %v1898
    %3167 = vmatpush1.bf16.msra.mxu0 %v1897
    %3168 = vmatprep.subr.bf16.mxu0 %v1904
    %3169 = vmatpush1.bf16.msra.mxu0 %v1903
    %3170 = vmatprep.subr.bf16.mxu0 %v1910
    %3171 = vmatpush1.bf16.msra.mxu0 %v1909
    %3172 = vmatprep.subr.bf16.mxu0 %v1916
    %3173 = vmatpush1.bf16.msra.mxu0 %v1915
    %3174 = vmatprep.subr.bf16.mxu0 %v1922
    %3175 = vmatpush1.bf16.msra.mxu0 %v1921
    %3176 = vmatprep.subr.bf16.mxu0 %v1928
    %3177 = vmatpush1.bf16.msra.mxu0 %v1927
    %3178 = vmatprep.subr.bf16.mxu0 0
    %3179 = vmatpush1.bf16.msra.mxu0 0
    %3180 = vmatprep.subr.bf16.mxu0 0
    %3181 = vmatpush1.bf16.msra.mxu0 0
    %3182 = vmatprep.subr.bf16.mxu0 0
    %3183 = vmatpush1.bf16.msra.mxu0 0
    %3184 = vmatprep.subr.bf16.mxu0 0
    %3185 = vmatpush1.bf16.msra.mxu0 0
    %3186 = vmatprep.subr.bf16.mxu0 0
    %3187 = vmatpush1.bf16.msra.mxu0 0
    %3188 = vmatprep.subr.bf16.mxu0 0
    %3189 = vmatpush1.bf16.msra.mxu0 0
    %3190 = vmatprep.subr.bf16.mxu0 0
    %3191 = vmatpush1.bf16.msra.mxu0 0
    %3192 = vmatprep.subr.bf16.mxu0 0
    %3193 = vmatpush1.bf16.msra.mxu0 0
    %3194 = vmatprep.mubr.bf16.mxu0 0
    %3195 = vmatmul.mubr.bf16.gmra.mrb[0].mxu0 %v3120
    %v3196 = vpop.f32.mrb[0].mxu0
    %v3197 = vadd.f32 0.0, %v3196
    %v3198 = vpop.f32.mrb[0].mxu0
    %v3199 = vadd.f32 0.0, %v3198
    %v3200 = vpop.f32.mrb[0].mxu0
    %v3201 = vpop.f32.mrb[0].mxu0
    %3202 = vdwg.mxu0
    %3203 = vmatprep.subr.bf16.mxu0 %v1888
    %3204 = vmatpush1.bf16.msra.mxu0 %v1887
    %3205 = vmatprep.subr.bf16.mxu0 %v1894
    %3206 = vmatpush1.bf16.msra.mxu0 %v1893
    %3207 = vmatprep.subr.bf16.mxu0 %v1900
    %3208 = vmatpush1.bf16.msra.mxu0 %v1899
    %3209 = vmatprep.subr.bf16.mxu0 %v1906
    %3210 = vmatpush1.bf16.msra.mxu0 %v1905
    %3211 = vmatprep.subr.bf16.mxu0 %v1912
    %3212 = vmatpush1.bf16.msra.mxu0 %v1911
    %3213 = vmatprep.subr.bf16.mxu0 %v1918
    %3214 = vmatpush1.bf16.msra.mxu0 %v1917
    %3215 = vmatprep.subr.bf16.mxu0 %v1924
    %3216 = vmatpush1.bf16.msra.mxu0 %v1923
    %3217 = vmatprep.subr.bf16.mxu0 %v1930
    %3218 = vmatpush1.bf16.msra.mxu0 %v1929
    %3219 = vmatprep.subr.bf16.mxu0 0
    %3220 = vmatpush1.bf16.msra.mxu0 0
    %3221 = vmatprep.subr.bf16.mxu0 0
    %3222 = vmatpush1.bf16.msra.mxu0 0
    %3223 = vmatprep.subr.bf16.mxu0 0
    %3224 = vmatpush1.bf16.msra.mxu0 0
    %3225 = vmatprep.subr.bf16.mxu0 0
    %3226 = vmatpush1.bf16.msra.mxu0 0
    %3227 = vmatprep.subr.bf16.mxu0 0
    %3228 = vmatpush1.bf16.msra.mxu0 0
    %3229 = vmatprep.subr.bf16.mxu0 0
    %3230 = vmatpush1.bf16.msra.mxu0 0
    %3231 = vmatprep.subr.bf16.mxu0 0
    %3232 = vmatpush1.bf16.msra.mxu0 0
    %3233 = vmatprep.subr.bf16.mxu0 0
    %3234 = vmatpush1.bf16.msra.mxu0 0
    %3235 = vmatprep.mubr.bf16.mxu0 0
    %3236 = vmatmul.mubr.bf16.gmra.mrb[0].mxu0 %v3120
    %v3237 = vpop.f32.mrb[0].mxu0
    %v3238 = vadd.f32 0.0, %v3237
    %v3239 = vpop.f32.mrb[0].mxu0
    %v3240 = vadd.f32 0.0, %v3239
    %v3241 = vpop.f32.mrb[0].mxu0
    %v3242 = vpop.f32.mrb[0].mxu0
    %3243 = vdwg.mxu0
    %v3244 = vpack.c.bf16 %v3119, %v3119
    %3245 = vmatprep.subr.bf16.mxu0 %v2248
    %3246 = vmatpush1.bf16.msra.mxu0 %v2247
    %3247 = vmatprep.subr.bf16.mxu0 %v2254
    %3248 = vmatpush1.bf16.msra.mxu0 %v2253
    %3249 = vmatprep.subr.bf16.mxu0 %v2260
    %3250 = vmatpush1.bf16.msra.mxu0 %v2259
    %3251 = vmatprep.subr.bf16.mxu0 %v2266
    %3252 = vmatpush1.bf16.msra.mxu0 %v2265
    %3253 = vmatprep.subr.bf16.mxu0 %v2272
    %3254 = vmatpush1.bf16.msra.mxu0 %v2271
    %3255 = vmatprep.subr.bf16.mxu0 %v2278
    %3256 = vmatpush1.bf16.msra.mxu0 %v2277
    %3257 = vmatprep.subr.bf16.mxu0 %v2284
    %3258 = vmatpush1.bf16.msra.mxu0 %v2283
    %3259 = vmatprep.subr.bf16.mxu0 %v2290
    %3260 = vmatpush1.bf16.msra.mxu0 %v2289
    %3261 = vmatprep.subr.bf16.mxu0 0
    %3262 = vmatpush1.bf16.msra.mxu0 0
    %3263 = vmatprep.subr.bf16.mxu0 0
    %3264 = vmatpush1.bf16.msra.mxu0 0
    %3265 = vmatprep.subr.bf16.mxu0 0
    %3266 = vmatpush1.bf16.msra.mxu0 0
    %3267 = vmatprep.subr.bf16.mxu0 0
    %3268 = vmatpush1.bf16.msra.mxu0 0
    %3269 = vmatprep.subr.bf16.mxu0 0
    %3270 = vmatpush1.bf16.msra.mxu0 0
    %3271 = vmatprep.subr.bf16.mxu0 0
    %3272 = vmatpush1.bf16.msra.mxu0 0
    %3273 = vmatprep.subr.bf16.mxu0 0
    %3274 = vmatpush1.bf16.msra.mxu0 0
    %3275 = vmatprep.subr.bf16.mxu0 0
    %3276 = vmatpush1.bf16.msra.mxu0 0
    %3277 = vmatprep.mubr.bf16.mxu0 0
    %3278 = vmatmul.mubr.bf16.gmra.mrb[0].mxu0 %v3244
    %v3279 = vpop.f32.mrb[0].mxu0
    %v3280 = vadd.f32 0.0, %v3279
    %v3281 = vpop.f32.mrb[0].mxu0
    %v3282 = vadd.f32 0.0, %v3281
    %v3283 = vpop.f32.mrb[0].mxu0
    %v3284 = vpop.f32.mrb[0].mxu0
    %3285 = vdwg.mxu0
    %3286 = vmatprep.subr.bf16.mxu0 %v2250
    %3287 = vmatpush1.bf16.msra.mxu0 %v2249
    %3288 = vmatprep.subr.bf16.mxu0 %v2256
    %3289 = vmatpush1.bf16.msra.mxu0 %v2255
    %3290 = vmatprep.subr.bf16.mxu0 %v2262
    %3291 = vmatpush1.bf16.msra.mxu0 %v2261
    %3292 = vmatprep.subr.bf16.mxu0 %v2268
    %3293 = vmatpush1.bf16.msra.mxu0 %v2267
    %3294 = vmatprep.subr.bf16.mxu0 %v2274
    %3295 = vmatpush1.bf16.msra.mxu0 %v2273
    %3296 = vmatprep.subr.bf16.mxu0 %v2280
    %3297 = vmatpush1.bf16.msra.mxu0 %v2279
    %3298 = vmatprep.subr.bf16.mxu0 %v2286
    %3299 = vmatpush1.bf16.msra.mxu0 %v2285
    %3300 = vmatprep.subr.bf16.mxu0 %v2292
    %3301 = vmatpush1.bf16.msra.mxu0 %v2291
    %3302 = vmatprep.subr.bf16.mxu0 0
    %3303 = vmatpush1.bf16.msra.mxu0 0
    %3304 = vmatprep.subr.bf16.mxu0 0
    %3305 = vmatpush1.bf16.msra.mxu0 0
    %3306 = vmatprep.subr.bf16.mxu0 0
    %3307 = vmatpush1.bf16.msra.mxu0 0
    %3308 = vmatprep.subr.bf16.mxu0 0
    %3309 = vmatpush1.bf16.msra.mxu0 0
    %3310 = vmatprep.subr.bf16.mxu0 0
    %3311 = vmatpush1.bf16.msra.mxu0 0
    %3312 = vmatprep.subr.bf16.mxu0 0
    %3313 = vmatpush1.bf16.msra.mxu0 0
    %3314 = vmatprep.subr.bf16.mxu0 0
    %3315 = vmatpush1.bf16.msra.mxu0 0
    %3316 = vmatprep.subr.bf16.mxu0 0
    %3317 = vmatpush1.bf16.msra.mxu0 0
    %3318 = vmatprep.mubr.bf16.mxu0 0
    %3319 = vmatmul.mubr.bf16.gmra.mrb[0].mxu0 %v3244
    %v3320 = vpop.f32.mrb[0].mxu0
    %v3321 = vadd.f32 0.0, %v3320
    %v3322 = vpop.f32.mrb[0].mxu0
    %v3323 = vadd.f32 0.0, %v3322
    %v3324 = vpop.f32.mrb[0].mxu0
    %v3325 = vpop.f32.mrb[0].mxu0
    %3326 = vdwg.mxu0
    %3327 = vmatprep.subr.bf16.mxu0 %v2252
    %3328 = vmatpush1.bf16.msra.mxu0 %v2251
    %3329 = vmatprep.subr.bf16.mxu0 %v2258
    %3330 = vmatpush1.bf16.msra.mxu0 %v2257
    %3331 = vmatprep.subr.bf16.mxu0 %v2264
    %3332 = vmatpush1.bf16.msra.mxu0 %v2263
    %3333 = vmatprep.subr.bf16.mxu0 %v2270
    %3334 = vmatpush1.bf16.msra.mxu0 %v2269
    %3335 = vmatprep.subr.bf16.mxu0 %v2276
    %3336 = vmatpush1.bf16.msra.mxu0 %v2275
    %3337 = vmatprep.subr.bf16.mxu0 %v2282
    %3338 = vmatpush1.bf16.msra.mxu0 %v2281
    %3339 = vmatprep.subr.bf16.mxu0 %v2288
    %3340 = vmatpush1.bf16.msra.mxu0 %v2287
    %3341 = vmatprep.subr.bf16.mxu0 %v2294
    %3342 = vmatpush1.bf16.msra.mxu0 %v2293
    %3343 = vmatprep.subr.bf16.mxu0 0
    %3344 = vmatpush1.bf16.msra.mxu0 0
    %3345 = vmatprep.subr.bf16.mxu0 0
    %3346 = vmatpush1.bf16.msra.mxu0 0
    %3347 = vmatprep.subr.bf16.mxu0 0
    %3348 = vmatpush1.bf16.msra.mxu0 0
    %3349 = vmatprep.subr.bf16.mxu0 0
    %3350 = vmatpush1.bf16.msra.mxu0 0
    %3351 = vmatprep.subr.bf16.mxu0 0
    %3352 = vmatpush1.bf16.msra.mxu0 0
    %3353 = vmatprep.subr.bf16.mxu0 0
    %3354 = vmatpush1.bf16.msra.mxu0 0
    %3355 = vmatprep.subr.bf16.mxu0 0
    %3356 = vmatpush1.bf16.msra.mxu0 0
    %3357 = vmatprep.subr.bf16.mxu0 0
    %3358 = vmatpush1.bf16.msra.mxu0 0
    %3359 = vmatprep.mubr.bf16.mxu0 0
    %3360 = vmatmul.mubr.bf16.gmra.mrb[0].mxu0 %v3244
    %v3361 = vpop.f32.mrb[0].mxu0
    %v3362 = vadd.f32 0.0, %v3361
    %v3363 = vpop.f32.mrb[0].mxu0
    %v3364 = vadd.f32 0.0, %v3363
    %v3365 = vpop.f32.mrb[0].mxu0
    %v3366 = vpop.f32.mrb[0].mxu0
    %3367 = vdwg.mxu0
    %v3368 = vld [vmem:[#allocation2 + $0x30] sm:$0xff]
    %v3369 = vld [vmem:[#allocation2 + $0x38] sm:$0xff]
    %v3370 = vld [vmem:[#allocation2 + $0x40] sm:$0xff]
    %v3371 = vadd.f32 %v3368, %v3156
    %v3372 = vadd.f32 %v3369, %v3158
    %v3373 = vadd.f32 %v3370, %v3197
    %3374 = vst [vmem:[#allocation2 + $0x30] sm:$0xff] %v3371
    %3375 = vst [vmem:[#allocation2 + $0x38] sm:$0xff] %v3372
    %3376 = vst [vmem:[#allocation2 + $0x40] sm:$0xff] %v3373
    %v3377 = vld [vmem:[#allocation3 + $0x30] sm:$0xff]
    %v3378 = vld [vmem:[#allocation3 + $0x38] sm:$0xff]
    %v3379 = vld [vmem:[#allocation3 + $0x40] sm:$0xff]
    %v3380 = vadd.f32 %v3377, %v3199
    %v3381 = vadd.f32 %v3378, %v3238
    %v3382 = vadd.f32 %v3379, %v3240
    %3383 = vst [vmem:[#allocation3 + $0x30] sm:$0xff] %v3380
    %3384 = vst [vmem:[#allocation3 + $0x38] sm:$0xff] %v3381
    %3385 = vst [vmem:[#allocation3 + $0x40] sm:$0xff] %v3382
    %v3386 = vld [vmem:[#allocation2 + $0x78] sm:$0xff]
    %v3387 = vld [vmem:[#allocation2 + $0x80] sm:$0xff]
    %v3388 = vld [vmem:[#allocation2 + $0x88] sm:$0xff]
    %v3389 = vadd.f32 %v3386, %v3280
    %v3390 = vadd.f32 %v3387, %v3282
    %v3391 = vadd.f32 %v3388, %v3321
    %3392 = vst [vmem:[#allocation2 + $0x78] sm:$0xff] %v3389
    %3393 = vst [vmem:[#allocation2 + $0x80] sm:$0xff] %v3390
    %3394 = vst [vmem:[#allocation2 + $0x88] sm:$0xff] %v3391
    %v3395 = vld [vmem:[#allocation3 + $0x78] sm:$0xff]
    %v3396 = vld [vmem:[#allocation3 + $0x80] sm:$0xff]
    %v3397 = vld [vmem:[#allocation3 + $0x88] sm:$0xff]
    %v3398 = vadd.f32 %v3395, %v3323
    %v3399 = vadd.f32 %v3396, %v3362
    %v3400 = vadd.f32 %v3397, %v3364
    %3401 = vst [vmem:[#allocation3 + $0x78] sm:$0xff] %v3398
    %3402 = vst [vmem:[#allocation3 + $0x80] sm:$0xff] %v3399
    %3403 = vst [vmem:[#allocation3 + $0x88] sm:$0xff] %v3400
    %3404 = vmatprep.subr.bf16.mxu0 %v1380
    %3405 = vmatpush1.bf16.msra.mxu0 %v1379
    %3406 = vmatprep.subr.bf16.mxu0 %v1386
    %3407 = vmatpush1.bf16.msra.mxu0 %v1385
    %3408 = vmatprep.subr.bf16.mxu0 %v1392
    %3409 = vmatpush1.bf16.msra.mxu0 %v1391
    %3410 = vmatprep.subr.bf16.mxu0 %v1398
    %3411 = vmatpush1.bf16.msra.mxu0 %v1397
    %3412 = vmatprep.subr.bf16.mxu0 %v1404
    %3413 = vmatpush1.bf16.msra.mxu0 %v1403
    %3414 = vmatprep.subr.bf16.mxu0 %v1410
    %3415 = vmatpush1.bf16.msra.mxu0 %v1409
    %3416 = vmatprep.subr.bf16.mxu0 %v1416
    %3417 = vmatpush1.bf16.msra.mxu0 %v1415
    %3418 = vmatprep.subr.bf16.mxu0 %v1422
    %3419 = vmatpush1.bf16.msra.mxu0 %v1421
    %3420 = vmatprep.subr.bf16.mxu0 %v1428
    %3421 = vmatpush1.bf16.msra.mxu0 %v1427
    %3422 = vmatprep.subr.bf16.mxu0 %v1434
    %3423 = vmatpush1.bf16.msra.mxu0 %v1433
    %3424 = vmatprep.subr.bf16.mxu0 %v1440
    %3425 = vmatpush1.bf16.msra.mxu0 %v1439
    %3426 = vmatprep.subr.bf16.mxu0 %v1446
    %3427 = vmatpush1.bf16.msra.mxu0 %v1445
    %3428 = vmatprep.subr.bf16.mxu0 %v1452
    %3429 = vmatpush1.bf16.msra.mxu0 %v1451
    %3430 = vmatprep.subr.bf16.mxu0 %v1458
    %3431 = vmatpush1.bf16.msra.mxu0 %v1457
    %3432 = vmatprep.subr.bf16.mxu0 %v1464
    %3433 = vmatpush1.bf16.msra.mxu0 %v1463
    %3434 = vmatprep.subr.bf16.mxu0 %v1470
    %3435 = vmatpush1.bf16.msra.mxu0 %v1469
    %3436 = vmatprep.mubr.bf16.mxu0 %v3244
    %3437 = vmatmul.mubr.bf16.gmra.mrb[0].mxu0 %v3120
    %v3438 = vpop.f32.mrb[0].mxu0
    %v3439 = vadd.f32 0.0, %v3438
    %v3440 = vpop.f32.mrb[0].mxu0
    %v3441 = vadd.f32 0.0, %v3440
    %v3442 = vpop.f32.mrb[0].mxu0
    %v3443 = vpop.f32.mrb[0].mxu0
    %3444 = vdwg.mxu0
    %3445 = vmatprep.subr.bf16.mxu0 %v1382
    %3446 = vmatpush1.bf16.msra.mxu0 %v1381
    %3447 = vmatprep.subr.bf16.mxu0 %v1388
    %3448 = vmatpush1.bf16.msra.mxu0 %v1387
    %3449 = vmatprep.subr.bf16.mxu0 %v1394
    %3450 = vmatpush1.bf16.msra.mxu0 %v1393
    %3451 = vmatprep.subr.bf16.mxu0 %v1400
    %3452 = vmatpush1.bf16.msra.mxu0 %v1399
    %3453 = vmatprep.subr.bf16.mxu0 %v1406
    %3454 = vmatpush1.bf16.msra.mxu0 %v1405
    %3455 = vmatprep.subr.bf16.mxu0 %v1412
    %3456 = vmatpush1.bf16.msra.mxu0 %v1411
    %3457 = vmatprep.subr.bf16.mxu0 %v1418
    %3458 = vmatpush1.bf16.msra.mxu0 %v1417
    %3459 = vmatprep.subr.bf16.mxu0 %v1424
    %3460 = vmatpush1.bf16.msra.mxu0 %v1423
    %3461 = vmatprep.subr.bf16.mxu0 %v1430
    %3462 = vmatpush1.bf16.msra.mxu0 %v1429
    %3463 = vmatprep.subr.bf16.mxu0 %v1436
    %3464 = vmatpush1.bf16.msra.mxu0 %v1435
    %3465 = vmatprep.subr.bf16.mxu0 %v1442
    %3466 = vmatpush1.bf16.msra.mxu0 %v1441
    %3467 = vmatprep.subr.bf16.mxu0 %v1448
    %3468 = vmatpush1.bf16.msra.mxu0 %v1447
    %3469 = vmatprep.subr.bf16.mxu0 %v1454
    %3470 = vmatpush1.bf16.msra.mxu0 %v1453
    %3471 = vmatprep.subr.bf16.mxu0 %v1460
    %3472 = vmatpush1.bf16.msra.mxu0 %v1459
    %3473 = vmatprep.subr.bf16.mxu0 %v1466
    %3474 = vmatpush1.bf16.msra.mxu0 %v1465
    %3475 = vmatprep.subr.bf16.mxu0 %v1472
    %3476 = vmatpush1.bf16.msra.mxu0 %v1471
    %3477 = vmatprep.mubr.bf16.mxu0 %v3244
    %3478 = vmatmul.mubr.bf16.gmra.mrb[0].mxu0 %v3120
    %v3479 = vpop.f32.mrb[0].mxu0
    %v3480 = vadd.f32 0.0, %v3479
    %v3481 = vpop.f32.mrb[0].mxu0
    %v3482 = vadd.f32 0.0, %v3481
    %v3483 = vpop.f32.mrb[0].mxu0
    %v3484 = vpop.f32.mrb[0].mxu0
    %3485 = vdwg.mxu0
    %3486 = vmatprep.subr.bf16.mxu0 %v1384
    %3487 = vmatpush1.bf16.msra.mxu0 %v1383
    %3488 = vmatprep.subr.bf16.mxu0 %v1390
    %3489 = vmatpush1.bf16.msra.mxu0 %v1389
    %3490 = vmatprep.subr.bf16.mxu0 %v1396
    %3491 = vmatpush1.bf16.msra.mxu0 %v1395
    %3492 = vmatprep.subr.bf16.mxu0 %v1402
    %3493 = vmatpush1.bf16.msra.mxu0 %v1401
    %3494 = vmatprep.subr.bf16.mxu0 %v1408
    %3495 = vmatpush1.bf16.msra.mxu0 %v1407
    %3496 = vmatprep.subr.bf16.mxu0 %v1414
    %3497 = vmatpush1.bf16.msra.mxu0 %v1413
    %3498 = vmatprep.subr.bf16.mxu0 %v1420
    %3499 = vmatpush1.bf16.msra.mxu0 %v1419
    %3500 = vmatprep.subr.bf16.mxu0 %v1426
    %3501 = vmatpush1.bf16.msra.mxu0 %v1425
    %3502 = vmatprep.subr.bf16.mxu0 %v1432
    %3503 = vmatpush1.bf16.msra.mxu0 %v1431
    %3504 = vmatprep.subr.bf16.mxu0 %v1438
    %3505 = vmatpush1.bf16.msra.mxu0 %v1437
    %3506 = vmatprep.subr.bf16.mxu0 %v1444
    %3507 = vmatpush1.bf16.msra.mxu0 %v1443
    %3508 = vmatprep.subr.bf16.mxu0 %v1450
    %3509 = vmatpush1.bf16.msra.mxu0 %v1449
    %3510 = vmatprep.subr.bf16.mxu0 %v1456
    %3511 = vmatpush1.bf16.msra.mxu0 %v1455
    %3512 = vmatprep.subr.bf16.mxu0 %v1462
    %3513 = vmatpush1.bf16.msra.mxu0 %v1461
    %3514 = vmatprep.subr.bf16.mxu0 %v1468
    %3515 = vmatpush1.bf16.msra.mxu0 %v1467
    %3516 = vmatprep.subr.bf16.mxu0 %v1474
    %3517 = vmatpush1.bf16.msra.mxu0 %v1473
    %3518 = vmatprep.mubr.bf16.mxu0 %v3244
    %3519 = vmatmul.mubr.bf16.gmra.mrb[0].mxu0 %v3120
    %v3520 = vpop.f32.mrb[0].mxu0
    %v3521 = vadd.f32 0.0, %v3520
    %v3522 = vpop.f32.mrb[0].mxu0
    %v3523 = vadd.f32 0.0, %v3522
    %v3524 = vpop.f32.mrb[0].mxu0
    %v3525 = vpop.f32.mrb[0].mxu0
    %3526 = vdwg.mxu0
    %v3527 = vadd.f32 %v501, %v3439
    %v3528 = vxor.u32 %v3527, 2147483648
    %v3529 = vmul.f32 %v3528, 1.442695
    %v3530 = vpow.pop %v3529
    %v3531 = vadd.f32 %v3530, 1.0
    %v3532 = vrcp.pop %v3531
    %v3533 = vmul.f32 1.0, %v3532
    %v3534 = vadd.f32 %v503, %v3441
    %v3535 = vxor.u32 %v3534, 2147483648
    %v3536 = vmul.f32 %v3535, 1.442695
    %v3537 = vpow.pop %v3536
    %v3538 = vadd.f32 %v3537, 1.0
    %v3539 = vrcp.pop %v3538
    %v3540 = vmul.f32 1.0, %v3539
    %v3541 = vadd.f32 %v3480, %v889
    %v3542 = vmul.f32 %v3533, %v3541
    %v3543 = vadd.f32 %v611, %v3542
    %v3544 = vtanh.pop %v3543
    %v3545 = vsub.f32 1.0, %v3540
    %v3546 = vmul.f32 %v3545, %v3544
    %v3547 = vmul.f32 %v3540, %v3097
    %v3548 = vadd.f32 %v3546, %v3547
    %v3549 = vadd.f32 %v757, %v3482
    %v3550 = vxor.u32 %v3549, 2147483648
    %v3551 = vmul.f32 %v3550, 1.442695
    %v3552 = vpow.pop %v3551
    %v3553 = vadd.f32 %v3552, 1.0
    %v3554 = vrcp.pop %v3553
    %v3555 = vmul.f32 1.0, %v3554
    %v3556 = vadd.f32 %v759, %v3521
    %v3557 = vxor.u32 %v3556, 2147483648
    %v3558 = vmul.f32 %v3557, 1.442695
    %v3559 = vpow.pop %v3558
    %v3560 = vadd.f32 %v3559, 1.0
    %v3561 = vrcp.pop %v3560
    %v3562 = vmul.f32 1.0, %v3561
    %v3563 = vadd.f32 %v3523, %v896
    %v3564 = vmul.f32 %v3555, %v3563
    %v3565 = vadd.f32 %v866, %v3564
    %v3566 = vtanh.pop %v3565
    %v3567 = vsub.f32 1.0, %v3562
    %v3568 = vmul.f32 %v3567, %v3566
    %v3569 = vmul.f32 %v3562, %v3119
    %v3570 = vadd.f32 %v3568, %v3569
    %v3571 = vpack.c.bf16 %v3548, %v3548
    %3572 = vmatprep.subr.bf16.mxu0 %v1884
    %3573 = vmatpush1.bf16.msra.mxu0 %v1883
    %3574 = vmatprep.subr.bf16.mxu0 %v1890
    %3575 = vmatpush1.bf16.msra.mxu0 %v1889
    %3576 = vmatprep.subr.bf16.mxu0 %v1896
    %3577 = vmatpush1.bf16.msra.mxu0 %v1895
    %3578 = vmatprep.subr.bf16.mxu0 %v1902
    %3579 = vmatpush1.bf16.msra.mxu0 %v1901
    %3580 = vmatprep.subr.bf16.mxu0 %v1908
    %3581 = vmatpush1.bf16.msra.mxu0 %v1907
    %3582 = vmatprep.subr.bf16.mxu0 %v1914
    %3583 = vmatpush1.bf16.msra.mxu0 %v1913
    %3584 = vmatprep.subr.bf16.mxu0 %v1920
    %3585 = vmatpush1.bf16.msra.mxu0 %v1919
    %3586 = vmatprep.subr.bf16.mxu0 %v1926
    %3587 = vmatpush1.bf16.msra.mxu0 %v1925
    %3588 = vmatprep.subr.bf16.mxu0 0
    %3589 = vmatpush1.bf16.msra.mxu0 0
    %3590 = vmatprep.subr.bf16.mxu0 0
    %3591 = vmatpush1.bf16.msra.mxu0 0
    %3592 = vmatprep.subr.bf16.mxu0 0
    %3593 = vmatpush1.bf16.msra.mxu0 0
    %3594 = vmatprep.subr.bf16.mxu0 0
    %3595 = vmatpush1.bf16.msra.mxu0 0
    %3596 = vmatprep.subr.bf16.mxu0 0
    %3597 = vmatpush1.bf16.msra.mxu0 0
    %3598 = vmatprep.subr.bf16.mxu0 0
    %3599 = vmatpush1.bf16.msra.mxu0 0
    %3600 = vmatprep.subr.bf16.mxu0 0
    %3601 = vmatpush1.bf16.msra.mxu0 0
    %3602 = vmatprep.subr.bf16.mxu0 0
    %3603 = vmatpush1.bf16.msra.mxu0 0
    %3604 = vmatprep.mubr.bf16.mxu0 0
    %3605 = vmatmul.mubr.bf16.gmra.mrb[0].mxu0 %v3571
    %v3606 = vpop.f32.mrb[0].mxu0
    %v3607 = vadd.f32 0.0, %v3606
    %v3608 = vpop.f32.mrb[0].mxu0
    %v3609 = vadd.f32 0.0, %v3608
    %v3610 = vpop.f32.mrb[0].mxu0
    %v3611 = vpop.f32.mrb[0].mxu0
    %3612 = vdwg.mxu0
    %3613 = vmatprep.subr.bf16.mxu0 %v1886
    %3614 = vmatpush1.bf16.msra.mxu0 %v1885
    %3615 = vmatprep.subr.bf16.mxu0 %v1892
    %3616 = vmatpush1.bf16.msra.mxu0 %v1891
    %3617 = vmatprep.subr.bf16.mxu0 %v1898
    %3618 = vmatpush1.bf16.msra.mxu0 %v1897
    %3619 = vmatprep.subr.bf16.mxu0 %v1904
    %3620 = vmatpush1.bf16.msra.mxu0 %v1903
    %3621 = vmatprep.subr.bf16.mxu0 %v1910
    %3622 = vmatpush1.bf16.msra.mxu0 %v1909
    %3623 = vmatprep.subr.bf16.mxu0 %v1916
    %3624 = vmatpush1.bf16.msra.mxu0 %v1915
    %3625 = vmatprep.subr.bf16.mxu0 %v1922
    %3626 = vmatpush1.bf16.msra.mxu0 %v1921
    %3627 = vmatprep.subr.bf16.mxu0 %v1928
    %3628 = vmatpush1.bf16.msra.mxu0 %v1927
    %3629 = vmatprep.subr.bf16.mxu0 0
    %3630 = vmatpush1.bf16.msra.mxu0 0
    %3631 = vmatprep.subr.bf16.mxu0 0
    %3632 = vmatpush1.bf16.msra.mxu0 0
    %3633 = vmatprep.subr.bf16.mxu0 0
    %3634 = vmatpush1.bf16.msra.mxu0 0
    %3635 = vmatprep.subr.bf16.mxu0 0
    %3636 = vmatpush1.bf16.msra.mxu0 0
    %3637 = vmatprep.subr.bf16.mxu0 0
    %3638 = vmatpush1.bf16.msra.mxu0 0
    %3639 = vmatprep.subr.bf16.mxu0 0
    %3640 = vmatpush1.bf16.msra.mxu0 0
    %3641 = vmatprep.subr.bf16.mxu0 0
    %3642 = vmatpush1.bf16.msra.mxu0 0
    %3643 = vmatprep.subr.bf16.mxu0 0
    %3644 = vmatpush1.bf16.msra.mxu0 0
    %3645 = vmatprep.mubr.bf16.mxu0 0
    %3646 = vmatmul.mubr.bf16.gmra.mrb[0].mxu0 %v3571
    %v3647 = vpop.f32.mrb[0].mxu0
    %v3648 = vadd.f32 0.0, %v3647
    %v3649 = vpop.f32.mrb[0].mxu0
    %v3650 = vadd.f32 0.0, %v3649
    %v3651 = vpop.f32.mrb[0].mxu0
    %v3652 = vpop.f32.mrb[0].mxu0
    %3653 = vdwg.mxu0
    %3654 = vmatprep.subr.bf16.mxu0 %v1888
    %3655 = vmatpush1.bf16.msra.mxu0 %v1887
    %3656 = vmatprep.subr.bf16.mxu0 %v1894
    %3657 = vmatpush1.bf16.msra.mxu0 %v1893
    %3658 = vmatprep.subr.bf16.mxu0 %v1900
    %3659 = vmatpush1.bf16.msra.mxu0 %v1899
    %3660 = vmatprep.subr.bf16.mxu0 %v1906
    %3661 = vmatpush1.bf16.msra.mxu0 %v1905
    %3662 = vmatprep.subr.bf16.mxu0 %v1912
    %3663 = vmatpush1.bf16.msra.mxu0 %v1911
    %3664 = vmatprep.subr.bf16.mxu0 %v1918
    %3665 = vmatpush1.bf16.msra.mxu0 %v1917
    %3666 = vmatprep.subr.bf16.mxu0 %v1924
    %3667 = vmatpush1.bf16.msra.mxu0 %v1923
    %3668 = vmatprep.subr.bf16.mxu0 %v1930
    %3669 = vmatpush1.bf16.msra.mxu0 %v1929
    %3670 = vmatprep.subr.bf16.mxu0 0
    %3671 = vmatpush1.bf16.msra.mxu0 0
    %3672 = vmatprep.subr.bf16.mxu0 0
    %3673 = vmatpush1.bf16.msra.mxu0 0
    %3674 = vmatprep.subr.bf16.mxu0 0
    %3675 = vmatpush1.bf16.msra.mxu0 0
    %3676 = vmatprep.subr.bf16.mxu0 0
    %3677 = vmatpush1.bf16.msra.mxu0 0
    %3678 = vmatprep.subr.bf16.mxu0 0
    %3679 = vmatpush1.bf16.msra.mxu0 0
    %3680 = vmatprep.subr.bf16.mxu0 0
    %3681 = vmatpush1.bf16.msra.mxu0 0
    %3682 = vmatprep.subr.bf16.mxu0 0
    %3683 = vmatpush1.bf16.msra.mxu0 0
    %3684 = vmatprep.subr.bf16.mxu0 0
    %3685 = vmatpush1.bf16.msra.mxu0 0
    %3686 = vmatprep.mubr.bf16.mxu0 0
    %3687 = vmatmul.mubr.bf16.gmra.mrb[0].mxu0 %v3571
    %v3688 = vpop.f32.mrb[0].mxu0
    %v3689 = vadd.f32 0.0, %v3688
    %v3690 = vpop.f32.mrb[0].mxu0
    %v3691 = vadd.f32 0.0, %v3690
    %v3692 = vpop.f32.mrb[0].mxu0
    %v3693 = vpop.f32.mrb[0].mxu0
    %3694 = vdwg.mxu0
    %v3695 = vpack.c.bf16 %v3570, %v3570
    %3696 = vmatprep.subr.bf16.mxu0 %v2248
    %3697 = vmatpush1.bf16.msra.mxu0 %v2247
    %3698 = vmatprep.subr.bf16.mxu0 %v2254
    %3699 = vmatpush1.bf16.msra.mxu0 %v2253
    %3700 = vmatprep.subr.bf16.mxu0 %v2260
    %3701 = vmatpush1.bf16.msra.mxu0 %v2259
    %3702 = vmatprep.subr.bf16.mxu0 %v2266
    %3703 = vmatpush1.bf16.msra.mxu0 %v2265
    %3704 = vmatprep.subr.bf16.mxu0 %v2272
    %3705 = vmatpush1.bf16.msra.mxu0 %v2271
    %3706 = vmatprep.subr.bf16.mxu0 %v2278
    %3707 = vmatpush1.bf16.msra.mxu0 %v2277
    %3708 = vmatprep.subr.bf16.mxu0 %v2284
    %3709 = vmatpush1.bf16.msra.mxu0 %v2283
    %3710 = vmatprep.subr.bf16.mxu0 %v2290
    %3711 = vmatpush1.bf16.msra.mxu0 %v2289
    %3712 = vmatprep.subr.bf16.mxu0 0
    %3713 = vmatpush1.bf16.msra.mxu0 0
    %3714 = vmatprep.subr.bf16.mxu0 0
    %3715 = vmatpush1.bf16.msra.mxu0 0
    %3716 = vmatprep.subr.bf16.mxu0 0
    %3717 = vmatpush1.bf16.msra.mxu0 0
    %3718 = vmatprep.subr.bf16.mxu0 0
    %3719 = vmatpush1.bf16.msra.mxu0 0
    %3720 = vmatprep.subr.bf16.mxu0 0
    %3721 = vmatpush1.bf16.msra.mxu0 0
    %3722 = vmatprep.subr.bf16.mxu0 0
    %3723 = vmatpush1.bf16.msra.mxu0 0
    %3724 = vmatprep.subr.bf16.mxu0 0
    %3725 = vmatpush1.bf16.msra.mxu0 0
    %3726 = vmatprep.subr.bf16.mxu0 0
    %3727 = vmatpush1.bf16.msra.mxu0 0
    %3728 = vmatprep.mubr.bf16.mxu0 0
    %3729 = vmatmul.mubr.bf16.gmra.mrb[0].mxu0 %v3695
    %v3730 = vpop.f32.mrb[0].mxu0
    %v3731 = vadd.f32 0.0, %v3730
    %v3732 = vpop.f32.mrb[0].mxu0
    %v3733 = vadd.f32 0.0, %v3732
    %v3734 = vpop.f32.mrb[0].mxu0
    %v3735 = vpop.f32.mrb[0].mxu0
    %3736 = vdwg.mxu0
    %3737 = vmatprep.subr.bf16.mxu0 %v2250
    %3738 = vmatpush1.bf16.msra.mxu0 %v2249
    %3739 = vmatprep.subr.bf16.mxu0 %v2256
    %3740 = vmatpush1.bf16.msra.mxu0 %v2255
    %3741 = vmatprep.subr.bf16.mxu0 %v2262
    %3742 = vmatpush1.bf16.msra.mxu0 %v2261
    %3743 = vmatprep.subr.bf16.mxu0 %v2268
    %3744 = vmatpush1.bf16.msra.mxu0 %v2267
    %3745 = vmatprep.subr.bf16.mxu0 %v2274
    %3746 = vmatpush1.bf16.msra.mxu0 %v2273
    %3747 = vmatprep.subr.bf16.mxu0 %v2280
    %3748 = vmatpush1.bf16.msra.mxu0 %v2279
    %3749 = vmatprep.subr.bf16.mxu0 %v2286
    %3750 = vmatpush1.bf16.msra.mxu0 %v2285
    %3751 = vmatprep.subr.bf16.mxu0 %v2292
    %3752 = vmatpush1.bf16.msra.mxu0 %v2291
    %3753 = vmatprep.subr.bf16.mxu0 0
    %3754 = vmatpush1.bf16.msra.mxu0 0
    %3755 = vmatprep.subr.bf16.mxu0 0
    %3756 = vmatpush1.bf16.msra.mxu0 0
    %3757 = vmatprep.subr.bf16.mxu0 0
    %3758 = vmatpush1.bf16.msra.mxu0 0
    %3759 = vmatprep.subr.bf16.mxu0 0
    %3760 = vmatpush1.bf16.msra.mxu0 0
    %3761 = vmatprep.subr.bf16.mxu0 0
    %3762 = vmatpush1.bf16.msra.mxu0 0
    %3763 = vmatprep.subr.bf16.mxu0 0
    %3764 = vmatpush1.bf16.msra.mxu0 0
    %3765 = vmatprep.subr.bf16.mxu0 0
    %3766 = vmatpush1.bf16.msra.mxu0 0
    %3767 = vmatprep.subr.bf16.mxu0 0
    %3768 = vmatpush1.bf16.msra.mxu0 0
    %3769 = vmatprep.mubr.bf16.mxu0 0
    %3770 = vmatmul.mubr.bf16.gmra.mrb[0].mxu0 %v3695
    %v3771 = vpop.f32.mrb[0].mxu0
    %v3772 = vadd.f32 0.0, %v3771
    %v3773 = vpop.f32.mrb[0].mxu0
    %v3774 = vadd.f32 0.0, %v3773
    %v3775 = vpop.f32.mrb[0].mxu0
    %v3776 = vpop.f32.mrb[0].mxu0
    %3777 = vdwg.mxu0
    %3778 = vmatprep.subr.bf16.mxu0 %v2252
    %3779 = vmatpush1.bf16.msra.mxu0 %v2251
    %3780 = vmatprep.subr.bf16.mxu0 %v2258
    %3781 = vmatpush1.bf16.msra.mxu0 %v2257
    %3782 = vmatprep.subr.bf16.mxu0 %v2264
    %3783 = vmatpush1.bf16.msra.mxu0 %v2263
    %3784 = vmatprep.subr.bf16.mxu0 %v2270
    %3785 = vmatpush1.bf16.msra.mxu0 %v2269
    %3786 = vmatprep.subr.bf16.mxu0 %v2276
    %3787 = vmatpush1.bf16.msra.mxu0 %v2275
    %3788 = vmatprep.subr.bf16.mxu0 %v2282
    %3789 = vmatpush1.bf16.msra.mxu0 %v2281
    %3790 = vmatprep.subr.bf16.mxu0 %v2288
    %3791 = vmatpush1.bf16.msra.mxu0 %v2287
    %3792 = vmatprep.subr.bf16.mxu0 %v2294
    %3793 = vmatpush1.bf16.msra.mxu0 %v2293
    %3794 = vmatprep.subr.bf16.mxu0 0
    %3795 = vmatpush1.bf16.msra.mxu0 0
    %3796 = vmatprep.subr.bf16.mxu0 0
    %3797 = vmatpush1.bf16.msra.mxu0 0
    %3798 = vmatprep.subr.bf16.mxu0 0
    %3799 = vmatpush1.bf16.msra.mxu0 0
    %3800 = vmatprep.subr.bf16.mxu0 0
    %3801 = vmatpush1.bf16.msra.mxu0 0
    %3802 = vmatprep.subr.bf16.mxu0 0
    %3803 = vmatpush1.bf16.msra.mxu0 0
    %3804 = vmatprep.subr.bf16.mxu0 0
    %3805 = vmatpush1.bf16.msra.mxu0 0
    %3806 = vmatprep.subr.bf16.mxu0 0
    %3807 = vmatpush1.bf16.msra.mxu0 0
    %3808 = vmatprep.subr.bf16.mxu0 0
    %3809 = vmatpush1.bf16.msra.mxu0 0
    %3810 = vmatprep.mubr.bf16.mxu0 0
    %3811 = vmatmul.mubr.bf16.gmra.mrb[0].mxu0 %v3695
    %v3812 = vpop.f32.mrb[0].mxu0
    %v3813 = vadd.f32 0.0, %v3812
    %v3814 = vpop.f32.mrb[0].mxu0
    %v3815 = vadd.f32 0.0, %v3814
    %v3816 = vpop.f32.mrb[0].mxu0
    %v3817 = vpop.f32.mrb[0].mxu0
    %3818 = vdwg.mxu0
    %v3819 = vld [vmem:[#allocation2 + $0x48] sm:$0xff]
    %v3820 = vld [vmem:[#allocation2 + $0x50] sm:$0xff]
    %v3821 = vld [vmem:[#allocation2 + $0x58] sm:$0xff]
    %v3822 = vadd.f32 %v3819, %v3607
    %v3823 = vadd.f32 %v3820, %v3609
    %v3824 = vadd.f32 %v3821, %v3648
    %3825 = vst [vmem:[#allocation2 + $0x48] sm:$0xff] %v3822
    %3826 = vst [vmem:[#allocation2 + $0x50] sm:$0xff] %v3823
    %3827 = vst [vmem:[#allocation2 + $0x58] sm:$0xff] %v3824
    %v3828 = vld [vmem:[#allocation3 + $0x48] sm:$0xff]
    %v3829 = vld [vmem:[#allocation3 + $0x50] sm:$0xff]
    %v3830 = vld [vmem:[#allocation3 + $0x58] sm:$0xff]
    %v3831 = vadd.f32 %v3828, %v3650
    %v3832 = vadd.f32 %v3829, %v3689
    %v3833 = vadd.f32 %v3830, %v3691
    %3834 = vst [vmem:[#allocation3 + $0x48] sm:$0xff] %v3831
    %3835 = vst [vmem:[#allocation3 + $0x50] sm:$0xff] %v3832
    %3836 = vst [vmem:[#allocation3 + $0x58] sm:$0xff] %v3833
    %v3837 = vld [vmem:[#allocation2 + $0x60] sm:$0xff]
    %v3838 = vld [vmem:[#allocation2 + $0x68] sm:$0xff]
    %v3839 = vld [vmem:[#allocation2 + $0x70] sm:$0xff]
    %v3840 = vadd.f32 %v3837, %v3731
    %v3841 = vadd.f32 %v3838, %v3733
    %v3842 = vadd.f32 %v3839, %v3772
    %3843 = vst [vmem:[#allocation2 + $0x60] sm:$0xff] %v3840
    %3844 = vst [vmem:[#allocation2 + $0x68] sm:$0xff] %v3841
    %3845 = vst [vmem:[#allocation2 + $0x70] sm:$0xff] %v3842
    %v3846 = vld [vmem:[#allocation3 + $0x60] sm:$0xff]
    %v3847 = vld [vmem:[#allocation3 + $0x68] sm:$0xff]
    %v3848 = vld [vmem:[#allocation3 + $0x70] sm:$0xff]
    %v3849 = vadd.f32 %v3846, %v3774
    %v3850 = vadd.f32 %v3847, %v3813
    %v3851 = vadd.f32 %v3848, %v3815
    %3852 = vst [vmem:[#allocation3 + $0x60] sm:$0xff] %v3849
    %3853 = vst [vmem:[#allocation3 + $0x68] sm:$0xff] %v3850
    %3854 = vst [vmem:[#allocation3 + $0x70] sm:$0xff] %v3851
    %3855 = vmatprep.subr.bf16.mxu0 %v1380
    %3856 = vmatpush1.bf16.msra.mxu0 %v1379
    %3857 = vmatprep.subr.bf16.mxu0 %v1386
    %3858 = vmatpush1.bf16.msra.mxu0 %v1385
    %3859 = vmatprep.subr.bf16.mxu0 %v1392
    %3860 = vmatpush1.bf16.msra.mxu0 %v1391
    %3861 = vmatprep.subr.bf16.mxu0 %v1398
    %3862 = vmatpush1.bf16.msra.mxu0 %v1397
    %3863 = vmatprep.subr.bf16.mxu0 %v1404
    %3864 = vmatpush1.bf16.msra.mxu0 %v1403
    %3865 = vmatprep.subr.bf16.mxu0 %v1410
    %3866 = vmatpush1.bf16.msra.mxu0 %v1409
    %3867 = vmatprep.subr.bf16.mxu0 %v1416
    %3868 = vmatpush1.bf16.msra.mxu0 %v1415
    %3869 = vmatprep.subr.bf16.mxu0 %v1422
    %3870 = vmatpush1.bf16.msra.mxu0 %v1421
    %3871 = vmatprep.subr.bf16.mxu0 %v1428
    %3872 = vmatpush1.bf16.msra.mxu0 %v1427
    %3873 = vmatprep.subr.bf16.mxu0 %v1434
    %3874 = vmatpush1.bf16.msra.mxu0 %v1433
    %3875 = vmatprep.subr.bf16.mxu0 %v1440
    %3876 = vmatpush1.bf16.msra.mxu0 %v1439
    %3877 = vmatprep.subr.bf16.mxu0 %v1446
    %3878 = vmatpush1.bf16.msra.mxu0 %v1445
    %3879 = vmatprep.subr.bf16.mxu0 %v1452
    %3880 = vmatpush1.bf16.msra.mxu0 %v1451
    %3881 = vmatprep.subr.bf16.mxu0 %v1458
    %3882 = vmatpush1.bf16.msra.mxu0 %v1457
    %3883 = vmatprep.subr.bf16.mxu0 %v1464
    %3884 = vmatpush1.bf16.msra.mxu0 %v1463
    %3885 = vmatprep.subr.bf16.mxu0 %v1470
    %3886 = vmatpush1.bf16.msra.mxu0 %v1469
    %3887 = vmatprep.mubr.bf16.mxu0 %v3695
    %3888 = vmatmul.mubr.bf16.gmra.mrb[0].mxu0 %v3571
    %v3889 = vpop.f32.mrb[0].mxu0
    %v3890 = vadd.f32 0.0, %v3889
    %v3891 = vpop.f32.mrb[0].mxu0
    %v3892 = vadd.f32 0.0, %v3891
    %v3893 = vpop.f32.mrb[0].mxu0
    %v3894 = vpop.f32.mrb[0].mxu0
    %3895 = vdwg.mxu0
    %3896 = vmatprep.subr.bf16.mxu0 %v1382
    %3897 = vmatpush1.bf16.msra.mxu0 %v1381
    %3898 = vmatprep.subr.bf16.mxu0 %v1388
    %3899 = vmatpush1.bf16.msra.mxu0 %v1387
    %3900 = vmatprep.subr.bf16.mxu0 %v1394
    %3901 = vmatpush1.bf16.msra.mxu0 %v1393
    %3902 = vmatprep.subr.bf16.mxu0 %v1400
    %3903 = vmatpush1.bf16.msra.mxu0 %v1399
    %3904 = vmatprep.subr.bf16.mxu0 %v1406
    %3905 = vmatpush1.bf16.msra.mxu0 %v1405
    %3906 = vmatprep.subr.bf16.mxu0 %v1412
    %3907 = vmatpush1.bf16.msra.mxu0 %v1411
    %3908 = vmatprep.subr.bf16.mxu0 %v1418
    %3909 = vmatpush1.bf16.msra.mxu0 %v1417
    %3910 = vmatprep.subr.bf16.mxu0 %v1424
    %3911 = vmatpush1.bf16.msra.mxu0 %v1423
    %3912 = vmatprep.subr.bf16.mxu0 %v1430
    %3913 = vmatpush1.bf16.msra.mxu0 %v1429
    %3914 = vmatprep.subr.bf16.mxu0 %v1436
    %3915 = vmatpush1.bf16.msra.mxu0 %v1435
    %3916 = vmatprep.subr.bf16.mxu0 %v1442
    %3917 = vmatpush1.bf16.msra.mxu0 %v1441
    %3918 = vmatprep.subr.bf16.mxu0 %v1448
    %3919 = vmatpush1.bf16.msra.mxu0 %v1447
    %3920 = vmatprep.subr.bf16.mxu0 %v1454
    %3921 = vmatpush1.bf16.msra.mxu0 %v1453
    %3922 = vmatprep.subr.bf16.mxu0 %v1460
    %3923 = vmatpush1.bf16.msra.mxu0 %v1459
    %3924 = vmatprep.subr.bf16.mxu0 %v1466
    %3925 = vmatpush1.bf16.msra.mxu0 %v1465
    %3926 = vmatprep.subr.bf16.mxu0 %v1472
    %3927 = vmatpush1.bf16.msra.mxu0 %v1471
    %3928 = vmatprep.mubr.bf16.mxu0 %v3695
    %3929 = vmatmul.mubr.bf16.gmra.mrb[0].mxu0 %v3571
    %v3930 = vpop.f32.mrb[0].mxu0
    %v3931 = vadd.f32 0.0, %v3930
    %v3932 = vpop.f32.mrb[0].mxu0
    %v3933 = vadd.f32 0.0, %v3932
    %v3934 = vpop.f32.mrb[0].mxu0
    %v3935 = vpop.f32.mrb[0].mxu0
    %3936 = vdwg.mxu0
    %3937 = vmatprep.subr.bf16.mxu0 %v1384
    %3938 = vmatpush1.bf16.msra.mxu0 %v1383
    %3939 = vmatprep.subr.bf16.mxu0 %v1390
    %3940 = vmatpush1.bf16.msra.mxu0 %v1389
    %3941 = vmatprep.subr.bf16.mxu0 %v1396
    %3942 = vmatpush1.bf16.msra.mxu0 %v1395
    %3943 = vmatprep.subr.bf16.mxu0 %v1402
    %3944 = vmatpush1.bf16.msra.mxu0 %v1401
    %3945 = vmatprep.subr.bf16.mxu0 %v1408
    %3946 = vmatpush1.bf16.msra.mxu0 %v1407
    %3947 = vmatprep.subr.bf16.mxu0 %v1414
    %3948 = vmatpush1.bf16.msra.mxu0 %v1413
    %3949 = vmatprep.subr.bf16.mxu0 %v1420
    %3950 = vmatpush1.bf16.msra.mxu0 %v1419
    %3951 = vmatprep.subr.bf16.mxu0 %v1426
    %3952 = vmatpush1.bf16.msra.mxu0 %v1425
    %3953 = vmatprep.subr.bf16.mxu0 %v1432
    %3954 = vmatpush1.bf16.msra.mxu0 %v1431
    %3955 = vmatprep.subr.bf16.mxu0 %v1438
    %3956 = vmatpush1.bf16.msra.mxu0 %v1437
    %3957 = vmatprep.subr.bf16.mxu0 %v1444
    %3958 = vmatpush1.bf16.msra.mxu0 %v1443
    %3959 = vmatprep.subr.bf16.mxu0 %v1450
    %3960 = vmatpush1.bf16.msra.mxu0 %v1449
    %3961 = vmatprep.subr.bf16.mxu0 %v1456
    %3962 = vmatpush1.bf16.msra.mxu0 %v1455
    %3963 = vmatprep.subr.bf16.mxu0 %v1462
    %3964 = vmatpush1.bf16.msra.mxu0 %v1461
    %3965 = vmatprep.subr.bf16.mxu0 %v1468
    %3966 = vmatpush1.bf16.msra.mxu0 %v1467
    %3967 = vmatprep.subr.bf16.mxu0 %v1474
    %3968 = vmatpush1.bf16.msra.mxu0 %v1473
    %3969 = vmatprep.mubr.bf16.mxu0 %v3695
    %3970 = vmatmul.mubr.bf16.gmra.mrb[0].mxu0 %v3571
    %v3971 = vpop.f32.mrb[0].mxu0
    %v3972 = vadd.f32 0.0, %v3971
    %v3973 = vpop.f32.mrb[0].mxu0
    %v3974 = vadd.f32 0.0, %v3973
    %v3975 = vpop.f32.mrb[0].mxu0
    %v3976 = vpop.f32.mrb[0].mxu0
    %3977 = vdwg.mxu0
    %v3978 = vadd.f32 %v507, %v3890
    %v3979 = vxor.u32 %v3978, 2147483648
    %v3980 = vmul.f32 %v3979, 1.442695
    %v3981 = vpow.pop %v3980
    %v3982 = vadd.f32 %v3981, 1.0
    %v3983 = vrcp.pop %v3982
    %v3984 = vmul.f32 1.0, %v3983
    %v3985 = vadd.f32 %v509, %v3892
    %v3986 = vxor.u32 %v3985, 2147483648
    %v3987 = vmul.f32 %v3986, 1.442695
    %v3988 = vpow.pop %v3987
    %v3989 = vadd.f32 %v3988, 1.0
    %v3990 = vrcp.pop %v3989
    %v3991 = vmul.f32 1.0, %v3990
    %v3992 = vadd.f32 %v3931, %v889
    %v3993 = vmul.f32 %v3984, %v3992
    %v3994 = vadd.f32 %v616, %v3993
    %v3995 = vtanh.pop %v3994
    %v3996 = vsub.f32 1.0, %v3991
    %v3997 = vmul.f32 %v3996, %v3995
    %v3998 = vmul.f32 %v3991, %v3548
    %v3999 = vadd.f32 %v3997, %v3998
    %v4000 = vadd.f32 %v751, %v3933
    %v4001 = vxor.u32 %v4000, 2147483648
    %v4002 = vmul.f32 %v4001, 1.442695
    %v4003 = vpow.pop %v4002
    %v4004 = vadd.f32 %v4003, 1.0
    %v4005 = vrcp.pop %v4004
    %v4006 = vmul.f32 1.0, %v4005
    %v4007 = vadd.f32 %v753, %v3972
    %v4008 = vxor.u32 %v4007, 2147483648
    %v4009 = vmul.f32 %v4008, 1.442695
    %v4010 = vpow.pop %v4009
    %v4011 = vadd.f32 %v4010, 1.0
    %v4012 = vrcp.pop %v4011
    %v4013 = vmul.f32 1.0, %v4012
    %v4014 = vadd.f32 %v3974, %v896
    %v4015 = vmul.f32 %v4006, %v4014
    %v4016 = vadd.f32 %v861, %v4015
    %v4017 = vtanh.pop %v4016
    %v4018 = vsub.f32 1.0, %v4013
    %v4019 = vmul.f32 %v4018, %v4017
    %v4020 = vmul.f32 %v4013, %v3570
    %v4021 = vadd.f32 %v4019, %v4020
    %v4022 = vpack.c.bf16 %v3999, %v3999
    %4023 = vmatprep.subr.bf16.mxu0 %v1884
    %4024 = vmatpush1.bf16.msra.mxu0 %v1883
    %4025 = vmatprep.subr.bf16.mxu0 %v1890
    %4026 = vmatpush1.bf16.msra.mxu0 %v1889
    %4027 = vmatprep.subr.bf16.mxu0 %v1896
    %4028 = vmatpush1.bf16.msra.mxu0 %v1895
    %4029 = vmatprep.subr.bf16.mxu0 %v1902
    %4030 = vmatpush1.bf16.msra.mxu0 %v1901
    %4031 = vmatprep.subr.bf16.mxu0 %v1908
    %4032 = vmatpush1.bf16.msra.mxu0 %v1907
    %4033 = vmatprep.subr.bf16.mxu0 %v1914
    %4034 = vmatpush1.bf16.msra.mxu0 %v1913
    %4035 = vmatprep.subr.bf16.mxu0 %v1920
    %4036 = vmatpush1.bf16.msra.mxu0 %v1919
    %4037 = vmatprep.subr.bf16.mxu0 %v1926
    %4038 = vmatpush1.bf16.msra.mxu0 %v1925
    %4039 = vmatprep.subr.bf16.mxu0 0
    %4040 = vmatpush1.bf16.msra.mxu0 0
    %4041 = vmatprep.subr.bf16.mxu0 0
    %4042 = vmatpush1.bf16.msra.mxu0 0
    %4043 = vmatprep.subr.bf16.mxu0 0
    %4044 = vmatpush1.bf16.msra.mxu0 0
    %4045 = vmatprep.subr.bf16.mxu0 0
    %4046 = vmatpush1.bf16.msra.mxu0 0
    %4047 = vmatprep.subr.bf16.mxu0 0
    %4048 = vmatpush1.bf16.msra.mxu0 0
    %4049 = vmatprep.subr.bf16.mxu0 0
    %4050 = vmatpush1.bf16.msra.mxu0 0
    %4051 = vmatprep.subr.bf16.mxu0 0
    %4052 = vmatpush1.bf16.msra.mxu0 0
    %4053 = vmatprep.subr.bf16.mxu0 0
    %4054 = vmatpush1.bf16.msra.mxu0 0
    %4055 = vmatprep.mubr.bf16.mxu0 0
    %4056 = vmatmul.mubr.bf16.gmra.mrb[0].mxu0 %v4022
    %v4057 = vpop.f32.mrb[0].mxu0
    %v4058 = vadd.f32 0.0, %v4057
    %v4059 = vpop.f32.mrb[0].mxu0
    %v4060 = vadd.f32 0.0, %v4059
    %v4061 = vpop.f32.mrb[0].mxu0
    %v4062 = vpop.f32.mrb[0].mxu0
    %4063 = vdwg.mxu0
    %4064 = vmatprep.subr.bf16.mxu0 %v1886
    %4065 = vmatpush1.bf16.msra.mxu0 %v1885
    %4066 = vmatprep.subr.bf16.mxu0 %v1892
    %4067 = vmatpush1.bf16.msra.mxu0 %v1891
    %4068 = vmatprep.subr.bf16.mxu0 %v1898
    %4069 = vmatpush1.bf16.msra.mxu0 %v1897
    %4070 = vmatprep.subr.bf16.mxu0 %v1904
    %4071 = vmatpush1.bf16.msra.mxu0 %v1903
    %4072 = vmatprep.subr.bf16.mxu0 %v1910
    %4073 = vmatpush1.bf16.msra.mxu0 %v1909
    %4074 = vmatprep.subr.bf16.mxu0 %v1916
    %4075 = vmatpush1.bf16.msra.mxu0 %v1915
    %4076 = vmatprep.subr.bf16.mxu0 %v1922
    %4077 = vmatpush1.bf16.msra.mxu0 %v1921
    %4078 = vmatprep.subr.bf16.mxu0 %v1928
    %4079 = vmatpush1.bf16.msra.mxu0 %v1927
    %4080 = vmatprep.subr.bf16.mxu0 0
    %4081 = vmatpush1.bf16.msra.mxu0 0
    %4082 = vmatprep.subr.bf16.mxu0 0
    %4083 = vmatpush1.bf16.msra.mxu0 0
    %4084 = vmatprep.subr.bf16.mxu0 0
    %4085 = vmatpush1.bf16.msra.mxu0 0
    %4086 = vmatprep.subr.bf16.mxu0 0
    %4087 = vmatpush1.bf16.msra.mxu0 0
    %4088 = vmatprep.subr.bf16.mxu0 0
    %4089 = vmatpush1.bf16.msra.mxu0 0
    %4090 = vmatprep.subr.bf16.mxu0 0
    %4091 = vmatpush1.bf16.msra.mxu0 0
    %4092 = vmatprep.subr.bf16.mxu0 0
    %4093 = vmatpush1.bf16.msra.mxu0 0
    %4094 = vmatprep.subr.bf16.mxu0 0
    %4095 = vmatpush1.bf16.msra.mxu0 0
    %4096 = vmatprep.mubr.bf16.mxu0 0
    %4097 = vmatmul.mubr.bf16.gmra.mrb[0].mxu0 %v4022
    %v4098 = vpop.f32.mrb[0].mxu0
    %v4099 = vadd.f32 0.0, %v4098
    %v4100 = vpop.f32.mrb[0].mxu0
    %v4101 = vadd.f32 0.0, %v4100
    %v4102 = vpop.f32.mrb[0].mxu0
    %v4103 = vpop.f32.mrb[0].mxu0
    %4104 = vdwg.mxu0
    %4105 = vmatprep.subr.bf16.mxu0 %v1888
    %4106 = vmatpush1.bf16.msra.mxu0 %v1887
    %4107 = vmatprep.subr.bf16.mxu0 %v1894
    %4108 = vmatpush1.bf16.msra.mxu0 %v1893
    %4109 = vmatprep.subr.bf16.mxu0 %v1900
    %4110 = vmatpush1.bf16.msra.mxu0 %v1899
    %4111 = vmatprep.subr.bf16.mxu0 %v1906
    %4112 = vmatpush1.bf16.msra.mxu0 %v1905
    %4113 = vmatprep.subr.bf16.mxu0 %v1912
    %4114 = vmatpush1.bf16.msra.mxu0 %v1911
    %4115 = vmatprep.subr.bf16.mxu0 %v1918
    %4116 = vmatpush1.bf16.msra.mxu0 %v1917
    %4117 = vmatprep.subr.bf16.mxu0 %v1924
    %4118 = vmatpush1.bf16.msra.mxu0 %v1923
    %4119 = vmatprep.subr.bf16.mxu0 %v1930
    %4120 = vmatpush1.bf16.msra.mxu0 %v1929
    %4121 = vmatprep.subr.bf16.mxu0 0
    %4122 = vmatpush1.bf16.msra.mxu0 0
    %4123 = vmatprep.subr.bf16.mxu0 0
    %4124 = vmatpush1.bf16.msra.mxu0 0
    %4125 = vmatprep.subr.bf16.mxu0 0
    %4126 = vmatpush1.bf16.msra.mxu0 0
    %4127 = vmatprep.subr.bf16.mxu0 0
    %4128 = vmatpush1.bf16.msra.mxu0 0
    %4129 = vmatprep.subr.bf16.mxu0 0
    %4130 = vmatpush1.bf16.msra.mxu0 0
    %4131 = vmatprep.subr.bf16.mxu0 0
    %4132 = vmatpush1.bf16.msra.mxu0 0
    %4133 = vmatprep.subr.bf16.mxu0 0
    %4134 = vmatpush1.bf16.msra.mxu0 0
    %4135 = vmatprep.subr.bf16.mxu0 0
    %4136 = vmatpush1.bf16.msra.mxu0 0
    %4137 = vmatprep.mubr.bf16.mxu0 0
    %4138 = vmatmul.mubr.bf16.gmra.mrb[0].mxu0 %v4022
    %v4139 = vpop.f32.mrb[0].mxu0
    %v4140 = vadd.f32 0.0, %v4139
    %v4141 = vpop.f32.mrb[0].mxu0
    %v4142 = vadd.f32 0.0, %v4141
    %v4143 = vpop.f32.mrb[0].mxu0
    %v4144 = vpop.f32.mrb[0].mxu0
    %4145 = vdwg.mxu0
    %v4146 = vpack.c.bf16 %v4021, %v4021
    %4147 = vmatprep.subr.bf16.mxu0 %v2248
    %4148 = vmatpush1.bf16.msra.mxu0 %v2247
    %4149 = vmatprep.subr.bf16.mxu0 %v2254
    %4150 = vmatpush1.bf16.msra.mxu0 %v2253
    %4151 = vmatprep.subr.bf16.mxu0 %v2260
    %4152 = vmatpush1.bf16.msra.mxu0 %v2259
    %4153 = vmatprep.subr.bf16.mxu0 %v2266
    %4154 = vmatpush1.bf16.msra.mxu0 %v2265
    %4155 = vmatprep.subr.bf16.mxu0 %v2272
    %4156 = vmatpush1.bf16.msra.mxu0 %v2271
    %4157 = vmatprep.subr.bf16.mxu0 %v2278
    %4158 = vmatpush1.bf16.msra.mxu0 %v2277
    %4159 = vmatprep.subr.bf16.mxu0 %v2284
    %4160 = vmatpush1.bf16.msra.mxu0 %v2283
    %4161 = vmatprep.subr.bf16.mxu0 %v2290
    %4162 = vmatpush1.bf16.msra.mxu0 %v2289
    %4163 = vmatprep.subr.bf16.mxu0 0
    %4164 = vmatpush1.bf16.msra.mxu0 0
    %4165 = vmatprep.subr.bf16.mxu0 0
    %4166 = vmatpush1.bf16.msra.mxu0 0
    %4167 = vmatprep.subr.bf16.mxu0 0
    %4168 = vmatpush1.bf16.msra.mxu0 0
    %4169 = vmatprep.subr.bf16.mxu0 0
    %4170 = vmatpush1.bf16.msra.mxu0 0
    %4171 = vmatprep.subr.bf16.mxu0 0
    %4172 = vmatpush1.bf16.msra.mxu0 0
    %4173 = vmatprep.subr.bf16.mxu0 0
    %4174 = vmatpush1.bf16.msra.mxu0 0
    %4175 = vmatprep.subr.bf16.mxu0 0
    %4176 = vmatpush1.bf16.msra.mxu0 0
    %4177 = vmatprep.subr.bf16.mxu0 0
    %4178 = vmatpush1.bf16.msra.mxu0 0
    %4179 = vmatprep.mubr.bf16.mxu0 0
    %4180 = vmatmul.mubr.bf16.gmra.mrb[0].mxu0 %v4146
    %v4181 = vpop.f32.mrb[0].mxu0
    %v4182 = vadd.f32 0.0, %v4181
    %v4183 = vpop.f32.mrb[0].mxu0
    %v4184 = vadd.f32 0.0, %v4183
    %v4185 = vpop.f32.mrb[0].mxu0
    %v4186 = vpop.f32.mrb[0].mxu0
    %4187 = vdwg.mxu0
    %4188 = vmatprep.subr.bf16.mxu0 %v2250
    %4189 = vmatpush1.bf16.msra.mxu0 %v2249
    %4190 = vmatprep.subr.bf16.mxu0 %v2256
    %4191 = vmatpush1.bf16.msra.mxu0 %v2255
    %4192 = vmatprep.subr.bf16.mxu0 %v2262
    %4193 = vmatpush1.bf16.msra.mxu0 %v2261
    %4194 = vmatprep.subr.bf16.mxu0 %v2268
    %4195 = vmatpush1.bf16.msra.mxu0 %v2267
    %4196 = vmatprep.subr.bf16.mxu0 %v2274
    %4197 = vmatpush1.bf16.msra.mxu0 %v2273
    %4198 = vmatprep.subr.bf16.mxu0 %v2280
    %4199 = vmatpush1.bf16.msra.mxu0 %v2279
    %4200 = vmatprep.subr.bf16.mxu0 %v2286
    %4201 = vmatpush1.bf16.msra.mxu0 %v2285
    %4202 = vmatprep.subr.bf16.mxu0 %v2292
    %4203 = vmatpush1.bf16.msra.mxu0 %v2291
    %4204 = vmatprep.subr.bf16.mxu0 0
    %4205 = vmatpush1.bf16.msra.mxu0 0
    %4206 = vmatprep.subr.bf16.mxu0 0
    %4207 = vmatpush1.bf16.msra.mxu0 0
    %4208 = vmatprep.subr.bf16.mxu0 0
    %4209 = vmatpush1.bf16.msra.mxu0 0
    %4210 = vmatprep.subr.bf16.mxu0 0
    %4211 = vmatpush1.bf16.msra.mxu0 0
    %4212 = vmatprep.subr.bf16.mxu0 0
    %4213 = vmatpush1.bf16.msra.mxu0 0
    %4214 = vmatprep.subr.bf16.mxu0 0
    %4215 = vmatpush1.bf16.msra.mxu0 0
    %4216 = vmatprep.subr.bf16.mxu0 0
    %4217 = vmatpush1.bf16.msra.mxu0 0
    %4218 = vmatprep.subr.bf16.mxu0 0
    %4219 = vmatpush1.bf16.msra.mxu0 0
    %4220 = vmatprep.mubr.bf16.mxu0 0
    %4221 = vmatmul.mubr.bf16.gmra.mrb[0].mxu0 %v4146
    %v4222 = vpop.f32.mrb[0].mxu0
    %v4223 = vadd.f32 0.0, %v4222
    %v4224 = vpop.f32.mrb[0].mxu0
    %v4225 = vadd.f32 0.0, %v4224
    %v4226 = vpop.f32.mrb[0].mxu0
    %v4227 = vpop.f32.mrb[0].mxu0
    %4228 = vdwg.mxu0
    %4229 = vmatprep.subr.bf16.mxu0 %v2252
    %4230 = vmatpush1.bf16.msra.mxu0 %v2251
    %4231 = vmatprep.subr.bf16.mxu0 %v2258
    %4232 = vmatpush1.bf16.msra.mxu0 %v2257
    %4233 = vmatprep.subr.bf16.mxu0 %v2264
    %4234 = vmatpush1.bf16.msra.mxu0 %v2263
    %4235 = vmatprep.subr.bf16.mxu0 %v2270
    %4236 = vmatpush1.bf16.msra.mxu0 %v2269
    %4237 = vmatprep.subr.bf16.mxu0 %v2276
    %4238 = vmatpush1.bf16.msra.mxu0 %v2275
    %4239 = vmatprep.subr.bf16.mxu0 %v2282
    %4240 = vmatpush1.bf16.msra.mxu0 %v2281
    %4241 = vmatprep.subr.bf16.mxu0 %v2288
    %4242 = vmatpush1.bf16.msra.mxu0 %v2287
    %4243 = vmatprep.subr.bf16.mxu0 %v2294
    %4244 = vmatpush1.bf16.msra.mxu0 %v2293
    %4245 = vmatprep.subr.bf16.mxu0 0
    %4246 = vmatpush1.bf16.msra.mxu0 0
    %4247 = vmatprep.subr.bf16.mxu0 0
    %4248 = vmatpush1.bf16.msra.mxu0 0
    %4249 = vmatprep.subr.bf16.mxu0 0
    %4250 = vmatpush1.bf16.msra.mxu0 0
    %4251 = vmatprep.subr.bf16.mxu0 0
    %4252 = vmatpush1.bf16.msra.mxu0 0
    %4253 = vmatprep.subr.bf16.mxu0 0
    %4254 = vmatpush1.bf16.msra.mxu0 0
    %4255 = vmatprep.subr.bf16.mxu0 0
    %4256 = vmatpush1.bf16.msra.mxu0 0
    %4257 = vmatprep.subr.bf16.mxu0 0
    %4258 = vmatpush1.bf16.msra.mxu0 0
    %4259 = vmatprep.subr.bf16.mxu0 0
    %4260 = vmatpush1.bf16.msra.mxu0 0
    %4261 = vmatprep.mubr.bf16.mxu0 0
    %4262 = vmatmul.mubr.bf16.gmra.mrb[0].mxu0 %v4146
    %v4263 = vpop.f32.mrb[0].mxu0
    %v4264 = vadd.f32 0.0, %v4263
    %v4265 = vpop.f32.mrb[0].mxu0
    %v4266 = vadd.f32 0.0, %v4265
    %v4267 = vpop.f32.mrb[0].mxu0
    %v4268 = vpop.f32.mrb[0].mxu0
    %4269 = vdwg.mxu0
    %v4270 = vld [vmem:[#allocation2 + $0x60] sm:$0xff]
    %v4271 = vld [vmem:[#allocation2 + $0x68] sm:$0xff]
    %v4272 = vld [vmem:[#allocation2 + $0x70] sm:$0xff]
    %v4273 = vadd.f32 %v4270, %v4058
    %v4274 = vadd.f32 %v4271, %v4060
    %v4275 = vadd.f32 %v4272, %v4099
    %4276 = vst [vmem:[#allocation2 + $0x60] sm:$0xff] %v4273
    %4277 = vst [vmem:[#allocation2 + $0x68] sm:$0xff] %v4274
    %4278 = vst [vmem:[#allocation2 + $0x70] sm:$0xff] %v4275
    %v4279 = vld [vmem:[#allocation3 + $0x60] sm:$0xff]
    %v4280 = vld [vmem:[#allocation3 + $0x68] sm:$0xff]
    %v4281 = vld [vmem:[#allocation3 + $0x70] sm:$0xff]
    %v4282 = vadd.f32 %v4279, %v4101
    %v4283 = vadd.f32 %v4280, %v4140
    %v4284 = vadd.f32 %v4281, %v4142
    %4285 = vst [vmem:[#allocation3 + $0x60] sm:$0xff] %v4282
    %4286 = vst [vmem:[#allocation3 + $0x68] sm:$0xff] %v4283
    %4287 = vst [vmem:[#allocation3 + $0x70] sm:$0xff] %v4284
    %v4288 = vld [vmem:[#allocation2 + $0x48] sm:$0xff]
    %v4289 = vld [vmem:[#allocation2 + $0x50] sm:$0xff]
    %v4290 = vld [vmem:[#allocation2 + $0x58] sm:$0xff]
    %v4291 = vadd.f32 %v4288, %v4182
    %v4292 = vadd.f32 %v4289, %v4184
    %v4293 = vadd.f32 %v4290, %v4223
    %4294 = vst [vmem:[#allocation2 + $0x48] sm:$0xff] %v4291
    %4295 = vst [vmem:[#allocation2 + $0x50] sm:$0xff] %v4292
    %4296 = vst [vmem:[#allocation2 + $0x58] sm:$0xff] %v4293
    %v4297 = vld [vmem:[#allocation3 + $0x48] sm:$0xff]
    %v4298 = vld [vmem:[#allocation3 + $0x50] sm:$0xff]
    %v4299 = vld [vmem:[#allocation3 + $0x58] sm:$0xff]
    %v4300 = vadd.f32 %v4297, %v4225
    %v4301 = vadd.f32 %v4298, %v4264
    %v4302 = vadd.f32 %v4299, %v4266
    %4303 = vst [vmem:[#allocation3 + $0x48] sm:$0xff] %v4300
    %4304 = vst [vmem:[#allocation3 + $0x50] sm:$0xff] %v4301
    %4305 = vst [vmem:[#allocation3 + $0x58] sm:$0xff] %v4302
    %4306 = vmatprep.subr.bf16.mxu0 %v1380
    %4307 = vmatpush1.bf16.msra.mxu0 %v1379
    %4308 = vmatprep.subr.bf16.mxu0 %v1386
    %4309 = vmatpush1.bf16.msra.mxu0 %v1385
    %4310 = vmatprep.subr.bf16.mxu0 %v1392
    %4311 = vmatpush1.bf16.msra.mxu0 %v1391
    %4312 = vmatprep.subr.bf16.mxu0 %v1398
    %4313 = vmatpush1.bf16.msra.mxu0 %v1397
    %4314 = vmatprep.subr.bf16.mxu0 %v1404
    %4315 = vmatpush1.bf16.msra.mxu0 %v1403
    %4316 = vmatprep.subr.bf16.mxu0 %v1410
    %4317 = vmatpush1.bf16.msra.mxu0 %v1409
    %4318 = vmatprep.subr.bf16.mxu0 %v1416
    %4319 = vmatpush1.bf16.msra.mxu0 %v1415
    %4320 = vmatprep.subr.bf16.mxu0 %v1422
    %4321 = vmatpush1.bf16.msra.mxu0 %v1421
    %4322 = vmatprep.subr.bf16.mxu0 %v1428
    %4323 = vmatpush1.bf16.msra.mxu0 %v1427
    %4324 = vmatprep.subr.bf16.mxu0 %v1434
    %4325 = vmatpush1.bf16.msra.mxu0 %v1433
    %4326 = vmatprep.subr.bf16.mxu0 %v1440
    %4327 = vmatpush1.bf16.msra.mxu0 %v1439
    %4328 = vmatprep.subr.bf16.mxu0 %v1446
    %4329 = vmatpush1.bf16.msra.mxu0 %v1445
    %4330 = vmatprep.subr.bf16.mxu0 %v1452
    %4331 = vmatpush1.bf16.msra.mxu0 %v1451
    %4332 = vmatprep.subr.bf16.mxu0 %v1458
    %4333 = vmatpush1.bf16.msra.mxu0 %v1457
    %4334 = vmatprep.subr.bf16.mxu0 %v1464
    %4335 = vmatpush1.bf16.msra.mxu0 %v1463
    %4336 = vmatprep.subr.bf16.mxu0 %v1470
    %4337 = vmatpush1.bf16.msra.mxu0 %v1469
    %4338 = vmatprep.mubr.bf16.mxu0 %v4146
    %4339 = vmatmul.mubr.bf16.gmra.mrb[0].mxu0 %v4022
    %v4340 = vpop.f32.mrb[0].mxu0
    %v4341 = vadd.f32 0.0, %v4340
    %v4342 = vpop.f32.mrb[0].mxu0
    %v4343 = vadd.f32 0.0, %v4342
    %v4344 = vpop.f32.mrb[0].mxu0
    %v4345 = vpop.f32.mrb[0].mxu0
    %4346 = vdwg.mxu0
    %4347 = vmatprep.subr.bf16.mxu0 %v1382
    %4348 = vmatpush1.bf16.msra.mxu0 %v1381
    %4349 = vmatprep.subr.bf16.mxu0 %v1388
    %4350 = vmatpush1.bf16.msra.mxu0 %v1387
    %4351 = vmatprep.subr.bf16.mxu0 %v1394
    %4352 = vmatpush1.bf16.msra.mxu0 %v1393
    %4353 = vmatprep.subr.bf16.mxu0 %v1400
    %4354 = vmatpush1.bf16.msra.mxu0 %v1399
    %4355 = vmatprep.subr.bf16.mxu0 %v1406
    %4356 = vmatpush1.bf16.msra.mxu0 %v1405
    %4357 = vmatprep.subr.bf16.mxu0 %v1412
    %4358 = vmatpush1.bf16.msra.mxu0 %v1411
    %4359 = vmatprep.subr.bf16.mxu0 %v1418
    %4360 = vmatpush1.bf16.msra.mxu0 %v1417
    %4361 = vmatprep.subr.bf16.mxu0 %v1424
    %4362 = vmatpush1.bf16.msra.mxu0 %v1423
    %4363 = vmatprep.subr.bf16.mxu0 %v1430
    %4364 = vmatpush1.bf16.msra.mxu0 %v1429
    %4365 = vmatprep.subr.bf16.mxu0 %v1436
    %4366 = vmatpush1.bf16.msra.mxu0 %v1435
    %4367 = vmatprep.subr.bf16.mxu0 %v1442
    %4368 = vmatpush1.bf16.msra.mxu0 %v1441
    %4369 = vmatprep.subr.bf16.mxu0 %v1448
    %4370 = vmatpush1.bf16.msra.mxu0 %v1447
    %4371 = vmatprep.subr.bf16.mxu0 %v1454
    %4372 = vmatpush1.bf16.msra.mxu0 %v1453
    %4373 = vmatprep.subr.bf16.mxu0 %v1460
    %4374 = vmatpush1.bf16.msra.mxu0 %v1459
    %4375 = vmatprep.subr.bf16.mxu0 %v1466
    %4376 = vmatpush1.bf16.msra.mxu0 %v1465
    %4377 = vmatprep.subr.bf16.mxu0 %v1472
    %4378 = vmatpush1.bf16.msra.mxu0 %v1471
    %4379 = vmatprep.mubr.bf16.mxu0 %v4146
    %4380 = vmatmul.mubr.bf16.gmra.mrb[0].mxu0 %v4022
    %v4381 = vpop.f32.mrb[0].mxu0
    %v4382 = vadd.f32 0.0, %v4381
    %v4383 = vpop.f32.mrb[0].mxu0
    %v4384 = vadd.f32 0.0, %v4383
    %v4385 = vpop.f32.mrb[0].mxu0
    %v4386 = vpop.f32.mrb[0].mxu0
    %4387 = vdwg.mxu0
    %4388 = vmatprep.subr.bf16.mxu0 %v1384
    %4389 = vmatpush1.bf16.msra.mxu0 %v1383
    %4390 = vmatprep.subr.bf16.mxu0 %v1390
    %4391 = vmatpush1.bf16.msra.mxu0 %v1389
    %4392 = vmatprep.subr.bf16.mxu0 %v1396
    %4393 = vmatpush1.bf16.msra.mxu0 %v1395
    %4394 = vmatprep.subr.bf16.mxu0 %v1402
    %4395 = vmatpush1.bf16.msra.mxu0 %v1401
    %4396 = vmatprep.subr.bf16.mxu0 %v1408
    %4397 = vmatpush1.bf16.msra.mxu0 %v1407
    %4398 = vmatprep.subr.bf16.mxu0 %v1414
    %4399 = vmatpush1.bf16.msra.mxu0 %v1413
    %4400 = vmatprep.subr.bf16.mxu0 %v1420
    %4401 = vmatpush1.bf16.msra.mxu0 %v1419
    %4402 = vmatprep.subr.bf16.mxu0 %v1426
    %4403 = vmatpush1.bf16.msra.mxu0 %v1425
    %4404 = vmatprep.subr.bf16.mxu0 %v1432
    %4405 = vmatpush1.bf16.msra.mxu0 %v1431
    %4406 = vmatprep.subr.bf16.mxu0 %v1438
    %4407 = vmatpush1.bf16.msra.mxu0 %v1437
    %4408 = vmatprep.subr.bf16.mxu0 %v1444
    %4409 = vmatpush1.bf16.msra.mxu0 %v1443
    %4410 = vmatprep.subr.bf16.mxu0 %v1450
    %4411 = vmatpush1.bf16.msra.mxu0 %v1449
    %4412 = vmatprep.subr.bf16.mxu0 %v1456
    %4413 = vmatpush1.bf16.msra.mxu0 %v1455
    %4414 = vmatprep.subr.bf16.mxu0 %v1462
    %4415 = vmatpush1.bf16.msra.mxu0 %v1461
    %4416 = vmatprep.subr.bf16.mxu0 %v1468
    %4417 = vmatpush1.bf16.msra.mxu0 %v1467
    %4418 = vmatprep.subr.bf16.mxu0 %v1474
    %4419 = vmatpush1.bf16.msra.mxu0 %v1473
    %4420 = vmatprep.mubr.bf16.mxu0 %v4146
    %4421 = vmatmul.mubr.bf16.gmra.mrb[0].mxu0 %v4022
    %v4422 = vpop.f32.mrb[0].mxu0
    %v4423 = vadd.f32 0.0, %v4422
    %v4424 = vpop.f32.mrb[0].mxu0
    %v4425 = vadd.f32 0.0, %v4424
    %v4426 = vpop.f32.mrb[0].mxu0
    %v4427 = vpop.f32.mrb[0].mxu0
    %4428 = vdwg.mxu0
    %v4429 = vadd.f32 %v513, %v4341
    %v4430 = vxor.u32 %v4429, 2147483648
    %v4431 = vmul.f32 %v4430, 1.442695
    %v4432 = vpow.pop %v4431
    %v4433 = vadd.f32 %v4432, 1.0
    %v4434 = vrcp.pop %v4433
    %v4435 = vmul.f32 1.0, %v4434
    %v4436 = vadd.f32 %v515, %v4343
    %v4437 = vxor.u32 %v4436, 2147483648
    %v4438 = vmul.f32 %v4437, 1.442695
    %v4439 = vpow.pop %v4438
    %v4440 = vadd.f32 %v4439, 1.0
    %v4441 = vrcp.pop %v4440
    %v4442 = vmul.f32 1.0, %v4441
    %v4443 = vadd.f32 %v4382, %v889
    %v4444 = vmul.f32 %v4435, %v4443
    %v4445 = vadd.f32 %v621, %v4444
    %v4446 = vtanh.pop %v4445
    %v4447 = vsub.f32 1.0, %v4442
    %v4448 = vmul.f32 %v4447, %v4446
    %v4449 = vmul.f32 %v4442, %v3999
    %v4450 = vadd.f32 %v4448, %v4449
    %v4451 = vadd.f32 %v745, %v4384
    %v4452 = vxor.u32 %v4451, 2147483648
    %v4453 = vmul.f32 %v4452, 1.442695
    %v4454 = vpow.pop %v4453
    %v4455 = vadd.f32 %v4454, 1.0
    %v4456 = vrcp.pop %v4455
    %v4457 = vmul.f32 1.0, %v4456
    %v4458 = vadd.f32 %v747, %v4423
    %v4459 = vxor.u32 %v4458, 2147483648
    %v4460 = vmul.f32 %v4459, 1.442695
    %v4461 = vpow.pop %v4460
    %v4462 = vadd.f32 %v4461, 1.0
    %v4463 = vrcp.pop %v4462
    %v4464 = vmul.f32 1.0, %v4463
    %v4465 = vadd.f32 %v4425, %v896
    %v4466 = vmul.f32 %v4457, %v4465
    %v4467 = vadd.f32 %v856, %v4466
    %v4468 = vtanh.pop %v4467
    %v4469 = vsub.f32 1.0, %v4464
    %v4470 = vmul.f32 %v4469, %v4468
    %v4471 = vmul.f32 %v4464, %v4021
    %v4472 = vadd.f32 %v4470, %v4471
    %v4473 = vpack.c.bf16 %v4450, %v4450
    %4474 = vmatprep.subr.bf16.mxu0 %v1884
    %4475 = vmatpush1.bf16.msra.mxu0 %v1883
    %4476 = vmatprep.subr.bf16.mxu0 %v1890
    %4477 = vmatpush1.bf16.msra.mxu0 %v1889
    %4478 = vmatprep.subr.bf16.mxu0 %v1896
    %4479 = vmatpush1.bf16.msra.mxu0 %v1895
    %4480 = vmatprep.subr.bf16.mxu0 %v1902
    %4481 = vmatpush1.bf16.msra.mxu0 %v1901
    %4482 = vmatprep.subr.bf16.mxu0 %v1908
    %4483 = vmatpush1.bf16.msra.mxu0 %v1907
    %4484 = vmatprep.subr.bf16.mxu0 %v1914
    %4485 = vmatpush1.bf16.msra.mxu0 %v1913
    %4486 = vmatprep.subr.bf16.mxu0 %v1920
    %4487 = vmatpush1.bf16.msra.mxu0 %v1919
    %4488 = vmatprep.subr.bf16.mxu0 %v1926
    %4489 = vmatpush1.bf16.msra.mxu0 %v1925
    %4490 = vmatprep.subr.bf16.mxu0 0
    %4491 = vmatpush1.bf16.msra.mxu0 0
    %4492 = vmatprep.subr.bf16.mxu0 0
    %4493 = vmatpush1.bf16.msra.mxu0 0
    %4494 = vmatprep.subr.bf16.mxu0 0
    %4495 = vmatpush1.bf16.msra.mxu0 0
    %4496 = vmatprep.subr.bf16.mxu0 0
    %4497 = vmatpush1.bf16.msra.mxu0 0
    %4498 = vmatprep.subr.bf16.mxu0 0
    %4499 = vmatpush1.bf16.msra.mxu0 0
    %4500 = vmatprep.subr.bf16.mxu0 0
    %4501 = vmatpush1.bf16.msra.mxu0 0
    %4502 = vmatprep.subr.bf16.mxu0 0
    %4503 = vmatpush1.bf16.msra.mxu0 0
    %4504 = vmatprep.subr.bf16.mxu0 0
    %4505 = vmatpush1.bf16.msra.mxu0 0
    %4506 = vmatprep.mubr.bf16.mxu0 0
    %4507 = vmatmul.mubr.bf16.gmra.mrb[0].mxu0 %v4473
    %v4508 = vpop.f32.mrb[0].mxu0
    %v4509 = vadd.f32 0.0, %v4508
    %v4510 = vpop.f32.mrb[0].mxu0
    %v4511 = vadd.f32 0.0, %v4510
    %v4512 = vpop.f32.mrb[0].mxu0
    %v4513 = vpop.f32.mrb[0].mxu0
    %4514 = vdwg.mxu0
    %4515 = vmatprep.subr.bf16.mxu0 %v1886
    %4516 = vmatpush1.bf16.msra.mxu0 %v1885
    %4517 = vmatprep.subr.bf16.mxu0 %v1892
    %4518 = vmatpush1.bf16.msra.mxu0 %v1891
    %4519 = vmatprep.subr.bf16.mxu0 %v1898
    %4520 = vmatpush1.bf16.msra.mxu0 %v1897
    %4521 = vmatprep.subr.bf16.mxu0 %v1904
    %4522 = vmatpush1.bf16.msra.mxu0 %v1903
    %4523 = vmatprep.subr.bf16.mxu0 %v1910
    %4524 = vmatpush1.bf16.msra.mxu0 %v1909
    %4525 = vmatprep.subr.bf16.mxu0 %v1916
    %4526 = vmatpush1.bf16.msra.mxu0 %v1915
    %4527 = vmatprep.subr.bf16.mxu0 %v1922
    %4528 = vmatpush1.bf16.msra.mxu0 %v1921
    %4529 = vmatprep.subr.bf16.mxu0 %v1928
    %4530 = vmatpush1.bf16.msra.mxu0 %v1927
    %4531 = vmatprep.subr.bf16.mxu0 0
    %4532 = vmatpush1.bf16.msra.mxu0 0
    %4533 = vmatprep.subr.bf16.mxu0 0
    %4534 = vmatpush1.bf16.msra.mxu0 0
    %4535 = vmatprep.subr.bf16.mxu0 0
    %4536 = vmatpush1.bf16.msra.mxu0 0
    %4537 = vmatprep.subr.bf16.mxu0 0
    %4538 = vmatpush1.bf16.msra.mxu0 0
    %4539 = vmatprep.subr.bf16.mxu0 0
    %4540 = vmatpush1.bf16.msra.mxu0 0
    %4541 = vmatprep.subr.bf16.mxu0 0
    %4542 = vmatpush1.bf16.msra.mxu0 0
    %4543 = vmatprep.subr.bf16.mxu0 0
    %4544 = vmatpush1.bf16.msra.mxu0 0
    %4545 = vmatprep.subr.bf16.mxu0 0
    %4546 = vmatpush1.bf16.msra.mxu0 0
    %4547 = vmatprep.mubr.bf16.mxu0 0
    %4548 = vmatmul.mubr.bf16.gmra.mrb[0].mxu0 %v4473
    %v4549 = vpop.f32.mrb[0].mxu0
    %v4550 = vadd.f32 0.0, %v4549
    %v4551 = vpop.f32.mrb[0].mxu0
    %v4552 = vadd.f32 0.0, %v4551
    %v4553 = vpop.f32.mrb[0].mxu0
    %v4554 = vpop.f32.mrb[0].mxu0
    %4555 = vdwg.mxu0
    %4556 = vmatprep.subr.bf16.mxu0 %v1888
    %4557 = vmatpush1.bf16.msra.mxu0 %v1887
    %4558 = vmatprep.subr.bf16.mxu0 %v1894
    %4559 = vmatpush1.bf16.msra.mxu0 %v1893
    %4560 = vmatprep.subr.bf16.mxu0 %v1900
    %4561 = vmatpush1.bf16.msra.mxu0 %v1899
    %4562 = vmatprep.subr.bf16.mxu0 %v1906
    %4563 = vmatpush1.bf16.msra.mxu0 %v1905
    %4564 = vmatprep.subr.bf16.mxu0 %v1912
    %4565 = vmatpush1.bf16.msra.mxu0 %v1911
    %4566 = vmatprep.subr.bf16.mxu0 %v1918
    %4567 = vmatpush1.bf16.msra.mxu0 %v1917
    %4568 = vmatprep.subr.bf16.mxu0 %v1924
    %4569 = vmatpush1.bf16.msra.mxu0 %v1923
    %4570 = vmatprep.subr.bf16.mxu0 %v1930
    %4571 = vmatpush1.bf16.msra.mxu0 %v1929
    %4572 = vmatprep.subr.bf16.mxu0 0
    %4573 = vmatpush1.bf16.msra.mxu0 0
    %4574 = vmatprep.subr.bf16.mxu0 0
    %4575 = vmatpush1.bf16.msra.mxu0 0
    %4576 = vmatprep.subr.bf16.mxu0 0
    %4577 = vmatpush1.bf16.msra.mxu0 0
    %4578 = vmatprep.subr.bf16.mxu0 0
    %4579 = vmatpush1.bf16.msra.mxu0 0
    %4580 = vmatprep.subr.bf16.mxu0 0
    %4581 = vmatpush1.bf16.msra.mxu0 0
    %4582 = vmatprep.subr.bf16.mxu0 0
    %4583 = vmatpush1.bf16.msra.mxu0 0
    %4584 = vmatprep.subr.bf16.mxu0 0
    %4585 = vmatpush1.bf16.msra.mxu0 0
    %4586 = vmatprep.subr.bf16.mxu0 0
    %4587 = vmatpush1.bf16.msra.mxu0 0
    %4588 = vmatprep.mubr.bf16.mxu0 0
    %4589 = vmatmul.mubr.bf16.gmra.mrb[0].mxu0 %v4473
    %v4590 = vpop.f32.mrb[0].mxu0
    %v4591 = vadd.f32 0.0, %v4590
    %v4592 = vpop.f32.mrb[0].mxu0
    %v4593 = vadd.f32 0.0, %v4592
    %v4594 = vpop.f32.mrb[0].mxu0
    %v4595 = vpop.f32.mrb[0].mxu0
    %4596 = vdwg.mxu0
    %v4597 = vpack.c.bf16 %v4472, %v4472
    %4598 = vmatprep.subr.bf16.mxu0 %v2248
    %4599 = vmatpush1.bf16.msra.mxu0 %v2247
    %4600 = vmatprep.subr.bf16.mxu0 %v2254
    %4601 = vmatpush1.bf16.msra.mxu0 %v2253
    %4602 = vmatprep.subr.bf16.mxu0 %v2260
    %4603 = vmatpush1.bf16.msra.mxu0 %v2259
    %4604 = vmatprep.subr.bf16.mxu0 %v2266
    %4605 = vmatpush1.bf16.msra.mxu0 %v2265
    %4606 = vmatprep.subr.bf16.mxu0 %v2272
    %4607 = vmatpush1.bf16.msra.mxu0 %v2271
    %4608 = vmatprep.subr.bf16.mxu0 %v2278
    %4609 = vmatpush1.bf16.msra.mxu0 %v2277
    %4610 = vmatprep.subr.bf16.mxu0 %v2284
    %4611 = vmatpush1.bf16.msra.mxu0 %v2283
    %4612 = vmatprep.subr.bf16.mxu0 %v2290
    %4613 = vmatpush1.bf16.msra.mxu0 %v2289
    %4614 = vmatprep.subr.bf16.mxu0 0
    %4615 = vmatpush1.bf16.msra.mxu0 0
    %4616 = vmatprep.subr.bf16.mxu0 0
    %4617 = vmatpush1.bf16.msra.mxu0 0
    %4618 = vmatprep.subr.bf16.mxu0 0
    %4619 = vmatpush1.bf16.msra.mxu0 0
    %4620 = vmatprep.subr.bf16.mxu0 0
    %4621 = vmatpush1.bf16.msra.mxu0 0
    %4622 = vmatprep.subr.bf16.mxu0 0
    %4623 = vmatpush1.bf16.msra.mxu0 0
    %4624 = vmatprep.subr.bf16.mxu0 0
    %4625 = vmatpush1.bf16.msra.mxu0 0
    %4626 = vmatprep.subr.bf16.mxu0 0
    %4627 = vmatpush1.bf16.msra.mxu0 0
    %4628 = vmatprep.subr.bf16.mxu0 0
    %4629 = vmatpush1.bf16.msra.mxu0 0
    %4630 = vmatprep.mubr.bf16.mxu0 0
    %4631 = vmatmul.mubr.bf16.gmra.mrb[0].mxu0 %v4597
    %v4632 = vpop.f32.mrb[0].mxu0
    %v4633 = vadd.f32 0.0, %v4632
    %v4634 = vpop.f32.mrb[0].mxu0
    %v4635 = vadd.f32 0.0, %v4634
    %v4636 = vpop.f32.mrb[0].mxu0
    %v4637 = vpop.f32.mrb[0].mxu0
    %4638 = vdwg.mxu0
    %4639 = vmatprep.subr.bf16.mxu0 %v2250
    %4640 = vmatpush1.bf16.msra.mxu0 %v2249
    %4641 = vmatprep.subr.bf16.mxu0 %v2256
    %4642 = vmatpush1.bf16.msra.mxu0 %v2255
    %4643 = vmatprep.subr.bf16.mxu0 %v2262
    %4644 = vmatpush1.bf16.msra.mxu0 %v2261
    %4645 = vmatprep.subr.bf16.mxu0 %v2268
    %4646 = vmatpush1.bf16.msra.mxu0 %v2267
    %4647 = vmatprep.subr.bf16.mxu0 %v2274
    %4648 = vmatpush1.bf16.msra.mxu0 %v2273
    %4649 = vmatprep.subr.bf16.mxu0 %v2280
    %4650 = vmatpush1.bf16.msra.mxu0 %v2279
    %4651 = vmatprep.subr.bf16.mxu0 %v2286
    %4652 = vmatpush1.bf16.msra.mxu0 %v2285
    %4653 = vmatprep.subr.bf16.mxu0 %v2292
    %4654 = vmatpush1.bf16.msra.mxu0 %v2291
    %4655 = vmatprep.subr.bf16.mxu0 0
    %4656 = vmatpush1.bf16.msra.mxu0 0
    %4657 = vmatprep.subr.bf16.mxu0 0
    %4658 = vmatpush1.bf16.msra.mxu0 0
    %4659 = vmatprep.subr.bf16.mxu0 0
    %4660 = vmatpush1.bf16.msra.mxu0 0
    %4661 = vmatprep.subr.bf16.mxu0 0
    %4662 = vmatpush1.bf16.msra.mxu0 0
    %4663 = vmatprep.subr.bf16.mxu0 0
    %4664 = vmatpush1.bf16.msra.mxu0 0
    %4665 = vmatprep.subr.bf16.mxu0 0
    %4666 = vmatpush1.bf16.msra.mxu0 0
    %4667 = vmatprep.subr.bf16.mxu0 0
    %4668 = vmatpush1.bf16.msra.mxu0 0
    %4669 = vmatprep.subr.bf16.mxu0 0
    %4670 = vmatpush1.bf16.msra.mxu0 0
    %4671 = vmatprep.mubr.bf16.mxu0 0
    %4672 = vmatmul.mubr.bf16.gmra.mrb[0].mxu0 %v4597
    %v4673 = vpop.f32.mrb[0].mxu0
    %v4674 = vadd.f32 0.0, %v4673
    %v4675 = vpop.f32.mrb[0].mxu0
    %v4676 = vadd.f32 0.0, %v4675
    %v4677 = vpop.f32.mrb[0].mxu0
    %v4678 = vpop.f32.mrb[0].mxu0
    %4679 = vdwg.mxu0
    %4680 = vmatprep.subr.bf16.mxu0 %v2252
    %4681 = vmatpush1.bf16.msra.mxu0 %v2251
    %4682 = vmatprep.subr.bf16.mxu0 %v2258
    %4683 = vmatpush1.bf16.msra.mxu0 %v2257
    %4684 = vmatprep.subr.bf16.mxu0 %v2264
    %4685 = vmatpush1.bf16.msra.mxu0 %v2263
    %4686 = vmatprep.subr.bf16.mxu0 %v2270
    %4687 = vmatpush1.bf16.msra.mxu0 %v2269
    %4688 = vmatprep.subr.bf16.mxu0 %v2276
    %4689 = vmatpush1.bf16.msra.mxu0 %v2275
    %4690 = vmatprep.subr.bf16.mxu0 %v2282
    %4691 = vmatpush1.bf16.msra.mxu0 %v2281
    %4692 = vmatprep.subr.bf16.mxu0 %v2288
    %4693 = vmatpush1.bf16.msra.mxu0 %v2287
    %4694 = vmatprep.subr.bf16.mxu0 %v2294
    %4695 = vmatpush1.bf16.msra.mxu0 %v2293
    %4696 = vmatprep.subr.bf16.mxu0 0
    %4697 = vmatpush1.bf16.msra.mxu0 0
    %4698 = vmatprep.subr.bf16.mxu0 0
    %4699 = vmatpush1.bf16.msra.mxu0 0
    %4700 = vmatprep.subr.bf16.mxu0 0
    %4701 = vmatpush1.bf16.msra.mxu0 0
    %4702 = vmatprep.subr.bf16.mxu0 0
    %4703 = vmatpush1.bf16.msra.mxu0 0
    %4704 = vmatprep.subr.bf16.mxu0 0
    %4705 = vmatpush1.bf16.msra.mxu0 0
    %4706 = vmatprep.subr.bf16.mxu0 0
    %4707 = vmatpush1.bf16.msra.mxu0 0
    %4708 = vmatprep.subr.bf16.mxu0 0
    %4709 = vmatpush1.bf16.msra.mxu0 0
    %4710 = vmatprep.subr.bf16.mxu0 0
    %4711 = vmatpush1.bf16.msra.mxu0 0
    %4712 = vmatprep.mubr.bf16.mxu0 0
    %4713 = vmatmul.mubr.bf16.gmra.mrb[0].mxu0 %v4597
    %v4714 = vpop.f32.mrb[0].mxu0
    %v4715 = vadd.f32 0.0, %v4714
    %v4716 = vpop.f32.mrb[0].mxu0
    %v4717 = vadd.f32 0.0, %v4716
    %v4718 = vpop.f32.mrb[0].mxu0
    %v4719 = vpop.f32.mrb[0].mxu0
    %4720 = vdwg.mxu0
    %v4721 = vld [vmem:[#allocation2 + $0x78] sm:$0xff]
    %v4722 = vld [vmem:[#allocation2 + $0x80] sm:$0xff]
    %v4723 = vld [vmem:[#allocation2 + $0x88] sm:$0xff]
    %v4724 = vadd.f32 %v4721, %v4509
    %v4725 = vadd.f32 %v4722, %v4511
    %v4726 = vadd.f32 %v4723, %v4550
    %4727 = vst [vmem:[#allocation2 + $0x78] sm:$0xff] %v4724
    %4728 = vst [vmem:[#allocation2 + $0x80] sm:$0xff] %v4725
    %4729 = vst [vmem:[#allocation2 + $0x88] sm:$0xff] %v4726
    %v4730 = vld [vmem:[#allocation3 + $0x78] sm:$0xff]
    %v4731 = vld [vmem:[#allocation3 + $0x80] sm:$0xff]
    %v4732 = vld [vmem:[#allocation3 + $0x88] sm:$0xff]
    %v4733 = vadd.f32 %v4730, %v4552
    %v4734 = vadd.f32 %v4731, %v4591
    %v4735 = vadd.f32 %v4732, %v4593
    %4736 = vst [vmem:[#allocation3 + $0x78] sm:$0xff] %v4733
    %4737 = vst [vmem:[#allocation3 + $0x80] sm:$0xff] %v4734
    %4738 = vst [vmem:[#allocation3 + $0x88] sm:$0xff] %v4735
    %v4739 = vld [vmem:[#allocation2 + $0x30] sm:$0xff]
    %v4740 = vld [vmem:[#allocation2 + $0x38] sm:$0xff]
    %v4741 = vld [vmem:[#allocation2 + $0x40] sm:$0xff]
    %v4742 = vadd.f32 %v4739, %v4633
    %v4743 = vadd.f32 %v4740, %v4635
    %v4744 = vadd.f32 %v4741, %v4674
    %4745 = vst [vmem:[#allocation2 + $0x30] sm:$0xff] %v4742
    %4746 = vst [vmem:[#allocation2 + $0x38] sm:$0xff] %v4743
    %4747 = vst [vmem:[#allocation2 + $0x40] sm:$0xff] %v4744
    %v4748 = vld [vmem:[#allocation3 + $0x30] sm:$0xff]
    %v4749 = vld [vmem:[#allocation3 + $0x38] sm:$0xff]
    %v4750 = vld [vmem:[#allocation3 + $0x40] sm:$0xff]
    %v4751 = vadd.f32 %v4748, %v4676
    %v4752 = vadd.f32 %v4749, %v4715
    %v4753 = vadd.f32 %v4750, %v4717
    %4754 = vst [vmem:[#allocation3 + $0x30] sm:$0xff] %v4751
    %4755 = vst [vmem:[#allocation3 + $0x38] sm:$0xff] %v4752
    %4756 = vst [vmem:[#allocation3 + $0x40] sm:$0xff] %v4753
    %4757 = vmatprep.subr.bf16.mxu0 %v1380
    %4758 = vmatpush1.bf16.msra.mxu0 %v1379
    %4759 = vmatprep.subr.bf16.mxu0 %v1386
    %4760 = vmatpush1.bf16.msra.mxu0 %v1385
    %4761 = vmatprep.subr.bf16.mxu0 %v1392
    %4762 = vmatpush1.bf16.msra.mxu0 %v1391
    %4763 = vmatprep.subr.bf16.mxu0 %v1398
    %4764 = vmatpush1.bf16.msra.mxu0 %v1397
    %4765 = vmatprep.subr.bf16.mxu0 %v1404
    %4766 = vmatpush1.bf16.msra.mxu0 %v1403
    %4767 = vmatprep.subr.bf16.mxu0 %v1410
    %4768 = vmatpush1.bf16.msra.mxu0 %v1409
    %4769 = vmatprep.subr.bf16.mxu0 %v1416
    %4770 = vmatpush1.bf16.msra.mxu0 %v1415
    %4771 = vmatprep.subr.bf16.mxu0 %v1422
    %4772 = vmatpush1.bf16.msra.mxu0 %v1421
    %4773 = vmatprep.subr.bf16.mxu0 %v1428
    %4774 = vmatpush1.bf16.msra.mxu0 %v1427
    %4775 = vmatprep.subr.bf16.mxu0 %v1434
    %4776 = vmatpush1.bf16.msra.mxu0 %v1433
    %4777 = vmatprep.subr.bf16.mxu0 %v1440
    %4778 = vmatpush1.bf16.msra.mxu0 %v1439
    %4779 = vmatprep.subr.bf16.mxu0 %v1446
    %4780 = vmatpush1.bf16.msra.mxu0 %v1445
    %4781 = vmatprep.subr.bf16.mxu0 %v1452
    %4782 = vmatpush1.bf16.msra.mxu0 %v1451
    %4783 = vmatprep.subr.bf16.mxu0 %v1458
    %4784 = vmatpush1.bf16.msra.mxu0 %v1457
    %4785 = vmatprep.subr.bf16.mxu0 %v1464
    %4786 = vmatpush1.bf16.msra.mxu0 %v1463
    %4787 = vmatprep.subr.bf16.mxu0 %v1470
    %4788 = vmatpush1.bf16.msra.mxu0 %v1469
    %4789 = vmatprep.mubr.bf16.mxu0 %v4597
    %4790 = vmatmul.mubr.bf16.gmra.mrb[0].mxu0 %v4473
    %v4791 = vpop.f32.mrb[0].mxu0
    %v4792 = vadd.f32 0.0, %v4791
    %v4793 = vpop.f32.mrb[0].mxu0
    %v4794 = vadd.f32 0.0, %v4793
    %v4795 = vpop.f32.mrb[0].mxu0
    %v4796 = vpop.f32.mrb[0].mxu0
    %4797 = vdwg.mxu0
    %4798 = vmatprep.subr.bf16.mxu0 %v1382
    %4799 = vmatpush1.bf16.msra.mxu0 %v1381
    %4800 = vmatprep.subr.bf16.mxu0 %v1388
    %4801 = vmatpush1.bf16.msra.mxu0 %v1387
    %4802 = vmatprep.subr.bf16.mxu0 %v1394
    %4803 = vmatpush1.bf16.msra.mxu0 %v1393
    %4804 = vmatprep.subr.bf16.mxu0 %v1400
    %4805 = vmatpush1.bf16.msra.mxu0 %v1399
    %4806 = vmatprep.subr.bf16.mxu0 %v1406
    %4807 = vmatpush1.bf16.msra.mxu0 %v1405
    %4808 = vmatprep.subr.bf16.mxu0 %v1412
    %4809 = vmatpush1.bf16.msra.mxu0 %v1411
    %4810 = vmatprep.subr.bf16.mxu0 %v1418
    %4811 = vmatpush1.bf16.msra.mxu0 %v1417
    %4812 = vmatprep.subr.bf16.mxu0 %v1424
    %4813 = vmatpush1.bf16.msra.mxu0 %v1423
    %4814 = vmatprep.subr.bf16.mxu0 %v1430
    %4815 = vmatpush1.bf16.msra.mxu0 %v1429
    %4816 = vmatprep.subr.bf16.mxu0 %v1436
    %4817 = vmatpush1.bf16.msra.mxu0 %v1435
    %4818 = vmatprep.subr.bf16.mxu0 %v1442
    %4819 = vmatpush1.bf16.msra.mxu0 %v1441
    %4820 = vmatprep.subr.bf16.mxu0 %v1448
    %4821 = vmatpush1.bf16.msra.mxu0 %v1447
    %4822 = vmatprep.subr.bf16.mxu0 %v1454
    %4823 = vmatpush1.bf16.msra.mxu0 %v1453
    %4824 = vmatprep.subr.bf16.mxu0 %v1460
    %4825 = vmatpush1.bf16.msra.mxu0 %v1459
    %4826 = vmatprep.subr.bf16.mxu0 %v1466
    %4827 = vmatpush1.bf16.msra.mxu0 %v1465
    %4828 = vmatprep.subr.bf16.mxu0 %v1472
    %4829 = vmatpush1.bf16.msra.mxu0 %v1471
    %4830 = vmatprep.mubr.bf16.mxu0 %v4597
    %4831 = vmatmul.mubr.bf16.gmra.mrb[0].mxu0 %v4473
    %v4832 = vpop.f32.mrb[0].mxu0
    %v4833 = vadd.f32 0.0, %v4832
    %v4834 = vpop.f32.mrb[0].mxu0
    %v4835 = vadd.f32 0.0, %v4834
    %v4836 = vpop.f32.mrb[0].mxu0
    %v4837 = vpop.f32.mrb[0].mxu0
    %4838 = vdwg.mxu0
    %4839 = vmatprep.subr.bf16.mxu0 %v1384
    %4840 = vmatpush1.bf16.msra.mxu0 %v1383
    %4841 = vmatprep.subr.bf16.mxu0 %v1390
    %4842 = vmatpush1.bf16.msra.mxu0 %v1389
    %4843 = vmatprep.subr.bf16.mxu0 %v1396
    %4844 = vmatpush1.bf16.msra.mxu0 %v1395
    %4845 = vmatprep.subr.bf16.mxu0 %v1402
    %4846 = vmatpush1.bf16.msra.mxu0 %v1401
    %4847 = vmatprep.subr.bf16.mxu0 %v1408
    %4848 = vmatpush1.bf16.msra.mxu0 %v1407
    %4849 = vmatprep.subr.bf16.mxu0 %v1414
    %4850 = vmatpush1.bf16.msra.mxu0 %v1413
    %4851 = vmatprep.subr.bf16.mxu0 %v1420
    %4852 = vmatpush1.bf16.msra.mxu0 %v1419
    %4853 = vmatprep.subr.bf16.mxu0 %v1426
    %4854 = vmatpush1.bf16.msra.mxu0 %v1425
    %4855 = vmatprep.subr.bf16.mxu0 %v1432
    %4856 = vmatpush1.bf16.msra.mxu0 %v1431
    %4857 = vmatprep.subr.bf16.mxu0 %v1438
    %4858 = vmatpush1.bf16.msra.mxu0 %v1437
    %4859 = vmatprep.subr.bf16.mxu0 %v1444
    %4860 = vmatpush1.bf16.msra.mxu0 %v1443
    %4861 = vmatprep.subr.bf16.mxu0 %v1450
    %4862 = vmatpush1.bf16.msra.mxu0 %v1449
    %4863 = vmatprep.subr.bf16.mxu0 %v1456
    %4864 = vmatpush1.bf16.msra.mxu0 %v1455
    %4865 = vmatprep.subr.bf16.mxu0 %v1462
    %4866 = vmatpush1.bf16.msra.mxu0 %v1461
    %4867 = vmatprep.subr.bf16.mxu0 %v1468
    %4868 = vmatpush1.bf16.msra.mxu0 %v1467
    %4869 = vmatprep.subr.bf16.mxu0 %v1474
    %4870 = vmatpush1.bf16.msra.mxu0 %v1473
    %4871 = vmatprep.mubr.bf16.mxu0 %v4597
    %4872 = vmatmul.mubr.bf16.gmra.mrb[0].mxu0 %v4473
    %v4873 = vpop.f32.mrb[0].mxu0
    %v4874 = vadd.f32 0.0, %v4873
    %v4875 = vpop.f32.mrb[0].mxu0
    %v4876 = vadd.f32 0.0, %v4875
    %v4877 = vpop.f32.mrb[0].mxu0
    %v4878 = vpop.f32.mrb[0].mxu0
    %4879 = vdwg.mxu0
    %v4880 = vadd.f32 %v519, %v4792
    %v4881 = vxor.u32 %v4880, 2147483648
    %v4882 = vmul.f32 %v4881, 1.442695
    %v4883 = vpow.pop %v4882
    %v4884 = vadd.f32 %v4883, 1.0
    %v4885 = vrcp.pop %v4884
    %v4886 = vmul.f32 1.0, %v4885
    %v4887 = vadd.f32 %v521, %v4794
    %v4888 = vxor.u32 %v4887, 2147483648
    %v4889 = vmul.f32 %v4888, 1.442695
    %v4890 = vpow.pop %v4889
    %v4891 = vadd.f32 %v4890, 1.0
    %v4892 = vrcp.pop %v4891
    %v4893 = vmul.f32 1.0, %v4892
    %v4894 = vadd.f32 %v4833, %v889
    %v4895 = vmul.f32 %v4886, %v4894
    %v4896 = vadd.f32 %v626, %v4895
    %v4897 = vtanh.pop %v4896
    %v4898 = vsub.f32 1.0, %v4893
    %v4899 = vmul.f32 %v4898, %v4897
    %v4900 = vmul.f32 %v4893, %v4450
    %v4901 = vadd.f32 %v4899, %v4900
    %v4902 = vadd.f32 %v739, %v4835
    %v4903 = vxor.u32 %v4902, 2147483648
    %v4904 = vmul.f32 %v4903, 1.442695
    %v4905 = vpow.pop %v4904
    %v4906 = vadd.f32 %v4905, 1.0
    %v4907 = vrcp.pop %v4906
    %v4908 = vmul.f32 1.0, %v4907
    %v4909 = vadd.f32 %v741, %v4874
    %v4910 = vxor.u32 %v4909, 2147483648
    %v4911 = vmul.f32 %v4910, 1.442695
    %v4912 = vpow.pop %v4911
    %v4913 = vadd.f32 %v4912, 1.0
    %v4914 = vrcp.pop %v4913
    %v4915 = vmul.f32 1.0, %v4914
    %v4916 = vadd.f32 %v4876, %v896
    %v4917 = vmul.f32 %v4908, %v4916
    %v4918 = vadd.f32 %v851, %v4917
    %v4919 = vtanh.pop %v4918
    %v4920 = vsub.f32 1.0, %v4915
    %v4921 = vmul.f32 %v4920, %v4919
    %v4922 = vmul.f32 %v4915, %v4472
    %v4923 = vadd.f32 %v4921, %v4922
    %v4924 = vpack.c.bf16 %v4901, %v4901
    %4925 = vmatprep.subr.bf16.mxu0 %v1884
    %4926 = vmatpush1.bf16.msra.mxu0 %v1883
    %4927 = vmatprep.subr.bf16.mxu0 %v1890
    %4928 = vmatpush1.bf16.msra.mxu0 %v1889
    %4929 = vmatprep.subr.bf16.mxu0 %v1896
    %4930 = vmatpush1.bf16.msra.mxu0 %v1895
    %4931 = vmatprep.subr.bf16.mxu0 %v1902
    %4932 = vmatpush1.bf16.msra.mxu0 %v1901
    %4933 = vmatprep.subr.bf16.mxu0 %v1908
    %4934 = vmatpush1.bf16.msra.mxu0 %v1907
    %4935 = vmatprep.subr.bf16.mxu0 %v1914
    %4936 = vmatpush1.bf16.msra.mxu0 %v1913
    %4937 = vmatprep.subr.bf16.mxu0 %v1920
    %4938 = vmatpush1.bf16.msra.mxu0 %v1919
    %4939 = vmatprep.subr.bf16.mxu0 %v1926
    %4940 = vmatpush1.bf16.msra.mxu0 %v1925
    %4941 = vmatprep.subr.bf16.mxu0 0
    %4942 = vmatpush1.bf16.msra.mxu0 0
    %4943 = vmatprep.subr.bf16.mxu0 0
    %4944 = vmatpush1.bf16.msra.mxu0 0
    %4945 = vmatprep.subr.bf16.mxu0 0
    %4946 = vmatpush1.bf16.msra.mxu0 0
    %4947 = vmatprep.subr.bf16.mxu0 0
    %4948 = vmatpush1.bf16.msra.mxu0 0
    %4949 = vmatprep.subr.bf16.mxu0 0
    %4950 = vmatpush1.bf16.msra.mxu0 0
    %4951 = vmatprep.subr.bf16.mxu0 0
    %4952 = vmatpush1.bf16.msra.mxu0 0
    %4953 = vmatprep.subr.bf16.mxu0 0
    %4954 = vmatpush1.bf16.msra.mxu0 0
    %4955 = vmatprep.subr.bf16.mxu0 0
    %4956 = vmatpush1.bf16.msra.mxu0 0
    %4957 = vmatprep.mubr.bf16.mxu0 0
    %4958 = vmatmul.mubr.bf16.gmra.mrb[0].mxu0 %v4924
    %v4959 = vpop.f32.mrb[0].mxu0
    %v4960 = vadd.f32 0.0, %v4959
    %v4961 = vpop.f32.mrb[0].mxu0
    %v4962 = vadd.f32 0.0, %v4961
    %v4963 = vpop.f32.mrb[0].mxu0
    %v4964 = vpop.f32.mrb[0].mxu0
    %4965 = vdwg.mxu0
    %4966 = vmatprep.subr.bf16.mxu0 %v1886
    %4967 = vmatpush1.bf16.msra.mxu0 %v1885
    %4968 = vmatprep.subr.bf16.mxu0 %v1892
    %4969 = vmatpush1.bf16.msra.mxu0 %v1891
    %4970 = vmatprep.subr.bf16.mxu0 %v1898
    %4971 = vmatpush1.bf16.msra.mxu0 %v1897
    %4972 = vmatprep.subr.bf16.mxu0 %v1904
    %4973 = vmatpush1.bf16.msra.mxu0 %v1903
    %4974 = vmatprep.subr.bf16.mxu0 %v1910
    %4975 = vmatpush1.bf16.msra.mxu0 %v1909
    %4976 = vmatprep.subr.bf16.mxu0 %v1916
    %4977 = vmatpush1.bf16.msra.mxu0 %v1915
    %4978 = vmatprep.subr.bf16.mxu0 %v1922
    %4979 = vmatpush1.bf16.msra.mxu0 %v1921
    %4980 = vmatprep.subr.bf16.mxu0 %v1928
    %4981 = vmatpush1.bf16.msra.mxu0 %v1927
    %4982 = vmatprep.subr.bf16.mxu0 0
    %4983 = vmatpush1.bf16.msra.mxu0 0
    %4984 = vmatprep.subr.bf16.mxu0 0
    %4985 = vmatpush1.bf16.msra.mxu0 0
    %4986 = vmatprep.subr.bf16.mxu0 0
    %4987 = vmatpush1.bf16.msra.mxu0 0
    %4988 = vmatprep.subr.bf16.mxu0 0
    %4989 = vmatpush1.bf16.msra.mxu0 0
    %4990 = vmatprep.subr.bf16.mxu0 0
    %4991 = vmatpush1.bf16.msra.mxu0 0
    %4992 = vmatprep.subr.bf16.mxu0 0
    %4993 = vmatpush1.bf16.msra.mxu0 0
    %4994 = vmatprep.subr.bf16.mxu0 0
    %4995 = vmatpush1.bf16.msra.mxu0 0
    %4996 = vmatprep.subr.bf16.mxu0 0
    %4997 = vmatpush1.bf16.msra.mxu0 0
    %4998 = vmatprep.mubr.bf16.mxu0 0
    %4999 = vmatmul.mubr.bf16.gmra.mrb[0].mxu0 %v4924
    %v5000 = vpop.f32.mrb[0].mxu0
    %v5001 = vadd.f32 0.0, %v5000
    %v5002 = vpop.f32.mrb[0].mxu0
    %v5003 = vadd.f32 0.0, %v5002
    %v5004 = vpop.f32.mrb[0].mxu0
    %v5005 = vpop.f32.mrb[0].mxu0
    %5006 = vdwg.mxu0
    %5007 = vmatprep.subr.bf16.mxu0 %v1888
    %5008 = vmatpush1.bf16.msra.mxu0 %v1887
    %5009 = vmatprep.subr.bf16.mxu0 %v1894
    %5010 = vmatpush1.bf16.msra.mxu0 %v1893
    %5011 = vmatprep.subr.bf16.mxu0 %v1900
    %5012 = vmatpush1.bf16.msra.mxu0 %v1899
    %5013 = vmatprep.subr.bf16.mxu0 %v1906
    %5014 = vmatpush1.bf16.msra.mxu0 %v1905
    %5015 = vmatprep.subr.bf16.mxu0 %v1912
    %5016 = vmatpush1.bf16.msra.mxu0 %v1911
    %5017 = vmatprep.subr.bf16.mxu0 %v1918
    %5018 = vmatpush1.bf16.msra.mxu0 %v1917
    %5019 = vmatprep.subr.bf16.mxu0 %v1924
    %5020 = vmatpush1.bf16.msra.mxu0 %v1923
    %5021 = vmatprep.subr.bf16.mxu0 %v1930
    %5022 = vmatpush1.bf16.msra.mxu0 %v1929
    %5023 = vmatprep.subr.bf16.mxu0 0
    %5024 = vmatpush1.bf16.msra.mxu0 0
    %5025 = vmatprep.subr.bf16.mxu0 0
    %5026 = vmatpush1.bf16.msra.mxu0 0
    %5027 = vmatprep.subr.bf16.mxu0 0
    %5028 = vmatpush1.bf16.msra.mxu0 0
    %5029 = vmatprep.subr.bf16.mxu0 0
    %5030 = vmatpush1.bf16.msra.mxu0 0
    %5031 = vmatprep.subr.bf16.mxu0 0
    %5032 = vmatpush1.bf16.msra.mxu0 0
    %5033 = vmatprep.subr.bf16.mxu0 0
    %5034 = vmatpush1.bf16.msra.mxu0 0
    %5035 = vmatprep.subr.bf16.mxu0 0
    %5036 = vmatpush1.bf16.msra.mxu0 0
    %5037 = vmatprep.subr.bf16.mxu0 0
    %5038 = vmatpush1.bf16.msra.mxu0 0
    %5039 = vmatprep.mubr.bf16.mxu0 0
    %5040 = vmatmul.mubr.bf16.gmra.mrb[0].mxu0 %v4924
    %v5041 = vpop.f32.mrb[0].mxu0
    %v5042 = vadd.f32 0.0, %v5041
    %v5043 = vpop.f32.mrb[0].mxu0
    %v5044 = vadd.f32 0.0, %v5043
    %v5045 = vpop.f32.mrb[0].mxu0
    %v5046 = vpop.f32.mrb[0].mxu0
    %5047 = vdwg.mxu0
    %v5048 = vpack.c.bf16 %v4923, %v4923
    %5049 = vmatprep.subr.bf16.mxu0 %v2248
    %5050 = vmatpush1.bf16.msra.mxu0 %v2247
    %5051 = vmatprep.subr.bf16.mxu0 %v2254
    %5052 = vmatpush1.bf16.msra.mxu0 %v2253
    %5053 = vmatprep.subr.bf16.mxu0 %v2260
    %5054 = vmatpush1.bf16.msra.mxu0 %v2259
    %5055 = vmatprep.subr.bf16.mxu0 %v2266
    %5056 = vmatpush1.bf16.msra.mxu0 %v2265
    %5057 = vmatprep.subr.bf16.mxu0 %v2272
    %5058 = vmatpush1.bf16.msra.mxu0 %v2271
    %5059 = vmatprep.subr.bf16.mxu0 %v2278
    %5060 = vmatpush1.bf16.msra.mxu0 %v2277
    %5061 = vmatprep.subr.bf16.mxu0 %v2284
    %5062 = vmatpush1.bf16.msra.mxu0 %v2283
    %5063 = vmatprep.subr.bf16.mxu0 %v2290
    %5064 = vmatpush1.bf16.msra.mxu0 %v2289
    %5065 = vmatprep.subr.bf16.mxu0 0
    %5066 = vmatpush1.bf16.msra.mxu0 0
    %5067 = vmatprep.subr.bf16.mxu0 0
    %5068 = vmatpush1.bf16.msra.mxu0 0
    %5069 = vmatprep.subr.bf16.mxu0 0
    %5070 = vmatpush1.bf16.msra.mxu0 0
    %5071 = vmatprep.subr.bf16.mxu0 0
    %5072 = vmatpush1.bf16.msra.mxu0 0
    %5073 = vmatprep.subr.bf16.mxu0 0
    %5074 = vmatpush1.bf16.msra.mxu0 0
    %5075 = vmatprep.subr.bf16.mxu0 0
    %5076 = vmatpush1.bf16.msra.mxu0 0
    %5077 = vmatprep.subr.bf16.mxu0 0
    %5078 = vmatpush1.bf16.msra.mxu0 0
    %5079 = vmatprep.subr.bf16.mxu0 0
    %5080 = vmatpush1.bf16.msra.mxu0 0
    %5081 = vmatprep.mubr.bf16.mxu0 0
    %5082 = vmatmul.mubr.bf16.gmra.mrb[0].mxu0 %v5048
    %v5083 = vpop.f32.mrb[0].mxu0
    %v5084 = vadd.f32 0.0, %v5083
    %v5085 = vpop.f32.mrb[0].mxu0
    %v5086 = vadd.f32 0.0, %v5085
    %v5087 = vpop.f32.mrb[0].mxu0
    %v5088 = vpop.f32.mrb[0].mxu0
    %5089 = vdwg.mxu0
    %5090 = vmatprep.subr.bf16.mxu0 %v2250
    %5091 = vmatpush1.bf16.msra.mxu0 %v2249
    %5092 = vmatprep.subr.bf16.mxu0 %v2256
    %5093 = vmatpush1.bf16.msra.mxu0 %v2255
    %5094 = vmatprep.subr.bf16.mxu0 %v2262
    %5095 = vmatpush1.bf16.msra.mxu0 %v2261
    %5096 = vmatprep.subr.bf16.mxu0 %v2268
    %5097 = vmatpush1.bf16.msra.mxu0 %v2267
    %5098 = vmatprep.subr.bf16.mxu0 %v2274
    %5099 = vmatpush1.bf16.msra.mxu0 %v2273
    %5100 = vmatprep.subr.bf16.mxu0 %v2280
    %5101 = vmatpush1.bf16.msra.mxu0 %v2279
    %5102 = vmatprep.subr.bf16.mxu0 %v2286
    %5103 = vmatpush1.bf16.msra.mxu0 %v2285
    %5104 = vmatprep.subr.bf16.mxu0 %v2292
    %5105 = vmatpush1.bf16.msra.mxu0 %v2291
    %5106 = vmatprep.subr.bf16.mxu0 0
    %5107 = vmatpush1.bf16.msra.mxu0 0
    %5108 = vmatprep.subr.bf16.mxu0 0
    %5109 = vmatpush1.bf16.msra.mxu0 0
    %5110 = vmatprep.subr.bf16.mxu0 0
    %5111 = vmatpush1.bf16.msra.mxu0 0
    %5112 = vmatprep.subr.bf16.mxu0 0
    %5113 = vmatpush1.bf16.msra.mxu0 0
    %5114 = vmatprep.subr.bf16.mxu0 0
    %5115 = vmatpush1.bf16.msra.mxu0 0
    %5116 = vmatprep.subr.bf16.mxu0 0
    %5117 = vmatpush1.bf16.msra.mxu0 0
    %5118 = vmatprep.subr.bf16.mxu0 0
    %5119 = vmatpush1.bf16.msra.mxu0 0
    %5120 = vmatprep.subr.bf16.mxu0 0
    %5121 = vmatpush1.bf16.msra.mxu0 0
    %5122 = vmatprep.mubr.bf16.mxu0 0
    %5123 = vmatmul.mubr.bf16.gmra.mrb[0].mxu0 %v5048
    %v5124 = vpop.f32.mrb[0].mxu0
    %v5125 = vadd.f32 0.0, %v5124
    %v5126 = vpop.f32.mrb[0].mxu0
    %v5127 = vadd.f32 0.0, %v5126
    %v5128 = vpop.f32.mrb[0].mxu0
    %v5129 = vpop.f32.mrb[0].mxu0
    %5130 = vdwg.mxu0
    %5131 = vmatprep.subr.bf16.mxu0 %v2252
    %5132 = vmatpush1.bf16.msra.mxu0 %v2251
    %5133 = vmatprep.subr.bf16.mxu0 %v2258
    %5134 = vmatpush1.bf16.msra.mxu0 %v2257
    %5135 = vmatprep.subr.bf16.mxu0 %v2264
    %5136 = vmatpush1.bf16.msra.mxu0 %v2263
    %5137 = vmatprep.subr.bf16.mxu0 %v2270
    %5138 = vmatpush1.bf16.msra.mxu0 %v2269
    %5139 = vmatprep.subr.bf16.mxu0 %v2276
    %5140 = vmatpush1.bf16.msra.mxu0 %v2275
    %5141 = vmatprep.subr.bf16.mxu0 %v2282
    %5142 = vmatpush1.bf16.msra.mxu0 %v2281
    %5143 = vmatprep.subr.bf16.mxu0 %v2288
    %5144 = vmatpush1.bf16.msra.mxu0 %v2287
    %5145 = vmatprep.subr.bf16.mxu0 %v2294
    %5146 = vmatpush1.bf16.msra.mxu0 %v2293
    %5147 = vmatprep.subr.bf16.mxu0 0
    %5148 = vmatpush1.bf16.msra.mxu0 0
    %5149 = vmatprep.subr.bf16.mxu0 0
    %5150 = vmatpush1.bf16.msra.mxu0 0
    %5151 = vmatprep.subr.bf16.mxu0 0
    %5152 = vmatpush1.bf16.msra.mxu0 0
    %5153 = vmatprep.subr.bf16.mxu0 0
    %5154 = vmatpush1.bf16.msra.mxu0 0
    %5155 = vmatprep.subr.bf16.mxu0 0
    %5156 = vmatpush1.bf16.msra.mxu0 0
    %5157 = vmatprep.subr.bf16.mxu0 0
    %5158 = vmatpush1.bf16.msra.mxu0 0
    %5159 = vmatprep.subr.bf16.mxu0 0
    %5160 = vmatpush1.bf16.msra.mxu0 0
    %5161 = vmatprep.subr.bf16.mxu0 0
    %5162 = vmatpush1.bf16.msra.mxu0 0
    %5163 = vmatprep.mubr.bf16.mxu0 0
    %5164 = vmatmul.mubr.bf16.gmra.mrb[0].mxu0 %v5048
    %v5165 = vpop.f32.mrb[0].mxu0
    %v5166 = vadd.f32 0.0, %v5165
    %v5167 = vpop.f32.mrb[0].mxu0
    %v5168 = vadd.f32 0.0, %v5167
    %v5169 = vpop.f32.mrb[0].mxu0
    %v5170 = vpop.f32.mrb[0].mxu0
    %5171 = vdwg.mxu0
    %v5172 = vld [vmem:[#allocation2 + $0x90] sm:$0xff]
    %v5173 = vld [vmem:[#allocation2 + $0x98] sm:$0xff]
    %v5174 = vld [vmem:[#allocation2 + $0xa0] sm:$0xff]
    %v5175 = vadd.f32 %v5172, %v4960
    %v5176 = vadd.f32 %v5173, %v4962
    %v5177 = vadd.f32 %v5174, %v5001
    %5178 = vst [vmem:[#allocation2 + $0x90] sm:$0xff] %v5175
    %5179 = vst [vmem:[#allocation2 + $0x98] sm:$0xff] %v5176
    %5180 = vst [vmem:[#allocation2 + $0xa0] sm:$0xff] %v5177
    %v5181 = vld [vmem:[#allocation3 + $0x90] sm:$0xff]
    %v5182 = vld [vmem:[#allocation3 + $0x98] sm:$0xff]
    %v5183 = vld [vmem:[#allocation3 + $0xa0] sm:$0xff]
    %v5184 = vadd.f32 %v5181, %v5003
    %v5185 = vadd.f32 %v5182, %v5042
    %v5186 = vadd.f32 %v5183, %v5044
    %5187 = vst [vmem:[#allocation3 + $0x90] sm:$0xff] %v5184
    %5188 = vst [vmem:[#allocation3 + $0x98] sm:$0xff] %v5185
    %5189 = vst [vmem:[#allocation3 + $0xa0] sm:$0xff] %v5186
    %v5190 = vld [vmem:[#allocation2 + $0x18] sm:$0xff]
    %v5191 = vld [vmem:[#allocation2 + $0x20] sm:$0xff]
    %v5192 = vld [vmem:[#allocation2 + $0x28] sm:$0xff]
    %v5193 = vadd.f32 %v5190, %v5084
    %v5194 = vadd.f32 %v5191, %v5086
    %v5195 = vadd.f32 %v5192, %v5125
    %5196 = vst [vmem:[#allocation2 + $0x18] sm:$0xff] %v5193
    %5197 = vst [vmem:[#allocation2 + $0x20] sm:$0xff] %v5194
    %5198 = vst [vmem:[#allocation2 + $0x28] sm:$0xff] %v5195
    %v5199 = vld [vmem:[#allocation3 + $0x18] sm:$0xff]
    %v5200 = vld [vmem:[#allocation3 + $0x20] sm:$0xff]
    %v5201 = vld [vmem:[#allocation3 + $0x28] sm:$0xff]
    %v5202 = vadd.f32 %v5199, %v5127
    %v5203 = vadd.f32 %v5200, %v5166
    %v5204 = vadd.f32 %v5201, %v5168
    %5205 = vst [vmem:[#allocation3 + $0x18] sm:$0xff] %v5202
    %5206 = vst [vmem:[#allocation3 + $0x20] sm:$0xff] %v5203
    %5207 = vst [vmem:[#allocation3 + $0x28] sm:$0xff] %v5204
    %5208 = vmatprep.subr.bf16.mxu0 %v1380
    %5209 = vmatpush1.bf16.msra.mxu0 %v1379
    %5210 = vmatprep.subr.bf16.mxu0 %v1386
    %5211 = vmatpush1.bf16.msra.mxu0 %v1385
    %5212 = vmatprep.subr.bf16.mxu0 %v1392
    %5213 = vmatpush1.bf16.msra.mxu0 %v1391
    %5214 = vmatprep.subr.bf16.mxu0 %v1398
    %5215 = vmatpush1.bf16.msra.mxu0 %v1397
    %5216 = vmatprep.subr.bf16.mxu0 %v1404
    %5217 = vmatpush1.bf16.msra.mxu0 %v1403
    %5218 = vmatprep.subr.bf16.mxu0 %v1410
    %5219 = vmatpush1.bf16.msra.mxu0 %v1409
    %5220 = vmatprep.subr.bf16.mxu0 %v1416
    %5221 = vmatpush1.bf16.msra.mxu0 %v1415
    %5222 = vmatprep.subr.bf16.mxu0 %v1422
    %5223 = vmatpush1.bf16.msra.mxu0 %v1421
    %5224 = vmatprep.subr.bf16.mxu0 %v1428
    %5225 = vmatpush1.bf16.msra.mxu0 %v1427
    %5226 = vmatprep.subr.bf16.mxu0 %v1434
    %5227 = vmatpush1.bf16.msra.mxu0 %v1433
    %5228 = vmatprep.subr.bf16.mxu0 %v1440
    %5229 = vmatpush1.bf16.msra.mxu0 %v1439
    %5230 = vmatprep.subr.bf16.mxu0 %v1446
    %5231 = vmatpush1.bf16.msra.mxu0 %v1445
    %5232 = vmatprep.subr.bf16.mxu0 %v1452
    %5233 = vmatpush1.bf16.msra.mxu0 %v1451
    %5234 = vmatprep.subr.bf16.mxu0 %v1458
    %5235 = vmatpush1.bf16.msra.mxu0 %v1457
    %5236 = vmatprep.subr.bf16.mxu0 %v1464
    %5237 = vmatpush1.bf16.msra.mxu0 %v1463
    %5238 = vmatprep.subr.bf16.mxu0 %v1470
    %5239 = vmatpush1.bf16.msra.mxu0 %v1469
    %5240 = vmatprep.mubr.bf16.mxu0 %v5048
    %5241 = vmatmul.mubr.bf16.gmra.mrb[0].mxu0 %v4924
    %v5242 = vpop.f32.mrb[0].mxu0
    %v5243 = vadd.f32 0.0, %v5242
    %v5244 = vpop.f32.mrb[0].mxu0
    %v5245 = vadd.f32 0.0, %v5244
    %v5246 = vpop.f32.mrb[0].mxu0
    %v5247 = vpop.f32.mrb[0].mxu0
    %5248 = vdwg.mxu0
    %5249 = vmatprep.subr.bf16.mxu0 %v1382
    %5250 = vmatpush1.bf16.msra.mxu0 %v1381
    %5251 = vmatprep.subr.bf16.mxu0 %v1388
    %5252 = vmatpush1.bf16.msra.mxu0 %v1387
    %5253 = vmatprep.subr.bf16.mxu0 %v1394
    %5254 = vmatpush1.bf16.msra.mxu0 %v1393
    %5255 = vmatprep.subr.bf16.mxu0 %v1400
    %5256 = vmatpush1.bf16.msra.mxu0 %v1399
    %5257 = vmatprep.subr.bf16.mxu0 %v1406
    %5258 = vmatpush1.bf16.msra.mxu0 %v1405
    %5259 = vmatprep.subr.bf16.mxu0 %v1412
    %5260 = vmatpush1.bf16.msra.mxu0 %v1411
    %5261 = vmatprep.subr.bf16.mxu0 %v1418
    %5262 = vmatpush1.bf16.msra.mxu0 %v1417
    %5263 = vmatprep.subr.bf16.mxu0 %v1424
    %5264 = vmatpush1.bf16.msra.mxu0 %v1423
    %5265 = vmatprep.subr.bf16.mxu0 %v1430
    %5266 = vmatpush1.bf16.msra.mxu0 %v1429
    %5267 = vmatprep.subr.bf16.mxu0 %v1436
    %5268 = vmatpush1.bf16.msra.mxu0 %v1435
    %5269 = vmatprep.subr.bf16.mxu0 %v1442
    %5270 = vmatpush1.bf16.msra.mxu0 %v1441
    %5271 = vmatprep.subr.bf16.mxu0 %v1448
    %5272 = vmatpush1.bf16.msra.mxu0 %v1447
    %5273 = vmatprep.subr.bf16.mxu0 %v1454
    %5274 = vmatpush1.bf16.msra.mxu0 %v1453
    %5275 = vmatprep.subr.bf16.mxu0 %v1460
    %5276 = vmatpush1.bf16.msra.mxu0 %v1459
    %5277 = vmatprep.subr.bf16.mxu0 %v1466
    %5278 = vmatpush1.bf16.msra.mxu0 %v1465
    %5279 = vmatprep.subr.bf16.mxu0 %v1472
    %5280 = vmatpush1.bf16.msra.mxu0 %v1471
    %5281 = vmatprep.mubr.bf16.mxu0 %v5048
    %5282 = vmatmul.mubr.bf16.gmra.mrb[0].mxu0 %v4924
    %v5283 = vpop.f32.mrb[0].mxu0
    %v5284 = vadd.f32 0.0, %v5283
    %v5285 = vpop.f32.mrb[0].mxu0
    %v5286 = vadd.f32 0.0, %v5285
    %v5287 = vpop.f32.mrb[0].mxu0
    %v5288 = vpop.f32.mrb[0].mxu0
    %5289 = vdwg.mxu0
    %5290 = vmatprep.subr.bf16.mxu0 %v1384
    %5291 = vmatpush1.bf16.msra.mxu0 %v1383
    %5292 = vmatprep.subr.bf16.mxu0 %v1390
    %5293 = vmatpush1.bf16.msra.mxu0 %v1389
    %5294 = vmatprep.subr.bf16.mxu0 %v1396
    %5295 = vmatpush1.bf16.msra.mxu0 %v1395
    %5296 = vmatprep.subr.bf16.mxu0 %v1402
    %5297 = vmatpush1.bf16.msra.mxu0 %v1401
    %5298 = vmatprep.subr.bf16.mxu0 %v1408
    %5299 = vmatpush1.bf16.msra.mxu0 %v1407
    %5300 = vmatprep.subr.bf16.mxu0 %v1414
    %5301 = vmatpush1.bf16.msra.mxu0 %v1413
    %5302 = vmatprep.subr.bf16.mxu0 %v1420
    %5303 = vmatpush1.bf16.msra.mxu0 %v1419
    %5304 = vmatprep.subr.bf16.mxu0 %v1426
    %5305 = vmatpush1.bf16.msra.mxu0 %v1425
    %5306 = vmatprep.subr.bf16.mxu0 %v1432
    %5307 = vmatpush1.bf16.msra.mxu0 %v1431
    %5308 = vmatprep.subr.bf16.mxu0 %v1438
    %5309 = vmatpush1.bf16.msra.mxu0 %v1437
    %5310 = vmatprep.subr.bf16.mxu0 %v1444
    %5311 = vmatpush1.bf16.msra.mxu0 %v1443
    %5312 = vmatprep.subr.bf16.mxu0 %v1450
    %5313 = vmatpush1.bf16.msra.mxu0 %v1449
    %5314 = vmatprep.subr.bf16.mxu0 %v1456
    %5315 = vmatpush1.bf16.msra.mxu0 %v1455
    %5316 = vmatprep.subr.bf16.mxu0 %v1462
    %5317 = vmatpush1.bf16.msra.mxu0 %v1461
    %5318 = vmatprep.subr.bf16.mxu0 %v1468
    %5319 = vmatpush1.bf16.msra.mxu0 %v1467
    %5320 = vmatprep.subr.bf16.mxu0 %v1474
    %5321 = vmatpush1.bf16.msra.mxu0 %v1473
    %5322 = vmatprep.mubr.bf16.mxu0 %v5048
    %5323 = vmatmul.mubr.bf16.gmra.mrb[0].mxu0 %v4924
    %v5324 = vpop.f32.mrb[0].mxu0
    %v5325 = vadd.f32 0.0, %v5324
    %v5326 = vpop.f32.mrb[0].mxu0
    %v5327 = vadd.f32 0.0, %v5326
    %v5328 = vpop.f32.mrb[0].mxu0
    %v5329 = vpop.f32.mrb[0].mxu0
    %5330 = vdwg.mxu0
    %v5331 = vadd.f32 %v525, %v5243
    %v5332 = vxor.u32 %v5331, 2147483648
    %v5333 = vmul.f32 %v5332, 1.442695
    %v5334 = vpow.pop %v5333
    %v5335 = vadd.f32 %v5334, 1.0
    %v5336 = vrcp.pop %v5335
    %v5337 = vmul.f32 1.0, %v5336
    %v5338 = vadd.f32 %v527, %v5245
    %v5339 = vxor.u32 %v5338, 2147483648
    %v5340 = vmul.f32 %v5339, 1.442695
    %v5341 = vpow.pop %v5340
    %v5342 = vadd.f32 %v5341, 1.0
    %v5343 = vrcp.pop %v5342
    %v5344 = vmul.f32 1.0, %v5343
    %v5345 = vadd.f32 %v5284, %v889
    %v5346 = vmul.f32 %v5337, %v5345
    %v5347 = vadd.f32 %v631, %v5346
    %v5348 = vtanh.pop %v5347
    %v5349 = vsub.f32 1.0, %v5344
    %v5350 = vmul.f32 %v5349, %v5348
    %v5351 = vmul.f32 %v5344, %v4901
    %v5352 = vadd.f32 %v5350, %v5351
    %v5353 = vadd.f32 %v733, %v5286
    %v5354 = vxor.u32 %v5353, 2147483648
    %v5355 = vmul.f32 %v5354, 1.442695
    %v5356 = vpow.pop %v5355
    %v5357 = vadd.f32 %v5356, 1.0
    %v5358 = vrcp.pop %v5357
    %v5359 = vmul.f32 1.0, %v5358
    %v5360 = vadd.f32 %v735, %v5325
    %v5361 = vxor.u32 %v5360, 2147483648
    %v5362 = vmul.f32 %v5361, 1.442695
    %v5363 = vpow.pop %v5362
    %v5364 = vadd.f32 %v5363, 1.0
    %v5365 = vrcp.pop %v5364
    %v5366 = vmul.f32 1.0, %v5365
    %v5367 = vadd.f32 %v5327, %v896
    %v5368 = vmul.f32 %v5359, %v5367
    %v5369 = vadd.f32 %v846, %v5368
    %v5370 = vtanh.pop %v5369
    %v5371 = vsub.f32 1.0, %v5366
    %v5372 = vmul.f32 %v5371, %v5370
    %v5373 = vmul.f32 %v5366, %v4923
    %v5374 = vadd.f32 %v5372, %v5373
    %v5375 = vpack.c.bf16 %v5352, %v5352
    %5376 = vmatprep.subr.bf16.mxu0 %v1884
    %5377 = vmatpush1.bf16.msra.mxu0 %v1883
    %5378 = vmatprep.subr.bf16.mxu0 %v1890
    %5379 = vmatpush1.bf16.msra.mxu0 %v1889
    %5380 = vmatprep.subr.bf16.mxu0 %v1896
    %5381 = vmatpush1.bf16.msra.mxu0 %v1895
    %5382 = vmatprep.subr.bf16.mxu0 %v1902
    %5383 = vmatpush1.bf16.msra.mxu0 %v1901
    %5384 = vmatprep.subr.bf16.mxu0 %v1908
    %5385 = vmatpush1.bf16.msra.mxu0 %v1907
    %5386 = vmatprep.subr.bf16.mxu0 %v1914
    %5387 = vmatpush1.bf16.msra.mxu0 %v1913
    %5388 = vmatprep.subr.bf16.mxu0 %v1920
    %5389 = vmatpush1.bf16.msra.mxu0 %v1919
    %5390 = vmatprep.subr.bf16.mxu0 %v1926
    %5391 = vmatpush1.bf16.msra.mxu0 %v1925
    %5392 = vmatprep.subr.bf16.mxu0 0
    %5393 = vmatpush1.bf16.msra.mxu0 0
    %5394 = vmatprep.subr.bf16.mxu0 0
    %5395 = vmatpush1.bf16.msra.mxu0 0
    %5396 = vmatprep.subr.bf16.mxu0 0
    %5397 = vmatpush1.bf16.msra.mxu0 0
    %5398 = vmatprep.subr.bf16.mxu0 0
    %5399 = vmatpush1.bf16.msra.mxu0 0
    %5400 = vmatprep.subr.bf16.mxu0 0
    %5401 = vmatpush1.bf16.msra.mxu0 0
    %5402 = vmatprep.subr.bf16.mxu0 0
    %5403 = vmatpush1.bf16.msra.mxu0 0
    %5404 = vmatprep.subr.bf16.mxu0 0
    %5405 = vmatpush1.bf16.msra.mxu0 0
    %5406 = vmatprep.subr.bf16.mxu0 0
    %5407 = vmatpush1.bf16.msra.mxu0 0
    %5408 = vmatprep.mubr.bf16.mxu0 0
    %5409 = vmatmul.mubr.bf16.gmra.mrb[0].mxu0 %v5375
    %v5410 = vpop.f32.mrb[0].mxu0
    %v5411 = vadd.f32 0.0, %v5410
    %v5412 = vpop.f32.mrb[0].mxu0
    %v5413 = vadd.f32 0.0, %v5412
    %v5414 = vpop.f32.mrb[0].mxu0
    %v5415 = vpop.f32.mrb[0].mxu0
    %5416 = vdwg.mxu0
    %5417 = vmatprep.subr.bf16.mxu0 %v1886
    %5418 = vmatpush1.bf16.msra.mxu0 %v1885
    %5419 = vmatprep.subr.bf16.mxu0 %v1892
    %5420 = vmatpush1.bf16.msra.mxu0 %v1891
    %5421 = vmatprep.subr.bf16.mxu0 %v1898
    %5422 = vmatpush1.bf16.msra.mxu0 %v1897
    %5423 = vmatprep.subr.bf16.mxu0 %v1904
    %5424 = vmatpush1.bf16.msra.mxu0 %v1903
    %5425 = vmatprep.subr.bf16.mxu0 %v1910
    %5426 = vmatpush1.bf16.msra.mxu0 %v1909
    %5427 = vmatprep.subr.bf16.mxu0 %v1916
    %5428 = vmatpush1.bf16.msra.mxu0 %v1915
    %5429 = vmatprep.subr.bf16.mxu0 %v1922
    %5430 = vmatpush1.bf16.msra.mxu0 %v1921
    %5431 = vmatprep.subr.bf16.mxu0 %v1928
    %5432 = vmatpush1.bf16.msra.mxu0 %v1927
    %5433 = vmatprep.subr.bf16.mxu0 0
    %5434 = vmatpush1.bf16.msra.mxu0 0
    %5435 = vmatprep.subr.bf16.mxu0 0
    %5436 = vmatpush1.bf16.msra.mxu0 0
    %5437 = vmatprep.subr.bf16.mxu0 0
    %5438 = vmatpush1.bf16.msra.mxu0 0
    %5439 = vmatprep.subr.bf16.mxu0 0
    %5440 = vmatpush1.bf16.msra.mxu0 0
    %5441 = vmatprep.subr.bf16.mxu0 0
    %5442 = vmatpush1.bf16.msra.mxu0 0
    %5443 = vmatprep.subr.bf16.mxu0 0
    %5444 = vmatpush1.bf16.msra.mxu0 0
    %5445 = vmatprep.subr.bf16.mxu0 0
    %5446 = vmatpush1.bf16.msra.mxu0 0
    %5447 = vmatprep.subr.bf16.mxu0 0
    %5448 = vmatpush1.bf16.msra.mxu0 0
    %5449 = vmatprep.mubr.bf16.mxu0 0
    %5450 = vmatmul.mubr.bf16.gmra.mrb[0].mxu0 %v5375
    %v5451 = vpop.f32.mrb[0].mxu0
    %v5452 = vadd.f32 0.0, %v5451
    %v5453 = vpop.f32.mrb[0].mxu0
    %v5454 = vadd.f32 0.0, %v5453
    %v5455 = vpop.f32.mrb[0].mxu0
    %v5456 = vpop.f32.mrb[0].mxu0
    %5457 = vdwg.mxu0
    %5458 = vmatprep.subr.bf16.mxu0 %v1888
    %5459 = vmatpush1.bf16.msra.mxu0 %v1887
    %5460 = vmatprep.subr.bf16.mxu0 %v1894
    %5461 = vmatpush1.bf16.msra.mxu0 %v1893
    %5462 = vmatprep.subr.bf16.mxu0 %v1900
    %5463 = vmatpush1.bf16.msra.mxu0 %v1899
    %5464 = vmatprep.subr.bf16.mxu0 %v1906
    %5465 = vmatpush1.bf16.msra.mxu0 %v1905
    %5466 = vmatprep.subr.bf16.mxu0 %v1912
    %5467 = vmatpush1.bf16.msra.mxu0 %v1911
    %5468 = vmatprep.subr.bf16.mxu0 %v1918
    %5469 = vmatpush1.bf16.msra.mxu0 %v1917
    %5470 = vmatprep.subr.bf16.mxu0 %v1924
    %5471 = vmatpush1.bf16.msra.mxu0 %v1923
    %5472 = vmatprep.subr.bf16.mxu0 %v1930
    %5473 = vmatpush1.bf16.msra.mxu0 %v1929
    %5474 = vmatprep.subr.bf16.mxu0 0
    %5475 = vmatpush1.bf16.msra.mxu0 0
    %5476 = vmatprep.subr.bf16.mxu0 0
    %5477 = vmatpush1.bf16.msra.mxu0 0
    %5478 = vmatprep.subr.bf16.mxu0 0
    %5479 = vmatpush1.bf16.msra.mxu0 0
    %5480 = vmatprep.subr.bf16.mxu0 0
    %5481 = vmatpush1.bf16.msra.mxu0 0
    %5482 = vmatprep.subr.bf16.mxu0 0
    %5483 = vmatpush1.bf16.msra.mxu0 0
    %5484 = vmatprep.subr.bf16.mxu0 0
    %5485 = vmatpush1.bf16.msra.mxu0 0
    %5486 = vmatprep.subr.bf16.mxu0 0
    %5487 = vmatpush1.bf16.msra.mxu0 0
    %5488 = vmatprep.subr.bf16.mxu0 0
    %5489 = vmatpush1.bf16.msra.mxu0 0
    %5490 = vmatprep.mubr.bf16.mxu0 0
    %5491 = vmatmul.mubr.bf16.gmra.mrb[0].mxu0 %v5375
    %v5492 = vpop.f32.mrb[0].mxu0
    %v5493 = vadd.f32 0.0, %v5492
    %v5494 = vpop.f32.mrb[0].mxu0
    %v5495 = vadd.f32 0.0, %v5494
    %v5496 = vpop.f32.mrb[0].mxu0
    %v5497 = vpop.f32.mrb[0].mxu0
    %5498 = vdwg.mxu0
    %v5499 = vpack.c.bf16 %v5374, %v5374
    %5500 = vmatprep.subr.bf16.mxu0 %v2248
    %5501 = vmatpush1.bf16.msra.mxu0 %v2247
    %5502 = vmatprep.subr.bf16.mxu0 %v2254
    %5503 = vmatpush1.bf16.msra.mxu0 %v2253
    %5504 = vmatprep.subr.bf16.mxu0 %v2260
    %5505 = vmatpush1.bf16.msra.mxu0 %v2259
    %5506 = vmatprep.subr.bf16.mxu0 %v2266
    %5507 = vmatpush1.bf16.msra.mxu0 %v2265
    %5508 = vmatprep.subr.bf16.mxu0 %v2272
    %5509 = vmatpush1.bf16.msra.mxu0 %v2271
    %5510 = vmatprep.subr.bf16.mxu0 %v2278
    %5511 = vmatpush1.bf16.msra.mxu0 %v2277
    %5512 = vmatprep.subr.bf16.mxu0 %v2284
    %5513 = vmatpush1.bf16.msra.mxu0 %v2283
    %5514 = vmatprep.subr.bf16.mxu0 %v2290
    %5515 = vmatpush1.bf16.msra.mxu0 %v2289
    %5516 = vmatprep.subr.bf16.mxu0 0
    %5517 = vmatpush1.bf16.msra.mxu0 0
    %5518 = vmatprep.subr.bf16.mxu0 0
    %5519 = vmatpush1.bf16.msra.mxu0 0
    %5520 = vmatprep.subr.bf16.mxu0 0
    %5521 = vmatpush1.bf16.msra.mxu0 0
    %5522 = vmatprep.subr.bf16.mxu0 0
    %5523 = vmatpush1.bf16.msra.mxu0 0
    %5524 = vmatprep.subr.bf16.mxu0 0
    %5525 = vmatpush1.bf16.msra.mxu0 0
    %5526 = vmatprep.subr.bf16.mxu0 0
    %5527 = vmatpush1.bf16.msra.mxu0 0
    %5528 = vmatprep.subr.bf16.mxu0 0
    %5529 = vmatpush1.bf16.msra.mxu0 0
    %5530 = vmatprep.subr.bf16.mxu0 0
    %5531 = vmatpush1.bf16.msra.mxu0 0
    %5532 = vmatprep.mubr.bf16.mxu0 0
    %5533 = vmatmul.mubr.bf16.gmra.mrb[0].mxu0 %v5499
    %v5534 = vpop.f32.mrb[0].mxu0
    %v5535 = vadd.f32 0.0, %v5534
    %v5536 = vpop.f32.mrb[0].mxu0
    %v5537 = vadd.f32 0.0, %v5536
    %v5538 = vpop.f32.mrb[0].mxu0
    %v5539 = vpop.f32.mrb[0].mxu0
    %5540 = vdwg.mxu0
    %5541 = vmatprep.subr.bf16.mxu0 %v2250
    %5542 = vmatpush1.bf16.msra.mxu0 %v2249
    %5543 = vmatprep.subr.bf16.mxu0 %v2256
    %5544 = vmatpush1.bf16.msra.mxu0 %v2255
    %5545 = vmatprep.subr.bf16.mxu0 %v2262
    %5546 = vmatpush1.bf16.msra.mxu0 %v2261
    %5547 = vmatprep.subr.bf16.mxu0 %v2268
    %5548 = vmatpush1.bf16.msra.mxu0 %v2267
    %5549 = vmatprep.subr.bf16.mxu0 %v2274
    %5550 = vmatpush1.bf16.msra.mxu0 %v2273
    %5551 = vmatprep.subr.bf16.mxu0 %v2280
    %5552 = vmatpush1.bf16.msra.mxu0 %v2279
    %5553 = vmatprep.subr.bf16.mxu0 %v2286
    %5554 = vmatpush1.bf16.msra.mxu0 %v2285
    %5555 = vmatprep.subr.bf16.mxu0 %v2292
    %5556 = vmatpush1.bf16.msra.mxu0 %v2291
    %5557 = vmatprep.subr.bf16.mxu0 0
    %5558 = vmatpush1.bf16.msra.mxu0 0
    %5559 = vmatprep.subr.bf16.mxu0 0
    %5560 = vmatpush1.bf16.msra.mxu0 0
    %5561 = vmatprep.subr.bf16.mxu0 0
    %5562 = vmatpush1.bf16.msra.mxu0 0
    %5563 = vmatprep.subr.bf16.mxu0 0
    %5564 = vmatpush1.bf16.msra.mxu0 0
    %5565 = vmatprep.subr.bf16.mxu0 0
    %5566 = vmatpush1.bf16.msra.mxu0 0
    %5567 = vmatprep.subr.bf16.mxu0 0
    %5568 = vmatpush1.bf16.msra.mxu0 0
    %5569 = vmatprep.subr.bf16.mxu0 0
    %5570 = vmatpush1.bf16.msra.mxu0 0
    %5571 = vmatprep.subr.bf16.mxu0 0
    %5572 = vmatpush1.bf16.msra.mxu0 0
    %5573 = vmatprep.mubr.bf16.mxu0 0
    %5574 = vmatmul.mubr.bf16.gmra.mrb[0].mxu0 %v5499
    %v5575 = vpop.f32.mrb[0].mxu0
    %v5576 = vadd.f32 0.0, %v5575
    %v5577 = vpop.f32.mrb[0].mxu0
    %v5578 = vadd.f32 0.0, %v5577
    %v5579 = vpop.f32.mrb[0].mxu0
    %v5580 = vpop.f32.mrb[0].mxu0
    %5581 = vdwg.mxu0
    %5582 = vmatprep.subr.bf16.mxu0 %v2252
    %5583 = vmatpush1.bf16.msra.mxu0 %v2251
    %5584 = vmatprep.subr.bf16.mxu0 %v2258
    %5585 = vmatpush1.bf16.msra.mxu0 %v2257
    %5586 = vmatprep.subr.bf16.mxu0 %v2264
    %5587 = vmatpush1.bf16.msra.mxu0 %v2263
    %5588 = vmatprep.subr.bf16.mxu0 %v2270
    %5589 = vmatpush1.bf16.msra.mxu0 %v2269
    %5590 = vmatprep.subr.bf16.mxu0 %v2276
    %5591 = vmatpush1.bf16.msra.mxu0 %v2275
    %5592 = vmatprep.subr.bf16.mxu0 %v2282
    %5593 = vmatpush1.bf16.msra.mxu0 %v2281
    %5594 = vmatprep.subr.bf16.mxu0 %v2288
    %5595 = vmatpush1.bf16.msra.mxu0 %v2287
    %5596 = vmatprep.subr.bf16.mxu0 %v2294
    %5597 = vmatpush1.bf16.msra.mxu0 %v2293
    %5598 = vmatprep.subr.bf16.mxu0 0
    %5599 = vmatpush1.bf16.msra.mxu0 0
    %5600 = vmatprep.subr.bf16.mxu0 0
    %5601 = vmatpush1.bf16.msra.mxu0 0
    %5602 = vmatprep.subr.bf16.mxu0 0
    %5603 = vmatpush1.bf16.msra.mxu0 0
    %5604 = vmatprep.subr.bf16.mxu0 0
    %5605 = vmatpush1.bf16.msra.mxu0 0
    %5606 = vmatprep.subr.bf16.mxu0 0
    %5607 = vmatpush1.bf16.msra.mxu0 0
    %5608 = vmatprep.subr.bf16.mxu0 0
    %5609 = vmatpush1.bf16.msra.mxu0 0
    %5610 = vmatprep.subr.bf16.mxu0 0
    %5611 = vmatpush1.bf16.msra.mxu0 0
    %5612 = vmatprep.subr.bf16.mxu0 0
    %5613 = vmatpush1.bf16.msra.mxu0 0
    %5614 = vmatprep.mubr.bf16.mxu0 0
    %5615 = vmatmul.mubr.bf16.gmra.mrb[0].mxu0 %v5499
    %v5616 = vpop.f32.mrb[0].mxu0
    %v5617 = vadd.f32 0.0, %v5616
    %v5618 = vpop.f32.mrb[0].mxu0
    %v5619 = vadd.f32 0.0, %v5618
    %v5620 = vpop.f32.mrb[0].mxu0
    %v5621 = vpop.f32.mrb[0].mxu0
    %5622 = vdwg.mxu0
    %v5623 = vld [vmem:[#allocation2 + $0xa8] sm:$0xff]
    %v5624 = vld [vmem:[#allocation2 + $0xb0] sm:$0xff]
    %v5625 = vld [vmem:[#allocation2 + $0xb8] sm:$0xff]
    %v5626 = vadd.f32 %v5623, %v5411
    %v5627 = vadd.f32 %v5624, %v5413
    %v5628 = vadd.f32 %v5625, %v5452
    %5629 = vst [vmem:[#allocation2 + $0xa8] sm:$0xff] %v5626
    %5630 = vst [vmem:[#allocation2 + $0xb0] sm:$0xff] %v5627
    %5631 = vst [vmem:[#allocation2 + $0xb8] sm:$0xff] %v5628
    %v5632 = vld [vmem:[#allocation3 + $0xa8] sm:$0xff]
    %v5633 = vld [vmem:[#allocation3 + $0xb0] sm:$0xff]
    %v5634 = vld [vmem:[#allocation3 + $0xb8] sm:$0xff]
    %v5635 = vadd.f32 %v5632, %v5454
    %v5636 = vadd.f32 %v5633, %v5493
    %v5637 = vadd.f32 %v5634, %v5495
    %5638 = vst [vmem:[#allocation3 + $0xa8] sm:$0xff] %v5635
    %5639 = vst [vmem:[#allocation3 + $0xb0] sm:$0xff] %v5636
    %5640 = vst [vmem:[#allocation3 + $0xb8] sm:$0xff] %v5637
    %v5641 = vld [vmem:[#allocation2] sm:$0xff]
    %v5642 = vld [vmem:[#allocation2 + $0x8] sm:$0xff]
    %v5643 = vld [vmem:[#allocation2 + $0x10] sm:$0xff]
    %v5644 = vadd.f32 %v5641, %v5535
    %v5645 = vadd.f32 %v5642, %v5537
    %v5646 = vadd.f32 %v5643, %v5576
    %5647 = vst [vmem:[#allocation2] sm:$0xff] %v5644
    %5648 = vst [vmem:[#allocation2 + $0x8] sm:$0xff] %v5645
    %5649 = vst [vmem:[#allocation2 + $0x10] sm:$0xff] %v5646
    %v5650 = vld [vmem:[#allocation3] sm:$0xff]
    %v5651 = vld [vmem:[#allocation3 + $0x8] sm:$0xff]
    %v5652 = vld [vmem:[#allocation3 + $0x10] sm:$0xff]
    %v5653 = vadd.f32 %v5650, %v5578
    %v5654 = vadd.f32 %v5651, %v5617
    %v5655 = vadd.f32 %v5652, %v5619
    %5656 = vst [vmem:[#allocation3] sm:$0xff] %v5653
    %5657 = vst [vmem:[#allocation3 + $0x8] sm:$0xff] %v5654
    %5658 = vst [vmem:[#allocation3 + $0x10] sm:$0xff] %v5655
    %s5659 = smul.u32 4, 32
    %s5660 = smul.u32 %s5659, 6
    %s5661 = sshll.u32 %s5660, 4
    %5662 = dma.done [#allocation7], %s5661
    %v5663 = vld [vmem:[#allocation4] sm:$0xff]
    %v5664 = vld [vmem:[#allocation4 + $0x8] sm:$0xff]
    %v5665 = vld [vmem:[#allocation4 + $0x10] sm:$0xff]
    %v5666 = vld [vmem:[#allocation4 + $0x18] sm:$0xff]
    %v5667 = vld [vmem:[#allocation4 + $0x20] sm:$0xff]
    %v5668 = vld [vmem:[#allocation4 + $0x28] sm:$0xff]
    %v5669 = vld [vmem:[#allocation4 + $0x30] sm:$0xff]
    %v5670 = vld [vmem:[#allocation4 + $0x38] sm:$0xff]
    %v5671 = vld [vmem:[#allocation4 + $0x40] sm:$0xff]
    %v5672 = vld [vmem:[#allocation4 + $0x48] sm:$0xff]
    %v5673 = vld [vmem:[#allocation4 + $0x50] sm:$0xff]
    %v5674 = vld [vmem:[#allocation4 + $0x58] sm:$0xff]
    %v5675 = vld [vmem:[#allocation4 + $0x60] sm:$0xff]
    %v5676 = vld [vmem:[#allocation4 + $0x68] sm:$0xff]
    %v5677 = vld [vmem:[#allocation4 + $0x70] sm:$0xff]
    %v5678 = vld [vmem:[#allocation4 + $0x78] sm:$0xff]
    %v5679 = vld [vmem:[#allocation4 + $0x80] sm:$0xff]
    %v5680 = vld [vmem:[#allocation4 + $0x88] sm:$0xff]
    %v5681 = vld [vmem:[#allocation4 + $0x90] sm:$0xff]
    %v5682 = vld [vmem:[#allocation4 + $0x98] sm:$0xff]
    %v5683 = vld [vmem:[#allocation4 + $0xa0] sm:$0xff]
    %v5684 = vld [vmem:[#allocation4 + $0xa8] sm:$0xff]
    %v5685 = vld [vmem:[#allocation4 + $0xb0] sm:$0xff]
    %v5686 = vld [vmem:[#allocation4 + $0xb8] sm:$0xff]
    %v5687 = vld [vmem:[#allocation4 + $0xc0] sm:$0xff]
    %v5688 = vld [vmem:[#allocation4 + $0xc8] sm:$0xff]
    %v5689 = vld [vmem:[#allocation4 + $0xd0] sm:$0xff]
    %v5690 = vld [vmem:[#allocation4 + $0xd8] sm:$0xff]
    %v5691 = vld [vmem:[#allocation4 + $0xe0] sm:$0xff]
    %v5692 = vld [vmem:[#allocation4 + $0xe8] sm:$0xff]
    %v5693 = vld [vmem:[#allocation4 + $0xf0] sm:$0xff]
    %v5694 = vld [vmem:[#allocation4 + $0xf8] sm:$0xff]
    %v5695 = vld [vmem:[#allocation4 + $0x100] sm:$0xff]
    %v5696 = vld [vmem:[#allocation4 + $0x108] sm:$0xff]
    %v5697 = vld [vmem:[#allocation4 + $0x110] sm:$0xff]
    %v5698 = vld [vmem:[#allocation4 + $0x118] sm:$0xff]
    %v5699 = vld [vmem:[#allocation4 + $0x120] sm:$0xff]
    %v5700 = vld [vmem:[#allocation4 + $0x128] sm:$0xff]
    %v5701 = vld [vmem:[#allocation4 + $0x130] sm:$0xff]
    %v5702 = vld [vmem:[#allocation4 + $0x138] sm:$0xff]
    %v5703 = vld [vmem:[#allocation4 + $0x140] sm:$0xff]
    %v5704 = vld [vmem:[#allocation4 + $0x148] sm:$0xff]
    %v5705 = vld [vmem:[#allocation4 + $0x150] sm:$0xff]
    %v5706 = vld [vmem:[#allocation4 + $0x158] sm:$0xff]
    %v5707 = vld [vmem:[#allocation4 + $0x160] sm:$0xff]
    %v5708 = vld [vmem:[#allocation4 + $0x168] sm:$0xff]
    %v5709 = vld [vmem:[#allocation4 + $0x170] sm:$0xff]
    %v5710 = vld [vmem:[#allocation4 + $0x178] sm:$0xff]
    %v5711 = vld [vmem:[#allocation4 + $0x180] sm:$0xff]
    %v5712 = vld [vmem:[#allocation4 + $0x188] sm:$0xff]
    %v5713 = vld [vmem:[#allocation4 + $0x190] sm:$0xff]
    %v5714 = vld [vmem:[#allocation4 + $0x198] sm:$0xff]
    %v5715 = vld [vmem:[#allocation4 + $0x1a0] sm:$0xff]
    %v5716 = vld [vmem:[#allocation4 + $0x1a8] sm:$0xff]
    %v5717 = vld [vmem:[#allocation4 + $0x1b0] sm:$0xff]
    %v5718 = vld [vmem:[#allocation4 + $0x1b8] sm:$0xff]
    %v5719 = vld [vmem:[#allocation4 + $0x1c0] sm:$0xff]
    %v5720 = vld [vmem:[#allocation4 + $0x1c8] sm:$0xff]
    %v5721 = vld [vmem:[#allocation4 + $0x1d0] sm:$0xff]
    %v5722 = vld [vmem:[#allocation4 + $0x1d8] sm:$0xff]
    %v5723 = vld [vmem:[#allocation4 + $0x1e0] sm:$0xff]
    %v5724 = vld [vmem:[#allocation4 + $0x1e8] sm:$0xff]
    %v5725 = vld [vmem:[#allocation4 + $0x1f0] sm:$0xff]
    %v5726 = vld [vmem:[#allocation4 + $0x1f8] sm:$0xff]
    %v5727 = vld [vmem:[#allocation4 + $0x200] sm:$0xff]
    %v5728 = vld [vmem:[#allocation4 + $0x208] sm:$0xff]
    %v5729 = vld [vmem:[#allocation4 + $0x210] sm:$0xff]
    %v5730 = vld [vmem:[#allocation4 + $0x218] sm:$0xff]
    %v5731 = vld [vmem:[#allocation4 + $0x220] sm:$0xff]
    %v5732 = vld [vmem:[#allocation4 + $0x228] sm:$0xff]
    %v5733 = vld [vmem:[#allocation4 + $0x230] sm:$0xff]
    %v5734 = vld [vmem:[#allocation4 + $0x238] sm:$0xff]
    %v5735 = vld [vmem:[#allocation4 + $0x240] sm:$0xff]
    %v5736 = vld [vmem:[#allocation4 + $0x248] sm:$0xff]
    %v5737 = vld [vmem:[#allocation4 + $0x250] sm:$0xff]
    %v5738 = vld [vmem:[#allocation4 + $0x258] sm:$0xff]
    %v5739 = vld [vmem:[#allocation4 + $0x260] sm:$0xff]
    %v5740 = vld [vmem:[#allocation4 + $0x268] sm:$0xff]
    %v5741 = vld [vmem:[#allocation4 + $0x270] sm:$0xff]
    %v5742 = vld [vmem:[#allocation4 + $0x278] sm:$0xff]
    %v5743 = vld [vmem:[#allocation4 + $0x280] sm:$0xff]
    %v5744 = vld [vmem:[#allocation4 + $0x288] sm:$0xff]
    %v5745 = vld [vmem:[#allocation4 + $0x290] sm:$0xff]
    %v5746 = vld [vmem:[#allocation4 + $0x298] sm:$0xff]
    %v5747 = vld [vmem:[#allocation4 + $0x2a0] sm:$0xff]
    %v5748 = vld [vmem:[#allocation4 + $0x2a8] sm:$0xff]
    %v5749 = vld [vmem:[#allocation4 + $0x2b0] sm:$0xff]
    %v5750 = vld [vmem:[#allocation4 + $0x2b8] sm:$0xff]
    %v5751 = vld [vmem:[#allocation4 + $0x2c0] sm:$0xff]
    %v5752 = vld [vmem:[#allocation4 + $0x2c8] sm:$0xff]
    %v5753 = vld [vmem:[#allocation4 + $0x2d0] sm:$0xff]
    %v5754 = vld [vmem:[#allocation4 + $0x2d8] sm:$0xff]
    %v5755 = vld [vmem:[#allocation4 + $0x2e0] sm:$0xff]
    %v5756 = vld [vmem:[#allocation4 + $0x2e8] sm:$0xff]
    %v5757 = vld [vmem:[#allocation4 + $0x2f0] sm:$0xff]
    %v5758 = vld [vmem:[#allocation4 + $0x2f8] sm:$0xff]
    %v5759 = vld [vmem:[%s12] sm:$0x1]
    %v5761 = vlaneseq
    %v5762 = vshrl.u32 %v5761, 7
    %v5763 = vsub.s32 0, %v5762
    %v5764 = vrot.slane %v5759, %v5763
    %v5766 = vld [vmem:[%s13] sm:$0x1]
    %v5768 = vlaneseq
    %v5769 = vshrl.u32 %v5768, 7
    %v5770 = vsub.s32 0, %v5769
    %v5771 = vrot.slane %v5766, %v5770
    %5773 = vmatprep.subr.bf16.mxu0 %v5664
    %5774 = vmatpush1.bf16.msra.mxu0 %v5663
    %5775 = vmatprep.subr.bf16.mxu0 %v5670
    %5776 = vmatpush1.bf16.msra.mxu0 %v5669
    %5777 = vmatprep.subr.bf16.mxu0 %v5676
    %5778 = vmatpush1.bf16.msra.mxu0 %v5675
    %5779 = vmatprep.subr.bf16.mxu0 %v5682
    %5780 = vmatpush1.bf16.msra.mxu0 %v5681
    %5781 = vmatprep.subr.bf16.mxu0 %v5688
    %5782 = vmatpush1.bf16.msra.mxu0 %v5687
    %5783 = vmatprep.subr.bf16.mxu0 %v5694
    %5784 = vmatpush1.bf16.msra.mxu0 %v5693
    %5785 = vmatprep.subr.bf16.mxu0 %v5700
    %5786 = vmatpush1.bf16.msra.mxu0 %v5699
    %5787 = vmatprep.subr.bf16.mxu0 %v5706
    %5788 = vmatpush1.bf16.msra.mxu0 %v5705
    %5789 = vmatprep.subr.bf16.mxu0 %v5712
    %5790 = vmatpush1.bf16.msra.mxu0 %v5711
    %5791 = vmatprep.subr.bf16.mxu0 %v5718
    %5792 = vmatpush1.bf16.msra.mxu0 %v5717
    %5793 = vmatprep.subr.bf16.mxu0 %v5724
    %5794 = vmatpush1.bf16.msra.mxu0 %v5723
    %5795 = vmatprep.subr.bf16.mxu0 %v5730
    %5796 = vmatpush1.bf16.msra.mxu0 %v5729
    %5797 = vmatprep.subr.bf16.mxu0 %v5736
    %5798 = vmatpush1.bf16.msra.mxu0 %v5735
    %5799 = vmatprep.subr.bf16.mxu0 %v5742
    %5800 = vmatpush1.bf16.msra.mxu0 %v5741
    %5801 = vmatprep.subr.bf16.mxu0 %v5748
    %5802 = vmatpush1.bf16.msra.mxu0 %v5747
    %5803 = vmatprep.subr.bf16.mxu0 %v5754
    %5804 = vmatpush1.bf16.msra.mxu0 %v5753
    %5805 = vmatprep.mubr.bf16.mxu0 %v1090
    %5806 = vmatmul.mubr.bf16.gmra.mrb[0].mxu0 %v1090
    %v5807 = vpop.f32.mrb[0].mxu0
    %v5808 = vadd.f32 0.0, %v5807
    %v5809 = vpop.f32.mrb[0].mxu0
    %v5810 = vadd.f32 0.0, %v5809
    %v5811 = vpop.f32.mrb[0].mxu0
    %v5812 = vpop.f32.mrb[0].mxu0
    %5813 = vdwg.mxu0
    %5814 = vmatprep.subr.bf16.mxu0 %v5666
    %5815 = vmatpush1.bf16.msra.mxu0 %v5665
    %5816 = vmatprep.subr.bf16.mxu0 %v5672
    %5817 = vmatpush1.bf16.msra.mxu0 %v5671
    %5818 = vmatprep.subr.bf16.mxu0 %v5678
    %5819 = vmatpush1.bf16.msra.mxu0 %v5677
    %5820 = vmatprep.subr.bf16.mxu0 %v5684
    %5821 = vmatpush1.bf16.msra.mxu0 %v5683
    %5822 = vmatprep.subr.bf16.mxu0 %v5690
    %5823 = vmatpush1.bf16.msra.mxu0 %v5689
    %5824 = vmatprep.subr.bf16.mxu0 %v5696
    %5825 = vmatpush1.bf16.msra.mxu0 %v5695
    %5826 = vmatprep.subr.bf16.mxu0 %v5702
    %5827 = vmatpush1.bf16.msra.mxu0 %v5701
    %5828 = vmatprep.subr.bf16.mxu0 %v5708
    %5829 = vmatpush1.bf16.msra.mxu0 %v5707
    %5830 = vmatprep.subr.bf16.mxu0 %v5714
    %5831 = vmatpush1.bf16.msra.mxu0 %v5713
    %5832 = vmatprep.subr.bf16.mxu0 %v5720
    %5833 = vmatpush1.bf16.msra.mxu0 %v5719
    %5834 = vmatprep.subr.bf16.mxu0 %v5726
    %5835 = vmatpush1.bf16.msra.mxu0 %v5725
    %5836 = vmatprep.subr.bf16.mxu0 %v5732
    %5837 = vmatpush1.bf16.msra.mxu0 %v5731
    %5838 = vmatprep.subr.bf16.mxu0 %v5738
    %5839 = vmatpush1.bf16.msra.mxu0 %v5737
    %5840 = vmatprep.subr.bf16.mxu0 %v5744
    %5841 = vmatpush1.bf16.msra.mxu0 %v5743
    %5842 = vmatprep.subr.bf16.mxu0 %v5750
    %5843 = vmatpush1.bf16.msra.mxu0 %v5749
    %5844 = vmatprep.subr.bf16.mxu0 %v5756
    %5845 = vmatpush1.bf16.msra.mxu0 %v5755
    %5846 = vmatprep.mubr.bf16.mxu0 %v1090
    %5847 = vmatmul.mubr.bf16.gmra.mrb[0].mxu0 %v1090
    %v5848 = vpop.f32.mrb[0].mxu0
    %v5849 = vadd.f32 0.0, %v5848
    %v5850 = vpop.f32.mrb[0].mxu0
    %v5851 = vadd.f32 0.0, %v5850
    %v5852 = vpop.f32.mrb[0].mxu0
    %v5853 = vpop.f32.mrb[0].mxu0
    %5854 = vdwg.mxu0
    %5855 = vmatprep.subr.bf16.mxu0 %v5668
    %5856 = vmatpush1.bf16.msra.mxu0 %v5667
    %5857 = vmatprep.subr.bf16.mxu0 %v5674
    %5858 = vmatpush1.bf16.msra.mxu0 %v5673
    %5859 = vmatprep.subr.bf16.mxu0 %v5680
    %5860 = vmatpush1.bf16.msra.mxu0 %v5679
    %5861 = vmatprep.subr.bf16.mxu0 %v5686
    %5862 = vmatpush1.bf16.msra.mxu0 %v5685
    %5863 = vmatprep.subr.bf16.mxu0 %v5692
    %5864 = vmatpush1.bf16.msra.mxu0 %v5691
    %5865 = vmatprep.subr.bf16.mxu0 %v5698
    %5866 = vmatpush1.bf16.msra.mxu0 %v5697
    %5867 = vmatprep.subr.bf16.mxu0 %v5704
    %5868 = vmatpush1.bf16.msra.mxu0 %v5703
    %5869 = vmatprep.subr.bf16.mxu0 %v5710
    %5870 = vmatpush1.bf16.msra.mxu0 %v5709
    %5871 = vmatprep.subr.bf16.mxu0 %v5716
    %5872 = vmatpush1.bf16.msra.mxu0 %v5715
    %5873 = vmatprep.subr.bf16.mxu0 %v5722
    %5874 = vmatpush1.bf16.msra.mxu0 %v5721
    %5875 = vmatprep.subr.bf16.mxu0 %v5728
    %5876 = vmatpush1.bf16.msra.mxu0 %v5727
    %5877 = vmatprep.subr.bf16.mxu0 %v5734
    %5878 = vmatpush1.bf16.msra.mxu0 %v5733
    %5879 = vmatprep.subr.bf16.mxu0 %v5740
    %5880 = vmatpush1.bf16.msra.mxu0 %v5739
    %5881 = vmatprep.subr.bf16.mxu0 %v5746
    %5882 = vmatpush1.bf16.msra.mxu0 %v5745
    %5883 = vmatprep.subr.bf16.mxu0 %v5752
    %5884 = vmatpush1.bf16.msra.mxu0 %v5751
    %5885 = vmatprep.subr.bf16.mxu0 %v5758
    %5886 = vmatpush1.bf16.msra.mxu0 %v5757
    %5887 = vmatprep.mubr.bf16.mxu0 %v1090
    %5888 = vmatmul.mubr.bf16.gmra.mrb[0].mxu0 %v1090
    %v5889 = vpop.f32.mrb[0].mxu0
    %v5890 = vadd.f32 0.0, %v5889
    %v5891 = vpop.f32.mrb[0].mxu0
    %v5892 = vadd.f32 0.0, %v5891
    %v5893 = vpop.f32.mrb[0].mxu0
    %v5894 = vpop.f32.mrb[0].mxu0
    %5895 = vdwg.mxu0
    %v5896 = vld [vmem:[#allocation2] sm:$0xff]
    %v5897 = vld [vmem:[#allocation2 + $0x8] sm:$0xff]
    %v5898 = vld [vmem:[#allocation2 + $0x10] sm:$0xff]
    %v5899 = vadd.f32 %v5896, %v5808
    %v5900 = vxor.u32 %v5899, 2147483648
    %v5901 = vmul.f32 %v5900, 1.442695
    %v5902 = vpow.pop %v5901
    %v5903 = vadd.f32 %v5902, 1.0
    %v5904 = vrcp.pop %v5903
    %v5905 = vmul.f32 1.0, %v5904
    %v5906 = vadd.f32 %v5897, %v5810
    %v5907 = vxor.u32 %v5906, 2147483648
    %v5908 = vmul.f32 %v5907, 1.442695
    %v5909 = vpow.pop %v5908
    %v5910 = vadd.f32 %v5909, 1.0
    %v5911 = vrcp.pop %v5910
    %v5912 = vmul.f32 1.0, %v5911
    %v5913 = vadd.f32 %v5849, %v5764
    %v5914 = vmul.f32 %v5905, %v5913
    %v5915 = vadd.f32 %v5898, %v5914
    %v5916 = vtanh.pop %v5915
    %v5917 = vsub.f32 1.0, %v5912
    %v5918 = vmul.f32 %v5917, %v5916
    %v5919 = vmul.f32 %v5912, 0.0
    %v5920 = vadd.f32 %v5918, %v5919
    %v5921 = vld [vmem:[#allocation3 + $0xa8] sm:$0xff]
    %v5922 = vld [vmem:[#allocation3 + $0xb0] sm:$0xff]
    %v5923 = vld [vmem:[#allocation3 + $0xb8] sm:$0xff]
    %v5924 = vadd.f32 %v5921, %v5851
    %v5925 = vxor.u32 %v5924, 2147483648
    %v5926 = vmul.f32 %v5925, 1.442695
    %v5927 = vpow.pop %v5926
    %v5928 = vadd.f32 %v5927, 1.0
    %v5929 = vrcp.pop %v5928
    %v5930 = vmul.f32 1.0, %v5929
    %v5931 = vadd.f32 %v5922, %v5890
    %v5932 = vxor.u32 %v5931, 2147483648
    %v5933 = vmul.f32 %v5932, 1.442695
    %v5934 = vpow.pop %v5933
    %v5935 = vadd.f32 %v5934, 1.0
    %v5936 = vrcp.pop %v5935
    %v5937 = vmul.f32 1.0, %v5936
    %v5938 = vadd.f32 %v5892, %v5771
    %v5939 = vmul.f32 %v5930, %v5938
    %v5940 = vadd.f32 %v5923, %v5939
    %v5941 = vtanh.pop %v5940
    %v5942 = vsub.f32 1.0, %v5937
    %v5943 = vmul.f32 %v5942, %v5941
    %v5944 = vmul.f32 %v5937, 0.0
    %v5945 = vadd.f32 %v5943, %v5944
    %v5946 = vpack.c.bf16 %v5920, %v5920
    %v5947 = vpack.c.bf16 %v5945, %v5945
    %5948 = vmatprep.subr.bf16.mxu0 %v5664
    %5949 = vmatpush1.bf16.msra.mxu0 %v5663
    %5950 = vmatprep.subr.bf16.mxu0 %v5670
    %5951 = vmatpush1.bf16.msra.mxu0 %v5669
    %5952 = vmatprep.subr.bf16.mxu0 %v5676
    %5953 = vmatpush1.bf16.msra.mxu0 %v5675
    %5954 = vmatprep.subr.bf16.mxu0 %v5682
    %5955 = vmatpush1.bf16.msra.mxu0 %v5681
    %5956 = vmatprep.subr.bf16.mxu0 %v5688
    %5957 = vmatpush1.bf16.msra.mxu0 %v5687
    %5958 = vmatprep.subr.bf16.mxu0 %v5694
    %5959 = vmatpush1.bf16.msra.mxu0 %v5693
    %5960 = vmatprep.subr.bf16.mxu0 %v5700
    %5961 = vmatpush1.bf16.msra.mxu0 %v5699
    %5962 = vmatprep.subr.bf16.mxu0 %v5706
    %5963 = vmatpush1.bf16.msra.mxu0 %v5705
    %5964 = vmatprep.subr.bf16.mxu0 %v5712
    %5965 = vmatpush1.bf16.msra.mxu0 %v5711
    %5966 = vmatprep.subr.bf16.mxu0 %v5718
    %5967 = vmatpush1.bf16.msra.mxu0 %v5717
    %5968 = vmatprep.subr.bf16.mxu0 %v5724
    %5969 = vmatpush1.bf16.msra.mxu0 %v5723
    %5970 = vmatprep.subr.bf16.mxu0 %v5730
    %5971 = vmatpush1.bf16.msra.mxu0 %v5729
    %5972 = vmatprep.subr.bf16.mxu0 %v5736
    %5973 = vmatpush1.bf16.msra.mxu0 %v5735
    %5974 = vmatprep.subr.bf16.mxu0 %v5742
    %5975 = vmatpush1.bf16.msra.mxu0 %v5741
    %5976 = vmatprep.subr.bf16.mxu0 %v5748
    %5977 = vmatpush1.bf16.msra.mxu0 %v5747
    %5978 = vmatprep.subr.bf16.mxu0 %v5754
    %5979 = vmatpush1.bf16.msra.mxu0 %v5753
    %5980 = vmatprep.mubr.bf16.mxu0 %v5947
    %5981 = vmatmul.mubr.bf16.gmra.mrb[0].mxu0 %v5946
    %v5982 = vpop.f32.mrb[0].mxu0
    %v5983 = vadd.f32 0.0, %v5982
    %v5984 = vpop.f32.mrb[0].mxu0
    %v5985 = vadd.f32 0.0, %v5984
    %v5986 = vpop.f32.mrb[0].mxu0
    %v5987 = vpop.f32.mrb[0].mxu0
    %5988 = vdwg.mxu0
    %5989 = vmatprep.subr.bf16.mxu0 %v5666
    %5990 = vmatpush1.bf16.msra.mxu0 %v5665
    %5991 = vmatprep.subr.bf16.mxu0 %v5672
    %5992 = vmatpush1.bf16.msra.mxu0 %v5671
    %5993 = vmatprep.subr.bf16.mxu0 %v5678
    %5994 = vmatpush1.bf16.msra.mxu0 %v5677
    %5995 = vmatprep.subr.bf16.mxu0 %v5684
    %5996 = vmatpush1.bf16.msra.mxu0 %v5683
    %5997 = vmatprep.subr.bf16.mxu0 %v5690
    %5998 = vmatpush1.bf16.msra.mxu0 %v5689
    %5999 = vmatprep.subr.bf16.mxu0 %v5696
    %6000 = vmatpush1.bf16.msra.mxu0 %v5695
    %6001 = vmatprep.subr.bf16.mxu0 %v5702
    %6002 = vmatpush1.bf16.msra.mxu0 %v5701
    %6003 = vmatprep.subr.bf16.mxu0 %v5708
    %6004 = vmatpush1.bf16.msra.mxu0 %v5707
    %6005 = vmatprep.subr.bf16.mxu0 %v5714
    %6006 = vmatpush1.bf16.msra.mxu0 %v5713
    %6007 = vmatprep.subr.bf16.mxu0 %v5720
    %6008 = vmatpush1.bf16.msra.mxu0 %v5719
    %6009 = vmatprep.subr.bf16.mxu0 %v5726
    %6010 = vmatpush1.bf16.msra.mxu0 %v5725
    %6011 = vmatprep.subr.bf16.mxu0 %v5732
    %6012 = vmatpush1.bf16.msra.mxu0 %v5731
    %6013 = vmatprep.subr.bf16.mxu0 %v5738
    %6014 = vmatpush1.bf16.msra.mxu0 %v5737
    %6015 = vmatprep.subr.bf16.mxu0 %v5744
    %6016 = vmatpush1.bf16.msra.mxu0 %v5743
    %6017 = vmatprep.subr.bf16.mxu0 %v5750
    %6018 = vmatpush1.bf16.msra.mxu0 %v5749
    %6019 = vmatprep.subr.bf16.mxu0 %v5756
    %6020 = vmatpush1.bf16.msra.mxu0 %v5755
    %6021 = vmatprep.mubr.bf16.mxu0 %v5947
    %6022 = vmatmul.mubr.bf16.gmra.mrb[0].mxu0 %v5946
    %v6023 = vpop.f32.mrb[0].mxu0
    %v6024 = vadd.f32 0.0, %v6023
    %v6025 = vpop.f32.mrb[0].mxu0
    %v6026 = vadd.f32 0.0, %v6025
    %v6027 = vpop.f32.mrb[0].mxu0
    %v6028 = vpop.f32.mrb[0].mxu0
    %6029 = vdwg.mxu0
    %6030 = vmatprep.subr.bf16.mxu0 %v5668
    %6031 = vmatpush1.bf16.msra.mxu0 %v5667
    %6032 = vmatprep.subr.bf16.mxu0 %v5674
    %6033 = vmatpush1.bf16.msra.mxu0 %v5673
    %6034 = vmatprep.subr.bf16.mxu0 %v5680
    %6035 = vmatpush1.bf16.msra.mxu0 %v5679
    %6036 = vmatprep.subr.bf16.mxu0 %v5686
    %6037 = vmatpush1.bf16.msra.mxu0 %v5685
    %6038 = vmatprep.subr.bf16.mxu0 %v5692
    %6039 = vmatpush1.bf16.msra.mxu0 %v5691
    %6040 = vmatprep.subr.bf16.mxu0 %v5698
    %6041 = vmatpush1.bf16.msra.mxu0 %v5697
    %6042 = vmatprep.subr.bf16.mxu0 %v5704
    %6043 = vmatpush1.bf16.msra.mxu0 %v5703
    %6044 = vmatprep.subr.bf16.mxu0 %v5710
    %6045 = vmatpush1.bf16.msra.mxu0 %v5709
    %6046 = vmatprep.subr.bf16.mxu0 %v5716
    %6047 = vmatpush1.bf16.msra.mxu0 %v5715
    %6048 = vmatprep.subr.bf16.mxu0 %v5722
    %6049 = vmatpush1.bf16.msra.mxu0 %v5721
    %6050 = vmatprep.subr.bf16.mxu0 %v5728
    %6051 = vmatpush1.bf16.msra.mxu0 %v5727
    %6052 = vmatprep.subr.bf16.mxu0 %v5734
    %6053 = vmatpush1.bf16.msra.mxu0 %v5733
    %6054 = vmatprep.subr.bf16.mxu0 %v5740
    %6055 = vmatpush1.bf16.msra.mxu0 %v5739
    %6056 = vmatprep.subr.bf16.mxu0 %v5746
    %6057 = vmatpush1.bf16.msra.mxu0 %v5745
    %6058 = vmatprep.subr.bf16.mxu0 %v5752
    %6059 = vmatpush1.bf16.msra.mxu0 %v5751
    %6060 = vmatprep.subr.bf16.mxu0 %v5758
    %6061 = vmatpush1.bf16.msra.mxu0 %v5757
    %6062 = vmatprep.mubr.bf16.mxu0 %v5947
    %6063 = vmatmul.mubr.bf16.gmra.mrb[0].mxu0 %v5946
    %v6064 = vpop.f32.mrb[0].mxu0
    %v6065 = vadd.f32 0.0, %v6064
    %v6066 = vpop.f32.mrb[0].mxu0
    %v6067 = vadd.f32 0.0, %v6066
    %v6068 = vpop.f32.mrb[0].mxu0
    %v6069 = vpop.f32.mrb[0].mxu0
    %6070 = vdwg.mxu0
    %v6071 = vld [vmem:[#allocation2 + $0x18] sm:$0xff]
    %v6072 = vld [vmem:[#allocation2 + $0x20] sm:$0xff]
    %v6073 = vld [vmem:[#allocation2 + $0x28] sm:$0xff]
    %v6074 = vadd.f32 %v6071, %v5983
    %v6075 = vxor.u32 %v6074, 2147483648
    %v6076 = vmul.f32 %v6075, 1.442695
    %v6077 = vpow.pop %v6076
    %v6078 = vadd.f32 %v6077, 1.0
    %v6079 = vrcp.pop %v6078
    %v6080 = vmul.f32 1.0, %v6079
    %v6081 = vadd.f32 %v6072, %v5985
    %v6082 = vxor.u32 %v6081, 2147483648
    %v6083 = vmul.f32 %v6082, 1.442695
    %v6084 = vpow.pop %v6083
    %v6085 = vadd.f32 %v6084, 1.0
    %v6086 = vrcp.pop %v6085
    %v6087 = vmul.f32 1.0, %v6086
    %v6088 = vadd.f32 %v6024, %v5764
    %v6089 = vmul.f32 %v6080, %v6088
    %v6090 = vadd.f32 %v6073, %v6089
    %v6091 = vtanh.pop %v6090
    %v6092 = vsub.f32 1.0, %v6087
    %v6093 = vmul.f32 %v6092, %v6091
    %v6094 = vmul.f32 %v6087, %v5920
    %v6095 = vadd.f32 %v6093, %v6094
    %v6096 = vld [vmem:[#allocation3 + $0x90] sm:$0xff]
    %v6097 = vld [vmem:[#allocation3 + $0x98] sm:$0xff]
    %v6098 = vld [vmem:[#allocation3 + $0xa0] sm:$0xff]
    %v6099 = vadd.f32 %v6096, %v6026
    %v6100 = vxor.u32 %v6099, 2147483648
    %v6101 = vmul.f32 %v6100, 1.442695
    %v6102 = vpow.pop %v6101
    %v6103 = vadd.f32 %v6102, 1.0
    %v6104 = vrcp.pop %v6103
    %v6105 = vmul.f32 1.0, %v6104
    %v6106 = vadd.f32 %v6097, %v6065
    %v6107 = vxor.u32 %v6106, 2147483648
    %v6108 = vmul.f32 %v6107, 1.442695
    %v6109 = vpow.pop %v6108
    %v6110 = vadd.f32 %v6109, 1.0
    %v6111 = vrcp.pop %v6110
    %v6112 = vmul.f32 1.0, %v6111
    %v6113 = vadd.f32 %v6067, %v5771
    %v6114 = vmul.f32 %v6105, %v6113
    %v6115 = vadd.f32 %v6098, %v6114
    %v6116 = vtanh.pop %v6115
    %v6117 = vsub.f32 1.0, %v6112
    %v6118 = vmul.f32 %v6117, %v6116
    %v6119 = vmul.f32 %v6112, %v5945
    %v6120 = vadd.f32 %v6118, %v6119
    %v6121 = vpack.c.bf16 %v6095, %v6095
    %v6122 = vpack.c.bf16 %v6120, %v6120
    %6123 = vmatprep.subr.bf16.mxu0 %v5664
    %6124 = vmatpush1.bf16.msra.mxu0 %v5663
    %6125 = vmatprep.subr.bf16.mxu0 %v5670
    %6126 = vmatpush1.bf16.msra.mxu0 %v5669
    %6127 = vmatprep.subr.bf16.mxu0 %v5676
    %6128 = vmatpush1.bf16.msra.mxu0 %v5675
    %6129 = vmatprep.subr.bf16.mxu0 %v5682
    %6130 = vmatpush1.bf16.msra.mxu0 %v5681
    %6131 = vmatprep.subr.bf16.mxu0 %v5688
    %6132 = vmatpush1.bf16.msra.mxu0 %v5687
    %6133 = vmatprep.subr.bf16.mxu0 %v5694
    %6134 = vmatpush1.bf16.msra.mxu0 %v5693
    %6135 = vmatprep.subr.bf16.mxu0 %v5700
    %6136 = vmatpush1.bf16.msra.mxu0 %v5699
    %6137 = vmatprep.subr.bf16.mxu0 %v5706
    %6138 = vmatpush1.bf16.msra.mxu0 %v5705
    %6139 = vmatprep.subr.bf16.mxu0 %v5712
    %6140 = vmatpush1.bf16.msra.mxu0 %v5711
    %6141 = vmatprep.subr.bf16.mxu0 %v5718
    %6142 = vmatpush1.bf16.msra.mxu0 %v5717
    %6143 = vmatprep.subr.bf16.mxu0 %v5724
    %6144 = vmatpush1.bf16.msra.mxu0 %v5723
    %6145 = vmatprep.subr.bf16.mxu0 %v5730
    %6146 = vmatpush1.bf16.msra.mxu0 %v5729
    %6147 = vmatprep.subr.bf16.mxu0 %v5736
    %6148 = vmatpush1.bf16.msra.mxu0 %v5735
    %6149 = vmatprep.subr.bf16.mxu0 %v5742
    %6150 = vmatpush1.bf16.msra.mxu0 %v5741
    %6151 = vmatprep.subr.bf16.mxu0 %v5748
    %6152 = vmatpush1.bf16.msra.mxu0 %v5747
    %6153 = vmatprep.subr.bf16.mxu0 %v5754
    %6154 = vmatpush1.bf16.msra.mxu0 %v5753
    %6155 = vmatprep.mubr.bf16.mxu0 %v6122
    %6156 = vmatmul.mubr.bf16.gmra.mrb[0].mxu0 %v6121
    %v6157 = vpop.f32.mrb[0].mxu0
    %v6158 = vadd.f32 0.0, %v6157
    %v6159 = vpop.f32.mrb[0].mxu0
    %v6160 = vadd.f32 0.0, %v6159
    %v6161 = vpop.f32.mrb[0].mxu0
    %v6162 = vpop.f32.mrb[0].mxu0
    %6163 = vdwg.mxu0
    %6164 = vmatprep.subr.bf16.mxu0 %v5666
    %6165 = vmatpush1.bf16.msra.mxu0 %v5665
    %6166 = vmatprep.subr.bf16.mxu0 %v5672
    %6167 = vmatpush1.bf16.msra.mxu0 %v5671
    %6168 = vmatprep.subr.bf16.mxu0 %v5678
    %6169 = vmatpush1.bf16.msra.mxu0 %v5677
    %6170 = vmatprep.subr.bf16.mxu0 %v5684
    %6171 = vmatpush1.bf16.msra.mxu0 %v5683
    %6172 = vmatprep.subr.bf16.mxu0 %v5690
    %6173 = vmatpush1.bf16.msra.mxu0 %v5689
    %6174 = vmatprep.subr.bf16.mxu0 %v5696
    %6175 = vmatpush1.bf16.msra.mxu0 %v5695
    %6176 = vmatprep.subr.bf16.mxu0 %v5702
    %6177 = vmatpush1.bf16.msra.mxu0 %v5701
    %6178 = vmatprep.subr.bf16.mxu0 %v5708
    %6179 = vmatpush1.bf16.msra.mxu0 %v5707
    %6180 = vmatprep.subr.bf16.mxu0 %v5714
    %6181 = vmatpush1.bf16.msra.mxu0 %v5713
    %6182 = vmatprep.subr.bf16.mxu0 %v5720
    %6183 = vmatpush1.bf16.msra.mxu0 %v5719
    %6184 = vmatprep.subr.bf16.mxu0 %v5726
    %6185 = vmatpush1.bf16.msra.mxu0 %v5725
    %6186 = vmatprep.subr.bf16.mxu0 %v5732
    %6187 = vmatpush1.bf16.msra.mxu0 %v5731
    %6188 = vmatprep.subr.bf16.mxu0 %v5738
    %6189 = vmatpush1.bf16.msra.mxu0 %v5737
    %6190 = vmatprep.subr.bf16.mxu0 %v5744
    %6191 = vmatpush1.bf16.msra.mxu0 %v5743
    %6192 = vmatprep.subr.bf16.mxu0 %v5750
    %6193 = vmatpush1.bf16.msra.mxu0 %v5749
    %6194 = vmatprep.subr.bf16.mxu0 %v5756
    %6195 = vmatpush1.bf16.msra.mxu0 %v5755
    %6196 = vmatprep.mubr.bf16.mxu0 %v6122
    %6197 = vmatmul.mubr.bf16.gmra.mrb[0].mxu0 %v6121
    %v6198 = vpop.f32.mrb[0].mxu0
    %v6199 = vadd.f32 0.0, %v6198
    %v6200 = vpop.f32.mrb[0].mxu0
    %v6201 = vadd.f32 0.0, %v6200
    %v6202 = vpop.f32.mrb[0].mxu0
    %v6203 = vpop.f32.mrb[0].mxu0
    %6204 = vdwg.mxu0
    %6205 = vmatprep.subr.bf16.mxu0 %v5668
    %6206 = vmatpush1.bf16.msra.mxu0 %v5667
    %6207 = vmatprep.subr.bf16.mxu0 %v5674
    %6208 = vmatpush1.bf16.msra.mxu0 %v5673
    %6209 = vmatprep.subr.bf16.mxu0 %v5680
    %6210 = vmatpush1.bf16.msra.mxu0 %v5679
    %6211 = vmatprep.subr.bf16.mxu0 %v5686
    %6212 = vmatpush1.bf16.msra.mxu0 %v5685
    %6213 = vmatprep.subr.bf16.mxu0 %v5692
    %6214 = vmatpush1.bf16.msra.mxu0 %v5691
    %6215 = vmatprep.subr.bf16.mxu0 %v5698
    %6216 = vmatpush1.bf16.msra.mxu0 %v5697
    %6217 = vmatprep.subr.bf16.mxu0 %v5704
    %6218 = vmatpush1.bf16.msra.mxu0 %v5703
    %6219 = vmatprep.subr.bf16.mxu0 %v5710
    %6220 = vmatpush1.bf16.msra.mxu0 %v5709
    %6221 = vmatprep.subr.bf16.mxu0 %v5716
    %6222 = vmatpush1.bf16.msra.mxu0 %v5715
    %6223 = vmatprep.subr.bf16.mxu0 %v5722
    %6224 = vmatpush1.bf16.msra.mxu0 %v5721
    %6225 = vmatprep.subr.bf16.mxu0 %v5728
    %6226 = vmatpush1.bf16.msra.mxu0 %v5727
    %6227 = vmatprep.subr.bf16.mxu0 %v5734
    %6228 = vmatpush1.bf16.msra.mxu0 %v5733
    %6229 = vmatprep.subr.bf16.mxu0 %v5740
    %6230 = vmatpush1.bf16.msra.mxu0 %v5739
    %6231 = vmatprep.subr.bf16.mxu0 %v5746
    %6232 = vmatpush1.bf16.msra.mxu0 %v5745
    %6233 = vmatprep.subr.bf16.mxu0 %v5752
    %6234 = vmatpush1.bf16.msra.mxu0 %v5751
    %6235 = vmatprep.subr.bf16.mxu0 %v5758
    %6236 = vmatpush1.bf16.msra.mxu0 %v5757
    %6237 = vmatprep.mubr.bf16.mxu0 %v6122
    %6238 = vmatmul.mubr.bf16.gmra.mrb[0].mxu0 %v6121
    %v6239 = vpop.f32.mrb[0].mxu0
    %v6240 = vadd.f32 0.0, %v6239
    %v6241 = vpop.f32.mrb[0].mxu0
    %v6242 = vadd.f32 0.0, %v6241
    %v6243 = vpop.f32.mrb[0].mxu0
    %v6244 = vpop.f32.mrb[0].mxu0
    %6245 = vdwg.mxu0
    %v6246 = vld [vmem:[#allocation2 + $0x30] sm:$0xff]
    %v6247 = vld [vmem:[#allocation2 + $0x38] sm:$0xff]
    %v6248 = vld [vmem:[#allocation2 + $0x40] sm:$0xff]
    %v6249 = vadd.f32 %v6246, %v6158
    %v6250 = vxor.u32 %v6249, 2147483648
    %v6251 = vmul.f32 %v6250, 1.442695
    %v6252 = vpow.pop %v6251
    %v6253 = vadd.f32 %v6252, 1.0
    %v6254 = vrcp.pop %v6253
    %v6255 = vmul.f32 1.0, %v6254
    %v6256 = vadd.f32 %v6247, %v6160
    %v6257 = vxor.u32 %v6256, 2147483648
    %v6258 = vmul.f32 %v6257, 1.442695
    %v6259 = vpow.pop %v6258
    %v6260 = vadd.f32 %v6259, 1.0
    %v6261 = vrcp.pop %v6260
    %v6262 = vmul.f32 1.0, %v6261
    %v6263 = vadd.f32 %v6199, %v5764
    %v6264 = vmul.f32 %v6255, %v6263
    %v6265 = vadd.f32 %v6248, %v6264
    %v6266 = vtanh.pop %v6265
    %v6267 = vsub.f32 1.0, %v6262
    %v6268 = vmul.f32 %v6267, %v6266
    %v6269 = vmul.f32 %v6262, %v6095
    %v6270 = vadd.f32 %v6268, %v6269
    %v6271 = vld [vmem:[#allocation3 + $0x78] sm:$0xff]
    %v6272 = vld [vmem:[#allocation3 + $0x80] sm:$0xff]
    %v6273 = vld [vmem:[#allocation3 + $0x88] sm:$0xff]
    %v6274 = vadd.f32 %v6271, %v6201
    %v6275 = vxor.u32 %v6274, 2147483648
    %v6276 = vmul.f32 %v6275, 1.442695
    %v6277 = vpow.pop %v6276
    %v6278 = vadd.f32 %v6277, 1.0
    %v6279 = vrcp.pop %v6278
    %v6280 = vmul.f32 1.0, %v6279
    %v6281 = vadd.f32 %v6272, %v6240
    %v6282 = vxor.u32 %v6281, 2147483648
    %v6283 = vmul.f32 %v6282, 1.442695
    %v6284 = vpow.pop %v6283
    %v6285 = vadd.f32 %v6284, 1.0
    %v6286 = vrcp.pop %v6285
    %v6287 = vmul.f32 1.0, %v6286
    %v6288 = vadd.f32 %v6242, %v5771
    %v6289 = vmul.f32 %v6280, %v6288
    %v6290 = vadd.f32 %v6273, %v6289
    %v6291 = vtanh.pop %v6290
    %v6292 = vsub.f32 1.0, %v6287
    %v6293 = vmul.f32 %v6292, %v6291
    %v6294 = vmul.f32 %v6287, %v6120
    %v6295 = vadd.f32 %v6293, %v6294
    %v6296 = vpack.c.bf16 %v6270, %v6270
    %v6297 = vpack.c.bf16 %v6295, %v6295
    %6298 = vmatprep.subr.bf16.mxu0 %v5664
    %6299 = vmatpush1.bf16.msra.mxu0 %v5663
    %6300 = vmatprep.subr.bf16.mxu0 %v5670
    %6301 = vmatpush1.bf16.msra.mxu0 %v5669
    %6302 = vmatprep.subr.bf16.mxu0 %v5676
    %6303 = vmatpush1.bf16.msra.mxu0 %v5675
    %6304 = vmatprep.subr.bf16.mxu0 %v5682
    %6305 = vmatpush1.bf16.msra.mxu0 %v5681
    %6306 = vmatprep.subr.bf16.mxu0 %v5688
    %6307 = vmatpush1.bf16.msra.mxu0 %v5687
    %6308 = vmatprep.subr.bf16.mxu0 %v5694
    %6309 = vmatpush1.bf16.msra.mxu0 %v5693
    %6310 = vmatprep.subr.bf16.mxu0 %v5700
    %6311 = vmatpush1.bf16.msra.mxu0 %v5699
    %6312 = vmatprep.subr.bf16.mxu0 %v5706
    %6313 = vmatpush1.bf16.msra.mxu0 %v5705
    %6314 = vmatprep.subr.bf16.mxu0 %v5712
    %6315 = vmatpush1.bf16.msra.mxu0 %v5711
    %6316 = vmatprep.subr.bf16.mxu0 %v5718
    %6317 = vmatpush1.bf16.msra.mxu0 %v5717
    %6318 = vmatprep.subr.bf16.mxu0 %v5724
    %6319 = vmatpush1.bf16.msra.mxu0 %v5723
    %6320 = vmatprep.subr.bf16.mxu0 %v5730
    %6321 = vmatpush1.bf16.msra.mxu0 %v5729
    %6322 = vmatprep.subr.bf16.mxu0 %v5736
    %6323 = vmatpush1.bf16.msra.mxu0 %v5735
    %6324 = vmatprep.subr.bf16.mxu0 %v5742
    %6325 = vmatpush1.bf16.msra.mxu0 %v5741
    %6326 = vmatprep.subr.bf16.mxu0 %v5748
    %6327 = vmatpush1.bf16.msra.mxu0 %v5747
    %6328 = vmatprep.subr.bf16.mxu0 %v5754
    %6329 = vmatpush1.bf16.msra.mxu0 %v5753
    %6330 = vmatprep.mubr.bf16.mxu0 %v6297
    %6331 = vmatmul.mubr.bf16.gmra.mrb[0].mxu0 %v6296
    %v6332 = vpop.f32.mrb[0].mxu0
    %v6333 = vadd.f32 0.0, %v6332
    %v6334 = vpop.f32.mrb[0].mxu0
    %v6335 = vadd.f32 0.0, %v6334
    %v6336 = vpop.f32.mrb[0].mxu0
    %v6337 = vpop.f32.mrb[0].mxu0
    %6338 = vdwg.mxu0
    %6339 = vmatprep.subr.bf16.mxu0 %v5666
    %6340 = vmatpush1.bf16.msra.mxu0 %v5665
    %6341 = vmatprep.subr.bf16.mxu0 %v5672
    %6342 = vmatpush1.bf16.msra.mxu0 %v5671
    %6343 = vmatprep.subr.bf16.mxu0 %v5678
    %6344 = vmatpush1.bf16.msra.mxu0 %v5677
    %6345 = vmatprep.subr.bf16.mxu0 %v5684
    %6346 = vmatpush1.bf16.msra.mxu0 %v5683
    %6347 = vmatprep.subr.bf16.mxu0 %v5690
    %6348 = vmatpush1.bf16.msra.mxu0 %v5689
    %6349 = vmatprep.subr.bf16.mxu0 %v5696
    %6350 = vmatpush1.bf16.msra.mxu0 %v5695
    %6351 = vmatprep.subr.bf16.mxu0 %v5702
    %6352 = vmatpush1.bf16.msra.mxu0 %v5701
    %6353 = vmatprep.subr.bf16.mxu0 %v5708
    %6354 = vmatpush1.bf16.msra.mxu0 %v5707
    %6355 = vmatprep.subr.bf16.mxu0 %v5714
    %6356 = vmatpush1.bf16.msra.mxu0 %v5713
    %6357 = vmatprep.subr.bf16.mxu0 %v5720
    %6358 = vmatpush1.bf16.msra.mxu0 %v5719
    %6359 = vmatprep.subr.bf16.mxu0 %v5726
    %6360 = vmatpush1.bf16.msra.mxu0 %v5725
    %6361 = vmatprep.subr.bf16.mxu0 %v5732
    %6362 = vmatpush1.bf16.msra.mxu0 %v5731
    %6363 = vmatprep.subr.bf16.mxu0 %v5738
    %6364 = vmatpush1.bf16.msra.mxu0 %v5737
    %6365 = vmatprep.subr.bf16.mxu0 %v5744
    %6366 = vmatpush1.bf16.msra.mxu0 %v5743
    %6367 = vmatprep.subr.bf16.mxu0 %v5750
    %6368 = vmatpush1.bf16.msra.mxu0 %v5749
    %6369 = vmatprep.subr.bf16.mxu0 %v5756
    %6370 = vmatpush1.bf16.msra.mxu0 %v5755
    %6371 = vmatprep.mubr.bf16.mxu0 %v6297
    %6372 = vmatmul.mubr.bf16.gmra.mrb[0].mxu0 %v6296
    %v6373 = vpop.f32.mrb[0].mxu0
    %v6374 = vadd.f32 0.0, %v6373
    %v6375 = vpop.f32.mrb[0].mxu0
    %v6376 = vadd.f32 0.0, %v6375
    %v6377 = vpop.f32.mrb[0].mxu0
    %v6378 = vpop.f32.mrb[0].mxu0
    %6379 = vdwg.mxu0
    %6380 = vmatprep.subr.bf16.mxu0 %v5668
    %6381 = vmatpush1.bf16.msra.mxu0 %v5667
    %6382 = vmatprep.subr.bf16.mxu0 %v5674
    %6383 = vmatpush1.bf16.msra.mxu0 %v5673
    %6384 = vmatprep.subr.bf16.mxu0 %v5680
    %6385 = vmatpush1.bf16.msra.mxu0 %v5679
    %6386 = vmatprep.subr.bf16.mxu0 %v5686
    %6387 = vmatpush1.bf16.msra.mxu0 %v5685
    %6388 = vmatprep.subr.bf16.mxu0 %v5692
    %6389 = vmatpush1.bf16.msra.mxu0 %v5691
    %6390 = vmatprep.subr.bf16.mxu0 %v5698
    %6391 = vmatpush1.bf16.msra.mxu0 %v5697
    %6392 = vmatprep.subr.bf16.mxu0 %v5704
    %6393 = vmatpush1.bf16.msra.mxu0 %v5703
    %6394 = vmatprep.subr.bf16.mxu0 %v5710
    %6395 = vmatpush1.bf16.msra.mxu0 %v5709
    %6396 = vmatprep.subr.bf16.mxu0 %v5716
    %6397 = vmatpush1.bf16.msra.mxu0 %v5715
    %6398 = vmatprep.subr.bf16.mxu0 %v5722
    %6399 = vmatpush1.bf16.msra.mxu0 %v5721
    %6400 = vmatprep.subr.bf16.mxu0 %v5728
    %6401 = vmatpush1.bf16.msra.mxu0 %v5727
    %6402 = vmatprep.subr.bf16.mxu0 %v5734
    %6403 = vmatpush1.bf16.msra.mxu0 %v5733
    %6404 = vmatprep.subr.bf16.mxu0 %v5740
    %6405 = vmatpush1.bf16.msra.mxu0 %v5739
    %6406 = vmatprep.subr.bf16.mxu0 %v5746
    %6407 = vmatpush1.bf16.msra.mxu0 %v5745
    %6408 = vmatprep.subr.bf16.mxu0 %v5752
    %6409 = vmatpush1.bf16.msra.mxu0 %v5751
    %6410 = vmatprep.subr.bf16.mxu0 %v5758
    %6411 = vmatpush1.bf16.msra.mxu0 %v5757
    %6412 = vmatprep.mubr.bf16.mxu0 %v6297
    %6413 = vmatmul.mubr.bf16.gmra.mrb[0].mxu0 %v6296
    %v6414 = vpop.f32.mrb[0].mxu0
    %v6415 = vadd.f32 0.0, %v6414
    %v6416 = vpop.f32.mrb[0].mxu0
    %v6417 = vadd.f32 0.0, %v6416
    %v6418 = vpop.f32.mrb[0].mxu0
    %v6419 = vpop.f32.mrb[0].mxu0
    %6420 = vdwg.mxu0
    %v6421 = vld [vmem:[#allocation2 + $0x48] sm:$0xff]
    %v6422 = vld [vmem:[#allocation2 + $0x50] sm:$0xff]
    %v6423 = vld [vmem:[#allocation2 + $0x58] sm:$0xff]
    %v6424 = vadd.f32 %v6421, %v6333
    %v6425 = vxor.u32 %v6424, 2147483648
    %v6426 = vmul.f32 %v6425, 1.442695
    %v6427 = vpow.pop %v6426
    %v6428 = vadd.f32 %v6427, 1.0
    %v6429 = vrcp.pop %v6428
    %v6430 = vmul.f32 1.0, %v6429
    %v6431 = vadd.f32 %v6422, %v6335
    %v6432 = vxor.u32 %v6431, 2147483648
    %v6433 = vmul.f32 %v6432, 1.442695
    %v6434 = vpow.pop %v6433
    %v6435 = vadd.f32 %v6434, 1.0
    %v6436 = vrcp.pop %v6435
    %v6437 = vmul.f32 1.0, %v6436
    %v6438 = vadd.f32 %v6374, %v5764
    %v6439 = vmul.f32 %v6430, %v6438
    %v6440 = vadd.f32 %v6423, %v6439
    %v6441 = vtanh.pop %v6440
    %v6442 = vsub.f32 1.0, %v6437
    %v6443 = vmul.f32 %v6442, %v6441
    %v6444 = vmul.f32 %v6437, %v6270
    %v6445 = vadd.f32 %v6443, %v6444
    %v6446 = vld [vmem:[#allocation3 + $0x60] sm:$0xff]
    %v6447 = vld [vmem:[#allocation3 + $0x68] sm:$0xff]
    %v6448 = vld [vmem:[#allocation3 + $0x70] sm:$0xff]
    %v6449 = vadd.f32 %v6446, %v6376
    %v6450 = vxor.u32 %v6449, 2147483648
    %v6451 = vmul.f32 %v6450, 1.442695
    %v6452 = vpow.pop %v6451
    %v6453 = vadd.f32 %v6452, 1.0
    %v6454 = vrcp.pop %v6453
    %v6455 = vmul.f32 1.0, %v6454
    %v6456 = vadd.f32 %v6447, %v6415
    %v6457 = vxor.u32 %v6456, 2147483648
    %v6458 = vmul.f32 %v6457, 1.442695
    %v6459 = vpow.pop %v6458
    %v6460 = vadd.f32 %v6459, 1.0
    %v6461 = vrcp.pop %v6460
    %v6462 = vmul.f32 1.0, %v6461
    %v6463 = vadd.f32 %v6417, %v5771
    %v6464 = vmul.f32 %v6455, %v6463
    %v6465 = vadd.f32 %v6448, %v6464
    %v6466 = vtanh.pop %v6465
    %v6467 = vsub.f32 1.0, %v6462
    %v6468 = vmul.f32 %v6467, %v6466
    %v6469 = vmul.f32 %v6462, %v6295
    %v6470 = vadd.f32 %v6468, %v6469
    %v6471 = vpack.c.bf16 %v6445, %v6445
    %v6472 = vpack.c.bf16 %v6470, %v6470
    %6473 = vmatprep.subr.bf16.mxu0 %v5664
    %6474 = vmatpush1.bf16.msra.mxu0 %v5663
    %6475 = vmatprep.subr.bf16.mxu0 %v5670
    %6476 = vmatpush1.bf16.msra.mxu0 %v5669
    %6477 = vmatprep.subr.bf16.mxu0 %v5676
    %6478 = vmatpush1.bf16.msra.mxu0 %v5675
    %6479 = vmatprep.subr.bf16.mxu0 %v5682
    %6480 = vmatpush1.bf16.msra.mxu0 %v5681
    %6481 = vmatprep.subr.bf16.mxu0 %v5688
    %6482 = vmatpush1.bf16.msra.mxu0 %v5687
    %6483 = vmatprep.subr.bf16.mxu0 %v5694
    %6484 = vmatpush1.bf16.msra.mxu0 %v5693
    %6485 = vmatprep.subr.bf16.mxu0 %v5700
    %6486 = vmatpush1.bf16.msra.mxu0 %v5699
    %6487 = vmatprep.subr.bf16.mxu0 %v5706
    %6488 = vmatpush1.bf16.msra.mxu0 %v5705
    %6489 = vmatprep.subr.bf16.mxu0 %v5712
    %6490 = vmatpush1.bf16.msra.mxu0 %v5711
    %6491 = vmatprep.subr.bf16.mxu0 %v5718
    %6492 = vmatpush1.bf16.msra.mxu0 %v5717
    %6493 = vmatprep.subr.bf16.mxu0 %v5724
    %6494 = vmatpush1.bf16.msra.mxu0 %v5723
    %6495 = vmatprep.subr.bf16.mxu0 %v5730
    %6496 = vmatpush1.bf16.msra.mxu0 %v5729
    %6497 = vmatprep.subr.bf16.mxu0 %v5736
    %6498 = vmatpush1.bf16.msra.mxu0 %v5735
    %6499 = vmatprep.subr.bf16.mxu0 %v5742
    %6500 = vmatpush1.bf16.msra.mxu0 %v5741
    %6501 = vmatprep.subr.bf16.mxu0 %v5748
    %6502 = vmatpush1.bf16.msra.mxu0 %v5747
    %6503 = vmatprep.subr.bf16.mxu0 %v5754
    %6504 = vmatpush1.bf16.msra.mxu0 %v5753
    %6505 = vmatprep.mubr.bf16.mxu0 %v6472
    %6506 = vmatmul.mubr.bf16.gmra.mrb[0].mxu0 %v6471
    %v6507 = vpop.f32.mrb[0].mxu0
    %v6508 = vadd.f32 0.0, %v6507
    %v6509 = vpop.f32.mrb[0].mxu0
    %v6510 = vadd.f32 0.0, %v6509
    %v6511 = vpop.f32.mrb[0].mxu0
    %v6512 = vpop.f32.mrb[0].mxu0
    %6513 = vdwg.mxu0
    %6514 = vmatprep.subr.bf16.mxu0 %v5666
    %6515 = vmatpush1.bf16.msra.mxu0 %v5665
    %6516 = vmatprep.subr.bf16.mxu0 %v5672
    %6517 = vmatpush1.bf16.msra.mxu0 %v5671
    %6518 = vmatprep.subr.bf16.mxu0 %v5678
    %6519 = vmatpush1.bf16.msra.mxu0 %v5677
    %6520 = vmatprep.subr.bf16.mxu0 %v5684
    %6521 = vmatpush1.bf16.msra.mxu0 %v5683
    %6522 = vmatprep.subr.bf16.mxu0 %v5690
    %6523 = vmatpush1.bf16.msra.mxu0 %v5689
    %6524 = vmatprep.subr.bf16.mxu0 %v5696
    %6525 = vmatpush1.bf16.msra.mxu0 %v5695
    %6526 = vmatprep.subr.bf16.mxu0 %v5702
    %6527 = vmatpush1.bf16.msra.mxu0 %v5701
    %6528 = vmatprep.subr.bf16.mxu0 %v5708
    %6529 = vmatpush1.bf16.msra.mxu0 %v5707
    %6530 = vmatprep.subr.bf16.mxu0 %v5714
    %6531 = vmatpush1.bf16.msra.mxu0 %v5713
    %6532 = vmatprep.subr.bf16.mxu0 %v5720
    %6533 = vmatpush1.bf16.msra.mxu0 %v5719
    %6534 = vmatprep.subr.bf16.mxu0 %v5726
    %6535 = vmatpush1.bf16.msra.mxu0 %v5725
    %6536 = vmatprep.subr.bf16.mxu0 %v5732
    %6537 = vmatpush1.bf16.msra.mxu0 %v5731
    %6538 = vmatprep.subr.bf16.mxu0 %v5738
    %6539 = vmatpush1.bf16.msra.mxu0 %v5737
    %6540 = vmatprep.subr.bf16.mxu0 %v5744
    %6541 = vmatpush1.bf16.msra.mxu0 %v5743
    %6542 = vmatprep.subr.bf16.mxu0 %v5750
    %6543 = vmatpush1.bf16.msra.mxu0 %v5749
    %6544 = vmatprep.subr.bf16.mxu0 %v5756
    %6545 = vmatpush1.bf16.msra.mxu0 %v5755
    %6546 = vmatprep.mubr.bf16.mxu0 %v6472
    %6547 = vmatmul.mubr.bf16.gmra.mrb[0].mxu0 %v6471
    %v6548 = vpop.f32.mrb[0].mxu0
    %v6549 = vadd.f32 0.0, %v6548
    %v6550 = vpop.f32.mrb[0].mxu0
    %v6551 = vadd.f32 0.0, %v6550
    %v6552 = vpop.f32.mrb[0].mxu0
    %v6553 = vpop.f32.mrb[0].mxu0
    %6554 = vdwg.mxu0
    %6555 = vmatprep.subr.bf16.mxu0 %v5668
    %6556 = vmatpush1.bf16.msra.mxu0 %v5667
    %6557 = vmatprep.subr.bf16.mxu0 %v5674
    %6558 = vmatpush1.bf16.msra.mxu0 %v5673
    %6559 = vmatprep.subr.bf16.mxu0 %v5680
    %6560 = vmatpush1.bf16.msra.mxu0 %v5679
    %6561 = vmatprep.subr.bf16.mxu0 %v5686
    %6562 = vmatpush1.bf16.msra.mxu0 %v5685
    %6563 = vmatprep.subr.bf16.mxu0 %v5692
    %6564 = vmatpush1.bf16.msra.mxu0 %v5691
    %6565 = vmatprep.subr.bf16.mxu0 %v5698
    %6566 = vmatpush1.bf16.msra.mxu0 %v5697
    %6567 = vmatprep.subr.bf16.mxu0 %v5704
    %6568 = vmatpush1.bf16.msra.mxu0 %v5703
    %6569 = vmatprep.subr.bf16.mxu0 %v5710
    %6570 = vmatpush1.bf16.msra.mxu0 %v5709
    %6571 = vmatprep.subr.bf16.mxu0 %v5716
    %6572 = vmatpush1.bf16.msra.mxu0 %v5715
    %6573 = vmatprep.subr.bf16.mxu0 %v5722
    %6574 = vmatpush1.bf16.msra.mxu0 %v5721
    %6575 = vmatprep.subr.bf16.mxu0 %v5728
    %6576 = vmatpush1.bf16.msra.mxu0 %v5727
    %6577 = vmatprep.subr.bf16.mxu0 %v5734
    %6578 = vmatpush1.bf16.msra.mxu0 %v5733
    %6579 = vmatprep.subr.bf16.mxu0 %v5740
    %6580 = vmatpush1.bf16.msra.mxu0 %v5739
    %6581 = vmatprep.subr.bf16.mxu0 %v5746
    %6582 = vmatpush1.bf16.msra.mxu0 %v5745
    %6583 = vmatprep.subr.bf16.mxu0 %v5752
    %6584 = vmatpush1.bf16.msra.mxu0 %v5751
    %6585 = vmatprep.subr.bf16.mxu0 %v5758
    %6586 = vmatpush1.bf16.msra.mxu0 %v5757
    %6587 = vmatprep.mubr.bf16.mxu0 %v6472
    %6588 = vmatmul.mubr.bf16.gmra.mrb[0].mxu0 %v6471
    %v6589 = vpop.f32.mrb[0].mxu0
    %v6590 = vadd.f32 0.0, %v6589
    %v6591 = vpop.f32.mrb[0].mxu0
    %v6592 = vadd.f32 0.0, %v6591
    %v6593 = vpop.f32.mrb[0].mxu0
    %v6594 = vpop.f32.mrb[0].mxu0
    %6595 = vdwg.mxu0
    %v6596 = vld [vmem:[#allocation2 + $0x60] sm:$0xff]
    %v6597 = vld [vmem:[#allocation2 + $0x68] sm:$0xff]
    %v6598 = vld [vmem:[#allocation2 + $0x70] sm:$0xff]
    %v6599 = vadd.f32 %v6596, %v6508
    %v6600 = vxor.u32 %v6599, 2147483648
    %v6601 = vmul.f32 %v6600, 1.442695
    %v6602 = vpow.pop %v6601
    %v6603 = vadd.f32 %v6602, 1.0
    %v6604 = vrcp.pop %v6603
    %v6605 = vmul.f32 1.0, %v6604
    %v6606 = vadd.f32 %v6597, %v6510
    %v6607 = vxor.u32 %v6606, 2147483648
    %v6608 = vmul.f32 %v6607, 1.442695
    %v6609 = vpow.pop %v6608
    %v6610 = vadd.f32 %v6609, 1.0
    %v6611 = vrcp.pop %v6610
    %v6612 = vmul.f32 1.0, %v6611
    %v6613 = vadd.f32 %v6549, %v5764
    %v6614 = vmul.f32 %v6605, %v6613
    %v6615 = vadd.f32 %v6598, %v6614
    %v6616 = vtanh.pop %v6615
    %v6617 = vsub.f32 1.0, %v6612
    %v6618 = vmul.f32 %v6617, %v6616
    %v6619 = vmul.f32 %v6612, %v6445
    %v6620 = vadd.f32 %v6618, %v6619
    %v6621 = vld [vmem:[#allocation3 + $0x48] sm:$0xff]
    %v6622 = vld [vmem:[#allocation3 + $0x50] sm:$0xff]
    %v6623 = vld [vmem:[#allocation3 + $0x58] sm:$0xff]
    %v6624 = vadd.f32 %v6621, %v6551
    %v6625 = vxor.u32 %v6624, 2147483648
    %v6626 = vmul.f32 %v6625, 1.442695
    %v6627 = vpow.pop %v6626
    %v6628 = vadd.f32 %v6627, 1.0
    %v6629 = vrcp.pop %v6628
    %v6630 = vmul.f32 1.0, %v6629
    %v6631 = vadd.f32 %v6622, %v6590
    %v6632 = vxor.u32 %v6631, 2147483648
    %v6633 = vmul.f32 %v6632, 1.442695
    %v6634 = vpow.pop %v6633
    %v6635 = vadd.f32 %v6634, 1.0
    %v6636 = vrcp.pop %v6635
    %v6637 = vmul.f32 1.0, %v6636
    %v6638 = vadd.f32 %v6592, %v5771
    %v6639 = vmul.f32 %v6630, %v6638
    %v6640 = vadd.f32 %v6623, %v6639
    %v6641 = vtanh.pop %v6640
    %v6642 = vsub.f32 1.0, %v6637
    %v6643 = vmul.f32 %v6642, %v6641
    %v6644 = vmul.f32 %v6637, %v6470
    %v6645 = vadd.f32 %v6643, %v6644
    %v6646 = vpack.c.bf16 %v6620, %v6620
    %v6647 = vpack.c.bf16 %v6645, %v6645
    %6648 = vmatprep.subr.bf16.mxu0 %v5664
    %6649 = vmatpush1.bf16.msra.mxu0 %v5663
    %6650 = vmatprep.subr.bf16.mxu0 %v5670
    %6651 = vmatpush1.bf16.msra.mxu0 %v5669
    %6652 = vmatprep.subr.bf16.mxu0 %v5676
    %6653 = vmatpush1.bf16.msra.mxu0 %v5675
    %6654 = vmatprep.subr.bf16.mxu0 %v5682
    %6655 = vmatpush1.bf16.msra.mxu0 %v5681
    %6656 = vmatprep.subr.bf16.mxu0 %v5688
    %6657 = vmatpush1.bf16.msra.mxu0 %v5687
    %6658 = vmatprep.subr.bf16.mxu0 %v5694
    %6659 = vmatpush1.bf16.msra.mxu0 %v5693
    %6660 = vmatprep.subr.bf16.mxu0 %v5700
    %6661 = vmatpush1.bf16.msra.mxu0 %v5699
    %6662 = vmatprep.subr.bf16.mxu0 %v5706
    %6663 = vmatpush1.bf16.msra.mxu0 %v5705
    %6664 = vmatprep.subr.bf16.mxu0 %v5712
    %6665 = vmatpush1.bf16.msra.mxu0 %v5711
    %6666 = vmatprep.subr.bf16.mxu0 %v5718
    %6667 = vmatpush1.bf16.msra.mxu0 %v5717
    %6668 = vmatprep.subr.bf16.mxu0 %v5724
    %6669 = vmatpush1.bf16.msra.mxu0 %v5723
    %6670 = vmatprep.subr.bf16.mxu0 %v5730
    %6671 = vmatpush1.bf16.msra.mxu0 %v5729
    %6672 = vmatprep.subr.bf16.mxu0 %v5736
    %6673 = vmatpush1.bf16.msra.mxu0 %v5735
    %6674 = vmatprep.subr.bf16.mxu0 %v5742
    %6675 = vmatpush1.bf16.msra.mxu0 %v5741
    %6676 = vmatprep.subr.bf16.mxu0 %v5748
    %6677 = vmatpush1.bf16.msra.mxu0 %v5747
    %6678 = vmatprep.subr.bf16.mxu0 %v5754
    %6679 = vmatpush1.bf16.msra.mxu0 %v5753
    %6680 = vmatprep.mubr.bf16.mxu0 %v6647
    %6681 = vmatmul.mubr.bf16.gmra.mrb[0].mxu0 %v6646
    %v6682 = vpop.f32.mrb[0].mxu0
    %v6683 = vadd.f32 0.0, %v6682
    %v6684 = vpop.f32.mrb[0].mxu0
    %v6685 = vadd.f32 0.0, %v6684
    %v6686 = vpop.f32.mrb[0].mxu0
    %v6687 = vpop.f32.mrb[0].mxu0
    %6688 = vdwg.mxu0
    %6689 = vmatprep.subr.bf16.mxu0 %v5666
    %6690 = vmatpush1.bf16.msra.mxu0 %v5665
    %6691 = vmatprep.subr.bf16.mxu0 %v5672
    %6692 = vmatpush1.bf16.msra.mxu0 %v5671
    %6693 = vmatprep.subr.bf16.mxu0 %v5678
    %6694 = vmatpush1.bf16.msra.mxu0 %v5677
    %6695 = vmatprep.subr.bf16.mxu0 %v5684
    %6696 = vmatpush1.bf16.msra.mxu0 %v5683
    %6697 = vmatprep.subr.bf16.mxu0 %v5690
    %6698 = vmatpush1.bf16.msra.mxu0 %v5689
    %6699 = vmatprep.subr.bf16.mxu0 %v5696
    %6700 = vmatpush1.bf16.msra.mxu0 %v5695
    %6701 = vmatprep.subr.bf16.mxu0 %v5702
    %6702 = vmatpush1.bf16.msra.mxu0 %v5701
    %6703 = vmatprep.subr.bf16.mxu0 %v5708
    %6704 = vmatpush1.bf16.msra.mxu0 %v5707
    %6705 = vmatprep.subr.bf16.mxu0 %v5714
    %6706 = vmatpush1.bf16.msra.mxu0 %v5713
    %6707 = vmatprep.subr.bf16.mxu0 %v5720
    %6708 = vmatpush1.bf16.msra.mxu0 %v5719
    %6709 = vmatprep.subr.bf16.mxu0 %v5726
    %6710 = vmatpush1.bf16.msra.mxu0 %v5725
    %6711 = vmatprep.subr.bf16.mxu0 %v5732
    %6712 = vmatpush1.bf16.msra.mxu0 %v5731
    %6713 = vmatprep.subr.bf16.mxu0 %v5738
    %6714 = vmatpush1.bf16.msra.mxu0 %v5737
    %6715 = vmatprep.subr.bf16.mxu0 %v5744
    %6716 = vmatpush1.bf16.msra.mxu0 %v5743
    %6717 = vmatprep.subr.bf16.mxu0 %v5750
    %6718 = vmatpush1.bf16.msra.mxu0 %v5749
    %6719 = vmatprep.subr.bf16.mxu0 %v5756
    %6720 = vmatpush1.bf16.msra.mxu0 %v5755
    %6721 = vmatprep.mubr.bf16.mxu0 %v6647
    %6722 = vmatmul.mubr.bf16.gmra.mrb[0].mxu0 %v6646
    %v6723 = vpop.f32.mrb[0].mxu0
    %v6724 = vadd.f32 0.0, %v6723
    %v6725 = vpop.f32.mrb[0].mxu0
    %v6726 = vadd.f32 0.0, %v6725
    %v6727 = vpop.f32.mrb[0].mxu0
    %v6728 = vpop.f32.mrb[0].mxu0
    %6729 = vdwg.mxu0
    %6730 = vmatprep.subr.bf16.mxu0 %v5668
    %6731 = vmatpush1.bf16.msra.mxu0 %v5667
    %6732 = vmatprep.subr.bf16.mxu0 %v5674
    %6733 = vmatpush1.bf16.msra.mxu0 %v5673
    %6734 = vmatprep.subr.bf16.mxu0 %v5680
    %6735 = vmatpush1.bf16.msra.mxu0 %v5679
    %6736 = vmatprep.subr.bf16.mxu0 %v5686
    %6737 = vmatpush1.bf16.msra.mxu0 %v5685
    %6738 = vmatprep.subr.bf16.mxu0 %v5692
    %6739 = vmatpush1.bf16.msra.mxu0 %v5691
    %6740 = vmatprep.subr.bf16.mxu0 %v5698
    %6741 = vmatpush1.bf16.msra.mxu0 %v5697
    %6742 = vmatprep.subr.bf16.mxu0 %v5704
    %6743 = vmatpush1.bf16.msra.mxu0 %v5703
    %6744 = vmatprep.subr.bf16.mxu0 %v5710
    %6745 = vmatpush1.bf16.msra.mxu0 %v5709
    %6746 = vmatprep.subr.bf16.mxu0 %v5716
    %6747 = vmatpush1.bf16.msra.mxu0 %v5715
    %6748 = vmatprep.subr.bf16.mxu0 %v5722
    %6749 = vmatpush1.bf16.msra.mxu0 %v5721
    %6750 = vmatprep.subr.bf16.mxu0 %v5728
    %6751 = vmatpush1.bf16.msra.mxu0 %v5727
    %6752 = vmatprep.subr.bf16.mxu0 %v5734
    %6753 = vmatpush1.bf16.msra.mxu0 %v5733
    %6754 = vmatprep.subr.bf16.mxu0 %v5740
    %6755 = vmatpush1.bf16.msra.mxu0 %v5739
    %6756 = vmatprep.subr.bf16.mxu0 %v5746
    %6757 = vmatpush1.bf16.msra.mxu0 %v5745
    %6758 = vmatprep.subr.bf16.mxu0 %v5752
    %6759 = vmatpush1.bf16.msra.mxu0 %v5751
    %6760 = vmatprep.subr.bf16.mxu0 %v5758
    %6761 = vmatpush1.bf16.msra.mxu0 %v5757
    %6762 = vmatprep.mubr.bf16.mxu0 %v6647
    %6763 = vmatmul.mubr.bf16.gmra.mrb[0].mxu0 %v6646
    %v6764 = vpop.f32.mrb[0].mxu0
    %v6765 = vadd.f32 0.0, %v6764
    %v6766 = vpop.f32.mrb[0].mxu0
    %v6767 = vadd.f32 0.0, %v6766
    %v6768 = vpop.f32.mrb[0].mxu0
    %v6769 = vpop.f32.mrb[0].mxu0
    %6770 = vdwg.mxu0
    %v6771 = vld [vmem:[#allocation2 + $0x78] sm:$0xff]
    %v6772 = vld [vmem:[#allocation2 + $0x80] sm:$0xff]
    %v6773 = vld [vmem:[#allocation2 + $0x88] sm:$0xff]
    %v6774 = vadd.f32 %v6771, %v6683
    %v6775 = vxor.u32 %v6774, 2147483648
    %v6776 = vmul.f32 %v6775, 1.442695
    %v6777 = vpow.pop %v6776
    %v6778 = vadd.f32 %v6777, 1.0
    %v6779 = vrcp.pop %v6778
    %v6780 = vmul.f32 1.0, %v6779
    %v6781 = vadd.f32 %v6772, %v6685
    %v6782 = vxor.u32 %v6781, 2147483648
    %v6783 = vmul.f32 %v6782, 1.442695
    %v6784 = vpow.pop %v6783
    %v6785 = vadd.f32 %v6784, 1.0
    %v6786 = vrcp.pop %v6785
    %v6787 = vmul.f32 1.0, %v6786
    %v6788 = vadd.f32 %v6724, %v5764
    %v6789 = vmul.f32 %v6780, %v6788
    %v6790 = vadd.f32 %v6773, %v6789
    %v6791 = vtanh.pop %v6790
    %v6792 = vsub.f32 1.0, %v6787
    %v6793 = vmul.f32 %v6792, %v6791
    %v6794 = vmul.f32 %v6787, %v6620
    %v6795 = vadd.f32 %v6793, %v6794
    %v6796 = vld [vmem:[#allocation3 + $0x30] sm:$0xff]
    %v6797 = vld [vmem:[#allocation3 + $0x38] sm:$0xff]
    %v6798 = vld [vmem:[#allocation3 + $0x40] sm:$0xff]
    %v6799 = vadd.f32 %v6796, %v6726
    %v6800 = vxor.u32 %v6799, 2147483648
    %v6801 = vmul.f32 %v6800, 1.442695
    %v6802 = vpow.pop %v6801
    %v6803 = vadd.f32 %v6802, 1.0
    %v6804 = vrcp.pop %v6803
    %v6805 = vmul.f32 1.0, %v6804
    %v6806 = vadd.f32 %v6797, %v6765
    %v6807 = vxor.u32 %v6806, 2147483648
    %v6808 = vmul.f32 %v6807, 1.442695
    %v6809 = vpow.pop %v6808
    %v6810 = vadd.f32 %v6809, 1.0
    %v6811 = vrcp.pop %v6810
    %v6812 = vmul.f32 1.0, %v6811
    %v6813 = vadd.f32 %v6767, %v5771
    %v6814 = vmul.f32 %v6805, %v6813
    %v6815 = vadd.f32 %v6798, %v6814
    %v6816 = vtanh.pop %v6815
    %v6817 = vsub.f32 1.0, %v6812
    %v6818 = vmul.f32 %v6817, %v6816
    %v6819 = vmul.f32 %v6812, %v6645
    %v6820 = vadd.f32 %v6818, %v6819
    %v6821 = vpack.c.bf16 %v6795, %v6795
    %v6822 = vpack.c.bf16 %v6820, %v6820
    %6823 = vmatprep.subr.bf16.mxu0 %v5664
    %6824 = vmatpush1.bf16.msra.mxu0 %v5663
    %6825 = vmatprep.subr.bf16.mxu0 %v5670
    %6826 = vmatpush1.bf16.msra.mxu0 %v5669
    %6827 = vmatprep.subr.bf16.mxu0 %v5676
    %6828 = vmatpush1.bf16.msra.mxu0 %v5675
    %6829 = vmatprep.subr.bf16.mxu0 %v5682
    %6830 = vmatpush1.bf16.msra.mxu0 %v5681
    %6831 = vmatprep.subr.bf16.mxu0 %v5688
    %6832 = vmatpush1.bf16.msra.mxu0 %v5687
    %6833 = vmatprep.subr.bf16.mxu0 %v5694
    %6834 = vmatpush1.bf16.msra.mxu0 %v5693
    %6835 = vmatprep.subr.bf16.mxu0 %v5700
    %6836 = vmatpush1.bf16.msra.mxu0 %v5699
    %6837 = vmatprep.subr.bf16.mxu0 %v5706
    %6838 = vmatpush1.bf16.msra.mxu0 %v5705
    %6839 = vmatprep.subr.bf16.mxu0 %v5712
    %6840 = vmatpush1.bf16.msra.mxu0 %v5711
    %6841 = vmatprep.subr.bf16.mxu0 %v5718
    %6842 = vmatpush1.bf16.msra.mxu0 %v5717
    %6843 = vmatprep.subr.bf16.mxu0 %v5724
    %6844 = vmatpush1.bf16.msra.mxu0 %v5723
    %6845 = vmatprep.subr.bf16.mxu0 %v5730
    %6846 = vmatpush1.bf16.msra.mxu0 %v5729
    %6847 = vmatprep.subr.bf16.mxu0 %v5736
    %6848 = vmatpush1.bf16.msra.mxu0 %v5735
    %6849 = vmatprep.subr.bf16.mxu0 %v5742
    %6850 = vmatpush1.bf16.msra.mxu0 %v5741
    %6851 = vmatprep.subr.bf16.mxu0 %v5748
    %6852 = vmatpush1.bf16.msra.mxu0 %v5747
    %6853 = vmatprep.subr.bf16.mxu0 %v5754
    %6854 = vmatpush1.bf16.msra.mxu0 %v5753
    %6855 = vmatprep.mubr.bf16.mxu0 %v6822
    %6856 = vmatmul.mubr.bf16.gmra.mrb[0].mxu0 %v6821
    %v6857 = vpop.f32.mrb[0].mxu0
    %v6858 = vadd.f32 0.0, %v6857
    %v6859 = vpop.f32.mrb[0].mxu0
    %v6860 = vadd.f32 0.0, %v6859
    %v6861 = vpop.f32.mrb[0].mxu0
    %v6862 = vpop.f32.mrb[0].mxu0
    %6863 = vdwg.mxu0
    %6864 = vmatprep.subr.bf16.mxu0 %v5666
    %6865 = vmatpush1.bf16.msra.mxu0 %v5665
    %6866 = vmatprep.subr.bf16.mxu0 %v5672
    %6867 = vmatpush1.bf16.msra.mxu0 %v5671
    %6868 = vmatprep.subr.bf16.mxu0 %v5678
    %6869 = vmatpush1.bf16.msra.mxu0 %v5677
    %6870 = vmatprep.subr.bf16.mxu0 %v5684
    %6871 = vmatpush1.bf16.msra.mxu0 %v5683
    %6872 = vmatprep.subr.bf16.mxu0 %v5690
    %6873 = vmatpush1.bf16.msra.mxu0 %v5689
    %6874 = vmatprep.subr.bf16.mxu0 %v5696
    %6875 = vmatpush1.bf16.msra.mxu0 %v5695
    %6876 = vmatprep.subr.bf16.mxu0 %v5702
    %6877 = vmatpush1.bf16.msra.mxu0 %v5701
    %6878 = vmatprep.subr.bf16.mxu0 %v5708
    %6879 = vmatpush1.bf16.msra.mxu0 %v5707
    %6880 = vmatprep.subr.bf16.mxu0 %v5714
    %6881 = vmatpush1.bf16.msra.mxu0 %v5713
    %6882 = vmatprep.subr.bf16.mxu0 %v5720
    %6883 = vmatpush1.bf16.msra.mxu0 %v5719
    %6884 = vmatprep.subr.bf16.mxu0 %v5726
    %6885 = vmatpush1.bf16.msra.mxu0 %v5725
    %6886 = vmatprep.subr.bf16.mxu0 %v5732
    %6887 = vmatpush1.bf16.msra.mxu0 %v5731
    %6888 = vmatprep.subr.bf16.mxu0 %v5738
    %6889 = vmatpush1.bf16.msra.mxu0 %v5737
    %6890 = vmatprep.subr.bf16.mxu0 %v5744
    %6891 = vmatpush1.bf16.msra.mxu0 %v5743
    %6892 = vmatprep.subr.bf16.mxu0 %v5750
    %6893 = vmatpush1.bf16.msra.mxu0 %v5749
    %6894 = vmatprep.subr.bf16.mxu0 %v5756
    %6895 = vmatpush1.bf16.msra.mxu0 %v5755
    %6896 = vmatprep.mubr.bf16.mxu0 %v6822
    %6897 = vmatmul.mubr.bf16.gmra.mrb[0].mxu0 %v6821
    %v6898 = vpop.f32.mrb[0].mxu0
    %v6899 = vadd.f32 0.0, %v6898
    %v6900 = vpop.f32.mrb[0].mxu0
    %v6901 = vadd.f32 0.0, %v6900
    %v6902 = vpop.f32.mrb[0].mxu0
    %v6903 = vpop.f32.mrb[0].mxu0
    %6904 = vdwg.mxu0
    %6905 = vmatprep.subr.bf16.mxu0 %v5668
    %6906 = vmatpush1.bf16.msra.mxu0 %v5667
    %6907 = vmatprep.subr.bf16.mxu0 %v5674
    %6908 = vmatpush1.bf16.msra.mxu0 %v5673
    %6909 = vmatprep.subr.bf16.mxu0 %v5680
    %6910 = vmatpush1.bf16.msra.mxu0 %v5679
    %6911 = vmatprep.subr.bf16.mxu0 %v5686
    %6912 = vmatpush1.bf16.msra.mxu0 %v5685
    %6913 = vmatprep.subr.bf16.mxu0 %v5692
    %6914 = vmatpush1.bf16.msra.mxu0 %v5691
    %6915 = vmatprep.subr.bf16.mxu0 %v5698
    %6916 = vmatpush1.bf16.msra.mxu0 %v5697
    %6917 = vmatprep.subr.bf16.mxu0 %v5704
    %6918 = vmatpush1.bf16.msra.mxu0 %v5703
    %6919 = vmatprep.subr.bf16.mxu0 %v5710
    %6920 = vmatpush1.bf16.msra.mxu0 %v5709
    %6921 = vmatprep.subr.bf16.mxu0 %v5716
    %6922 = vmatpush1.bf16.msra.mxu0 %v5715
    %6923 = vmatprep.subr.bf16.mxu0 %v5722
    %6924 = vmatpush1.bf16.msra.mxu0 %v5721
    %6925 = vmatprep.subr.bf16.mxu0 %v5728
    %6926 = vmatpush1.bf16.msra.mxu0 %v5727
    %6927 = vmatprep.subr.bf16.mxu0 %v5734
    %6928 = vmatpush1.bf16.msra.mxu0 %v5733
    %6929 = vmatprep.subr.bf16.mxu0 %v5740
    %6930 = vmatpush1.bf16.msra.mxu0 %v5739
    %6931 = vmatprep.subr.bf16.mxu0 %v5746
    %6932 = vmatpush1.bf16.msra.mxu0 %v5745
    %6933 = vmatprep.subr.bf16.mxu0 %v5752
    %6934 = vmatpush1.bf16.msra.mxu0 %v5751
    %6935 = vmatprep.subr.bf16.mxu0 %v5758
    %6936 = vmatpush1.bf16.msra.mxu0 %v5757
    %6937 = vmatprep.mubr.bf16.mxu0 %v6822
    %6938 = vmatmul.mubr.bf16.gmra.mrb[0].mxu0 %v6821
    %v6939 = vpop.f32.mrb[0].mxu0
    %v6940 = vadd.f32 0.0, %v6939
    %v6941 = vpop.f32.mrb[0].mxu0
    %v6942 = vadd.f32 0.0, %v6941
    %v6943 = vpop.f32.mrb[0].mxu0
    %v6944 = vpop.f32.mrb[0].mxu0
    %6945 = vdwg.mxu0
    %v6946 = vld [vmem:[#allocation2 + $0x90] sm:$0xff]
    %v6947 = vld [vmem:[#allocation2 + $0x98] sm:$0xff]
    %v6948 = vld [vmem:[#allocation2 + $0xa0] sm:$0xff]
    %v6949 = vadd.f32 %v6946, %v6858
    %v6950 = vxor.u32 %v6949, 2147483648
    %v6951 = vmul.f32 %v6950, 1.442695
    %v6952 = vpow.pop %v6951
    %v6953 = vadd.f32 %v6952, 1.0
    %v6954 = vrcp.pop %v6953
    %v6955 = vmul.f32 1.0, %v6954
    %v6956 = vadd.f32 %v6947, %v6860
    %v6957 = vxor.u32 %v6956, 2147483648
    %v6958 = vmul.f32 %v6957, 1.442695
    %v6959 = vpow.pop %v6958
    %v6960 = vadd.f32 %v6959, 1.0
    %v6961 = vrcp.pop %v6960
    %v6962 = vmul.f32 1.0, %v6961
    %v6963 = vadd.f32 %v6899, %v5764
    %v6964 = vmul.f32 %v6955, %v6963
    %v6965 = vadd.f32 %v6948, %v6964
    %v6966 = vtanh.pop %v6965
    %v6967 = vsub.f32 1.0, %v6962
    %v6968 = vmul.f32 %v6967, %v6966
    %v6969 = vmul.f32 %v6962, %v6795
    %v6970 = vadd.f32 %v6968, %v6969
    %v6971 = vld [vmem:[#allocation3 + $0x18] sm:$0xff]
    %v6972 = vld [vmem:[#allocation3 + $0x20] sm:$0xff]
    %v6973 = vld [vmem:[#allocation3 + $0x28] sm:$0xff]
    %v6974 = vadd.f32 %v6971, %v6901
    %v6975 = vxor.u32 %v6974, 2147483648
    %v6976 = vmul.f32 %v6975, 1.442695
    %v6977 = vpow.pop %v6976
    %v6978 = vadd.f32 %v6977, 1.0
    %v6979 = vrcp.pop %v6978
    %v6980 = vmul.f32 1.0, %v6979
    %v6981 = vadd.f32 %v6972, %v6940
    %v6982 = vxor.u32 %v6981, 2147483648
    %v6983 = vmul.f32 %v6982, 1.442695
    %v6984 = vpow.pop %v6983
    %v6985 = vadd.f32 %v6984, 1.0
    %v6986 = vrcp.pop %v6985
    %v6987 = vmul.f32 1.0, %v6986
    %v6988 = vadd.f32 %v6942, %v5771
    %v6989 = vmul.f32 %v6980, %v6988
    %v6990 = vadd.f32 %v6973, %v6989
    %v6991 = vtanh.pop %v6990
    %v6992 = vsub.f32 1.0, %v6987
    %v6993 = vmul.f32 %v6992, %v6991
    %v6994 = vmul.f32 %v6987, %v6820
    %v6995 = vadd.f32 %v6993, %v6994
    %v6996 = vpack.c.bf16 %v6970, %v6970
    %v6997 = vpack.c.bf16 %v6995, %v6995
    %6998 = vmatprep.subr.bf16.mxu0 %v5664
    %6999 = vmatpush1.bf16.msra.mxu0 %v5663
    %7000 = vmatprep.subr.bf16.mxu0 %v5670
    %7001 = vmatpush1.bf16.msra.mxu0 %v5669
    %7002 = vmatprep.subr.bf16.mxu0 %v5676
    %7003 = vmatpush1.bf16.msra.mxu0 %v5675
    %7004 = vmatprep.subr.bf16.mxu0 %v5682
    %7005 = vmatpush1.bf16.msra.mxu0 %v5681
    %7006 = vmatprep.subr.bf16.mxu0 %v5688
    %7007 = vmatpush1.bf16.msra.mxu0 %v5687
    %7008 = vmatprep.subr.bf16.mxu0 %v5694
    %7009 = vmatpush1.bf16.msra.mxu0 %v5693
    %7010 = vmatprep.subr.bf16.mxu0 %v5700
    %7011 = vmatpush1.bf16.msra.mxu0 %v5699
    %7012 = vmatprep.subr.bf16.mxu0 %v5706
    %7013 = vmatpush1.bf16.msra.mxu0 %v5705
    %7014 = vmatprep.subr.bf16.mxu0 %v5712
    %7015 = vmatpush1.bf16.msra.mxu0 %v5711
    %7016 = vmatprep.subr.bf16.mxu0 %v5718
    %7017 = vmatpush1.bf16.msra.mxu0 %v5717
    %7018 = vmatprep.subr.bf16.mxu0 %v5724
    %7019 = vmatpush1.bf16.msra.mxu0 %v5723
    %7020 = vmatprep.subr.bf16.mxu0 %v5730
    %7021 = vmatpush1.bf16.msra.mxu0 %v5729
    %7022 = vmatprep.subr.bf16.mxu0 %v5736
    %7023 = vmatpush1.bf16.msra.mxu0 %v5735
    %7024 = vmatprep.subr.bf16.mxu0 %v5742
    %7025 = vmatpush1.bf16.msra.mxu0 %v5741
    %7026 = vmatprep.subr.bf16.mxu0 %v5748
    %7027 = vmatpush1.bf16.msra.mxu0 %v5747
    %7028 = vmatprep.subr.bf16.mxu0 %v5754
    %7029 = vmatpush1.bf16.msra.mxu0 %v5753
    %7030 = vmatprep.mubr.bf16.mxu0 %v6997
    %7031 = vmatmul.mubr.bf16.gmra.mrb[0].mxu0 %v6996
    %v7032 = vpop.f32.mrb[0].mxu0
    %v7033 = vadd.f32 0.0, %v7032
    %v7034 = vpop.f32.mrb[0].mxu0
    %v7035 = vadd.f32 0.0, %v7034
    %v7036 = vpop.f32.mrb[0].mxu0
    %v7037 = vpop.f32.mrb[0].mxu0
    %7038 = vdwg.mxu0
    %7039 = vmatprep.subr.bf16.mxu0 %v5666
    %7040 = vmatpush1.bf16.msra.mxu0 %v5665
    %7041 = vmatprep.subr.bf16.mxu0 %v5672
    %7042 = vmatpush1.bf16.msra.mxu0 %v5671
    %7043 = vmatprep.subr.bf16.mxu0 %v5678
    %7044 = vmatpush1.bf16.msra.mxu0 %v5677
    %7045 = vmatprep.subr.bf16.mxu0 %v5684
    %7046 = vmatpush1.bf16.msra.mxu0 %v5683
    %7047 = vmatprep.subr.bf16.mxu0 %v5690
    %7048 = vmatpush1.bf16.msra.mxu0 %v5689
    %7049 = vmatprep.subr.bf16.mxu0 %v5696
    %7050 = vmatpush1.bf16.msra.mxu0 %v5695
    %7051 = vmatprep.subr.bf16.mxu0 %v5702
    %7052 = vmatpush1.bf16.msra.mxu0 %v5701
    %7053 = vmatprep.subr.bf16.mxu0 %v5708
    %7054 = vmatpush1.bf16.msra.mxu0 %v5707
    %7055 = vmatprep.subr.bf16.mxu0 %v5714
    %7056 = vmatpush1.bf16.msra.mxu0 %v5713
    %7057 = vmatprep.subr.bf16.mxu0 %v5720
    %7058 = vmatpush1.bf16.msra.mxu0 %v5719
    %7059 = vmatprep.subr.bf16.mxu0 %v5726
    %7060 = vmatpush1.bf16.msra.mxu0 %v5725
    %7061 = vmatprep.subr.bf16.mxu0 %v5732
    %7062 = vmatpush1.bf16.msra.mxu0 %v5731
    %7063 = vmatprep.subr.bf16.mxu0 %v5738
    %7064 = vmatpush1.bf16.msra.mxu0 %v5737
    %7065 = vmatprep.subr.bf16.mxu0 %v5744
    %7066 = vmatpush1.bf16.msra.mxu0 %v5743
    %7067 = vmatprep.subr.bf16.mxu0 %v5750
    %7068 = vmatpush1.bf16.msra.mxu0 %v5749
    %7069 = vmatprep.subr.bf16.mxu0 %v5756
    %7070 = vmatpush1.bf16.msra.mxu0 %v5755
    %7071 = vmatprep.mubr.bf16.mxu0 %v6997
    %7072 = vmatmul.mubr.bf16.gmra.mrb[0].mxu0 %v6996
    %v7073 = vpop.f32.mrb[0].mxu0
    %v7074 = vadd.f32 0.0, %v7073
    %v7075 = vpop.f32.mrb[0].mxu0
    %v7076 = vadd.f32 0.0, %v7075
    %v7077 = vpop.f32.mrb[0].mxu0
    %v7078 = vpop.f32.mrb[0].mxu0
    %7079 = vdwg.mxu0
    %7080 = vmatprep.subr.bf16.mxu0 %v5668
    %7081 = vmatpush1.bf16.msra.mxu0 %v5667
    %7082 = vmatprep.subr.bf16.mxu0 %v5674
    %7083 = vmatpush1.bf16.msra.mxu0 %v5673
    %7084 = vmatprep.subr.bf16.mxu0 %v5680
    %7085 = vmatpush1.bf16.msra.mxu0 %v5679
    %7086 = vmatprep.subr.bf16.mxu0 %v5686
    %7087 = vmatpush1.bf16.msra.mxu0 %v5685
    %7088 = vmatprep.subr.bf16.mxu0 %v5692
    %7089 = vmatpush1.bf16.msra.mxu0 %v5691
    %7090 = vmatprep.subr.bf16.mxu0 %v5698
    %7091 = vmatpush1.bf16.msra.mxu0 %v5697
    %7092 = vmatprep.subr.bf16.mxu0 %v5704
    %7093 = vmatpush1.bf16.msra.mxu0 %v5703
    %7094 = vmatprep.subr.bf16.mxu0 %v5710
    %7095 = vmatpush1.bf16.msra.mxu0 %v5709
    %7096 = vmatprep.subr.bf16.mxu0 %v5716
    %7097 = vmatpush1.bf16.msra.mxu0 %v5715
    %7098 = vmatprep.subr.bf16.mxu0 %v5722
    %7099 = vmatpush1.bf16.msra.mxu0 %v5721
    %7100 = vmatprep.subr.bf16.mxu0 %v5728
    %7101 = vmatpush1.bf16.msra.mxu0 %v5727
    %7102 = vmatprep.subr.bf16.mxu0 %v5734
    %7103 = vmatpush1.bf16.msra.mxu0 %v5733
    %7104 = vmatprep.subr.bf16.mxu0 %v5740
    %7105 = vmatpush1.bf16.msra.mxu0 %v5739
    %7106 = vmatprep.subr.bf16.mxu0 %v5746
    %7107 = vmatpush1.bf16.msra.mxu0 %v5745
    %7108 = vmatprep.subr.bf16.mxu0 %v5752
    %7109 = vmatpush1.bf16.msra.mxu0 %v5751
    %7110 = vmatprep.subr.bf16.mxu0 %v5758
    %7111 = vmatpush1.bf16.msra.mxu0 %v5757
    %7112 = vmatprep.mubr.bf16.mxu0 %v6997
    %7113 = vmatmul.mubr.bf16.gmra.mrb[0].mxu0 %v6996
    %v7114 = vpop.f32.mrb[0].mxu0
    %v7115 = vadd.f32 0.0, %v7114
    %v7116 = vpop.f32.mrb[0].mxu0
    %v7117 = vadd.f32 0.0, %v7116
    %v7118 = vpop.f32.mrb[0].mxu0
    %v7119 = vpop.f32.mrb[0].mxu0
    %7120 = vdwg.mxu0
    %v7121 = vld [vmem:[#allocation2 + $0xa8] sm:$0xff]
    %v7122 = vld [vmem:[#allocation2 + $0xb0] sm:$0xff]
    %v7123 = vld [vmem:[#allocation2 + $0xb8] sm:$0xff]
    %v7124 = vadd.f32 %v7121, %v7033
    %v7125 = vxor.u32 %v7124, 2147483648
    %v7126 = vmul.f32 %v7125, 1.442695
    %v7127 = vpow.pop %v7126
    %v7128 = vadd.f32 %v7127, 1.0
    %v7129 = vrcp.pop %v7128
    %v7130 = vmul.f32 1.0, %v7129
    %v7131 = vadd.f32 %v7122, %v7035
    %v7132 = vxor.u32 %v7131, 2147483648
    %v7133 = vmul.f32 %v7132, 1.442695
    %v7134 = vpow.pop %v7133
    %v7135 = vadd.f32 %v7134, 1.0
    %v7136 = vrcp.pop %v7135
    %v7137 = vmul.f32 1.0, %v7136
    %v7138 = vadd.f32 %v7074, %v5764
    %v7139 = vmul.f32 %v7130, %v7138
    %v7140 = vadd.f32 %v7123, %v7139
    %v7141 = vtanh.pop %v7140
    %v7142 = vsub.f32 1.0, %v7137
    %v7143 = vmul.f32 %v7142, %v7141
    %v7144 = vmul.f32 %v7137, %v6970
    %v7145 = vadd.f32 %v7143, %v7144
    %v7146 = vld [vmem:[#allocation3] sm:$0xff]
    %v7147 = vld [vmem:[#allocation3 + $0x8] sm:$0xff]
    %v7148 = vld [vmem:[#allocation3 + $0x10] sm:$0xff]
    %v7149 = vadd.f32 %v7146, %v7076
    %v7150 = vxor.u32 %v7149, 2147483648
    %v7151 = vmul.f32 %v7150, 1.442695
    %v7152 = vpow.pop %v7151
    %v7153 = vadd.f32 %v7152, 1.0
    %v7154 = vrcp.pop %v7153
    %v7155 = vmul.f32 1.0, %v7154
    %v7156 = vadd.f32 %v7147, %v7115
    %v7157 = vxor.u32 %v7156, 2147483648
    %v7158 = vmul.f32 %v7157, 1.442695
    %v7159 = vpow.pop %v7158
    %v7160 = vadd.f32 %v7159, 1.0
    %v7161 = vrcp.pop %v7160
    %v7162 = vmul.f32 1.0, %v7161
    %v7163 = vadd.f32 %v7117, %v5771
    %v7164 = vmul.f32 %v7155, %v7163
    %v7165 = vadd.f32 %v7148, %v7164
    %v7166 = vtanh.pop %v7165
    %v7167 = vsub.f32 1.0, %v7162
    %v7168 = vmul.f32 %v7167, %v7166
    %v7169 = vmul.f32 %v7162, %v6995
    %v7170 = vadd.f32 %v7168, %v7169
    %s7171 = smul.u32 4, 64
    %s7172 = smul.u32 %s7171, 2
    %s7173 = sshll.u32 %s7172, 4
    %7174 = dma.done %s160, %s7173
    %s7175 = smul.u32 %s5659, 1
    %s7176 = sshll.u32 %s7175, 4
    %7177 = dma.done %s195, %s7176
    %v7178 = vpack.c.bf16 %v7145, %v7145
    %v7179 = vpack.c.bf16 %v7170, %v7170
    %v7180 = vld [vmem:[#allocation5] sm:$0xff]
    %v7181 = vld [vmem:[#allocation5 + $0x8] sm:$0xff]
    %v7182 = vld [vmem:[#allocation5 + $0x10] sm:$0xff]
    %v7183 = vld [vmem:[#allocation5 + $0x18] sm:$0xff]
    %v7184 = vld [vmem:[#allocation5 + $0x20] sm:$0xff]
    %v7185 = vld [vmem:[#allocation5 + $0x28] sm:$0xff]
    %v7186 = vld [vmem:[#allocation5 + $0x30] sm:$0xff]
    %v7187 = vld [vmem:[#allocation5 + $0x38] sm:$0xff]
    %v7188 = vld [vmem:[#allocation5 + $0x40] sm:$0xff]
    %v7189 = vld [vmem:[#allocation5 + $0x48] sm:$0xff]
    %v7190 = vld [vmem:[#allocation5 + $0x50] sm:$0xff]
    %v7191 = vld [vmem:[#allocation5 + $0x58] sm:$0xff]
    %v7192 = vld [vmem:[#allocation5 + $0x60] sm:$0xff]
    %v7193 = vld [vmem:[#allocation5 + $0x68] sm:$0xff]
    %v7194 = vld [vmem:[#allocation5 + $0x70] sm:$0xff]
    %v7195 = vld [vmem:[#allocation5 + $0x78] sm:$0xff]
    %v7196 = vld [vmem:[#allocation5 + $0x80] sm:$0xff]
    %v7197 = vld [vmem:[#allocation5 + $0x88] sm:$0xff]
    %v7198 = vld [vmem:[#allocation5 + $0x90] sm:$0xff]
    %v7199 = vld [vmem:[#allocation5 + $0x98] sm:$0xff]
    %v7200 = vld [vmem:[#allocation5 + $0xa0] sm:$0xff]
    %v7201 = vld [vmem:[#allocation5 + $0xa8] sm:$0xff]
    %v7202 = vld [vmem:[#allocation5 + $0xb0] sm:$0xff]
    %v7203 = vld [vmem:[#allocation5 + $0xb8] sm:$0xff]
    %v7204 = vld [vmem:[#allocation5 + $0xc0] sm:$0xff]
    %v7205 = vld [vmem:[#allocation5 + $0xc8] sm:$0xff]
    %v7206 = vld [vmem:[#allocation5 + $0xd0] sm:$0xff]
    %v7207 = vld [vmem:[#allocation5 + $0xd8] sm:$0xff]
    %v7208 = vld [vmem:[#allocation5 + $0xe0] sm:$0xff]
    %v7209 = vld [vmem:[#allocation5 + $0xe8] sm:$0xff]
    %v7210 = vld [vmem:[#allocation5 + $0xf0] sm:$0xff]
    %v7211 = vld [vmem:[#allocation5 + $0xf8] sm:$0xff]
    %v7212 = vld [vmem:[#allocation5 + $0x100] sm:$0xff]
    %v7213 = vld [vmem:[#allocation5 + $0x108] sm:$0xff]
    %v7214 = vld [vmem:[#allocation5 + $0x110] sm:$0xff]
    %v7215 = vld [vmem:[#allocation5 + $0x118] sm:$0xff]
    %v7216 = vld [vmem:[#allocation5 + $0x120] sm:$0xff]
    %v7217 = vld [vmem:[#allocation5 + $0x128] sm:$0xff]
    %v7218 = vld [vmem:[#allocation5 + $0x130] sm:$0xff]
    %v7219 = vld [vmem:[#allocation5 + $0x138] sm:$0xff]
    %v7220 = vld [vmem:[#allocation5 + $0x140] sm:$0xff]
    %v7221 = vld [vmem:[#allocation5 + $0x148] sm:$0xff]
    %v7222 = vld [vmem:[#allocation5 + $0x150] sm:$0xff]
    %v7223 = vld [vmem:[#allocation5 + $0x158] sm:$0xff]
    %v7224 = vld [vmem:[#allocation5 + $0x160] sm:$0xff]
    %v7225 = vld [vmem:[#allocation5 + $0x168] sm:$0xff]
    %v7226 = vld [vmem:[#allocation5 + $0x170] sm:$0xff]
    %v7227 = vld [vmem:[#allocation5 + $0x178] sm:$0xff]
    %v7228 = vld [vmem:[#allocation5 + $0x180] sm:$0xff]
    %v7229 = vld [vmem:[#allocation5 + $0x188] sm:$0xff]
    %v7230 = vld [vmem:[#allocation5 + $0x190] sm:$0xff]
    %v7231 = vld [vmem:[#allocation5 + $0x198] sm:$0xff]
    %v7232 = vld [vmem:[#allocation5 + $0x1a0] sm:$0xff]
    %v7233 = vld [vmem:[#allocation5 + $0x1a8] sm:$0xff]
    %v7234 = vld [vmem:[#allocation5 + $0x1b0] sm:$0xff]
    %v7235 = vld [vmem:[#allocation5 + $0x1b8] sm:$0xff]
    %v7236 = vld [vmem:[#allocation5 + $0x1c0] sm:$0xff]
    %v7237 = vld [vmem:[#allocation5 + $0x1c8] sm:$0xff]
    %v7238 = vld [vmem:[#allocation5 + $0x1d0] sm:$0xff]
    %v7239 = vld [vmem:[#allocation5 + $0x1d8] sm:$0xff]
    %v7240 = vld [vmem:[#allocation5 + $0x1e0] sm:$0xff]
    %v7241 = vld [vmem:[#allocation5 + $0x1e8] sm:$0xff]
    %v7242 = vld [vmem:[#allocation5 + $0x1f0] sm:$0xff]
    %v7243 = vld [vmem:[#allocation5 + $0x1f8] sm:$0xff]
    %v7244 = vld [vmem:[%s17] sm:$0x3]
    %v7246 = vlaneseq
    %v7247 = vshrl.u32 %v7246, 7
    %v7248 = vsub.s32 0, %v7247
    %v7249 = vrot.slane %v7244, %v7248
    %v7250 = vlaneseq
    %v7251 = vshrl.u32 %v7250, 7
    %v7252 = vsub.s32 1, %v7251
    %v7253 = vrot.slane %v7244, %v7252
    %7256 = vmatprep.subr.bf16.mxu0 %v7181
    %7257 = vmatpush1.bf16.msra.mxu0 %v7180
    %7258 = vmatprep.subr.bf16.mxu0 %v7183
    %7259 = vmatpush1.bf16.msra.mxu0 %v7182
    %7260 = vmatprep.subr.bf16.mxu0 %v7185
    %7261 = vmatpush1.bf16.msra.mxu0 %v7184
    %7262 = vmatprep.subr.bf16.mxu0 %v7187
    %7263 = vmatpush1.bf16.msra.mxu0 %v7186
    %7264 = vmatprep.subr.bf16.mxu0 %v7189
    %7265 = vmatpush1.bf16.msra.mxu0 %v7188
    %7266 = vmatprep.subr.bf16.mxu0 %v7191
    %7267 = vmatpush1.bf16.msra.mxu0 %v7190
    %7268 = vmatprep.subr.bf16.mxu0 %v7193
    %7269 = vmatpush1.bf16.msra.mxu0 %v7192
    %7270 = vmatprep.subr.bf16.mxu0 %v7195
    %7271 = vmatpush1.bf16.msra.mxu0 %v7194
    %7272 = vmatprep.subr.bf16.mxu0 %v7197
    %7273 = vmatpush1.bf16.msra.mxu0 %v7196
    %7274 = vmatprep.subr.bf16.mxu0 %v7199
    %7275 = vmatpush1.bf16.msra.mxu0 %v7198
    %7276 = vmatprep.subr.bf16.mxu0 %v7201
    %7277 = vmatpush1.bf16.msra.mxu0 %v7200
    %7278 = vmatprep.subr.bf16.mxu0 %v7203
    %7279 = vmatpush1.bf16.msra.mxu0 %v7202
    %7280 = vmatprep.subr.bf16.mxu0 %v7205
    %7281 = vmatpush1.bf16.msra.mxu0 %v7204
    %7282 = vmatprep.subr.bf16.mxu0 %v7207
    %7283 = vmatpush1.bf16.msra.mxu0 %v7206
    %7284 = vmatprep.subr.bf16.mxu0 %v7209
    %7285 = vmatpush1.bf16.msra.mxu0 %v7208
    %7286 = vmatprep.subr.bf16.mxu0 %v7211
    %7287 = vmatpush1.bf16.msra.mxu0 %v7210
    %7288 = vmatprep.mubr.bf16.mxu0 %v5499
    %7289 = vmatmul.mubr.bf16.gmra.mrb[0].mxu0 %v5375
    %v7290 = vpop.f32.mrb[0].mxu0
    %v7291 = vadd.f32 %v7249, %v7290
    %v7292 = vpop.f32.mrb[0].mxu0
    %v7293 = vadd.f32 %v7253, %v7292
    %v7294 = vpop.f32.mrb[0].mxu0
    %v7295 = vpop.f32.mrb[0].mxu0
    %7296 = vdwg.mxu0
    %7297 = vmatprep.subr.bf16.mxu0 %v7213
    %7298 = vmatpush1.bf16.msra.mxu0 %v7212
    %7299 = vmatprep.subr.bf16.mxu0 %v7215
    %7300 = vmatpush1.bf16.msra.mxu0 %v7214
    %7301 = vmatprep.subr.bf16.mxu0 %v7217
    %7302 = vmatpush1.bf16.msra.mxu0 %v7216
    %7303 = vmatprep.subr.bf16.mxu0 %v7219
    %7304 = vmatpush1.bf16.msra.mxu0 %v7218
    %7305 = vmatprep.subr.bf16.mxu0 %v7221
    %7306 = vmatpush1.bf16.msra.mxu0 %v7220
    %7307 = vmatprep.subr.bf16.mxu0 %v7223
    %7308 = vmatpush1.bf16.msra.mxu0 %v7222
    %7309 = vmatprep.subr.bf16.mxu0 %v7225
    %7310 = vmatpush1.bf16.msra.mxu0 %v7224
    %7311 = vmatprep.subr.bf16.mxu0 %v7227
    %7312 = vmatpush1.bf16.msra.mxu0 %v7226
    %7313 = vmatprep.subr.bf16.mxu0 %v7229
    %7314 = vmatpush1.bf16.msra.mxu0 %v7228
    %7315 = vmatprep.subr.bf16.mxu0 %v7231
    %7316 = vmatpush1.bf16.msra.mxu0 %v7230
    %7317 = vmatprep.subr.bf16.mxu0 %v7233
    %7318 = vmatpush1.bf16.msra.mxu0 %v7232
    %7319 = vmatprep.subr.bf16.mxu0 %v7235
    %7320 = vmatpush1.bf16.msra.mxu0 %v7234
    %7321 = vmatprep.subr.bf16.mxu0 %v7237
    %7322 = vmatpush1.bf16.msra.mxu0 %v7236
    %7323 = vmatprep.subr.bf16.mxu0 %v7239
    %7324 = vmatpush1.bf16.msra.mxu0 %v7238
    %7325 = vmatprep.subr.bf16.mxu0 %v7241
    %7326 = vmatpush1.bf16.msra.mxu0 %v7240
    %7327 = vmatprep.subr.bf16.mxu0 %v7243
    %7328 = vmatpush1.bf16.msra.mxu0 %v7242
    %7329 = vmatprep.mubr.bf16.mxu0 %v7179
    %7330 = vmatmul.mubr.bf16.gmra.mrb[0].mxu0 %v7178
    %v7331 = vpop.f32.mrb[0].mxu0
    %v7332 = vadd.f32 %v7291, %v7331
    %v7333 = vpop.f32.mrb[0].mxu0
    %v7334 = vadd.f32 %v7293, %v7333
    %v7335 = vpop.f32.mrb[0].mxu0
    %v7336 = vpop.f32.mrb[0].mxu0
    %7337 = vdwg.mxu0
    %v7338 = vpack.c.bf16 %v7332, %v7332
    %v7339 = vpack.c.bf16 %v7334, %v7334
    %v7340 = vld [vmem:[#allocation6] sm:$0xff]
    %v7341 = vld [vmem:[#allocation6 + $0x8] sm:$0xff]
    %v7342 = vld [vmem:[#allocation6 + $0x10] sm:$0xff]
    %v7343 = vld [vmem:[#allocation6 + $0x18] sm:$0xff]
    %v7344 = vld [vmem:[#allocation6 + $0x20] sm:$0xff]
    %v7345 = vld [vmem:[#allocation6 + $0x28] sm:$0xff]
    %v7346 = vld [vmem:[#allocation6 + $0x30] sm:$0xff]
    %v7347 = vld [vmem:[#allocation6 + $0x38] sm:$0xff]
    %v7348 = vld [vmem:[#allocation6 + $0x40] sm:$0xff]
    %v7349 = vld [vmem:[#allocation6 + $0x48] sm:$0xff]
    %v7350 = vld [vmem:[#allocation6 + $0x50] sm:$0xff]
    %v7351 = vld [vmem:[#allocation6 + $0x58] sm:$0xff]
    %v7352 = vld [vmem:[#allocation6 + $0x60] sm:$0xff]
    %v7353 = vld [vmem:[#allocation6 + $0x68] sm:$0xff]
    %v7354 = vld [vmem:[#allocation6 + $0x70] sm:$0xff]
    %v7355 = vld [vmem:[#allocation6 + $0x78] sm:$0xff]
    %v7356 = vld [vmem:[%s18] sm:$0x1]
    %v7358 = vlaneseq
    %v7359 = vshrl.u32 %v7358, 7
    %v7360 = vsub.s32 0, %v7359
    %v7361 = vrot.slane %v7356, %v7360
    %7363 = vmatprep.subr.bf16.mxu0 0
    %7364 = vmatpush1.bf16.msra.mxu0 %v7340
    %7365 = vmatprep.subr.bf16.mxu0 0
    %7366 = vmatpush1.bf16.msra.mxu0 %v7341
    %7367 = vmatprep.subr.bf16.mxu0 0
    %7368 = vmatpush1.bf16.msra.mxu0 %v7342
    %7369 = vmatprep.subr.bf16.mxu0 0
    %7370 = vmatpush1.bf16.msra.mxu0 %v7343
    %7371 = vmatprep.subr.bf16.mxu0 0
    %7372 = vmatpush1.bf16.msra.mxu0 %v7344
    %7373 = vmatprep.subr.bf16.mxu0 0
    %7374 = vmatpush1.bf16.msra.mxu0 %v7345
    %7375 = vmatprep.subr.bf16.mxu0 0
    %7376 = vmatpush1.bf16.msra.mxu0 %v7346
    %7377 = vmatprep.subr.bf16.mxu0 0
    %7378 = vmatpush1.bf16.msra.mxu0 %v7347
    %7379 = vmatprep.subr.bf16.mxu0 0
    %7380 = vmatpush1.bf16.msra.mxu0 %v7348
    %7381 = vmatprep.subr.bf16.mxu0 0
    %7382 = vmatpush1.bf16.msra.mxu0 %v7349
    %7383 = vmatprep.subr.bf16.mxu0 0
    %7384 = vmatpush1.bf16.msra.mxu0 %v7350
    %7385 = vmatprep.subr.bf16.mxu0 0
    %7386 = vmatpush1.bf16.msra.mxu0 %v7351
    %7387 = vmatprep.subr.bf16.mxu0 0
    %7388 = vmatpush1.bf16.msra.mxu0 %v7352
    %7389 = vmatprep.subr.bf16.mxu0 0
    %7390 = vmatpush1.bf16.msra.mxu0 %v7353
    %7391 = vmatprep.subr.bf16.mxu0 0
    %7392 = vmatpush1.bf16.msra.mxu0 %v7354
    %7393 = vmatprep.subr.bf16.mxu0 0
    %7394 = vmatpush1.bf16.msra.mxu0 %v7355
    %7395 = vmatprep.mubr.bf16.mxu0 %v7339
    %7396 = vmatmul.mubr.bf16.gmra.mrb[0].mxu0 %v7338
    %v7397 = vpop.f32.mrb[0].mxu0
    %v7398 = vadd.f32 %v7361, %v7397
    %v7399 = vpop.f32.mrb[0].mxu0
    %v7400 = vpop.f32.mrb[0].mxu0
    %v7401 = vpop.f32.mrb[0].mxu0
    %7402 = vdwg.mxu0
    %7403 = vst [vmem:[%s19] sm:$0xff] %v7398
    // Predicated region
    $region120: #{rnn_forward.1} parent=1 // pred_check
      _
    $region121: #{rnn_forward.1} parent=1 // pred_check_branch
      %7405 = sbr.rel (0) target = $region123
    $region122: #{rnn_forward.1} parent=1 // pred_region
      _
    $region123: #{rnn_forward.1} parent=1 // pred_fallthru
      _
    // Predicated region
    $region124: #{rnn_forward.1} parent=1 // pred_check
      _
    $region125: #{rnn_forward.1} parent=1 // pred_check_branch
      %7407 = sbr.rel (0) target = $region127
    $region126: #{rnn_forward.1} parent=1 // pred_region
      _
    $region127: #{rnn_forward.1} parent=1 // pred_fallthru
      _
    %7408 = vsyncpa [#allocation9], 1
    %7409 = vsyncpa [#allocation11], 1
    %7410 = vsyncpa [#allocation14], 1
  %7411 = vsyncmov [#allocation7]
  %s7412 = vpop.sfrf %7411
  %p7413 = scmp.eq.s32.totalorder %s7412, 0
  %p7414 = pneg %p7413
  %7416 = shalt.err (%p7414)
  %s7417 = scalar_lea.sflag [#allocation7], 1
  %7418 = vsyncmov %s7417
  %s7419 = vpop.sfrf %7418
  %p7420 = scmp.eq.s32.totalorder %s7419, 0
  %p7421 = pneg %p7420
  %7423 = shalt.err (%p7421)
  %s7424 = scalar_lea.sflag [#allocation7], 2
  %7425 = vsyncmov %s7424
  %s7426 = vpop.sfrf %7425
  %p7427 = scmp.eq.s32.totalorder %s7426, 0
  %p7428 = pneg %p7427
  %7430 = shalt.err (%p7428)

</llo_original>
